<compile_context>
chip_gen: v6e
topology: v6e:2x2x1
jax: 0.10.0
libtpu: 0.0.40
codegen_flags: <defaults>
</compile_context>

<pallas_src>
import functools

import jax
import jax.numpy as jnp
from jax.experimental import pallas as pl
from jax.experimental.pallas import tpu as pltpu


def _round_up(x, m):
    return ((x + m - 1) // m) * m


def _cparams(sem):
    # 32 MiB scoped VMEM is valid on v5e (128 MiB phys), v6e (128 MiB) and v7x (64 MiB).
    return pltpu.CompilerParams(dimension_semantics=sem,
                                vmem_limit_bytes=32 * 1024 * 1024)


# ----------------------------------------------------------------------------
# Kernel 1: tiled bf16 matmul (backbone im2col convs)
# ----------------------------------------------------------------------------

def _matmul_kernel(a_ref, b_ref, o_ref, *, relu):
    acc = jnp.dot(a_ref[...], b_ref[...], preferred_element_type=jnp.float32)
    if relu:
        acc = jnp.maximum(acc, 0.0)
    o_ref[...] = acc


def pallas_matmul(a, b, relu=False):
    """(M,K)@(K,N): bf16 MXU inputs, K/N zero-padded to 128, M tiled ("parallel")."""
    M, K = a.shape
    K2, N = b.shape
    assert K == K2
    Kp = _round_up(K, 128)
    Np = _round_up(N, 128)
    tile_m = 256 if M >= 256 else _round_up(M, 16)
    Mp = _round_up(M, tile_m)
    a_p = jnp.pad(a.astype(jnp.float32), ((0, Mp - M), (0, Kp - K))).astype(jnp.bfloat16)
    b_p = jnp.pad(b.astype(jnp.float32), ((0, Kp - K), (0, Np - N))).astype(jnp.bfloat16)
    out = pl.pallas_call(
        functools.partial(_matmul_kernel, relu=relu),
        out_shape=jax.ShapeDtypeStruct((Mp, Np), jnp.float32),
        grid=(Mp // tile_m,),
        in_specs=[pl.BlockSpec((tile_m, Kp), lambda i: (i, 0)),
                  pl.BlockSpec((Kp, Np), lambda i: (0, 0))],
        out_specs=pl.BlockSpec((tile_m, Np), lambda i: (i, 0)),
        compiler_params=_cparams(("parallel",)),
    )(a_p, b_p)
    return out[:M, :N]


def conv2d_im2col(x, w, stride=1, padding=0, relu=False):
    """x: (B, H, W, Cin) NHWC; w: (kh, kw, Cin, Cout). im2col + tiled bf16 matmul.

    TODO(synk): for production-size backbones replace the wrapper-side im2col
    (9x read expansion) with an in-kernel halo'd tap-accumulation conv.
    """
    B, H, W, Cin = x.shape
    kh, kw, _, Cout = w.shape
    xp = jnp.pad(x, ((0, 0), (padding, padding), (padding, padding), (0, 0)))
    Ho = (H + 2 * padding - kh) // stride + 1
    Wo = (W + 2 * padding - kw) // stride + 1
    patches = []
    for i in range(kh):
        for j in range(kw):
            patches.append(xp[:, i:i + stride * Ho:stride, j:j + stride * Wo:stride, :])
    a = jnp.concatenate(patches, axis=-1).reshape(B * Ho * Wo, kh * kw * Cin)
    out = pallas_matmul(a, w.reshape(kh * kw * Cin, Cout), relu=relu)
    return out.reshape(B, Ho, Wo, Cout)


def f_forward(x_nchw, p):
    """Stand-in for the frozen SimCLRStage1 backbone f (no grads anyway)."""
    x = jnp.transpose(x_nchw, (0, 2, 3, 1))              # NCHW -> NHWC
    x = conv2d_im2col(x, p["w1"], stride=2, padding=1, relu=True)
    x = conv2d_im2col(x, p["w2"], stride=2, padding=1, relu=True)
    return jnp.transpose(x, (0, 3, 1, 2))                # back to NCHW features


# ----------------------------------------------------------------------------
# Kernel 2: fused BGR->gray + LBP(P=8, R=1), int32 bitwise accumulation
# ----------------------------------------------------------------------------

def _gray_lbp_kernel(xp_ref, o_ref):
    xp = xp_ref[0]                                       # (3, H+2, W+2), BGR, zero halo
    gray = 0.114 * xp[0] + 0.587 * xp[1] + 0.299 * xp[2]
    _, H, W = o_ref.shape
    center = gray[1:1 + H, 1:1 + W]
    code = jnp.zeros((H, W), jnp.int32)
    offsets = ((0, 1), (1, 1), (1, 0), (1, -1), (0, -1), (-1, -1), (-1, 0), (-1, 1))
    for k, (di, dj) in enumerate(offsets):
        neigh = gray[1 + di:1 + di + H, 1 + dj:1 + dj + W]
        code = code | ((neigh >= center).astype(jnp.int32) << k)
    o_ref[...] = code.astype(jnp.float32)[None]          # (1, H, W)


def pallas_gray_lbp(x_nchw):
    """x: (B, 3, H, W) BGR (cv2 convention) -> LBP codes (B, H, W) in one pass.

    TODO(synk): skimage 'default' bilinearly samples the unit circle; the diagonal
    samples here use the integer corner pixel instead.
    """
    B, C, H, W = x_nchw.shape
    xp = jnp.pad(x_nchw.astype(jnp.float32), ((0, 0), (0, 0), (1, 1), (1, 1)))
    return pl.pallas_call(
        _gray_lbp_kernel,
        out_shape=jax.ShapeDtypeStruct((B, H, W), jnp.float32),
        grid=(B,),
        in_specs=[pl.BlockSpec((1, C, H + 2, W + 2), lambda b: (b, 0, 0, 0))],
        out_specs=pl.BlockSpec((1, H, W), lambda b: (b, 0, 0)),
        compiler_params=_cparams(("parallel",)),
    )(xp)


# ----------------------------------------------------------------------------
# Kernel 3: fused attention gate
#   Z-pool over dim-1 -> 7x7 conv (49-tap VPU accumulate, BN folded) -> sigmoid
#   -> gate multiply, all in one kernel per triplet branch.
# ----------------------------------------------------------------------------

def _fused_gate_kernel(xp_ref, wb_ref, o_ref):
    _, D1, D2, D3 = o_ref.shape
    xp = xp_ref[0]                                       # (D1, D2+6, D3+6), zero halo
    pmax = jnp.max(xp, axis=0)                           # (D2+6, D3+6)  Z-pool max
    pmean = jnp.mean(xp, axis=0)                         # (D2+6, D3+6)  Z-pool mean
    att = jnp.zeros((D2, D3), jnp.float32) + wb_ref[98]  # folded BN bias
    for di in range(7):
        for dj in range(7):
            k = (di * 7 + dj) * 2
            att = att + wb_ref[k] * pmax[di:di + D2, dj:dj + D3]
            att = att + wb_ref[k + 1] * pmean[di:di + D2, dj:dj + D3]
    gate = jax.nn.sigmoid(att)
    o_ref[...] = (xp[:, 3:3 + D2, 3:3 + D3] * gate[None, :, :])[None]


def fused_attention_gate(x, gate_p):
    """x: (B, D1, D2, D3). Z-pool over D1, 7x7 conv (+folded BN), sigmoid gate."""
    B, D1, D2, D3 = x.shape
    # Fold eval-mode BatchNorm into the (7,7,2)->1 conv weights at trace time.
    scale = gate_p["bn"]["gamma"] / jnp.sqrt(gate_p["bn"]["var"] + 1e-5)   # (1,)
    w_fold = gate_p["w"].reshape(7, 7, 2) * scale[0]
    b_fold = gate_p["bn"]["beta"] - gate_p["bn"]["mean"] * scale            # (1,)
    wb = jnp.concatenate([w_fold.reshape(-1), b_fold]).astype(jnp.float32)  # (99,)
    # Zero-padding x spatially by 3 makes the in-kernel Z-pool produce zeros in
    # the halo, which is exactly the conv's zero padding of the pooled map.
    xp = jnp.pad(x.astype(jnp.float32), ((0, 0), (0, 0), (3, 3), (3, 3)))
    return pl.pallas_call(
        _fused_gate_kernel,
        out_shape=jax.ShapeDtypeStruct((B, D1, D2, D3), jnp.float32),
        grid=(B,),
        in_specs=[pl.BlockSpec((1, D1, D2 + 6, D3 + 6), lambda b: (b, 0, 0, 0)),
                  pl.BlockSpec(memory_space=pltpu.MemorySpace.SMEM)],
        out_specs=pl.BlockSpec((1, D1, D2, D3), lambda b: (b, 0, 0, 0)),
        compiler_params=_cparams(("parallel",)),
    )(xp, wb)


def triplet_attention(x, p):
    """x: (B, C, H, W). Three rotated Z-pool gates, averaged."""
    out0 = fused_attention_gate(x, p["hw"])
    x1 = jnp.transpose(x, (0, 2, 1, 3))                  # (B, H, C, W)
    out1 = jnp.transpose(fused_attention_gate(x1, p["cw"]), (0, 2, 1, 3))
    x2 = jnp.transpose(x, (0, 3, 2, 1))                  # (B, W, H, C)
    out2 = jnp.transpose(fused_attention_gate(x2, p["hc"]), (0, 3, 2, 1))
    return (out0 + out1 + out2) / 3.0


# ----------------------------------------------------------------------------
# Kernel 4: fused classifier head (pointwise conv -> ReLU -> GAP -> FC)
# ----------------------------------------------------------------------------

def _head_kernel(x_ref, wpw_ref, wfc_ref, bfc_ref, o_ref):
    x = x_ref[0]                                          # (Hf*Wf, C)
    h = jnp.dot(x.astype(jnp.bfloat16), wpw_ref[...].astype(jnp.bfloat16),
                preferred_element_type=jnp.float32)       # (Hf*Wf, Ch)
    h = jnp.maximum(h, 0.0)
    # FC commutes with the spatial mean, so apply it per-pixel and average:
    g = jnp.dot(h, wfc_ref[...], preferred_element_type=jnp.float32)  # (Hf*Wf, nc)
    o_ref[...] = (jnp.mean(g, axis=0, keepdims=True) + bfc_ref[...])[None]


def xception_head(x_nchw, p):
    # TODO(synk): full Xception(num_classes) definition is not provided; reduced to
    # pointwise conv -> ReLU -> global average pool -> linear classifier, fused
    # into a single Pallas kernel (no (B,H,W,Ch) HBM intermediate).
    x = jnp.transpose(x_nchw, (0, 2, 3, 1)).astype(jnp.float32)   # (B, Hf, Wf, C)
    B, Hf, Wf, C = x.shape
    x2 = x.reshape(B, Hf * Wf, C)
    Ch = p["w_pw"].shape[1]
    nc = p["w_fc"].shape[1]
    out = pl.pallas_call(
        _head_kernel,
        out_shape=jax.ShapeDtypeStruct((B, 1, nc), jnp.float32),
        grid=(B,),
        in_specs=[pl.BlockSpec((1, Hf * Wf, C), lambda b: (b, 0, 0)),
                  pl.BlockSpec((C, Ch), lambda b: (0, 0)),
                  pl.BlockSpec((Ch, nc), lambda b: (0, 0)),
                  pl.BlockSpec((1, nc), lambda b: (0, 0))],
        out_specs=pl.BlockSpec((1, 1, nc), lambda b: (b, 0, 0)),
        compiler_params=_cparams(("parallel",)),
    )(x2, p["w_pw"].astype(jnp.float32), p["w_fc"].astype(jnp.float32),
      p["b_fc"].reshape(1, nc).astype(jnp.float32))
    return out[:, 0, :]                                   # (B, num_class)


# ----------------------------------------------------------------------------
# Forward pass
# ----------------------------------------------------------------------------

def simclr_stage2_forward(params, x_device, x):
    """x_device, x: (B, 3, H, W) NCHW, channels in BGR order (cv2 convention)."""
    feats = f_forward(x_device, params["f"])              # (B, C_feat, Hf, Wf)
    B, _, Hf, Wf = feats.shape

    # cv2 BGR2GRAY + LBP(P=8, R=1) fused in one kernel, then bicubic resize to the
    # feature resolution.
    # TODO(synk): PIL bicubic is approximated with jax.image.resize 'bicubic'.
    lbp = pallas_gray_lbp(x)                              # (B, H, W), codes 0..255
    lbp = jax.image.resize(lbp, (B, Hf, Wf), method="bicubic")[:, None]

    # "cat zeros twice then overwrite each sample" net effect:
    x_cat = jnp.concatenate([lbp, lbp, feats], axis=1)    # (B, C_feat+2, Hf, Wf)

    x_att = triplet_attention(x_cat, params["att"])
    return xception_head(x_att, params["fc"])


# ----------------------------------------------------------------------------
# Deterministic parameter init (synthetic; shapes follow the module structure)
# ----------------------------------------------------------------------------

def init_params(key, num_class, c_feat=6, c_hidden=16):
    ks = jax.random.split(key, 8)

    def w(k, shape, scale=0.1):
        return (scale * jax.random.normal(k, shape)).astype(jnp.float32)

    def bn(c):
        return dict(gamma=jnp.ones((c,), jnp.float32),
                    beta=jnp.zeros((c,), jnp.float32),
                    mean=jnp.zeros((c,), jnp.float32),
                    var=jnp.ones((c,), jnp.float32))

    def gate(k):
        return dict(w=w(k, (7, 7, 2, 1)), bn=bn(1))

    return dict(
        f=dict(w1=w(ks[0], (3, 3, 3, 8)), w2=w(ks[1], (3, 3, 8, c_feat))),
        att=dict(cw=gate(ks[2]), hc=gate(ks[3]), hw=gate(ks[4])),
        fc=dict(w_pw=w(ks[5], (c_feat + 2, c_hidden)),
                w_fc=w(ks[6], (c_hidden, num_class)),
                b_fc=jnp.zeros((num_class,), jnp.float32)),
    )


if __name__ == "__main__":
    key = jax.random.PRNGKey(0)
    k1, k2, kp = jax.random.split(key, 3)

    B, C, H, W = 2, 3, 16, 16
    num_class = 5

    x_device = jax.random.uniform(k1, (B, C, H, W), dtype=jnp.float32)
    x = jax.random.uniform(k2, (B, C, H, W), dtype=jnp.float32)
    params = init_params(kp, num_class)

    fwd = jax.jit(functools.partial(simclr_stage2_forward, params))
    out = jax.block_until_ready(fwd(x_device, x))

    assert out.shape == (B, num_class)
    assert jnp.all(jnp.isfinite(out))
    print("KERNEL_OK")
</pallas_src>

<mosaic_0001>
module attributes {stable_mosaic.version = 11 : i64} {
  func.func @_matmul_kernel(%arg0: i32, %arg1: memref<128x128xbf16, #tpu.memory_space<vmem>>, %arg2: memref<128x128xbf16, #tpu.memory_space<vmem>>, %arg3: memref<128x128xf32, #tpu.memory_space<vmem>>) attributes {dimension_semantics = [#tpu.dimension_semantics<parallel>], iteration_bounds = array<i64: 1>, scalar_prefetch = 0 : i64, scratch_operands = 0 : i64, tpu.core_type = #tpu.core_type<tc>, window_params = [{transform_indices = @transform_0, window_bounds = array<i64: 128, 128>}, {pipeline_mode = #tpu.pipeline_mode<synchronous>, transform_indices = @transform_1, window_bounds = array<i64: 128, 128>}, {transform_indices = @transform_2, window_bounds = array<i64: 128, 128>}]} {
    %c0 = arith.constant 0 : index
    %c0_0 = arith.constant 0 : index
    %0 = vector.load %arg1[%c0, %c0_0] : memref<128x128xbf16, #tpu.memory_space<vmem>>, vector<128x128xbf16>
    %c0_1 = arith.constant 0 : index
    %c0_2 = arith.constant 0 : index
    %1 = vector.load %arg2[%c0_1, %c0_2] : memref<128x128xbf16, #tpu.memory_space<vmem>>, vector<128x128xbf16>
    %cst = arith.constant dense<0.000000e+00> : vector<128x128xf32>
    %2 = tpu.matmul %0, %1, %cst {dimension_numbers = #tpu.dot_dimension_numbers<[1], [0], [0], [1], [0, 0, 1, 1], [], []>} : vector<128x128xbf16>, vector<128x128xbf16>, vector<128x128xf32> -> vector<128x128xf32>
    %cst_3 = arith.constant 0.000000e+00 : f32
    %3 = vector.broadcast %cst_3 : f32 to vector<128x128xf32>
    %4 = arith.maximumf %2, %3 : vector<128x128xf32>
    %c0_4 = arith.constant 0 : index
    %c0_5 = arith.constant 0 : index
    %5 = vector.load %arg3[%c0_4, %c0_5] : memref<128x128xf32, #tpu.memory_space<vmem>>, vector<128x128xf32>
    tpu.vector_store %arg3[%c0_4, %c0_5], %4 {strides = array<i32>} : memref<128x128xf32, #tpu.memory_space<vmem>>, vector<128x128xf32>,
    return
  }
  func.func @transform_0(%arg0: i32) -> (i32, i32) {
    %c0_i32 = arith.constant 0 : i32
    %c0_i32_0 = arith.constant 0 : i32
    return %arg0, %c0_i32 : i32, i32
  }
  func.func @transform_1(%arg0: i32) -> (i32, i32) {
    %c0_i32 = arith.constant 0 : i32
    %c0_i32_0 = arith.constant 0 : i32
    %c0_i32_1 = arith.constant 0 : i32
    return %c0_i32, %c0_i32_0 : i32, i32
  }
  func.func @transform_2(%arg0: i32) -> (i32, i32) {
    %c0_i32 = arith.constant 0 : i32
    %c0_i32_0 = arith.constant 0 : i32
    return %arg0, %c0_i32 : i32, i32
  }
}

module attributes {stable_mosaic.version = 11 : i64} {
  func.func @_matmul_kernel(%arg0: i32, %arg1: memref<32x128xbf16, #tpu.memory_space<vmem>>, %arg2: memref<128x128xbf16, #tpu.memory_space<vmem>>, %arg3: memref<32x128xf32, #tpu.memory_space<vmem>>) attributes {dimension_semantics = [#tpu.dimension_semantics<parallel>], iteration_bounds = array<i64: 1>, scalar_prefetch = 0 : i64, scratch_operands = 0 : i64, tpu.core_type = #tpu.core_type<tc>, window_params = [{transform_indices = @transform_0, window_bounds = array<i64: 32, 128>}, {pipeline_mode = #tpu.pipeline_mode<synchronous>, transform_indices = @transform_1, window_bounds = array<i64: 128, 128>}, {transform_indices = @transform_2, window_bounds = array<i64: 32, 128>}]} {
    %c0 = arith.constant 0 : index
    %c0_0 = arith.constant 0 : index
    %0 = vector.load %arg1[%c0, %c0_0] : memref<32x128xbf16, #tpu.memory_space<vmem>>, vector<32x128xbf16>
    %c0_1 = arith.constant 0 : index
    %c0_2 = arith.constant 0 : index
    %1 = vector.load %arg2[%c0_1, %c0_2] : memref<128x128xbf16, #tpu.memory_space<vmem>>, vector<128x128xbf16>
    %cst = arith.constant dense<0.000000e+00> : vector<32x128xf32>
    %2 = tpu.matmul %0, %1, %cst {dimension_numbers = #tpu.dot_dimension_numbers<[1], [0], [0], [1], [0, 0, 1, 1], [], []>} : vector<32x128xbf16>, vector<128x128xbf16>, vector<32x128xf32> -> vector<32x128xf32>
    %cst_3 = arith.constant 0.000000e+00 : f32
    %3 = vector.broadcast %cst_3 : f32 to vector<32x128xf32>
    %4 = arith.maximumf %2, %3 : vector<32x128xf32>
    %c0_4 = arith.constant 0 : index
    %c0_5 = arith.constant 0 : index
    %5 = vector.load %arg3[%c0_4, %c0_5] : memref<32x128xf32, #tpu.memory_space<vmem>>, vector<32x128xf32>
    tpu.vector_store %arg3[%c0_4, %c0_5], %4 {strides = array<i32>} : memref<32x128xf32, #tpu.memory_space<vmem>>, vector<32x128xf32>,
    return
  }
  func.func @transform_0(%arg0: i32) -> (i32, i32) {
    %c0_i32 = arith.constant 0 : i32
    %c0_i32_0 = arith.constant 0 : i32
    return %arg0, %c0_i32 : i32, i32
  }
  func.func @transform_1(%arg0: i32) -> (i32, i32) {
    %c0_i32 = arith.constant 0 : i32
    %c0_i32_0 = arith.constant 0 : i32
    %c0_i32_1 = arith.constant 0 : i32
    return %c0_i32, %c0_i32_0 : i32, i32
  }
  func.func @transform_2(%arg0: i32) -> (i32, i32) {
    %c0_i32 = arith.constant 0 : i32
    %c0_i32_0 = arith.constant 0 : i32
    return %arg0, %c0_i32 : i32, i32
  }
}

module attributes {stable_mosaic.version = 11 : i64} {
  func.func @_gray_lbp_kernel(%arg0: i32, %arg1: memref<1x3x18x18xf32, #tpu.memory_space<vmem>>, %arg2: memref<1x16x16xf32, #tpu.memory_space<vmem>>) attributes {dimension_semantics = [#tpu.dimension_semantics<parallel>], iteration_bounds = array<i64: 2>, scalar_prefetch = 0 : i64, scratch_operands = 0 : i64, tpu.core_type = #tpu.core_type<tc>, window_params = [{transform_indices = @transform_0, window_bounds = array<i64: 1, 3, 18, 18>}, {transform_indices = @transform_1, window_bounds = array<i64: 1, 16, 16>}]} {
    %c0 = arith.constant 0 : index
    %c0_0 = arith.constant 0 : index
    %c0_1 = arith.constant 0 : index
    %c0_2 = arith.constant 0 : index
    %0 = vector.load %arg1[%c0, %c0_0, %c0_1, %c0_2] : memref<1x3x18x18xf32, #tpu.memory_space<vmem>>, vector<1x3x18x18xf32>
    %1 = vector.shape_cast %0 : vector<1x3x18x18xf32> to vector<3x18x18xf32>
    %2 = vector.extract_strided_slice %1 {offsets = [0, 0, 0], sizes = [1, 18, 18], strides = [1, 1, 1]} : vector<3x18x18xf32> to vector<1x18x18xf32>
    %3 = vector.shape_cast %2 : vector<1x18x18xf32> to vector<18x18xf32>
    %cst = arith.constant 1.140000e-01 : f32
    %4 = vector.broadcast %cst : f32 to vector<18x18xf32>
    %5 = arith.mulf %4, %3 : vector<18x18xf32>
    %6 = vector.extract_strided_slice %1 {offsets = [1, 0, 0], sizes = [1, 18, 18], strides = [1, 1, 1]} : vector<3x18x18xf32> to vector<1x18x18xf32>
    %7 = vector.shape_cast %6 : vector<1x18x18xf32> to vector<18x18xf32>
    %cst_3 = arith.constant 5.870000e-01 : f32
    %8 = vector.broadcast %cst_3 : f32 to vector<18x18xf32>
    %9 = arith.mulf %8, %7 : vector<18x18xf32>
    %10 = arith.addf %5, %9 : vector<18x18xf32>
    %11 = vector.extract_strided_slice %1 {offsets = [2, 0, 0], sizes = [1, 18, 18], strides = [1, 1, 1]} : vector<3x18x18xf32> to vector<1x18x18xf32>
    %12 = vector.shape_cast %11 : vector<1x18x18xf32> to vector<18x18xf32>
    %cst_4 = arith.constant 2.990000e-01 : f32
    %13 = vector.broadcast %cst_4 : f32 to vector<18x18xf32>
    %14 = arith.mulf %13, %12 : vector<18x18xf32>
    %15 = arith.addf %10, %14 : vector<18x18xf32>
    %16 = vector.extract_strided_slice %15 {offsets = [1, 1], sizes = [16, 16], strides = [1, 1]} : vector<18x18xf32> to vector<16x16xf32>
    %c0_i32 = arith.constant 0 : i32
    %17 = vector.broadcast %c0_i32 : i32 to vector<16x16xi32>
    %18 = vector.extract_strided_slice %15 {offsets = [1, 2], sizes = [16, 16], strides = [1, 1]} : vector<18x18xf32> to vector<16x16xf32>
    %19 = arith.cmpf oge, %18, %16 : vector<16x16xf32>
    %20 = arith.extui %19 : vector<16x16xi1> to vector<16x16xi32>
    %c0_i32_5 = arith.constant 0 : i32
    %21 = vector.broadcast %c0_i32_5 : i32 to vector<16x16xi32>
    %22 = arith.shli %20, %21 : vector<16x16xi32>
    %23 = arith.ori %17, %22 : vector<16x16xi32>
    %24 = vector.extract_strided_slice %15 {offsets = [2, 2], sizes = [16, 16], strides = [1, 1]} : vector<18x18xf32> to vector<16x16xf32>
    %25 = arith.cmpf oge, %24, %16 : vector<16x16xf32>
    %26 = arith.extui %25 : vector<16x16xi1> to vector<16x16xi32>
    %c1_i32 = arith.constant 1 : i32
    %27 = vector.broadcast %c1_i32 : i32 to vector<16x16xi32>
    %28 = arith.shli %26, %27 : vector<16x16xi32>
    %29 = arith.ori %23, %28 : vector<16x16xi32>
    %30 = vector.extract_strided_slice %15 {offsets = [2, 1], sizes = [16, 16], strides = [1, 1]} : vector<18x18xf32> to vector<16x16xf32>
    %31 = arith.cmpf oge, %30, %16 : vector<16x16xf32>
    %32 = arith.extui %31 : vector<16x16xi1> to vector<16x16xi32>
    %c2_i32 = arith.constant 2 : i32
    %33 = vector.broadcast %c2_i32 : i32 to vector<16x16xi32>
    %34 = arith.shli %32, %33 : vector<16x16xi32>
    %35 = arith.ori %29, %34 : vector<16x16xi32>
    %36 = vector.extract_strided_slice %15 {offsets = [2, 0], sizes = [16, 16], strides = [1, 1]} : vector<18x18xf32> to vector<16x16xf32>
    %37 = arith.cmpf oge, %36, %16 : vector<16x16xf32>
    %38 = arith.extui %37 : vector<16x16xi1> to vector<16x16xi32>
    %c3_i32 = arith.constant 3 : i32
    %39 = vector.broadcast %c3_i32 : i32 to vector<16x16xi32>
    %40 = arith.shli %38, %39 : vector<16x16xi32>
    %41 = arith.ori %35, %40 : vector<16x16xi32>
    %42 = vector.extract_strided_slice %15 {offsets = [1, 0], sizes = [16, 16], strides = [1, 1]} : vector<18x18xf32> to vector<16x16xf32>
    %43 = arith.cmpf oge, %42, %16 : vector<16x16xf32>
    %44 = arith.extui %43 : vector<16x16xi1> to vector<16x16xi32>
    %c4_i32 = arith.constant 4 : i32
    %45 = vector.broadcast %c4_i32 : i32 to vector<16x16xi32>
    %46 = arith.shli %44, %45 : vector<16x16xi32>
    %47 = arith.ori %41, %46 : vector<16x16xi32>
    %48 = vector.extract_strided_slice %15 {offsets = [0, 0], sizes = [16, 16], strides = [1, 1]} : vector<18x18xf32> to vector<16x16xf32>
    %49 = arith.cmpf oge, %48, %16 : vector<16x16xf32>
    %50 = arith.extui %49 : vector<16x16xi1> to vector<16x16xi32>
    %c5_i32 = arith.constant 5 : i32
    %51 = vector.broadcast %c5_i32 : i32 to vector<16x16xi32>
    %52 = arith.shli %50, %51 : vector<16x16xi32>
    %53 = arith.ori %47, %52 : vector<16x16xi32>
    %54 = vector.extract_strided_slice %15 {offsets = [0, 1], sizes = [16, 16], strides = [1, 1]} : vector<18x18xf32> to vector<16x16xf32>
    %55 = arith.cmpf oge, %54, %16 : vector<16x16xf32>
    %56 = arith.extui %55 : vector<16x16xi1> to vector<16x16xi32>
    %c6_i32 = arith.constant 6 : i32
    %57 = vector.broadcast %c6_i32 : i32 to vector<16x16xi32>
    %58 = arith.shli %56, %57 : vector<16x16xi32>
    %59 = arith.ori %53, %58 : vector<16x16xi32>
    %60 = vector.extract_strided_slice %15 {offsets = [0, 2], sizes = [16, 16], strides = [1, 1]} : vector<18x18xf32> to vector<16x16xf32>
    %61 = arith.cmpf oge, %60, %16 : vector<16x16xf32>
    %62 = arith.extui %61 : vector<16x16xi1> to vector<16x16xi32>
    %c7_i32 = arith.constant 7 : i32
    %63 = vector.broadcast %c7_i32 : i32 to vector<16x16xi32>
    %64 = arith.shli %62, %63 : vector<16x16xi32>
    %65 = arith.ori %59, %64 : vector<16x16xi32>
    %66 = arith.sitofp %65 : vector<16x16xi32> to vector<16x16xf32>
    %67 = vector.shape_cast %66 : vector<16x16xf32> to vector<1x16x16xf32>
    %c0_6 = arith.constant 0 : index
    %c0_7 = arith.constant 0 : index
    %c0_8 = arith.constant 0 : index
    %68 = vector.load %arg2[%c0_6, %c0_7, %c0_8] : memref<1x16x16xf32, #tpu.memory_space<vmem>>, vector<1x16x16xf32>
    tpu.vector_store %arg2[%c0_6, %c0_7, %c0_8], %67 {strides = array<i32>} : memref<1x16x16xf32, #tpu.memory_space<vmem>>, vector<1x16x16xf32>,
    return
  }
  func.func @transform_0(%arg0: i32) -> (i32, i32, i32, i32) {
    %c0_i32 = arith.constant 0 : i32
    %c0_i32_0 = arith.constant 0 : i32
    %c0_i32_1 = arith.constant 0 : i32
    %c0_i32_2 = arith.constant 0 : i32
    return %arg0, %c0_i32, %c0_i32_0, %c0_i32_1 : i32, i32, i32, i32
  }
  func.func @transform_1(%arg0: i32) -> (i32, i32, i32) {
    %c0_i32 = arith.constant 0 : i32
    %c0_i32_0 = arith.constant 0 : i32
    %c0_i32_1 = arith.constant 0 : i32
    return %arg0, %c0_i32, %c0_i32_0 : i32, i32, i32
  }
}

module attributes {stable_mosaic.version = 11 : i64} {
  func.func @_fused_gate_kernel(%arg0: i32, %arg1: memref<1x8x10x10xf32, #tpu.memory_space<vmem>>, %arg2: memref<99xf32, #tpu.memory_space<smem>>, %arg3: memref<1x8x4x4xf32, #tpu.memory_space<vmem>>) attributes {dimension_semantics = [#tpu.dimension_semantics<parallel>], iteration_bounds = array<i64: 2>, scalar_prefetch = 0 : i64, scratch_operands = 0 : i64, tpu.core_type = #tpu.core_type<tc>, window_params = [{transform_indices = @transform_0, window_bounds = array<i64: 1, 8, 10, 10>}, {transform_indices = @transform_1, window_bounds = array<i64: 99>}, {transform_indices = @transform_2, window_bounds = array<i64: 1, 8, 4, 4>}]} {
    %c0 = arith.constant 0 : index
    %c0_0 = arith.constant 0 : index
    %c0_1 = arith.constant 0 : index
    %c0_2 = arith.constant 0 : index
    %0 = vector.load %arg1[%c0, %c0_0, %c0_1, %c0_2] : memref<1x8x10x10xf32, #tpu.memory_space<vmem>>, vector<1x8x10x10xf32>
    %1 = vector.shape_cast %0 : vector<1x8x10x10xf32> to vector<8x10x10xf32>
    %cst = arith.constant dense<0xFF800000> : vector<10x10xf32>
    %2 = vector.multi_reduction <maximumf>, %1, %cst [0] : vector<8x10x10xf32> to vector<10x10xf32>
    %cst_3 = arith.constant dense<0.000000e+00> : vector<10x10xf32>
    %3 = vector.multi_reduction <add>, %1, %cst_3 [0] : vector<8x10x10xf32> to vector<10x10xf32>
    %cst_4 = arith.constant 8.000000e+00 : f32
    %4 = vector.broadcast %cst_4 : f32 to vector<10x10xf32>
    %5 = arith.divf %3, %4 : vector<10x10xf32>
    %cst_5 = arith.constant 0.000000e+00 : f32
    %6 = vector.broadcast %cst_5 : f32 to vector<4x4xf32>
    %c98 = arith.constant 98 : index
    %7 = memref.load %arg2[%c98] : memref<99xf32, #tpu.memory_space<smem>>
    %8 = vector.broadcast %7 : f32 to vector<4x4xf32>
    %9 = arith.addf %6, %8 : vector<4x4xf32>
    %c0_6 = arith.constant 0 : index
    %10 = memref.load %arg2[%c0_6] : memref<99xf32, #tpu.memory_space<smem>>
    %11 = vector.extract_strided_slice %2 {offsets = [0, 0], sizes = [4, 4], strides = [1, 1]} : vector<10x10xf32> to vector<4x4xf32>
    %12 = vector.broadcast %10 : f32 to vector<4x4xf32>
    %13 = arith.mulf %12, %11 : vector<4x4xf32>
    %14 = arith.addf %9, %13 : vector<4x4xf32>
    %c1 = arith.constant 1 : index
    %15 = memref.load %arg2[%c1] : memref<99xf32, #tpu.memory_space<smem>>
    %16 = vector.extract_strided_slice %5 {offsets = [0, 0], sizes = [4, 4], strides = [1, 1]} : vector<10x10xf32> to vector<4x4xf32>
    %17 = vector.broadcast %15 : f32 to vector<4x4xf32>
    %18 = arith.mulf %17, %16 : vector<4x4xf32>
    %19 = arith.addf %14, %18 : vector<4x4xf32>
    %c2 = arith.constant 2 : index
    %20 = memref.load %arg2[%c2] : memref<99xf32, #tpu.memory_space<smem>>
    %21 = vector.extract_strided_slice %2 {offsets = [0, 1], sizes = [4, 4], strides = [1, 1]} : vector<10x10xf32> to vector<4x4xf32>
    %22 = vector.broadcast %20 : f32 to vector<4x4xf32>
    %23 = arith.mulf %22, %21 : vector<4x4xf32>
    %24 = arith.addf %19, %23 : vector<4x4xf32>
    %c3 = arith.constant 3 : index
    %25 = memref.load %arg2[%c3] : memref<99xf32, #tpu.memory_space<smem>>
    %26 = vector.extract_strided_slice %5 {offsets = [0, 1], sizes = [4, 4], strides = [1, 1]} : vector<10x10xf32> to vector<4x4xf32>
    %27 = vector.broadcast %25 : f32 to vector<4x4xf32>
    %28 = arith.mulf %27, %26 : vector<4x4xf32>
    %29 = arith.addf %24, %28 : vector<4x4xf32>
    %c4 = arith.constant 4 : index
    %30 = memref.load %arg2[%c4] : memref<99xf32, #tpu.memory_space<smem>>
    %31 = vector.extract_strided_slice %2 {offsets = [0, 2], sizes = [4, 4], strides = [1, 1]} : vector<10x10xf32> to vector<4x4xf32>
    %32 = vector.broadcast %30 : f32 to vector<4x4xf32>
    %33 = arith.mulf %32, %31 : vector<4x4xf32>
    %34 = arith.addf %29, %33 : vector<4x4xf32>
    %c5 = arith.constant 5 : index
    %35 = memref.load %arg2[%c5] : memref<99xf32, #tpu.memory_space<smem>>
    %36 = vector.extract_strided_slice %5 {offsets = [0, 2], sizes = [4, 4], strides = [1, 1]} : vector<10x10xf32> to vector<4x4xf32>
    %37 = vector.broadcast %35 : f32 to vector<4x4xf32>
    %38 = arith.mulf %37, %36 : vector<4x4xf32>
    %39 = arith.addf %34, %38 : vector<4x4xf32>
    %c6 = arith.constant 6 : index
    %40 = memref.load %arg2[%c6] : memref<99xf32, #tpu.memory_space<smem>>
    %41 = vector.extract_strided_slice %2 {offsets = [0, 3], sizes = [4, 4], strides = [1, 1]} : vector<10x10xf32> to vector<4x4xf32>
    %42 = vector.broadcast %40 : f32 to vector<4x4xf32>
    %43 = arith.mulf %42, %41 : vector<4x4xf32>
    %44 = arith.addf %39, %43 : vector<4x4xf32>
    %c7 = arith.constant 7 : index
    %45 = memref.load %arg2[%c7] : memref<99xf32, #tpu.memory_space<smem>>
    %46 = vector.extract_strided_slice %5 {offsets = [0, 3], sizes = [4, 4], strides = [1, 1]} : vector<10x10xf32> to vector<4x4xf32>
    %47 = vector.broadcast %45 : f32 to vector<4x4xf32>
    %48 = arith.mulf %47, %46 : vector<4x4xf32>
    %49 = arith.addf %44, %48 : vector<4x4xf32>
    %c8 = arith.constant 8 : index
    %50 = memref.load %arg2[%c8] : memref<99xf32, #tpu.memory_space<smem>>
    %51 = vector.extract_strided_slice %2 {offsets = [0, 4], sizes = [4, 4], strides = [1, 1]} : vector<10x10xf32> to vector<4x4xf32>
    %52 = vector.broadcast %50 : f32 to vector<4x4xf32>
    %53 = arith.mulf %52, %51 : vector<4x4xf32>
    %54 = arith.addf %49, %53 : vector<4x4xf32>
    %c9 = arith.constant 9 : index
    %55 = memref.load %arg2[%c9] : memref<99xf32, #tpu.memory_space<smem>>
    %56 = vector.extract_strided_slice %5 {offsets = [0, 4], sizes = [4, 4], strides = [1, 1]} : vector<10x10xf32> to vector<4x4xf32>
    %57 = vector.broadcast %55 : f32 to vector<4x4xf32>
    %58 = arith.mulf %57, %56 : vector<4x4xf32>
    %59 = arith.addf %54, %58 : vector<4x4xf32>
    %c10 = arith.constant 10 : index
    %60 = memref.load %arg2[%c10] : memref<99xf32, #tpu.memory_space<smem>>
    %61 = vector.extract_strided_slice %2 {offsets = [0, 5], sizes = [4, 4], strides = [1, 1]} : vector<10x10xf32> to vector<4x4xf32>
    %62 = vector.broadcast %60 : f32 to vector<4x4xf32>
    %63 = arith.mulf %62, %61 : vector<4x4xf32>
    %64 = arith.addf %59, %63 : vector<4x4xf32>
    %c11 = arith.constant 11 : index
    %65 = memref.load %arg2[%c11] : memref<99xf32, #tpu.memory_space<smem>>
    %66 = vector.extract_strided_slice %5 {offsets = [0, 5], sizes = [4, 4], strides = [1, 1]} : vector<10x10xf32> to vector<4x4xf32>
    %67 = vector.broadcast %65 : f32 to vector<4x4xf32>
    %68 = arith.mulf %67, %66 : vector<4x4xf32>
    %69 = arith.addf %64, %68 : vector<4x4xf32>
    %c12 = arith.constant 12 : index
    %70 = memref.load %arg2[%c12] : memref<99xf32, #tpu.memory_space<smem>>
    %71 = vector.extract_strided_slice %2 {offsets = [0, 6], sizes = [4, 4], strides = [1, 1]} : vector<10x10xf32> to vector<4x4xf32>
    %72 = vector.broadcast %70 : f32 to vector<4x4xf32>
    %73 = arith.mulf %72, %71 : vector<4x4xf32>
    %74 = arith.addf %69, %73 : vector<4x4xf32>
    %c13 = arith.constant 13 : index
    %75 = memref.load %arg2[%c13] : memref<99xf32, #tpu.memory_space<smem>>
    %76 = vector.extract_strided_slice %5 {offsets = [0, 6], sizes = [4, 4], strides = [1, 1]} : vector<10x10xf32> to vector<4x4xf32>
    %77 = vector.broadcast %75 : f32 to vector<4x4xf32>
    %78 = arith.mulf %77, %76 : vector<4x4xf32>
    %79 = arith.addf %74, %78 : vector<4x4xf32>
    %c14 = arith.constant 14 : index
    %80 = memref.load %arg2[%c14] : memref<99xf32, #tpu.memory_space<smem>>
    %81 = vector.extract_strided_slice %2 {offsets = [1, 0], sizes = [4, 4], strides = [1, 1]} : vector<10x10xf32> to vector<4x4xf32>
    %82 = vector.broadcast %80 : f32 to vector<4x4xf32>
    %83 = arith.mulf %82, %81 : vector<4x4xf32>
    %84 = arith.addf %79, %83 : vector<4x4xf32>
    %c15 = arith.constant 15 : index
    %85 = memref.load %arg2[%c15] : memref<99xf32, #tpu.memory_space<smem>>
    %86 = vector.extract_strided_slice %5 {offsets = [1, 0], sizes = [4, 4], strides = [1, 1]} : vector<10x10xf32> to vector<4x4xf32>
    %87 = vector.broadcast %85 : f32 to vector<4x4xf32>
    %88 = arith.mulf %87, %86 : vector<4x4xf32>
    %89 = arith.addf %84, %88 : vector<4x4xf32>
    %c16 = arith.constant 16 : index
    %90 = memref.load %arg2[%c16] : memref<99xf32, #tpu.memory_space<smem>>
    %91 = vector.extract_strided_slice %2 {offsets = [1, 1], sizes = [4, 4], strides = [1, 1]} : vector<10x10xf32> to vector<4x4xf32>
    %92 = vector.broadcast %90 : f32 to vector<4x4xf32>
    %93 = arith.mulf %92, %91 : vector<4x4xf32>
    %94 = arith.addf %89, %93 : vector<4x4xf32>
    %c17 = arith.constant 17 : index
    %95 = memref.load %arg2[%c17] : memref<99xf32, #tpu.memory_space<smem>>
    %96 = vector.extract_strided_slice %5 {offsets = [1, 1], sizes = [4, 4], strides = [1, 1]} : vector<10x10xf32> to vector<4x4xf32>
    %97 = vector.broadcast %95 : f32 to vector<4x4xf32>
    %98 = arith.mulf %97, %96 : vector<4x4xf32>
    %99 = arith.addf %94, %98 : vector<4x4xf32>
    %c18 = arith.constant 18 : index
    %100 = memref.load %arg2[%c18] : memref<99xf32, #tpu.memory_space<smem>>
    %101 = vector.extract_strided_slice %2 {offsets = [1, 2], sizes = [4, 4], strides = [1, 1]} : vector<10x10xf32> to vector<4x4xf32>
    %102 = vector.broadcast %100 : f32 to vector<4x4xf32>
    %103 = arith.mulf %102, %101 : vector<4x4xf32>
    %104 = arith.addf %99, %103 : vector<4x4xf32>
    %c19 = arith.constant 19 : index
    %105 = memref.load %arg2[%c19] : memref<99xf32, #tpu.memory_space<smem>>
    %106 = vector.extract_strided_slice %5 {offsets = [1, 2], sizes = [4, 4], strides = [1, 1]} : vector<10x10xf32> to vector<4x4xf32>
    %107 = vector.broadcast %105 : f32 to vector<4x4xf32>
    %108 = arith.mulf %107, %106 : vector<4x4xf32>
    %109 = arith.addf %104, %108 : vector<4x4xf32>
    %c20 = arith.constant 20 : index
    %110 = memref.load %arg2[%c20] : memref<99xf32, #tpu.memory_space<smem>>
    %111 = vector.extract_strided_slice %2 {offsets = [1, 3], sizes = [4, 4], strides = [1, 1]} : vector<10x10xf32> to vector<4x4xf32>
    %112 = vector.broadcast %110 : f32 to vector<4x4xf32>
    %113 = arith.mulf %112, %111 : vector<4x4xf32>
    %114 = arith.addf %109, %113 : vector<4x4xf32>
    %c21 = arith.constant 21 : index
    %115 = memref.load %arg2[%c21] : memref<99xf32, #tpu.memory_space<smem>>
    %116 = vector.extract_strided_slice %5 {offsets = [1, 3], sizes = [4, 4], strides = [1, 1]} : vector<10x10xf32> to vector<4x4xf32>
    %117 = vector.broadcast %115 : f32 to vector<4x4xf32>
    %118 = arith.mulf %117, %116 : vector<4x4xf32>
    %119 = arith.addf %114, %118 : vector<4x4xf32>
    %c22 = arith.constant 22 : index
    %120 = memref.load %arg2[%c22] : memref<99xf32, #tpu.memory_space<smem>>
    %121 = vector.extract_strided_slice %2 {offsets = [1, 4], sizes = [4, 4], strides = [1, 1]} : vector<10x10xf32> to vector<4x4xf32>
    %122 = vector.broadcast %120 : f32 to vector<4x4xf32>
    %123 = arith.mulf %122, %121 : vector<4x4xf32>
    %124 = arith.addf %119, %123 : vector<4x4xf32>
    %c23 = arith.constant 23 : index
    %125 = memref.load %arg2[%c23] : memref<99xf32, #tpu.memory_space<smem>>
    %126 = vector.extract_strided_slice %5 {offsets = [1, 4], sizes = [4, 4], strides = [1, 1]} : vector<10x10xf32> to vector<4x4xf32>
    %127 = vector.broadcast %125 : f32 to vector<4x4xf32>
    %128 = arith.mulf %127, %126 : vector<4x4xf32>
    %129 = arith.addf %124, %128 : vector<4x4xf32>
    %c24 = arith.constant 24 : index
    %130 = memref.load %arg2[%c24] : memref<99xf32, #tpu.memory_space<smem>>
    %131 = vector.extract_strided_slice %2 {offsets = [1, 5], sizes = [4, 4], strides = [1, 1]} : vector<10x10xf32> to vector<4x4xf32>
    %132 = vector.broadcast %130 : f32 to vector<4x4xf32>
    %133 = arith.mulf %132, %131 : vector<4x4xf32>
    %134 = arith.addf %129, %133 : vector<4x4xf32>
    %c25 = arith.constant 25 : index
    %135 = memref.load %arg2[%c25] : memref<99xf32, #tpu.memory_space<smem>>
    %136 = vector.extract_strided_slice %5 {offsets = [1, 5], sizes = [4, 4], strides = [1, 1]} : vector<10x10xf32> to vector<4x4xf32>
    %137 = vector.broadcast %135 : f32 to vector<4x4xf32>
    %138 = arith.mulf %137, %136 : vector<4x4xf32>
    %139 = arith.addf %134, %138 : vector<4x4xf32>
    %c26 = arith.constant 26 : index
    %140 = memref.load %arg2[%c26] : memref<99xf32, #tpu.memory_space<smem>>
    %141 = vector.extract_strided_slice %2 {offsets = [1, 6], sizes = [4, 4], strides = [1, 1]} : vector<10x10xf32> to vector<4x4xf32>
    %142 = vector.broadcast %140 : f32 to vector<4x4xf32>
    %143 = arith.mulf %142, %141 : vector<4x4xf32>
    %144 = arith.addf %139, %143 : vector<4x4xf32>
    %c27 = arith.constant 27 : index
    %145 = memref.load %arg2[%c27] : memref<99xf32, #tpu.memory_space<smem>>
    %146 = vector.extract_strided_slice %5 {offsets = [1, 6], sizes = [4, 4], strides = [1, 1]} : vector<10x10xf32> to vector<4x4xf32>
    %147 = vector.broadcast %145 : f32 to vector<4x4xf32>
    %148 = arith.mulf %147, %146 : vector<4x4xf32>
    %149 = arith.addf %144, %148 : vector<4x4xf32>
    %c28 = arith.constant 28 : index
    %150 = memref.load %arg2[%c28] : memref<99xf32, #tpu.memory_space<smem>>
    %151 = vector.extract_strided_slice %2 {offsets = [2, 0], sizes = [4, 4], strides = [1, 1]} : vector<10x10xf32> to vector<4x4xf32>
    %152 = vector.broadcast %150 : f32 to vector<4x4xf32>
    %153 = arith.mulf %152, %151 : vector<4x4xf32>
    %154 = arith.addf %149, %153 : vector<4x4xf32>
    %c29 = arith.constant 29 : index
    %155 = memref.load %arg2[%c29] : memref<99xf32, #tpu.memory_space<smem>>
    %156 = vector.extract_strided_slice %5 {offsets = [2, 0], sizes = [4, 4], strides = [1, 1]} : vector<10x10xf32> to vector<4x4xf32>
    %157 = vector.broadcast %155 : f32 to vector<4x4xf32>
    %158 = arith.mulf %157, %156 : vector<4x4xf32>
    %159 = arith.addf %154, %158 : vector<4x4xf32>
    %c30 = arith.constant 30 : index
    %160 = memref.load %arg2[%c30] : memref<99xf32, #tpu.memory_space<smem>>
    %161 = vector.extract_strided_slice %2 {offsets = [2, 1], sizes = [4, 4], strides = [1, 1]} : vector<10x10xf32> to vector<4x4xf32>
    %162 = vector.broadcast %160 : f32 to vector<4x4xf32>
    %163 = arith.mulf %162, %161 : vector<4x4xf32>
    %164 = arith.addf %159, %163 : vector<4x4xf32>
    %c31 = arith.constant 31 : index
    %165 = memref.load %arg2[%c31] : memref<99xf32, #tpu.memory_space<smem>>
    %166 = vector.extract_strided_slice %5 {offsets = [2, 1], sizes = [4, 4], strides = [1, 1]} : vector<10x10xf32> to vector<4x4xf32>
    %167 = vector.broadcast %165 : f32 to vector<4x4xf32>
    %168 = arith.mulf %167, %166 : vector<4x4xf32>
    %169 = arith.addf %164, %168 : vector<4x4xf32>
    %c32 = arith.constant 32 : index
    %170 = memref.load %arg2[%c32] : memref<99xf32, #tpu.memory_space<smem>>
    %171 = vector.extract_strided_slice %2 {offsets = [2, 2], sizes = [4, 4], strides = [1, 1]} : vector<10x10xf32> to vector<4x4xf32>
    %172 = vector.broadcast %170 : f32 to vector<4x4xf32>
    %173 = arith.mulf %172, %171 : vector<4x4xf32>
    %174 = arith.addf %169, %173 : vector<4x4xf32>
    %c33 = arith.constant 33 : index
    %175 = memref.load %arg2[%c33] : memref<99xf32, #tpu.memory_space<smem>>
    %176 = vector.extract_strided_slice %5 {offsets = [2, 2], sizes = [4, 4], strides = [1, 1]} : vector<10x10xf32> to vector<4x4xf32>
    %177 = vector.broadcast %175 : f32 to vector<4x4xf32>
    %178 = arith.mulf %177, %176 : vector<4x4xf32>
    %179 = arith.addf %174, %178 : vector<4x4xf32>
    %c34 = arith.constant 34 : index
    %180 = memref.load %arg2[%c34] : memref<99xf32, #tpu.memory_space<smem>>
    %181 = vector.extract_strided_slice %2 {offsets = [2, 3], sizes = [4, 4], strides = [1, 1]} : vector<10x10xf32> to vector<4x4xf32>
    %182 = vector.broadcast %180 : f32 to vector<4x4xf32>
    %183 = arith.mulf %182, %181 : vector<4x4xf32>
    %184 = arith.addf %179, %183 : vector<4x4xf32>
    %c35 = arith.constant 35 : index
    %185 = memref.load %arg2[%c35] : memref<99xf32, #tpu.memory_space<smem>>
    %186 = vector.extract_strided_slice %5 {offsets = [2, 3], sizes = [4, 4], strides = [1, 1]} : vector<10x10xf32> to vector<4x4xf32>
    %187 = vector.broadcast %185 : f32 to vector<4x4xf32>
    %188 = arith.mulf %187, %186 : vector<4x4xf32>
    %189 = arith.addf %184, %188 : vector<4x4xf32>
    %c36 = arith.constant 36 : index
    %190 = memref.load %arg2[%c36] : memref<99xf32, #tpu.memory_space<smem>>
    %191 = vector.extract_strided_slice %2 {offsets = [2, 4], sizes = [4, 4], strides = [1, 1]} : vector<10x10xf32> to vector<4x4xf32>
    %192 = vector.broadcast %190 : f32 to vector<4x4xf32>
    %193 = arith.mulf %192, %191 : vector<4x4xf32>
    %194 = arith.addf %189, %193 : vector<4x4xf32>
    %c37 = arith.constant 37 : index
    %195 = memref.load %arg2[%c37] : memref<99xf32, #tpu.memory_space<smem>>
    %196 = vector.extract_strided_slice %5 {offsets = [2, 4], sizes = [4, 4], strides = [1, 1]} : vector<10x10xf32> to vector<4x4xf32>
    %197 = vector.broadcast %195 : f32 to vector<4x4xf32>
    %198 = arith.mulf %197, %196 : vector<4x4xf32>
    %199 = arith.addf %194, %198 : vector<4x4xf32>
    %c38 = arith.constant 38 : index
    %200 = memref.load %arg2[%c38] : memref<99xf32, #tpu.memory_space<smem>>
    %201 = vector.extract_strided_slice %2 {offsets = [2, 5], sizes = [4, 4], strides = [1, 1]} : vector<10x10xf32> to vector<4x4xf32>
    %202 = vector.broadcast %200 : f32 to vector<4x4xf32>
    %203 = arith.mulf %202, %201 : vector<4x4xf32>
    %204 = arith.addf %199, %203 : vector<4x4xf32>
    %c39 = arith.constant 39 : index
    %205 = memref.load %arg2[%c39] : memref<99xf32, #tpu.memory_space<smem>>
    %206 = vector.extract_strided_slice %5 {offsets = [2, 5], sizes = [4, 4], strides = [1, 1]} : vector<10x10xf32> to vector<4x4xf32>
    %207 = vector.broadcast %205 : f32 to vector<4x4xf32>
    %208 = arith.mulf %207, %206 : vector<4x4xf32>
    %209 = arith.addf %204, %208 : vector<4x4xf32>
    %c40 = arith.constant 40 : index
    %210 = memref.load %arg2[%c40] : memref<99xf32, #tpu.memory_space<smem>>
    %211 = vector.extract_strided_slice %2 {offsets = [2, 6], sizes = [4, 4], strides = [1, 1]} : vector<10x10xf32> to vector<4x4xf32>
    %212 = vector.broadcast %210 : f32 to vector<4x4xf32>
    %213 = arith.mulf %212, %211 : vector<4x4xf32>
    %214 = arith.addf %209, %213 : vector<4x4xf32>
    %c41 = arith.constant 41 : index
    %215 = memref.load %arg2[%c41] : memref<99xf32, #tpu.memory_space<smem>>
    %216 = vector.extract_strided_slice %5 {offsets = [2, 6], sizes = [4, 4], strides = [1, 1]} : vector<10x10xf32> to vector<4x4xf32>
    %217 = vector.broadcast %215 : f32 to vector<4x4xf32>
    %218 = arith.mulf %217, %216 : vector<4x4xf32>
    %219 = arith.addf %214, %218 : vector<4x4xf32>
    %c42 = arith.constant 42 : index
    %220 = memref.load %arg2[%c42] : memref<99xf32, #tpu.memory_space<smem>>
    %221 = vector.extract_strided_slice %2 {offsets = [3, 0], sizes = [4, 4], strides = [1, 1]} : vector<10x10xf32> to vector<4x4xf32>
    %222 = vector.broadcast %220 : f32 to vector<4x4xf32>
    %223 = arith.mulf %222, %221 : vector<4x4xf32>
    %224 = arith.addf %219, %223 : vector<4x4xf32>
    %c43 = arith.constant 43 : index
    %225 = memref.load %arg2[%c43] : memref<99xf32, #tpu.memory_space<smem>>
    %226 = vector.extract_strided_slice %5 {offsets = [3, 0], sizes = [4, 4], strides = [1, 1]} : vector<10x10xf32> to vector<4x4xf32>
    %227 = vector.broadcast %225 : f32 to vector<4x4xf32>
    %228 = arith.mulf %227, %226 : vector<4x4xf32>
    %229 = arith.addf %224, %228 : vector<4x4xf32>
    %c44 = arith.constant 44 : index
    %230 = memref.load %arg2[%c44] : memref<99xf32, #tpu.memory_space<smem>>
    %231 = vector.extract_strided_slice %2 {offsets = [3, 1], sizes = [4, 4], strides = [1, 1]} : vector<10x10xf32> to vector<4x4xf32>
    %232 = vector.broadcast %230 : f32 to vector<4x4xf32>
    %233 = arith.mulf %232, %231 : vector<4x4xf32>
    %234 = arith.addf %229, %233 : vector<4x4xf32>
    %c45 = arith.constant 45 : index
    %235 = memref.load %arg2[%c45] : memref<99xf32, #tpu.memory_space<smem>>
    %236 = vector.extract_strided_slice %5 {offsets = [3, 1], sizes = [4, 4], strides = [1, 1]} : vector<10x10xf32> to vector<4x4xf32>
    %237 = vector.broadcast %235 : f32 to vector<4x4xf32>
    %238 = arith.mulf %237, %236 : vector<4x4xf32>
    %239 = arith.addf %234, %238 : vector<4x4xf32>
    %c46 = arith.constant 46 : index
    %240 = memref.load %arg2[%c46] : memref<99xf32, #tpu.memory_space<smem>>
    %241 = vector.extract_strided_slice %2 {offsets = [3, 2], sizes = [4, 4], strides = [1, 1]} : vector<10x10xf32> to vector<4x4xf32>
    %242 = vector.broadcast %240 : f32 to vector<4x4xf32>
    %243 = arith.mulf %242, %241 : vector<4x4xf32>
    %244 = arith.addf %239, %243 : vector<4x4xf32>
    %c47 = arith.constant 47 : index
    %245 = memref.load %arg2[%c47] : memref<99xf32, #tpu.memory_space<smem>>
    %246 = vector.extract_strided_slice %5 {offsets = [3, 2], sizes = [4, 4], strides = [1, 1]} : vector<10x10xf32> to vector<4x4xf32>
    %247 = vector.broadcast %245 : f32 to vector<4x4xf32>
    %248 = arith.mulf %247, %246 : vector<4x4xf32>
    %249 = arith.addf %244, %248 : vector<4x4xf32>
    %c48 = arith.constant 48 : index
    %250 = memref.load %arg2[%c48] : memref<99xf32, #tpu.memory_space<smem>>
    %251 = vector.extract_strided_slice %2 {offsets = [3, 3], sizes = [4, 4], strides = [1, 1]} : vector<10x10xf32> to vector<4x4xf32>
    %252 = vector.broadcast %250 : f32 to vector<4x4xf32>
    %253 = arith.mulf %252, %251 : vector<4x4xf32>
    %254 = arith.addf %249, %253 : vector<4x4xf32>
    %c49 = arith.constant 49 : index
    %255 = memref.load %arg2[%c49] : memref<99xf32, #tpu.memory_space<smem>>
    %256 = vector.extract_strided_slice %5 {offsets = [3, 3], sizes = [4, 4], strides = [1, 1]} : vector<10x10xf32> to vector<4x4xf32>
    %257 = vector.broadcast %255 : f32 to vector<4x4xf32>
    %258 = arith.mulf %257, %256 : vector<4x4xf32>
    %259 = arith.addf %254, %258 : vector<4x4xf32>
    %c50 = arith.constant 50 : index
    %260 = memref.load %arg2[%c50] : memref<99xf32, #tpu.memory_space<smem>>
    %261 = vector.extract_strided_slice %2 {offsets = [3, 4], sizes = [4, 4], strides = [1, 1]} : vector<10x10xf32> to vector<4x4xf32>
    %262 = vector.broadcast %260 : f32 to vector<4x4xf32>
    %263 = arith.mulf %262, %261 : vector<4x4xf32>
    %264 = arith.addf %259, %263 : vector<4x4xf32>
    %c51 = arith.constant 51 : index
    %265 = memref.load %arg2[%c51] : memref<99xf32, #tpu.memory_space<smem>>
    %266 = vector.extract_strided_slice %5 {offsets = [3, 4], sizes = [4, 4], strides = [1, 1]} : vector<10x10xf32> to vector<4x4xf32>
    %267 = vector.broadcast %265 : f32 to vector<4x4xf32>
    %268 = arith.mulf %267, %266 : vector<4x4xf32>
    %269 = arith.addf %264, %268 : vector<4x4xf32>
    %c52 = arith.constant 52 : index
    %270 = memref.load %arg2[%c52] : memref<99xf32, #tpu.memory_space<smem>>
    %271 = vector.extract_strided_slice %2 {offsets = [3, 5], sizes = [4, 4], strides = [1, 1]} : vector<10x10xf32> to vector<4x4xf32>
    %272 = vector.broadcast %270 : f32 to vector<4x4xf32>
    %273 = arith.mulf %272, %271 : vector<4x4xf32>
    %274 = arith.addf %269, %273 : vector<4x4xf32>
    %c53 = arith.constant 53 : index
    %275 = memref.load %arg2[%c53] : memref<99xf32, #tpu.memory_space<smem>>
    %276 = vector.extract_strided_slice %5 {offsets = [3, 5], sizes = [4, 4], strides = [1, 1]} : vector<10x10xf32> to vector<4x4xf32>
    %277 = vector.broadcast %275 : f32 to vector<4x4xf32>
    %278 = arith.mulf %277, %276 : vector<4x4xf32>
    %279 = arith.addf %274, %278 : vector<4x4xf32>
    %c54 = arith.constant 54 : index
    %280 = memref.load %arg2[%c54] : memref<99xf32, #tpu.memory_space<smem>>
    %281 = vector.extract_strided_slice %2 {offsets = [3, 6], sizes = [4, 4], strides = [1, 1]} : vector<10x10xf32> to vector<4x4xf32>
    %282 = vector.broadcast %280 : f32 to vector<4x4xf32>
    %283 = arith.mulf %282, %281 : vector<4x4xf32>
    %284 = arith.addf %279, %283 : vector<4x4xf32>
    %c55 = arith.constant 55 : index
    %285 = memref.load %arg2[%c55] : memref<99xf32, #tpu.memory_space<smem>>
    %286 = vector.extract_strided_slice %5 {offsets = [3, 6], sizes = [4, 4], strides = [1, 1]} : vector<10x10xf32> to vector<4x4xf32>
    %287 = vector.broadcast %285 : f32 to vector<4x4xf32>
    %288 = arith.mulf %287, %286 : vector<4x4xf32>
    %289 = arith.addf %284, %288 : vector<4x4xf32>
    %c56 = arith.constant 56 : index
    %290 = memref.load %arg2[%c56] : memref<99xf32, #tpu.memory_space<smem>>
    %291 = vector.extract_strided_slice %2 {offsets = [4, 0], sizes = [4, 4], strides = [1, 1]} : vector<10x10xf32> to vector<4x4xf32>
    %292 = vector.broadcast %290 : f32 to vector<4x4xf32>
    %293 = arith.mulf %292, %291 : vector<4x4xf32>
    %294 = arith.addf %289, %293 : vector<4x4xf32>
    %c57 = arith.constant 57 : index
    %295 = memref.load %arg2[%c57] : memref<99xf32, #tpu.memory_space<smem>>
    %296 = vector.extract_strided_slice %5 {offsets = [4, 0], sizes = [4, 4], strides = [1, 1]} : vector<10x10xf32> to vector<4x4xf32>
    %297 = vector.broadcast %295 : f32 to vector<4x4xf32>
    %298 = arith.mulf %297, %296 : vector<4x4xf32>
    %299 = arith.addf %294, %298 : vector<4x4xf32>
    %c58 = arith.constant 58 : index
    %300 = memref.load %arg2[%c58] : memref<99xf32, #tpu.memory_space<smem>>
    %301 = vector.extract_strided_slice %2 {offsets = [4, 1], sizes = [4, 4], strides = [1, 1]} : vector<10x10xf32> to vector<4x4xf32>
    %302 = vector.broadcast %300 : f32 to vector<4x4xf32>
    %303 = arith.mulf %302, %301 : vector<4x4xf32>
    %304 = arith.addf %299, %303 : vector<4x4xf32>
    %c59 = arith.constant 59 : index
    %305 = memref.load %arg2[%c59] : memref<99xf32, #tpu.memory_space<smem>>
    %306 = vector.extract_strided_slice %5 {offsets = [4, 1], sizes = [4, 4], strides = [1, 1]} : vector<10x10xf32> to vector<4x4xf32>
    %307 = vector.broadcast %305 : f32 to vector<4x4xf32>
    %308 = arith.mulf %307, %306 : vector<4x4xf32>
    %309 = arith.addf %304, %308 : vector<4x4xf32>
    %c60 = arith.constant 60 : index
    %310 = memref.load %arg2[%c60] : memref<99xf32, #tpu.memory_space<smem>>
    %311 = vector.extract_strided_slice %2 {offsets = [4, 2], sizes = [4, 4], strides = [1, 1]} : vector<10x10xf32> to vector<4x4xf32>
    %312 = vector.broadcast %310 : f32 to vector<4x4xf32>
    %313 = arith.mulf %312, %311 : vector<4x4xf32>
    %314 = arith.addf %309, %313 : vector<4x4xf32>
    %c61 = arith.constant 61 : index
    %315 = memref.load %arg2[%c61] : memref<99xf32, #tpu.memory_space<smem>>
    %316 = vector.extract_strided_slice %5 {offsets = [4, 2], sizes = [4, 4], strides = [1, 1]} : vector<10x10xf32> to vector<4x4xf32>
    %317 = vector.broadcast %315 : f32 to vector<4x4xf32>
    %318 = arith.mulf %317, %316 : vector<4x4xf32>
    %319 = arith.addf %314, %318 : vector<4x4xf32>
    %c62 = arith.constant 62 : index
    %320 = memref.load %arg2[%c62] : memref<99xf32, #tpu.memory_space<smem>>
    %321 = vector.extract_strided_slice %2 {offsets = [4, 3], sizes = [4, 4], strides = [1, 1]} : vector<10x10xf32> to vector<4x4xf32>
    %322 = vector.broadcast %320 : f32 to vector<4x4xf32>
    %323 = arith.mulf %322, %321 : vector<4x4xf32>
    %324 = arith.addf %319, %323 : vector<4x4xf32>
    %c63 = arith.constant 63 : index
    %325 = memref.load %arg2[%c63] : memref<99xf32, #tpu.memory_space<smem>>
    %326 = vector.extract_strided_slice %5 {offsets = [4, 3], sizes = [4, 4], strides = [1, 1]} : vector<10x10xf32> to vector<4x4xf32>
    %327 = vector.broadcast %325 : f32 to vector<4x4xf32>
    %328 = arith.mulf %327, %326 : vector<4x4xf32>
    %329 = arith.addf %324, %328 : vector<4x4xf32>
    %c64 = arith.constant 64 : index
    %330 = memref.load %arg2[%c64] : memref<99xf32, #tpu.memory_space<smem>>
    %331 = vector.extract_strided_slice %2 {offsets = [4, 4], sizes = [4, 4], strides = [1, 1]} : vector<10x10xf32> to vector<4x4xf32>
    %332 = vector.broadcast %330 : f32 to vector<4x4xf32>
    %333 = arith.mulf %332, %331 : vector<4x4xf32>
    %334 = arith.addf %329, %333 : vector<4x4xf32>
    %c65 = arith.constant 65 : index
    %335 = memref.load %arg2[%c65] : memref<99xf32, #tpu.memory_space<smem>>
    %336 = vector.extract_strided_slice %5 {offsets = [4, 4], sizes = [4, 4], strides = [1, 1]} : vector<10x10xf32> to vector<4x4xf32>
    %337 = vector.broadcast %335 : f32 to vector<4x4xf32>
    %338 = arith.mulf %337, %336 : vector<4x4xf32>
    %339 = arith.addf %334, %338 : vector<4x4xf32>
    %c66 = arith.constant 66 : index
    %340 = memref.load %arg2[%c66] : memref<99xf32, #tpu.memory_space<smem>>
    %341 = vector.extract_strided_slice %2 {offsets = [4, 5], sizes = [4, 4], strides = [1, 1]} : vector<10x10xf32> to vector<4x4xf32>
    %342 = vector.broadcast %340 : f32 to vector<4x4xf32>
    %343 = arith.mulf %342, %341 : vector<4x4xf32>
    %344 = arith.addf %339, %343 : vector<4x4xf32>
    %c67 = arith.constant 67 : index
    %345 = memref.load %arg2[%c67] : memref<99xf32, #tpu.memory_space<smem>>
    %346 = vector.extract_strided_slice %5 {offsets = [4, 5], sizes = [4, 4], strides = [1, 1]} : vector<10x10xf32> to vector<4x4xf32>
    %347 = vector.broadcast %345 : f32 to vector<4x4xf32>
    %348 = arith.mulf %347, %346 : vector<4x4xf32>
    %349 = arith.addf %344, %348 : vector<4x4xf32>
    %c68 = arith.constant 68 : index
    %350 = memref.load %arg2[%c68] : memref<99xf32, #tpu.memory_space<smem>>
    %351 = vector.extract_strided_slice %2 {offsets = [4, 6], sizes = [4, 4], strides = [1, 1]} : vector<10x10xf32> to vector<4x4xf32>
    %352 = vector.broadcast %350 : f32 to vector<4x4xf32>
    %353 = arith.mulf %352, %351 : vector<4x4xf32>
    %354 = arith.addf %349, %353 : vector<4x4xf32>
    %c69 = arith.constant 69 : index
    %355 = memref.load %arg2[%c69] : memref<99xf32, #tpu.memory_space<smem>>
    %356 = vector.extract_strided_slice %5 {offsets = [4, 6], sizes = [4, 4], strides = [1, 1]} : vector<10x10xf32> to vector<4x4xf32>
    %357 = vector.broadcast %355 : f32 to vector<4x4xf32>
    %358 = arith.mulf %357, %356 : vector<4x4xf32>
    %359 = arith.addf %354, %358 : vector<4x4xf32>
    %c70 = arith.constant 70 : index
    %360 = memref.load %arg2[%c70] : memref<99xf32, #tpu.memory_space<smem>>
    %361 = vector.extract_strided_slice %2 {offsets = [5, 0], sizes = [4, 4], strides = [1, 1]} : vector<10x10xf32> to vector<4x4xf32>
    %362 = vector.broadcast %360 : f32 to vector<4x4xf32>
    %363 = arith.mulf %362, %361 : vector<4x4xf32>
    %364 = arith.addf %359, %363 : vector<4x4xf32>
    %c71 = arith.constant 71 : index
    %365 = memref.load %arg2[%c71] : memref<99xf32, #tpu.memory_space<smem>>
    %366 = vector.extract_strided_slice %5 {offsets = [5, 0], sizes = [4, 4], strides = [1, 1]} : vector<10x10xf32> to vector<4x4xf32>
    %367 = vector.broadcast %365 : f32 to vector<4x4xf32>
    %368 = arith.mulf %367, %366 : vector<4x4xf32>
    %369 = arith.addf %364, %368 : vector<4x4xf32>
    %c72 = arith.constant 72 : index
    %370 = memref.load %arg2[%c72] : memref<99xf32, #tpu.memory_space<smem>>
    %371 = vector.extract_strided_slice %2 {offsets = [5, 1], sizes = [4, 4], strides = [1, 1]} : vector<10x10xf32> to vector<4x4xf32>
    %372 = vector.broadcast %370 : f32 to vector<4x4xf32>
    %373 = arith.mulf %372, %371 : vector<4x4xf32>
    %374 = arith.addf %369, %373 : vector<4x4xf32>
    %c73 = arith.constant 73 : index
    %375 = memref.load %arg2[%c73] : memref<99xf32, #tpu.memory_space<smem>>
    %376 = vector.extract_strided_slice %5 {offsets = [5, 1], sizes = [4, 4], strides = [1, 1]} : vector<10x10xf32> to vector<4x4xf32>
    %377 = vector.broadcast %375 : f32 to vector<4x4xf32>
    %378 = arith.mulf %377, %376 : vector<4x4xf32>
    %379 = arith.addf %374, %378 : vector<4x4xf32>
    %c74 = arith.constant 74 : index
    %380 = memref.load %arg2[%c74] : memref<99xf32, #tpu.memory_space<smem>>
    %381 = vector.extract_strided_slice %2 {offsets = [5, 2], sizes = [4, 4], strides = [1, 1]} : vector<10x10xf32> to vector<4x4xf32>
    %382 = vector.broadcast %380 : f32 to vector<4x4xf32>
    %383 = arith.mulf %382, %381 : vector<4x4xf32>
    %384 = arith.addf %379, %383 : vector<4x4xf32>
    %c75 = arith.constant 75 : index
    %385 = memref.load %arg2[%c75] : memref<99xf32, #tpu.memory_space<smem>>
    %386 = vector.extract_strided_slice %5 {offsets = [5, 2], sizes = [4, 4], strides = [1, 1]} : vector<10x10xf32> to vector<4x4xf32>
    %387 = vector.broadcast %385 : f32 to vector<4x4xf32>
    %388 = arith.mulf %387, %386 : vector<4x4xf32>
    %389 = arith.addf %384, %388 : vector<4x4xf32>
    %c76 = arith.constant 76 : index
    %390 = memref.load %arg2[%c76] : memref<99xf32, #tpu.memory_space<smem>>
    %391 = vector.extract_strided_slice %2 {offsets = [5, 3], sizes = [4, 4], strides = [1, 1]} : vector<10x10xf32> to vector<4x4xf32>
    %392 = vector.broadcast %390 : f32 to vector<4x4xf32>
    %393 = arith.mulf %392, %391 : vector<4x4xf32>
    %394 = arith.addf %389, %393 : vector<4x4xf32>
    %c77 = arith.constant 77 : index
    %395 = memref.load %arg2[%c77] : memref<99xf32, #tpu.memory_space<smem>>
    %396 = vector.extract_strided_slice %5 {offsets = [5, 3], sizes = [4, 4], strides = [1, 1]} : vector<10x10xf32> to vector<4x4xf32>
    %397 = vector.broadcast %395 : f32 to vector<4x4xf32>
    %398 = arith.mulf %397, %396 : vector<4x4xf32>
    %399 = arith.addf %394, %398 : vector<4x4xf32>
    %c78 = arith.constant 78 : index
    %400 = memref.load %arg2[%c78] : memref<99xf32, #tpu.memory_space<smem>>
    %401 = vector.extract_strided_slice %2 {offsets = [5, 4], sizes = [4, 4], strides = [1, 1]} : vector<10x10xf32> to vector<4x4xf32>
    %402 = vector.broadcast %400 : f32 to vector<4x4xf32>
    %403 = arith.mulf %402, %401 : vector<4x4xf32>
    %404 = arith.addf %399, %403 : vector<4x4xf32>
    %c79 = arith.constant 79 : index
    %405 = memref.load %arg2[%c79] : memref<99xf32, #tpu.memory_space<smem>>
    %406 = vector.extract_strided_slice %5 {offsets = [5, 4], sizes = [4, 4], strides = [1, 1]} : vector<10x10xf32> to vector<4x4xf32>
    %407 = vector.broadcast %405 : f32 to vector<4x4xf32>
    %408 = arith.mulf %407, %406 : vector<4x4xf32>
    %409 = arith.addf %404, %408 : vector<4x4xf32>
    %c80 = arith.constant 80 : index
    %410 = memref.load %arg2[%c80] : memref<99xf32, #tpu.memory_space<smem>>
    %411 = vector.extract_strided_slice %2 {offsets = [5, 5], sizes = [4, 4], strides = [1, 1]} : vector<10x10xf32> to vector<4x4xf32>
    %412 = vector.broadcast %410 : f32 to vector<4x4xf32>
    %413 = arith.mulf %412, %411 : vector<4x4xf32>
    %414 = arith.addf %409, %413 : vector<4x4xf32>
    %c81 = arith.constant 81 : index
    %415 = memref.load %arg2[%c81] : memref<99xf32, #tpu.memory_space<smem>>
    %416 = vector.extract_strided_slice %5 {offsets = [5, 5], sizes = [4, 4], strides = [1, 1]} : vector<10x10xf32> to vector<4x4xf32>
    %417 = vector.broadcast %415 : f32 to vector<4x4xf32>
    %418 = arith.mulf %417, %416 : vector<4x4xf32>
    %419 = arith.addf %414, %418 : vector<4x4xf32>
    %c82 = arith.constant 82 : index
    %420 = memref.load %arg2[%c82] : memref<99xf32, #tpu.memory_space<smem>>
    %421 = vector.extract_strided_slice %2 {offsets = [5, 6], sizes = [4, 4], strides = [1, 1]} : vector<10x10xf32> to vector<4x4xf32>
    %422 = vector.broadcast %420 : f32 to vector<4x4xf32>
    %423 = arith.mulf %422, %421 : vector<4x4xf32>
    %424 = arith.addf %419, %423 : vector<4x4xf32>
    %c83 = arith.constant 83 : index
    %425 = memref.load %arg2[%c83] : memref<99xf32, #tpu.memory_space<smem>>
    %426 = vector.extract_strided_slice %5 {offsets = [5, 6], sizes = [4, 4], strides = [1, 1]} : vector<10x10xf32> to vector<4x4xf32>
    %427 = vector.broadcast %425 : f32 to vector<4x4xf32>
    %428 = arith.mulf %427, %426 : vector<4x4xf32>
    %429 = arith.addf %424, %428 : vector<4x4xf32>
    %c84 = arith.constant 84 : index
    %430 = memref.load %arg2[%c84] : memref<99xf32, #tpu.memory_space<smem>>
    %431 = vector.extract_strided_slice %2 {offsets = [6, 0], sizes = [4, 4], strides = [1, 1]} : vector<10x10xf32> to vector<4x4xf32>
    %432 = vector.broadcast %430 : f32 to vector<4x4xf32>
    %433 = arith.mulf %432, %431 : vector<4x4xf32>
    %434 = arith.addf %429, %433 : vector<4x4xf32>
    %c85 = arith.constant 85 : index
    %435 = memref.load %arg2[%c85] : memref<99xf32, #tpu.memory_space<smem>>
    %436 = vector.extract_strided_slice %5 {offsets = [6, 0], sizes = [4, 4], strides = [1, 1]} : vector<10x10xf32> to vector<4x4xf32>
    %437 = vector.broadcast %435 : f32 to vector<4x4xf32>
    %438 = arith.mulf %437, %436 : vector<4x4xf32>
    %439 = arith.addf %434, %438 : vector<4x4xf32>
    %c86 = arith.constant 86 : index
    %440 = memref.load %arg2[%c86] : memref<99xf32, #tpu.memory_space<smem>>
    %441 = vector.extract_strided_slice %2 {offsets = [6, 1], sizes = [4, 4], strides = [1, 1]} : vector<10x10xf32> to vector<4x4xf32>
    %442 = vector.broadcast %440 : f32 to vector<4x4xf32>
    %443 = arith.mulf %442, %441 : vector<4x4xf32>
    %444 = arith.addf %439, %443 : vector<4x4xf32>
    %c87 = arith.constant 87 : index
    %445 = memref.load %arg2[%c87] : memref<99xf32, #tpu.memory_space<smem>>
    %446 = vector.extract_strided_slice %5 {offsets = [6, 1], sizes = [4, 4], strides = [1, 1]} : vector<10x10xf32> to vector<4x4xf32>
    %447 = vector.broadcast %445 : f32 to vector<4x4xf32>
    %448 = arith.mulf %447, %446 : vector<4x4xf32>
    %449 = arith.addf %444, %448 : vector<4x4xf32>
    %c88 = arith.constant 88 : index
    %450 = memref.load %arg2[%c88] : memref<99xf32, #tpu.memory_space<smem>>
    %451 = vector.extract_strided_slice %2 {offsets = [6, 2], sizes = [4, 4], strides = [1, 1]} : vector<10x10xf32> to vector<4x4xf32>
    %452 = vector.broadcast %450 : f32 to vector<4x4xf32>
    %453 = arith.mulf %452, %451 : vector<4x4xf32>
    %454 = arith.addf %449, %453 : vector<4x4xf32>
    %c89 = arith.constant 89 : index
    %455 = memref.load %arg2[%c89] : memref<99xf32, #tpu.memory_space<smem>>
    %456 = vector.extract_strided_slice %5 {offsets = [6, 2], sizes = [4, 4], strides = [1, 1]} : vector<10x10xf32> to vector<4x4xf32>
    %457 = vector.broadcast %455 : f32 to vector<4x4xf32>
    %458 = arith.mulf %457, %456 : vector<4x4xf32>
    %459 = arith.addf %454, %458 : vector<4x4xf32>
    %c90 = arith.constant 90 : index
    %460 = memref.load %arg2[%c90] : memref<99xf32, #tpu.memory_space<smem>>
    %461 = vector.extract_strided_slice %2 {offsets = [6, 3], sizes = [4, 4], strides = [1, 1]} : vector<10x10xf32> to vector<4x4xf32>
    %462 = vector.broadcast %460 : f32 to vector<4x4xf32>
    %463 = arith.mulf %462, %461 : vector<4x4xf32>
    %464 = arith.addf %459, %463 : vector<4x4xf32>
    %c91 = arith.constant 91 : index
    %465 = memref.load %arg2[%c91] : memref<99xf32, #tpu.memory_space<smem>>
    %466 = vector.extract_strided_slice %5 {offsets = [6, 3], sizes = [4, 4], strides = [1, 1]} : vector<10x10xf32> to vector<4x4xf32>
    %467 = vector.broadcast %465 : f32 to vector<4x4xf32>
    %468 = arith.mulf %467, %466 : vector<4x4xf32>
    %469 = arith.addf %464, %468 : vector<4x4xf32>
    %c92 = arith.constant 92 : index
    %470 = memref.load %arg2[%c92] : memref<99xf32, #tpu.memory_space<smem>>
    %471 = vector.extract_strided_slice %2 {offsets = [6, 4], sizes = [4, 4], strides = [1, 1]} : vector<10x10xf32> to vector<4x4xf32>
    %472 = vector.broadcast %470 : f32 to vector<4x4xf32>
    %473 = arith.mulf %472, %471 : vector<4x4xf32>
    %474 = arith.addf %469, %473 : vector<4x4xf32>
    %c93 = arith.constant 93 : index
    %475 = memref.load %arg2[%c93] : memref<99xf32, #tpu.memory_space<smem>>
    %476 = vector.extract_strided_slice %5 {offsets = [6, 4], sizes = [4, 4], strides = [1, 1]} : vector<10x10xf32> to vector<4x4xf32>
    %477 = vector.broadcast %475 : f32 to vector<4x4xf32>
    %478 = arith.mulf %477, %476 : vector<4x4xf32>
    %479 = arith.addf %474, %478 : vector<4x4xf32>
    %c94 = arith.constant 94 : index
    %480 = memref.load %arg2[%c94] : memref<99xf32, #tpu.memory_space<smem>>
    %481 = vector.extract_strided_slice %2 {offsets = [6, 5], sizes = [4, 4], strides = [1, 1]} : vector<10x10xf32> to vector<4x4xf32>
    %482 = vector.broadcast %480 : f32 to vector<4x4xf32>
    %483 = arith.mulf %482, %481 : vector<4x4xf32>
    %484 = arith.addf %479, %483 : vector<4x4xf32>
    %c95 = arith.constant 95 : index
    %485 = memref.load %arg2[%c95] : memref<99xf32, #tpu.memory_space<smem>>
    %486 = vector.extract_strided_slice %5 {offsets = [6, 5], sizes = [4, 4], strides = [1, 1]} : vector<10x10xf32> to vector<4x4xf32>
    %487 = vector.broadcast %485 : f32 to vector<4x4xf32>
    %488 = arith.mulf %487, %486 : vector<4x4xf32>
    %489 = arith.addf %484, %488 : vector<4x4xf32>
    %c96 = arith.constant 96 : index
    %490 = memref.load %arg2[%c96] : memref<99xf32, #tpu.memory_space<smem>>
    %491 = vector.extract_strided_slice %2 {offsets = [6, 6], sizes = [4, 4], strides = [1, 1]} : vector<10x10xf32> to vector<4x4xf32>
    %492 = vector.broadcast %490 : f32 to vector<4x4xf32>
    %493 = arith.mulf %492, %491 : vector<4x4xf32>
    %494 = arith.addf %489, %493 : vector<4x4xf32>
    %c97 = arith.constant 97 : index
    %495 = memref.load %arg2[%c97] : memref<99xf32, #tpu.memory_space<smem>>
    %496 = vector.extract_strided_slice %5 {offsets = [6, 6], sizes = [4, 4], strides = [1, 1]} : vector<10x10xf32> to vector<4x4xf32>
    %497 = vector.broadcast %495 : f32 to vector<4x4xf32>
    %498 = arith.mulf %497, %496 : vector<4x4xf32>
    %499 = arith.addf %494, %498 : vector<4x4xf32>
    %500 = arith.negf %499 : vector<4x4xf32>
    %501 = math.exp %500 : vector<4x4xf32>
    %cst_7 = arith.constant 1.000000e+00 : f32
    %502 = vector.broadcast %cst_7 : f32 to vector<4x4xf32>
    %503 = arith.addf %502, %501 : vector<4x4xf32>
    %504 = arith.divf %502, %503 : vector<4x4xf32>
    %505 = vector.extract_strided_slice %1 {offsets = [0, 3, 3], sizes = [8, 4, 4], strides = [1, 1, 1]} : vector<8x10x10xf32> to vector<8x4x4xf32>
    %506 = vector.shape_cast %504 : vector<4x4xf32> to vector<1x4x4xf32>
    %507 = vector.broadcast %506 : vector<1x4x4xf32> to vector<8x4x4xf32>
    %508 = arith.mulf %505, %507 : vector<8x4x4xf32>
    %509 = vector.shape_cast %508 : vector<8x4x4xf32> to vector<1x8x4x4xf32>
    %c0_8 = arith.constant 0 : index
    %c0_9 = arith.constant 0 : index
    %c0_10 = arith.constant 0 : index
    %c0_11 = arith.constant 0 : index
    %510 = vector.load %arg3[%c0_8, %c0_9, %c0_10, %c0_11] : memref<1x8x4x4xf32, #tpu.memory_space<vmem>>, vector<1x8x4x4xf32>
    tpu.vector_store %arg3[%c0_8, %c0_9, %c0_10, %c0_11], %509 {strides = array<i32>} : memref<1x8x4x4xf32, #tpu.memory_space<vmem>>, vector<1x8x4x4xf32>,
    return
  }
  func.func @transform_0(%arg0: i32) -> (i32, i32, i32, i32) {
    %c0_i32 = arith.constant 0 : i32
    %c0_i32_0 = arith.constant 0 : i32
    %c0_i32_1 = arith.constant 0 : i32
    %c0_i32_2 = arith.constant 0 : i32
    return %arg0, %c0_i32, %c0_i32_0, %c0_i32_1 : i32, i32, i32, i32
  }
  func.func @transform_1(%arg0: i32) -> i32 {
    %c0_i32 = arith.constant 0 : i32
    %c0_i32_0 = arith.constant 0 : i32
    return %c0_i32 : i32
  }
  func.func @transform_2(%arg0: i32) -> (i32, i32, i32, i32) {
    %c0_i32 = arith.constant 0 : i32
    %c0_i32_0 = arith.constant 0 : i32
    %c0_i32_1 = arith.constant 0 : i32
    %c0_i32_2 = arith.constant 0 : i32
    return %arg0, %c0_i32, %c0_i32_0, %c0_i32_1 : i32, i32, i32, i32
  }
}

module attributes {stable_mosaic.version = 11 : i64} {
  func.func @_fused_gate_kernel(%arg0: i32, %arg1: memref<1x4x10x14xf32, #tpu.memory_space<vmem>>, %arg2: memref<99xf32, #tpu.memory_space<smem>>, %arg3: memref<1x4x4x8xf32, #tpu.memory_space<vmem>>) attributes {dimension_semantics = [#tpu.dimension_semantics<parallel>], iteration_bounds = array<i64: 2>, scalar_prefetch = 0 : i64, scratch_operands = 0 : i64, tpu.core_type = #tpu.core_type<tc>, window_params = [{transform_indices = @transform_0, window_bounds = array<i64: 1, 4, 10, 14>}, {transform_indices = @transform_1, window_bounds = array<i64: 99>}, {transform_indices = @transform_2, window_bounds = array<i64: 1, 4, 4, 8>}]} {
    %c0 = arith.constant 0 : index
    %c0_0 = arith.constant 0 : index
    %c0_1 = arith.constant 0 : index
    %c0_2 = arith.constant 0 : index
    %0 = vector.load %arg1[%c0, %c0_0, %c0_1, %c0_2] : memref<1x4x10x14xf32, #tpu.memory_space<vmem>>, vector<1x4x10x14xf32>
    %1 = vector.shape_cast %0 : vector<1x4x10x14xf32> to vector<4x10x14xf32>
    %cst = arith.constant dense<0xFF800000> : vector<10x14xf32>
    %2 = vector.multi_reduction <maximumf>, %1, %cst [0] : vector<4x10x14xf32> to vector<10x14xf32>
    %cst_3 = arith.constant dense<0.000000e+00> : vector<10x14xf32>
    %3 = vector.multi_reduction <add>, %1, %cst_3 [0] : vector<4x10x14xf32> to vector<10x14xf32>
    %cst_4 = arith.constant 4.000000e+00 : f32
    %4 = vector.broadcast %cst_4 : f32 to vector<10x14xf32>
    %5 = arith.divf %3, %4 : vector<10x14xf32>
    %cst_5 = arith.constant 0.000000e+00 : f32
    %6 = vector.broadcast %cst_5 : f32 to vector<4x8xf32>
    %c98 = arith.constant 98 : index
    %7 = memref.load %arg2[%c98] : memref<99xf32, #tpu.memory_space<smem>>
    %8 = vector.broadcast %7 : f32 to vector<4x8xf32>
    %9 = arith.addf %6, %8 : vector<4x8xf32>
    %c0_6 = arith.constant 0 : index
    %10 = memref.load %arg2[%c0_6] : memref<99xf32, #tpu.memory_space<smem>>
    %11 = vector.extract_strided_slice %2 {offsets = [0, 0], sizes = [4, 8], strides = [1, 1]} : vector<10x14xf32> to vector<4x8xf32>
    %12 = vector.broadcast %10 : f32 to vector<4x8xf32>
    %13 = arith.mulf %12, %11 : vector<4x8xf32>
    %14 = arith.addf %9, %13 : vector<4x8xf32>
    %c1 = arith.constant 1 : index
    %15 = memref.load %arg2[%c1] : memref<99xf32, #tpu.memory_space<smem>>
    %16 = vector.extract_strided_slice %5 {offsets = [0, 0], sizes = [4, 8], strides = [1, 1]} : vector<10x14xf32> to vector<4x8xf32>
    %17 = vector.broadcast %15 : f32 to vector<4x8xf32>
    %18 = arith.mulf %17, %16 : vector<4x8xf32>
    %19 = arith.addf %14, %18 : vector<4x8xf32>
    %c2 = arith.constant 2 : index
    %20 = memref.load %arg2[%c2] : memref<99xf32, #tpu.memory_space<smem>>
    %21 = vector.extract_strided_slice %2 {offsets = [0, 1], sizes = [4, 8], strides = [1, 1]} : vector<10x14xf32> to vector<4x8xf32>
    %22 = vector.broadcast %20 : f32 to vector<4x8xf32>
    %23 = arith.mulf %22, %21 : vector<4x8xf32>
    %24 = arith.addf %19, %23 : vector<4x8xf32>
    %c3 = arith.constant 3 : index
    %25 = memref.load %arg2[%c3] : memref<99xf32, #tpu.memory_space<smem>>
    %26 = vector.extract_strided_slice %5 {offsets = [0, 1], sizes = [4, 8], strides = [1, 1]} : vector<10x14xf32> to vector<4x8xf32>
    %27 = vector.broadcast %25 : f32 to vector<4x8xf32>
    %28 = arith.mulf %27, %26 : vector<4x8xf32>
    %29 = arith.addf %24, %28 : vector<4x8xf32>
    %c4 = arith.constant 4 : index
    %30 = memref.load %arg2[%c4] : memref<99xf32, #tpu.memory_space<smem>>
    %31 = vector.extract_strided_slice %2 {offsets = [0, 2], sizes = [4, 8], strides = [1, 1]} : vector<10x14xf32> to vector<4x8xf32>
    %32 = vector.broadcast %30 : f32 to vector<4x8xf32>
    %33 = arith.mulf %32, %31 : vector<4x8xf32>
    %34 = arith.addf %29, %33 : vector<4x8xf32>
    %c5 = arith.constant 5 : index
    %35 = memref.load %arg2[%c5] : memref<99xf32, #tpu.memory_space<smem>>
    %36 = vector.extract_strided_slice %5 {offsets = [0, 2], sizes = [4, 8], strides = [1, 1]} : vector<10x14xf32> to vector<4x8xf32>
    %37 = vector.broadcast %35 : f32 to vector<4x8xf32>
    %38 = arith.mulf %37, %36 : vector<4x8xf32>
    %39 = arith.addf %34, %38 : vector<4x8xf32>
    %c6 = arith.constant 6 : index
    %40 = memref.load %arg2[%c6] : memref<99xf32, #tpu.memory_space<smem>>
    %41 = vector.extract_strided_slice %2 {offsets = [0, 3], sizes = [4, 8], strides = [1, 1]} : vector<10x14xf32> to vector<4x8xf32>
    %42 = vector.broadcast %40 : f32 to vector<4x8xf32>
    %43 = arith.mulf %42, %41 : vector<4x8xf32>
    %44 = arith.addf %39, %43 : vector<4x8xf32>
    %c7 = arith.constant 7 : index
    %45 = memref.load %arg2[%c7] : memref<99xf32, #tpu.memory_space<smem>>
    %46 = vector.extract_strided_slice %5 {offsets = [0, 3], sizes = [4, 8], strides = [1, 1]} : vector<10x14xf32> to vector<4x8xf32>
    %47 = vector.broadcast %45 : f32 to vector<4x8xf32>
    %48 = arith.mulf %47, %46 : vector<4x8xf32>
    %49 = arith.addf %44, %48 : vector<4x8xf32>
    %c8 = arith.constant 8 : index
    %50 = memref.load %arg2[%c8] : memref<99xf32, #tpu.memory_space<smem>>
    %51 = vector.extract_strided_slice %2 {offsets = [0, 4], sizes = [4, 8], strides = [1, 1]} : vector<10x14xf32> to vector<4x8xf32>
    %52 = vector.broadcast %50 : f32 to vector<4x8xf32>
    %53 = arith.mulf %52, %51 : vector<4x8xf32>
    %54 = arith.addf %49, %53 : vector<4x8xf32>
    %c9 = arith.constant 9 : index
    %55 = memref.load %arg2[%c9] : memref<99xf32, #tpu.memory_space<smem>>
    %56 = vector.extract_strided_slice %5 {offsets = [0, 4], sizes = [4, 8], strides = [1, 1]} : vector<10x14xf32> to vector<4x8xf32>
    %57 = vector.broadcast %55 : f32 to vector<4x8xf32>
    %58 = arith.mulf %57, %56 : vector<4x8xf32>
    %59 = arith.addf %54, %58 : vector<4x8xf32>
    %c10 = arith.constant 10 : index
    %60 = memref.load %arg2[%c10] : memref<99xf32, #tpu.memory_space<smem>>
    %61 = vector.extract_strided_slice %2 {offsets = [0, 5], sizes = [4, 8], strides = [1, 1]} : vector<10x14xf32> to vector<4x8xf32>
    %62 = vector.broadcast %60 : f32 to vector<4x8xf32>
    %63 = arith.mulf %62, %61 : vector<4x8xf32>
    %64 = arith.addf %59, %63 : vector<4x8xf32>
    %c11 = arith.constant 11 : index
    %65 = memref.load %arg2[%c11] : memref<99xf32, #tpu.memory_space<smem>>
    %66 = vector.extract_strided_slice %5 {offsets = [0, 5], sizes = [4, 8], strides = [1, 1]} : vector<10x14xf32> to vector<4x8xf32>
    %67 = vector.broadcast %65 : f32 to vector<4x8xf32>
    %68 = arith.mulf %67, %66 : vector<4x8xf32>
    %69 = arith.addf %64, %68 : vector<4x8xf32>
    %c12 = arith.constant 12 : index
    %70 = memref.load %arg2[%c12] : memref<99xf32, #tpu.memory_space<smem>>
    %71 = vector.extract_strided_slice %2 {offsets = [0, 6], sizes = [4, 8], strides = [1, 1]} : vector<10x14xf32> to vector<4x8xf32>
    %72 = vector.broadcast %70 : f32 to vector<4x8xf32>
    %73 = arith.mulf %72, %71 : vector<4x8xf32>
    %74 = arith.addf %69, %73 : vector<4x8xf32>
    %c13 = arith.constant 13 : index
    %75 = memref.load %arg2[%c13] : memref<99xf32, #tpu.memory_space<smem>>
    %76 = vector.extract_strided_slice %5 {offsets = [0, 6], sizes = [4, 8], strides = [1, 1]} : vector<10x14xf32> to vector<4x8xf32>
    %77 = vector.broadcast %75 : f32 to vector<4x8xf32>
    %78 = arith.mulf %77, %76 : vector<4x8xf32>
    %79 = arith.addf %74, %78 : vector<4x8xf32>
    %c14 = arith.constant 14 : index
    %80 = memref.load %arg2[%c14] : memref<99xf32, #tpu.memory_space<smem>>
    %81 = vector.extract_strided_slice %2 {offsets = [1, 0], sizes = [4, 8], strides = [1, 1]} : vector<10x14xf32> to vector<4x8xf32>
    %82 = vector.broadcast %80 : f32 to vector<4x8xf32>
    %83 = arith.mulf %82, %81 : vector<4x8xf32>
    %84 = arith.addf %79, %83 : vector<4x8xf32>
    %c15 = arith.constant 15 : index
    %85 = memref.load %arg2[%c15] : memref<99xf32, #tpu.memory_space<smem>>
    %86 = vector.extract_strided_slice %5 {offsets = [1, 0], sizes = [4, 8], strides = [1, 1]} : vector<10x14xf32> to vector<4x8xf32>
    %87 = vector.broadcast %85 : f32 to vector<4x8xf32>
    %88 = arith.mulf %87, %86 : vector<4x8xf32>
    %89 = arith.addf %84, %88 : vector<4x8xf32>
    %c16 = arith.constant 16 : index
    %90 = memref.load %arg2[%c16] : memref<99xf32, #tpu.memory_space<smem>>
    %91 = vector.extract_strided_slice %2 {offsets = [1, 1], sizes = [4, 8], strides = [1, 1]} : vector<10x14xf32> to vector<4x8xf32>
    %92 = vector.broadcast %90 : f32 to vector<4x8xf32>
    %93 = arith.mulf %92, %91 : vector<4x8xf32>
    %94 = arith.addf %89, %93 : vector<4x8xf32>
    %c17 = arith.constant 17 : index
    %95 = memref.load %arg2[%c17] : memref<99xf32, #tpu.memory_space<smem>>
    %96 = vector.extract_strided_slice %5 {offsets = [1, 1], sizes = [4, 8], strides = [1, 1]} : vector<10x14xf32> to vector<4x8xf32>
    %97 = vector.broadcast %95 : f32 to vector<4x8xf32>
    %98 = arith.mulf %97, %96 : vector<4x8xf32>
    %99 = arith.addf %94, %98 : vector<4x8xf32>
    %c18 = arith.constant 18 : index
    %100 = memref.load %arg2[%c18] : memref<99xf32, #tpu.memory_space<smem>>
    %101 = vector.extract_strided_slice %2 {offsets = [1, 2], sizes = [4, 8], strides = [1, 1]} : vector<10x14xf32> to vector<4x8xf32>
    %102 = vector.broadcast %100 : f32 to vector<4x8xf32>
    %103 = arith.mulf %102, %101 : vector<4x8xf32>
    %104 = arith.addf %99, %103 : vector<4x8xf32>
    %c19 = arith.constant 19 : index
    %105 = memref.load %arg2[%c19] : memref<99xf32, #tpu.memory_space<smem>>
    %106 = vector.extract_strided_slice %5 {offsets = [1, 2], sizes = [4, 8], strides = [1, 1]} : vector<10x14xf32> to vector<4x8xf32>
    %107 = vector.broadcast %105 : f32 to vector<4x8xf32>
    %108 = arith.mulf %107, %106 : vector<4x8xf32>
    %109 = arith.addf %104, %108 : vector<4x8xf32>
    %c20 = arith.constant 20 : index
    %110 = memref.load %arg2[%c20] : memref<99xf32, #tpu.memory_space<smem>>
    %111 = vector.extract_strided_slice %2 {offsets = [1, 3], sizes = [4, 8], strides = [1, 1]} : vector<10x14xf32> to vector<4x8xf32>
    %112 = vector.broadcast %110 : f32 to vector<4x8xf32>
    %113 = arith.mulf %112, %111 : vector<4x8xf32>
    %114 = arith.addf %109, %113 : vector<4x8xf32>
    %c21 = arith.constant 21 : index
    %115 = memref.load %arg2[%c21] : memref<99xf32, #tpu.memory_space<smem>>
    %116 = vector.extract_strided_slice %5 {offsets = [1, 3], sizes = [4, 8], strides = [1, 1]} : vector<10x14xf32> to vector<4x8xf32>
    %117 = vector.broadcast %115 : f32 to vector<4x8xf32>
    %118 = arith.mulf %117, %116 : vector<4x8xf32>
    %119 = arith.addf %114, %118 : vector<4x8xf32>
    %c22 = arith.constant 22 : index
    %120 = memref.load %arg2[%c22] : memref<99xf32, #tpu.memory_space<smem>>
    %121 = vector.extract_strided_slice %2 {offsets = [1, 4], sizes = [4, 8], strides = [1, 1]} : vector<10x14xf32> to vector<4x8xf32>
    %122 = vector.broadcast %120 : f32 to vector<4x8xf32>
    %123 = arith.mulf %122, %121 : vector<4x8xf32>
    %124 = arith.addf %119, %123 : vector<4x8xf32>
    %c23 = arith.constant 23 : index
    %125 = memref.load %arg2[%c23] : memref<99xf32, #tpu.memory_space<smem>>
    %126 = vector.extract_strided_slice %5 {offsets = [1, 4], sizes = [4, 8], strides = [1, 1]} : vector<10x14xf32> to vector<4x8xf32>
    %127 = vector.broadcast %125 : f32 to vector<4x8xf32>
    %128 = arith.mulf %127, %126 : vector<4x8xf32>
    %129 = arith.addf %124, %128 : vector<4x8xf32>
    %c24 = arith.constant 24 : index
    %130 = memref.load %arg2[%c24] : memref<99xf32, #tpu.memory_space<smem>>
    %131 = vector.extract_strided_slice %2 {offsets = [1, 5], sizes = [4, 8], strides = [1, 1]} : vector<10x14xf32> to vector<4x8xf32>
    %132 = vector.broadcast %130 : f32 to vector<4x8xf32>
    %133 = arith.mulf %132, %131 : vector<4x8xf32>
    %134 = arith.addf %129, %133 : vector<4x8xf32>
    %c25 = arith.constant 25 : index
    %135 = memref.load %arg2[%c25] : memref<99xf32, #tpu.memory_space<smem>>
    %136 = vector.extract_strided_slice %5 {offsets = [1, 5], sizes = [4, 8], strides = [1, 1]} : vector<10x14xf32> to vector<4x8xf32>
    %137 = vector.broadcast %135 : f32 to vector<4x8xf32>
    %138 = arith.mulf %137, %136 : vector<4x8xf32>
    %139 = arith.addf %134, %138 : vector<4x8xf32>
    %c26 = arith.constant 26 : index
    %140 = memref.load %arg2[%c26] : memref<99xf32, #tpu.memory_space<smem>>
    %141 = vector.extract_strided_slice %2 {offsets = [1, 6], sizes = [4, 8], strides = [1, 1]} : vector<10x14xf32> to vector<4x8xf32>
    %142 = vector.broadcast %140 : f32 to vector<4x8xf32>
    %143 = arith.mulf %142, %141 : vector<4x8xf32>
    %144 = arith.addf %139, %143 : vector<4x8xf32>
    %c27 = arith.constant 27 : index
    %145 = memref.load %arg2[%c27] : memref<99xf32, #tpu.memory_space<smem>>
    %146 = vector.extract_strided_slice %5 {offsets = [1, 6], sizes = [4, 8], strides = [1, 1]} : vector<10x14xf32> to vector<4x8xf32>
    %147 = vector.broadcast %145 : f32 to vector<4x8xf32>
    %148 = arith.mulf %147, %146 : vector<4x8xf32>
    %149 = arith.addf %144, %148 : vector<4x8xf32>
    %c28 = arith.constant 28 : index
    %150 = memref.load %arg2[%c28] : memref<99xf32, #tpu.memory_space<smem>>
    %151 = vector.extract_strided_slice %2 {offsets = [2, 0], sizes = [4, 8], strides = [1, 1]} : vector<10x14xf32> to vector<4x8xf32>
    %152 = vector.broadcast %150 : f32 to vector<4x8xf32>
    %153 = arith.mulf %152, %151 : vector<4x8xf32>
    %154 = arith.addf %149, %153 : vector<4x8xf32>
    %c29 = arith.constant 29 : index
    %155 = memref.load %arg2[%c29] : memref<99xf32, #tpu.memory_space<smem>>
    %156 = vector.extract_strided_slice %5 {offsets = [2, 0], sizes = [4, 8], strides = [1, 1]} : vector<10x14xf32> to vector<4x8xf32>
    %157 = vector.broadcast %155 : f32 to vector<4x8xf32>
    %158 = arith.mulf %157, %156 : vector<4x8xf32>
    %159 = arith.addf %154, %158 : vector<4x8xf32>
    %c30 = arith.constant 30 : index
    %160 = memref.load %arg2[%c30] : memref<99xf32, #tpu.memory_space<smem>>
    %161 = vector.extract_strided_slice %2 {offsets = [2, 1], sizes = [4, 8], strides = [1, 1]} : vector<10x14xf32> to vector<4x8xf32>
    %162 = vector.broadcast %160 : f32 to vector<4x8xf32>
    %163 = arith.mulf %162, %161 : vector<4x8xf32>
    %164 = arith.addf %159, %163 : vector<4x8xf32>
    %c31 = arith.constant 31 : index
    %165 = memref.load %arg2[%c31] : memref<99xf32, #tpu.memory_space<smem>>
    %166 = vector.extract_strided_slice %5 {offsets = [2, 1], sizes = [4, 8], strides = [1, 1]} : vector<10x14xf32> to vector<4x8xf32>
    %167 = vector.broadcast %165 : f32 to vector<4x8xf32>
    %168 = arith.mulf %167, %166 : vector<4x8xf32>
    %169 = arith.addf %164, %168 : vector<4x8xf32>
    %c32 = arith.constant 32 : index
    %170 = memref.load %arg2[%c32] : memref<99xf32, #tpu.memory_space<smem>>
    %171 = vector.extract_strided_slice %2 {offsets = [2, 2], sizes = [4, 8], strides = [1, 1]} : vector<10x14xf32> to vector<4x8xf32>
    %172 = vector.broadcast %170 : f32 to vector<4x8xf32>
    %173 = arith.mulf %172, %171 : vector<4x8xf32>
    %174 = arith.addf %169, %173 : vector<4x8xf32>
    %c33 = arith.constant 33 : index
    %175 = memref.load %arg2[%c33] : memref<99xf32, #tpu.memory_space<smem>>
    %176 = vector.extract_strided_slice %5 {offsets = [2, 2], sizes = [4, 8], strides = [1, 1]} : vector<10x14xf32> to vector<4x8xf32>
    %177 = vector.broadcast %175 : f32 to vector<4x8xf32>
    %178 = arith.mulf %177, %176 : vector<4x8xf32>
    %179 = arith.addf %174, %178 : vector<4x8xf32>
    %c34 = arith.constant 34 : index
    %180 = memref.load %arg2[%c34] : memref<99xf32, #tpu.memory_space<smem>>
    %181 = vector.extract_strided_slice %2 {offsets = [2, 3], sizes = [4, 8], strides = [1, 1]} : vector<10x14xf32> to vector<4x8xf32>
    %182 = vector.broadcast %180 : f32 to vector<4x8xf32>
    %183 = arith.mulf %182, %181 : vector<4x8xf32>
    %184 = arith.addf %179, %183 : vector<4x8xf32>
    %c35 = arith.constant 35 : index
    %185 = memref.load %arg2[%c35] : memref<99xf32, #tpu.memory_space<smem>>
    %186 = vector.extract_strided_slice %5 {offsets = [2, 3], sizes = [4, 8], strides = [1, 1]} : vector<10x14xf32> to vector<4x8xf32>
    %187 = vector.broadcast %185 : f32 to vector<4x8xf32>
    %188 = arith.mulf %187, %186 : vector<4x8xf32>
    %189 = arith.addf %184, %188 : vector<4x8xf32>
    %c36 = arith.constant 36 : index
    %190 = memref.load %arg2[%c36] : memref<99xf32, #tpu.memory_space<smem>>
    %191 = vector.extract_strided_slice %2 {offsets = [2, 4], sizes = [4, 8], strides = [1, 1]} : vector<10x14xf32> to vector<4x8xf32>
    %192 = vector.broadcast %190 : f32 to vector<4x8xf32>
    %193 = arith.mulf %192, %191 : vector<4x8xf32>
    %194 = arith.addf %189, %193 : vector<4x8xf32>
    %c37 = arith.constant 37 : index
    %195 = memref.load %arg2[%c37] : memref<99xf32, #tpu.memory_space<smem>>
    %196 = vector.extract_strided_slice %5 {offsets = [2, 4], sizes = [4, 8], strides = [1, 1]} : vector<10x14xf32> to vector<4x8xf32>
    %197 = vector.broadcast %195 : f32 to vector<4x8xf32>
    %198 = arith.mulf %197, %196 : vector<4x8xf32>
    %199 = arith.addf %194, %198 : vector<4x8xf32>
    %c38 = arith.constant 38 : index
    %200 = memref.load %arg2[%c38] : memref<99xf32, #tpu.memory_space<smem>>
    %201 = vector.extract_strided_slice %2 {offsets = [2, 5], sizes = [4, 8], strides = [1, 1]} : vector<10x14xf32> to vector<4x8xf32>
    %202 = vector.broadcast %200 : f32 to vector<4x8xf32>
    %203 = arith.mulf %202, %201 : vector<4x8xf32>
    %204 = arith.addf %199, %203 : vector<4x8xf32>
    %c39 = arith.constant 39 : index
    %205 = memref.load %arg2[%c39] : memref<99xf32, #tpu.memory_space<smem>>
    %206 = vector.extract_strided_slice %5 {offsets = [2, 5], sizes = [4, 8], strides = [1, 1]} : vector<10x14xf32> to vector<4x8xf32>
    %207 = vector.broadcast %205 : f32 to vector<4x8xf32>
    %208 = arith.mulf %207, %206 : vector<4x8xf32>
    %209 = arith.addf %204, %208 : vector<4x8xf32>
    %c40 = arith.constant 40 : index
    %210 = memref.load %arg2[%c40] : memref<99xf32, #tpu.memory_space<smem>>
    %211 = vector.extract_strided_slice %2 {offsets = [2, 6], sizes = [4, 8], strides = [1, 1]} : vector<10x14xf32> to vector<4x8xf32>
    %212 = vector.broadcast %210 : f32 to vector<4x8xf32>
    %213 = arith.mulf %212, %211 : vector<4x8xf32>
    %214 = arith.addf %209, %213 : vector<4x8xf32>
    %c41 = arith.constant 41 : index
    %215 = memref.load %arg2[%c41] : memref<99xf32, #tpu.memory_space<smem>>
    %216 = vector.extract_strided_slice %5 {offsets = [2, 6], sizes = [4, 8], strides = [1, 1]} : vector<10x14xf32> to vector<4x8xf32>
    %217 = vector.broadcast %215 : f32 to vector<4x8xf32>
    %218 = arith.mulf %217, %216 : vector<4x8xf32>
    %219 = arith.addf %214, %218 : vector<4x8xf32>
    %c42 = arith.constant 42 : index
    %220 = memref.load %arg2[%c42] : memref<99xf32, #tpu.memory_space<smem>>
    %221 = vector.extract_strided_slice %2 {offsets = [3, 0], sizes = [4, 8], strides = [1, 1]} : vector<10x14xf32> to vector<4x8xf32>
    %222 = vector.broadcast %220 : f32 to vector<4x8xf32>
    %223 = arith.mulf %222, %221 : vector<4x8xf32>
    %224 = arith.addf %219, %223 : vector<4x8xf32>
    %c43 = arith.constant 43 : index
    %225 = memref.load %arg2[%c43] : memref<99xf32, #tpu.memory_space<smem>>
    %226 = vector.extract_strided_slice %5 {offsets = [3, 0], sizes = [4, 8], strides = [1, 1]} : vector<10x14xf32> to vector<4x8xf32>
    %227 = vector.broadcast %225 : f32 to vector<4x8xf32>
    %228 = arith.mulf %227, %226 : vector<4x8xf32>
    %229 = arith.addf %224, %228 : vector<4x8xf32>
    %c44 = arith.constant 44 : index
    %230 = memref.load %arg2[%c44] : memref<99xf32, #tpu.memory_space<smem>>
    %231 = vector.extract_strided_slice %2 {offsets = [3, 1], sizes = [4, 8], strides = [1, 1]} : vector<10x14xf32> to vector<4x8xf32>
    %232 = vector.broadcast %230 : f32 to vector<4x8xf32>
    %233 = arith.mulf %232, %231 : vector<4x8xf32>
    %234 = arith.addf %229, %233 : vector<4x8xf32>
    %c45 = arith.constant 45 : index
    %235 = memref.load %arg2[%c45] : memref<99xf32, #tpu.memory_space<smem>>
    %236 = vector.extract_strided_slice %5 {offsets = [3, 1], sizes = [4, 8], strides = [1, 1]} : vector<10x14xf32> to vector<4x8xf32>
    %237 = vector.broadcast %235 : f32 to vector<4x8xf32>
    %238 = arith.mulf %237, %236 : vector<4x8xf32>
    %239 = arith.addf %234, %238 : vector<4x8xf32>
    %c46 = arith.constant 46 : index
    %240 = memref.load %arg2[%c46] : memref<99xf32, #tpu.memory_space<smem>>
    %241 = vector.extract_strided_slice %2 {offsets = [3, 2], sizes = [4, 8], strides = [1, 1]} : vector<10x14xf32> to vector<4x8xf32>
    %242 = vector.broadcast %240 : f32 to vector<4x8xf32>
    %243 = arith.mulf %242, %241 : vector<4x8xf32>
    %244 = arith.addf %239, %243 : vector<4x8xf32>
    %c47 = arith.constant 47 : index
    %245 = memref.load %arg2[%c47] : memref<99xf32, #tpu.memory_space<smem>>
    %246 = vector.extract_strided_slice %5 {offsets = [3, 2], sizes = [4, 8], strides = [1, 1]} : vector<10x14xf32> to vector<4x8xf32>
    %247 = vector.broadcast %245 : f32 to vector<4x8xf32>
    %248 = arith.mulf %247, %246 : vector<4x8xf32>
    %249 = arith.addf %244, %248 : vector<4x8xf32>
    %c48 = arith.constant 48 : index
    %250 = memref.load %arg2[%c48] : memref<99xf32, #tpu.memory_space<smem>>
    %251 = vector.extract_strided_slice %2 {offsets = [3, 3], sizes = [4, 8], strides = [1, 1]} : vector<10x14xf32> to vector<4x8xf32>
    %252 = vector.broadcast %250 : f32 to vector<4x8xf32>
    %253 = arith.mulf %252, %251 : vector<4x8xf32>
    %254 = arith.addf %249, %253 : vector<4x8xf32>
    %c49 = arith.constant 49 : index
    %255 = memref.load %arg2[%c49] : memref<99xf32, #tpu.memory_space<smem>>
    %256 = vector.extract_strided_slice %5 {offsets = [3, 3], sizes = [4, 8], strides = [1, 1]} : vector<10x14xf32> to vector<4x8xf32>
    %257 = vector.broadcast %255 : f32 to vector<4x8xf32>
    %258 = arith.mulf %257, %256 : vector<4x8xf32>
    %259 = arith.addf %254, %258 : vector<4x8xf32>
    %c50 = arith.constant 50 : index
    %260 = memref.load %arg2[%c50] : memref<99xf32, #tpu.memory_space<smem>>
    %261 = vector.extract_strided_slice %2 {offsets = [3, 4], sizes = [4, 8], strides = [1, 1]} : vector<10x14xf32> to vector<4x8xf32>
    %262 = vector.broadcast %260 : f32 to vector<4x8xf32>
    %263 = arith.mulf %262, %261 : vector<4x8xf32>
    %264 = arith.addf %259, %263 : vector<4x8xf32>
    %c51 = arith.constant 51 : index
    %265 = memref.load %arg2[%c51] : memref<99xf32, #tpu.memory_space<smem>>
    %266 = vector.extract_strided_slice %5 {offsets = [3, 4], sizes = [4, 8], strides = [1, 1]} : vector<10x14xf32> to vector<4x8xf32>
    %267 = vector.broadcast %265 : f32 to vector<4x8xf32>
    %268 = arith.mulf %267, %266 : vector<4x8xf32>
    %269 = arith.addf %264, %268 : vector<4x8xf32>
    %c52 = arith.constant 52 : index
    %270 = memref.load %arg2[%c52] : memref<99xf32, #tpu.memory_space<smem>>
    %271 = vector.extract_strided_slice %2 {offsets = [3, 5], sizes = [4, 8], strides = [1, 1]} : vector<10x14xf32> to vector<4x8xf32>
    %272 = vector.broadcast %270 : f32 to vector<4x8xf32>
    %273 = arith.mulf %272, %271 : vector<4x8xf32>
    %274 = arith.addf %269, %273 : vector<4x8xf32>
    %c53 = arith.constant 53 : index
    %275 = memref.load %arg2[%c53] : memref<99xf32, #tpu.memory_space<smem>>
    %276 = vector.extract_strided_slice %5 {offsets = [3, 5], sizes = [4, 8], strides = [1, 1]} : vector<10x14xf32> to vector<4x8xf32>
    %277 = vector.broadcast %275 : f32 to vector<4x8xf32>
    %278 = arith.mulf %277, %276 : vector<4x8xf32>
    %279 = arith.addf %274, %278 : vector<4x8xf32>
    %c54 = arith.constant 54 : index
    %280 = memref.load %arg2[%c54] : memref<99xf32, #tpu.memory_space<smem>>
    %281 = vector.extract_strided_slice %2 {offsets = [3, 6], sizes = [4, 8], strides = [1, 1]} : vector<10x14xf32> to vector<4x8xf32>
    %282 = vector.broadcast %280 : f32 to vector<4x8xf32>
    %283 = arith.mulf %282, %281 : vector<4x8xf32>
    %284 = arith.addf %279, %283 : vector<4x8xf32>
    %c55 = arith.constant 55 : index
    %285 = memref.load %arg2[%c55] : memref<99xf32, #tpu.memory_space<smem>>
    %286 = vector.extract_strided_slice %5 {offsets = [3, 6], sizes = [4, 8], strides = [1, 1]} : vector<10x14xf32> to vector<4x8xf32>
    %287 = vector.broadcast %285 : f32 to vector<4x8xf32>
    %288 = arith.mulf %287, %286 : vector<4x8xf32>
    %289 = arith.addf %284, %288 : vector<4x8xf32>
    %c56 = arith.constant 56 : index
    %290 = memref.load %arg2[%c56] : memref<99xf32, #tpu.memory_space<smem>>
    %291 = vector.extract_strided_slice %2 {offsets = [4, 0], sizes = [4, 8], strides = [1, 1]} : vector<10x14xf32> to vector<4x8xf32>
    %292 = vector.broadcast %290 : f32 to vector<4x8xf32>
    %293 = arith.mulf %292, %291 : vector<4x8xf32>
    %294 = arith.addf %289, %293 : vector<4x8xf32>
    %c57 = arith.constant 57 : index
    %295 = memref.load %arg2[%c57] : memref<99xf32, #tpu.memory_space<smem>>
    %296 = vector.extract_strided_slice %5 {offsets = [4, 0], sizes = [4, 8], strides = [1, 1]} : vector<10x14xf32> to vector<4x8xf32>
    %297 = vector.broadcast %295 : f32 to vector<4x8xf32>
    %298 = arith.mulf %297, %296 : vector<4x8xf32>
    %299 = arith.addf %294, %298 : vector<4x8xf32>
    %c58 = arith.constant 58 : index
    %300 = memref.load %arg2[%c58] : memref<99xf32, #tpu.memory_space<smem>>
    %301 = vector.extract_strided_slice %2 {offsets = [4, 1], sizes = [4, 8], strides = [1, 1]} : vector<10x14xf32> to vector<4x8xf32>
    %302 = vector.broadcast %300 : f32 to vector<4x8xf32>
    %303 = arith.mulf %302, %301 : vector<4x8xf32>
    %304 = arith.addf %299, %303 : vector<4x8xf32>
    %c59 = arith.constant 59 : index
    %305 = memref.load %arg2[%c59] : memref<99xf32, #tpu.memory_space<smem>>
    %306 = vector.extract_strided_slice %5 {offsets = [4, 1], sizes = [4, 8], strides = [1, 1]} : vector<10x14xf32> to vector<4x8xf32>
    %307 = vector.broadcast %305 : f32 to vector<4x8xf32>
    %308 = arith.mulf %307, %306 : vector<4x8xf32>
    %309 = arith.addf %304, %308 : vector<4x8xf32>
    %c60 = arith.constant 60 : index
    %310 = memref.load %arg2[%c60] : memref<99xf32, #tpu.memory_space<smem>>
    %311 = vector.extract_strided_slice %2 {offsets = [4, 2], sizes = [4, 8], strides = [1, 1]} : vector<10x14xf32> to vector<4x8xf32>
    %312 = vector.broadcast %310 : f32 to vector<4x8xf32>
    %313 = arith.mulf %312, %311 : vector<4x8xf32>
    %314 = arith.addf %309, %313 : vector<4x8xf32>
    %c61 = arith.constant 61 : index
    %315 = memref.load %arg2[%c61] : memref<99xf32, #tpu.memory_space<smem>>
    %316 = vector.extract_strided_slice %5 {offsets = [4, 2], sizes = [4, 8], strides = [1, 1]} : vector<10x14xf32> to vector<4x8xf32>
    %317 = vector.broadcast %315 : f32 to vector<4x8xf32>
    %318 = arith.mulf %317, %316 : vector<4x8xf32>
    %319 = arith.addf %314, %318 : vector<4x8xf32>
    %c62 = arith.constant 62 : index
    %320 = memref.load %arg2[%c62] : memref<99xf32, #tpu.memory_space<smem>>
    %321 = vector.extract_strided_slice %2 {offsets = [4, 3], sizes = [4, 8], strides = [1, 1]} : vector<10x14xf32> to vector<4x8xf32>
    %322 = vector.broadcast %320 : f32 to vector<4x8xf32>
    %323 = arith.mulf %322, %321 : vector<4x8xf32>
    %324 = arith.addf %319, %323 : vector<4x8xf32>
    %c63 = arith.constant 63 : index
    %325 = memref.load %arg2[%c63] : memref<99xf32, #tpu.memory_space<smem>>
    %326 = vector.extract_strided_slice %5 {offsets = [4, 3], sizes = [4, 8], strides = [1, 1]} : vector<10x14xf32> to vector<4x8xf32>
    %327 = vector.broadcast %325 : f32 to vector<4x8xf32>
    %328 = arith.mulf %327, %326 : vector<4x8xf32>
    %329 = arith.addf %324, %328 : vector<4x8xf32>
    %c64 = arith.constant 64 : index
    %330 = memref.load %arg2[%c64] : memref<99xf32, #tpu.memory_space<smem>>
    %331 = vector.extract_strided_slice %2 {offsets = [4, 4], sizes = [4, 8], strides = [1, 1]} : vector<10x14xf32> to vector<4x8xf32>
    %332 = vector.broadcast %330 : f32 to vector<4x8xf32>
    %333 = arith.mulf %332, %331 : vector<4x8xf32>
    %334 = arith.addf %329, %333 : vector<4x8xf32>
    %c65 = arith.constant 65 : index
    %335 = memref.load %arg2[%c65] : memref<99xf32, #tpu.memory_space<smem>>
    %336 = vector.extract_strided_slice %5 {offsets = [4, 4], sizes = [4, 8], strides = [1, 1]} : vector<10x14xf32> to vector<4x8xf32>
    %337 = vector.broadcast %335 : f32 to vector<4x8xf32>
    %338 = arith.mulf %337, %336 : vector<4x8xf32>
    %339 = arith.addf %334, %338 : vector<4x8xf32>
    %c66 = arith.constant 66 : index
    %340 = memref.load %arg2[%c66] : memref<99xf32, #tpu.memory_space<smem>>
    %341 = vector.extract_strided_slice %2 {offsets = [4, 5], sizes = [4, 8], strides = [1, 1]} : vector<10x14xf32> to vector<4x8xf32>
    %342 = vector.broadcast %340 : f32 to vector<4x8xf32>
    %343 = arith.mulf %342, %341 : vector<4x8xf32>
    %344 = arith.addf %339, %343 : vector<4x8xf32>
    %c67 = arith.constant 67 : index
    %345 = memref.load %arg2[%c67] : memref<99xf32, #tpu.memory_space<smem>>
    %346 = vector.extract_strided_slice %5 {offsets = [4, 5], sizes = [4, 8], strides = [1, 1]} : vector<10x14xf32> to vector<4x8xf32>
    %347 = vector.broadcast %345 : f32 to vector<4x8xf32>
    %348 = arith.mulf %347, %346 : vector<4x8xf32>
    %349 = arith.addf %344, %348 : vector<4x8xf32>
    %c68 = arith.constant 68 : index
    %350 = memref.load %arg2[%c68] : memref<99xf32, #tpu.memory_space<smem>>
    %351 = vector.extract_strided_slice %2 {offsets = [4, 6], sizes = [4, 8], strides = [1, 1]} : vector<10x14xf32> to vector<4x8xf32>
    %352 = vector.broadcast %350 : f32 to vector<4x8xf32>
    %353 = arith.mulf %352, %351 : vector<4x8xf32>
    %354 = arith.addf %349, %353 : vector<4x8xf32>
    %c69 = arith.constant 69 : index
    %355 = memref.load %arg2[%c69] : memref<99xf32, #tpu.memory_space<smem>>
    %356 = vector.extract_strided_slice %5 {offsets = [4, 6], sizes = [4, 8], strides = [1, 1]} : vector<10x14xf32> to vector<4x8xf32>
    %357 = vector.broadcast %355 : f32 to vector<4x8xf32>
    %358 = arith.mulf %357, %356 : vector<4x8xf32>
    %359 = arith.addf %354, %358 : vector<4x8xf32>
    %c70 = arith.constant 70 : index
    %360 = memref.load %arg2[%c70] : memref<99xf32, #tpu.memory_space<smem>>
    %361 = vector.extract_strided_slice %2 {offsets = [5, 0], sizes = [4, 8], strides = [1, 1]} : vector<10x14xf32> to vector<4x8xf32>
    %362 = vector.broadcast %360 : f32 to vector<4x8xf32>
    %363 = arith.mulf %362, %361 : vector<4x8xf32>
    %364 = arith.addf %359, %363 : vector<4x8xf32>
    %c71 = arith.constant 71 : index
    %365 = memref.load %arg2[%c71] : memref<99xf32, #tpu.memory_space<smem>>
    %366 = vector.extract_strided_slice %5 {offsets = [5, 0], sizes = [4, 8], strides = [1, 1]} : vector<10x14xf32> to vector<4x8xf32>
    %367 = vector.broadcast %365 : f32 to vector<4x8xf32>
    %368 = arith.mulf %367, %366 : vector<4x8xf32>
    %369 = arith.addf %364, %368 : vector<4x8xf32>
    %c72 = arith.constant 72 : index
    %370 = memref.load %arg2[%c72] : memref<99xf32, #tpu.memory_space<smem>>
    %371 = vector.extract_strided_slice %2 {offsets = [5, 1], sizes = [4, 8], strides = [1, 1]} : vector<10x14xf32> to vector<4x8xf32>
    %372 = vector.broadcast %370 : f32 to vector<4x8xf32>
    %373 = arith.mulf %372, %371 : vector<4x8xf32>
    %374 = arith.addf %369, %373 : vector<4x8xf32>
    %c73 = arith.constant 73 : index
    %375 = memref.load %arg2[%c73] : memref<99xf32, #tpu.memory_space<smem>>
    %376 = vector.extract_strided_slice %5 {offsets = [5, 1], sizes = [4, 8], strides = [1, 1]} : vector<10x14xf32> to vector<4x8xf32>
    %377 = vector.broadcast %375 : f32 to vector<4x8xf32>
    %378 = arith.mulf %377, %376 : vector<4x8xf32>
    %379 = arith.addf %374, %378 : vector<4x8xf32>
    %c74 = arith.constant 74 : index
    %380 = memref.load %arg2[%c74] : memref<99xf32, #tpu.memory_space<smem>>
    %381 = vector.extract_strided_slice %2 {offsets = [5, 2], sizes = [4, 8], strides = [1, 1]} : vector<10x14xf32> to vector<4x8xf32>
    %382 = vector.broadcast %380 : f32 to vector<4x8xf32>
    %383 = arith.mulf %382, %381 : vector<4x8xf32>
    %384 = arith.addf %379, %383 : vector<4x8xf32>
    %c75 = arith.constant 75 : index
    %385 = memref.load %arg2[%c75] : memref<99xf32, #tpu.memory_space<smem>>
    %386 = vector.extract_strided_slice %5 {offsets = [5, 2], sizes = [4, 8], strides = [1, 1]} : vector<10x14xf32> to vector<4x8xf32>
    %387 = vector.broadcast %385 : f32 to vector<4x8xf32>
    %388 = arith.mulf %387, %386 : vector<4x8xf32>
    %389 = arith.addf %384, %388 : vector<4x8xf32>
    %c76 = arith.constant 76 : index
    %390 = memref.load %arg2[%c76] : memref<99xf32, #tpu.memory_space<smem>>
    %391 = vector.extract_strided_slice %2 {offsets = [5, 3], sizes = [4, 8], strides = [1, 1]} : vector<10x14xf32> to vector<4x8xf32>
    %392 = vector.broadcast %390 : f32 to vector<4x8xf32>
    %393 = arith.mulf %392, %391 : vector<4x8xf32>
    %394 = arith.addf %389, %393 : vector<4x8xf32>
    %c77 = arith.constant 77 : index
    %395 = memref.load %arg2[%c77] : memref<99xf32, #tpu.memory_space<smem>>
    %396 = vector.extract_strided_slice %5 {offsets = [5, 3], sizes = [4, 8], strides = [1, 1]} : vector<10x14xf32> to vector<4x8xf32>
    %397 = vector.broadcast %395 : f32 to vector<4x8xf32>
    %398 = arith.mulf %397, %396 : vector<4x8xf32>
    %399 = arith.addf %394, %398 : vector<4x8xf32>
    %c78 = arith.constant 78 : index
    %400 = memref.load %arg2[%c78] : memref<99xf32, #tpu.memory_space<smem>>
    %401 = vector.extract_strided_slice %2 {offsets = [5, 4], sizes = [4, 8], strides = [1, 1]} : vector<10x14xf32> to vector<4x8xf32>
    %402 = vector.broadcast %400 : f32 to vector<4x8xf32>
    %403 = arith.mulf %402, %401 : vector<4x8xf32>
    %404 = arith.addf %399, %403 : vector<4x8xf32>
    %c79 = arith.constant 79 : index
    %405 = memref.load %arg2[%c79] : memref<99xf32, #tpu.memory_space<smem>>
    %406 = vector.extract_strided_slice %5 {offsets = [5, 4], sizes = [4, 8], strides = [1, 1]} : vector<10x14xf32> to vector<4x8xf32>
    %407 = vector.broadcast %405 : f32 to vector<4x8xf32>
    %408 = arith.mulf %407, %406 : vector<4x8xf32>
    %409 = arith.addf %404, %408 : vector<4x8xf32>
    %c80 = arith.constant 80 : index
    %410 = memref.load %arg2[%c80] : memref<99xf32, #tpu.memory_space<smem>>
    %411 = vector.extract_strided_slice %2 {offsets = [5, 5], sizes = [4, 8], strides = [1, 1]} : vector<10x14xf32> to vector<4x8xf32>
    %412 = vector.broadcast %410 : f32 to vector<4x8xf32>
    %413 = arith.mulf %412, %411 : vector<4x8xf32>
    %414 = arith.addf %409, %413 : vector<4x8xf32>
    %c81 = arith.constant 81 : index
    %415 = memref.load %arg2[%c81] : memref<99xf32, #tpu.memory_space<smem>>
    %416 = vector.extract_strided_slice %5 {offsets = [5, 5], sizes = [4, 8], strides = [1, 1]} : vector<10x14xf32> to vector<4x8xf32>
    %417 = vector.broadcast %415 : f32 to vector<4x8xf32>
    %418 = arith.mulf %417, %416 : vector<4x8xf32>
    %419 = arith.addf %414, %418 : vector<4x8xf32>
    %c82 = arith.constant 82 : index
    %420 = memref.load %arg2[%c82] : memref<99xf32, #tpu.memory_space<smem>>
    %421 = vector.extract_strided_slice %2 {offsets = [5, 6], sizes = [4, 8], strides = [1, 1]} : vector<10x14xf32> to vector<4x8xf32>
    %422 = vector.broadcast %420 : f32 to vector<4x8xf32>
    %423 = arith.mulf %422, %421 : vector<4x8xf32>
    %424 = arith.addf %419, %423 : vector<4x8xf32>
    %c83 = arith.constant 83 : index
    %425 = memref.load %arg2[%c83] : memref<99xf32, #tpu.memory_space<smem>>
    %426 = vector.extract_strided_slice %5 {offsets = [5, 6], sizes = [4, 8], strides = [1, 1]} : vector<10x14xf32> to vector<4x8xf32>
    %427 = vector.broadcast %425 : f32 to vector<4x8xf32>
    %428 = arith.mulf %427, %426 : vector<4x8xf32>
    %429 = arith.addf %424, %428 : vector<4x8xf32>
    %c84 = arith.constant 84 : index
    %430 = memref.load %arg2[%c84] : memref<99xf32, #tpu.memory_space<smem>>
    %431 = vector.extract_strided_slice %2 {offsets = [6, 0], sizes = [4, 8], strides = [1, 1]} : vector<10x14xf32> to vector<4x8xf32>
    %432 = vector.broadcast %430 : f32 to vector<4x8xf32>
    %433 = arith.mulf %432, %431 : vector<4x8xf32>
    %434 = arith.addf %429, %433 : vector<4x8xf32>
    %c85 = arith.constant 85 : index
    %435 = memref.load %arg2[%c85] : memref<99xf32, #tpu.memory_space<smem>>
    %436 = vector.extract_strided_slice %5 {offsets = [6, 0], sizes = [4, 8], strides = [1, 1]} : vector<10x14xf32> to vector<4x8xf32>
    %437 = vector.broadcast %435 : f32 to vector<4x8xf32>
    %438 = arith.mulf %437, %436 : vector<4x8xf32>
    %439 = arith.addf %434, %438 : vector<4x8xf32>
    %c86 = arith.constant 86 : index
    %440 = memref.load %arg2[%c86] : memref<99xf32, #tpu.memory_space<smem>>
    %441 = vector.extract_strided_slice %2 {offsets = [6, 1], sizes = [4, 8], strides = [1, 1]} : vector<10x14xf32> to vector<4x8xf32>
    %442 = vector.broadcast %440 : f32 to vector<4x8xf32>
    %443 = arith.mulf %442, %441 : vector<4x8xf32>
    %444 = arith.addf %439, %443 : vector<4x8xf32>
    %c87 = arith.constant 87 : index
    %445 = memref.load %arg2[%c87] : memref<99xf32, #tpu.memory_space<smem>>
    %446 = vector.extract_strided_slice %5 {offsets = [6, 1], sizes = [4, 8], strides = [1, 1]} : vector<10x14xf32> to vector<4x8xf32>
    %447 = vector.broadcast %445 : f32 to vector<4x8xf32>
    %448 = arith.mulf %447, %446 : vector<4x8xf32>
    %449 = arith.addf %444, %448 : vector<4x8xf32>
    %c88 = arith.constant 88 : index
    %450 = memref.load %arg2[%c88] : memref<99xf32, #tpu.memory_space<smem>>
    %451 = vector.extract_strided_slice %2 {offsets = [6, 2], sizes = [4, 8], strides = [1, 1]} : vector<10x14xf32> to vector<4x8xf32>
    %452 = vector.broadcast %450 : f32 to vector<4x8xf32>
    %453 = arith.mulf %452, %451 : vector<4x8xf32>
    %454 = arith.addf %449, %453 : vector<4x8xf32>
    %c89 = arith.constant 89 : index
    %455 = memref.load %arg2[%c89] : memref<99xf32, #tpu.memory_space<smem>>
    %456 = vector.extract_strided_slice %5 {offsets = [6, 2], sizes = [4, 8], strides = [1, 1]} : vector<10x14xf32> to vector<4x8xf32>
    %457 = vector.broadcast %455 : f32 to vector<4x8xf32>
    %458 = arith.mulf %457, %456 : vector<4x8xf32>
    %459 = arith.addf %454, %458 : vector<4x8xf32>
    %c90 = arith.constant 90 : index
    %460 = memref.load %arg2[%c90] : memref<99xf32, #tpu.memory_space<smem>>
    %461 = vector.extract_strided_slice %2 {offsets = [6, 3], sizes = [4, 8], strides = [1, 1]} : vector<10x14xf32> to vector<4x8xf32>
    %462 = vector.broadcast %460 : f32 to vector<4x8xf32>
    %463 = arith.mulf %462, %461 : vector<4x8xf32>
    %464 = arith.addf %459, %463 : vector<4x8xf32>
    %c91 = arith.constant 91 : index
    %465 = memref.load %arg2[%c91] : memref<99xf32, #tpu.memory_space<smem>>
    %466 = vector.extract_strided_slice %5 {offsets = [6, 3], sizes = [4, 8], strides = [1, 1]} : vector<10x14xf32> to vector<4x8xf32>
    %467 = vector.broadcast %465 : f32 to vector<4x8xf32>
    %468 = arith.mulf %467, %466 : vector<4x8xf32>
    %469 = arith.addf %464, %468 : vector<4x8xf32>
    %c92 = arith.constant 92 : index
    %470 = memref.load %arg2[%c92] : memref<99xf32, #tpu.memory_space<smem>>
    %471 = vector.extract_strided_slice %2 {offsets = [6, 4], sizes = [4, 8], strides = [1, 1]} : vector<10x14xf32> to vector<4x8xf32>
    %472 = vector.broadcast %470 : f32 to vector<4x8xf32>
    %473 = arith.mulf %472, %471 : vector<4x8xf32>
    %474 = arith.addf %469, %473 : vector<4x8xf32>
    %c93 = arith.constant 93 : index
    %475 = memref.load %arg2[%c93] : memref<99xf32, #tpu.memory_space<smem>>
    %476 = vector.extract_strided_slice %5 {offsets = [6, 4], sizes = [4, 8], strides = [1, 1]} : vector<10x14xf32> to vector<4x8xf32>
    %477 = vector.broadcast %475 : f32 to vector<4x8xf32>
    %478 = arith.mulf %477, %476 : vector<4x8xf32>
    %479 = arith.addf %474, %478 : vector<4x8xf32>
    %c94 = arith.constant 94 : index
    %480 = memref.load %arg2[%c94] : memref<99xf32, #tpu.memory_space<smem>>
    %481 = vector.extract_strided_slice %2 {offsets = [6, 5], sizes = [4, 8], strides = [1, 1]} : vector<10x14xf32> to vector<4x8xf32>
    %482 = vector.broadcast %480 : f32 to vector<4x8xf32>
    %483 = arith.mulf %482, %481 : vector<4x8xf32>
    %484 = arith.addf %479, %483 : vector<4x8xf32>
    %c95 = arith.constant 95 : index
    %485 = memref.load %arg2[%c95] : memref<99xf32, #tpu.memory_space<smem>>
    %486 = vector.extract_strided_slice %5 {offsets = [6, 5], sizes = [4, 8], strides = [1, 1]} : vector<10x14xf32> to vector<4x8xf32>
    %487 = vector.broadcast %485 : f32 to vector<4x8xf32>
    %488 = arith.mulf %487, %486 : vector<4x8xf32>
    %489 = arith.addf %484, %488 : vector<4x8xf32>
    %c96 = arith.constant 96 : index
    %490 = memref.load %arg2[%c96] : memref<99xf32, #tpu.memory_space<smem>>
    %491 = vector.extract_strided_slice %2 {offsets = [6, 6], sizes = [4, 8], strides = [1, 1]} : vector<10x14xf32> to vector<4x8xf32>
    %492 = vector.broadcast %490 : f32 to vector<4x8xf32>
    %493 = arith.mulf %492, %491 : vector<4x8xf32>
    %494 = arith.addf %489, %493 : vector<4x8xf32>
    %c97 = arith.constant 97 : index
    %495 = memref.load %arg2[%c97] : memref<99xf32, #tpu.memory_space<smem>>
    %496 = vector.extract_strided_slice %5 {offsets = [6, 6], sizes = [4, 8], strides = [1, 1]} : vector<10x14xf32> to vector<4x8xf32>
    %497 = vector.broadcast %495 : f32 to vector<4x8xf32>
    %498 = arith.mulf %497, %496 : vector<4x8xf32>
    %499 = arith.addf %494, %498 : vector<4x8xf32>
    %500 = arith.negf %499 : vector<4x8xf32>
    %501 = math.exp %500 : vector<4x8xf32>
    %cst_7 = arith.constant 1.000000e+00 : f32
    %502 = vector.broadcast %cst_7 : f32 to vector<4x8xf32>
    %503 = arith.addf %502, %501 : vector<4x8xf32>
    %504 = arith.divf %502, %503 : vector<4x8xf32>
    %505 = vector.extract_strided_slice %1 {offsets = [0, 3, 3], sizes = [4, 4, 8], strides = [1, 1, 1]} : vector<4x10x14xf32> to vector<4x4x8xf32>
    %506 = vector.shape_cast %504 : vector<4x8xf32> to vector<1x4x8xf32>
    %507 = vector.broadcast %506 : vector<1x4x8xf32> to vector<4x4x8xf32>
    %508 = arith.mulf %505, %507 : vector<4x4x8xf32>
    %509 = vector.shape_cast %508 : vector<4x4x8xf32> to vector<1x4x4x8xf32>
    %c0_8 = arith.constant 0 : index
    %c0_9 = arith.constant 0 : index
    %c0_10 = arith.constant 0 : index
    %c0_11 = arith.constant 0 : index
    %510 = vector.load %arg3[%c0_8, %c0_9, %c0_10, %c0_11] : memref<1x4x4x8xf32, #tpu.memory_space<vmem>>, vector<1x4x4x8xf32>
    tpu.vector_store %arg3[%c0_8, %c0_9, %c0_10, %c0_11], %509 {strides = array<i32>} : memref<1x4x4x8xf32, #tpu.memory_space<vmem>>, vector<1x4x4x8xf32>,
    return
  }
  func.func @transform_0(%arg0: i32) -> (i32, i32, i32, i32) {
    %c0_i32 = arith.constant 0 : i32
    %c0_i32_0 = arith.constant 0 : i32
    %c0_i32_1 = arith.constant 0 : i32
    %c0_i32_2 = arith.constant 0 : i32
    return %arg0, %c0_i32, %c0_i32_0, %c0_i32_1 : i32, i32, i32, i32
  }
  func.func @transform_1(%arg0: i32) -> i32 {
    %c0_i32 = arith.constant 0 : i32
    %c0_i32_0 = arith.constant 0 : i32
    return %c0_i32 : i32
  }
  func.func @transform_2(%arg0: i32) -> (i32, i32, i32, i32) {
    %c0_i32 = arith.constant 0 : i32
    %c0_i32_0 = arith.constant 0 : i32
    %c0_i32_1 = arith.constant 0 : i32
    %c0_i32_2 = arith.constant 0 : i32
    return %arg0, %c0_i32, %c0_i32_0, %c0_i32_1 : i32, i32, i32, i32
  }
}

module attributes {stable_mosaic.version = 11 : i64} {
  func.func @_fused_gate_kernel(%arg0: i32, %arg1: memref<1x4x14x10xf32, #tpu.memory_space<vmem>>, %arg2: memref<99xf32, #tpu.memory_space<smem>>, %arg3: memref<1x4x8x4xf32, #tpu.memory_space<vmem>>) attributes {dimension_semantics = [#tpu.dimension_semantics<parallel>], iteration_bounds = array<i64: 2>, scalar_prefetch = 0 : i64, scratch_operands = 0 : i64, tpu.core_type = #tpu.core_type<tc>, window_params = [{transform_indices = @transform_0, window_bounds = array<i64: 1, 4, 14, 10>}, {transform_indices = @transform_1, window_bounds = array<i64: 99>}, {transform_indices = @transform_2, window_bounds = array<i64: 1, 4, 8, 4>}]} {
    %c0 = arith.constant 0 : index
    %c0_0 = arith.constant 0 : index
    %c0_1 = arith.constant 0 : index
    %c0_2 = arith.constant 0 : index
    %0 = vector.load %arg1[%c0, %c0_0, %c0_1, %c0_2] : memref<1x4x14x10xf32, #tpu.memory_space<vmem>>, vector<1x4x14x10xf32>
    %1 = vector.shape_cast %0 : vector<1x4x14x10xf32> to vector<4x14x10xf32>
    %cst = arith.constant dense<0xFF800000> : vector<14x10xf32>
    %2 = vector.multi_reduction <maximumf>, %1, %cst [0] : vector<4x14x10xf32> to vector<14x10xf32>
    %cst_3 = arith.constant dense<0.000000e+00> : vector<14x10xf32>
    %3 = vector.multi_reduction <add>, %1, %cst_3 [0] : vector<4x14x10xf32> to vector<14x10xf32>
    %cst_4 = arith.constant 4.000000e+00 : f32
    %4 = vector.broadcast %cst_4 : f32 to vector<14x10xf32>
    %5 = arith.divf %3, %4 : vector<14x10xf32>
    %cst_5 = arith.constant 0.000000e+00 : f32
    %6 = vector.broadcast %cst_5 : f32 to vector<8x4xf32>
    %c98 = arith.constant 98 : index
    %7 = memref.load %arg2[%c98] : memref<99xf32, #tpu.memory_space<smem>>
    %8 = vector.broadcast %7 : f32 to vector<8x4xf32>
    %9 = arith.addf %6, %8 : vector<8x4xf32>
    %c0_6 = arith.constant 0 : index
    %10 = memref.load %arg2[%c0_6] : memref<99xf32, #tpu.memory_space<smem>>
    %11 = vector.extract_strided_slice %2 {offsets = [0, 0], sizes = [8, 4], strides = [1, 1]} : vector<14x10xf32> to vector<8x4xf32>
    %12 = vector.broadcast %10 : f32 to vector<8x4xf32>
    %13 = arith.mulf %12, %11 : vector<8x4xf32>
    %14 = arith.addf %9, %13 : vector<8x4xf32>
    %c1 = arith.constant 1 : index
    %15 = memref.load %arg2[%c1] : memref<99xf32, #tpu.memory_space<smem>>
    %16 = vector.extract_strided_slice %5 {offsets = [0, 0], sizes = [8, 4], strides = [1, 1]} : vector<14x10xf32> to vector<8x4xf32>
    %17 = vector.broadcast %15 : f32 to vector<8x4xf32>
    %18 = arith.mulf %17, %16 : vector<8x4xf32>
    %19 = arith.addf %14, %18 : vector<8x4xf32>
    %c2 = arith.constant 2 : index
    %20 = memref.load %arg2[%c2] : memref<99xf32, #tpu.memory_space<smem>>
    %21 = vector.extract_strided_slice %2 {offsets = [0, 1], sizes = [8, 4], strides = [1, 1]} : vector<14x10xf32> to vector<8x4xf32>
    %22 = vector.broadcast %20 : f32 to vector<8x4xf32>
    %23 = arith.mulf %22, %21 : vector<8x4xf32>
    %24 = arith.addf %19, %23 : vector<8x4xf32>
    %c3 = arith.constant 3 : index
    %25 = memref.load %arg2[%c3] : memref<99xf32, #tpu.memory_space<smem>>
    %26 = vector.extract_strided_slice %5 {offsets = [0, 1], sizes = [8, 4], strides = [1, 1]} : vector<14x10xf32> to vector<8x4xf32>
    %27 = vector.broadcast %25 : f32 to vector<8x4xf32>
    %28 = arith.mulf %27, %26 : vector<8x4xf32>
    %29 = arith.addf %24, %28 : vector<8x4xf32>
    %c4 = arith.constant 4 : index
    %30 = memref.load %arg2[%c4] : memref<99xf32, #tpu.memory_space<smem>>
    %31 = vector.extract_strided_slice %2 {offsets = [0, 2], sizes = [8, 4], strides = [1, 1]} : vector<14x10xf32> to vector<8x4xf32>
    %32 = vector.broadcast %30 : f32 to vector<8x4xf32>
    %33 = arith.mulf %32, %31 : vector<8x4xf32>
    %34 = arith.addf %29, %33 : vector<8x4xf32>
    %c5 = arith.constant 5 : index
    %35 = memref.load %arg2[%c5] : memref<99xf32, #tpu.memory_space<smem>>
    %36 = vector.extract_strided_slice %5 {offsets = [0, 2], sizes = [8, 4], strides = [1, 1]} : vector<14x10xf32> to vector<8x4xf32>
    %37 = vector.broadcast %35 : f32 to vector<8x4xf32>
    %38 = arith.mulf %37, %36 : vector<8x4xf32>
    %39 = arith.addf %34, %38 : vector<8x4xf32>
    %c6 = arith.constant 6 : index
    %40 = memref.load %arg2[%c6] : memref<99xf32, #tpu.memory_space<smem>>
    %41 = vector.extract_strided_slice %2 {offsets = [0, 3], sizes = [8, 4], strides = [1, 1]} : vector<14x10xf32> to vector<8x4xf32>
    %42 = vector.broadcast %40 : f32 to vector<8x4xf32>
    %43 = arith.mulf %42, %41 : vector<8x4xf32>
    %44 = arith.addf %39, %43 : vector<8x4xf32>
    %c7 = arith.constant 7 : index
    %45 = memref.load %arg2[%c7] : memref<99xf32, #tpu.memory_space<smem>>
    %46 = vector.extract_strided_slice %5 {offsets = [0, 3], sizes = [8, 4], strides = [1, 1]} : vector<14x10xf32> to vector<8x4xf32>
    %47 = vector.broadcast %45 : f32 to vector<8x4xf32>
    %48 = arith.mulf %47, %46 : vector<8x4xf32>
    %49 = arith.addf %44, %48 : vector<8x4xf32>
    %c8 = arith.constant 8 : index
    %50 = memref.load %arg2[%c8] : memref<99xf32, #tpu.memory_space<smem>>
    %51 = vector.extract_strided_slice %2 {offsets = [0, 4], sizes = [8, 4], strides = [1, 1]} : vector<14x10xf32> to vector<8x4xf32>
    %52 = vector.broadcast %50 : f32 to vector<8x4xf32>
    %53 = arith.mulf %52, %51 : vector<8x4xf32>
    %54 = arith.addf %49, %53 : vector<8x4xf32>
    %c9 = arith.constant 9 : index
    %55 = memref.load %arg2[%c9] : memref<99xf32, #tpu.memory_space<smem>>
    %56 = vector.extract_strided_slice %5 {offsets = [0, 4], sizes = [8, 4], strides = [1, 1]} : vector<14x10xf32> to vector<8x4xf32>
    %57 = vector.broadcast %55 : f32 to vector<8x4xf32>
    %58 = arith.mulf %57, %56 : vector<8x4xf32>
    %59 = arith.addf %54, %58 : vector<8x4xf32>
    %c10 = arith.constant 10 : index
    %60 = memref.load %arg2[%c10] : memref<99xf32, #tpu.memory_space<smem>>
    %61 = vector.extract_strided_slice %2 {offsets = [0, 5], sizes = [8, 4], strides = [1, 1]} : vector<14x10xf32> to vector<8x4xf32>
    %62 = vector.broadcast %60 : f32 to vector<8x4xf32>
    %63 = arith.mulf %62, %61 : vector<8x4xf32>
    %64 = arith.addf %59, %63 : vector<8x4xf32>
    %c11 = arith.constant 11 : index
    %65 = memref.load %arg2[%c11] : memref<99xf32, #tpu.memory_space<smem>>
    %66 = vector.extract_strided_slice %5 {offsets = [0, 5], sizes = [8, 4], strides = [1, 1]} : vector<14x10xf32> to vector<8x4xf32>
    %67 = vector.broadcast %65 : f32 to vector<8x4xf32>
    %68 = arith.mulf %67, %66 : vector<8x4xf32>
    %69 = arith.addf %64, %68 : vector<8x4xf32>
    %c12 = arith.constant 12 : index
    %70 = memref.load %arg2[%c12] : memref<99xf32, #tpu.memory_space<smem>>
    %71 = vector.extract_strided_slice %2 {offsets = [0, 6], sizes = [8, 4], strides = [1, 1]} : vector<14x10xf32> to vector<8x4xf32>
    %72 = vector.broadcast %70 : f32 to vector<8x4xf32>
    %73 = arith.mulf %72, %71 : vector<8x4xf32>
    %74 = arith.addf %69, %73 : vector<8x4xf32>
    %c13 = arith.constant 13 : index
    %75 = memref.load %arg2[%c13] : memref<99xf32, #tpu.memory_space<smem>>
    %76 = vector.extract_strided_slice %5 {offsets = [0, 6], sizes = [8, 4], strides = [1, 1]} : vector<14x10xf32> to vector<8x4xf32>
    %77 = vector.broadcast %75 : f32 to vector<8x4xf32>
    %78 = arith.mulf %77, %76 : vector<8x4xf32>
    %79 = arith.addf %74, %78 : vector<8x4xf32>
    %c14 = arith.constant 14 : index
    %80 = memref.load %arg2[%c14] : memref<99xf32, #tpu.memory_space<smem>>
    %81 = vector.extract_strided_slice %2 {offsets = [1, 0], sizes = [8, 4], strides = [1, 1]} : vector<14x10xf32> to vector<8x4xf32>
    %82 = vector.broadcast %80 : f32 to vector<8x4xf32>
    %83 = arith.mulf %82, %81 : vector<8x4xf32>
    %84 = arith.addf %79, %83 : vector<8x4xf32>
    %c15 = arith.constant 15 : index
    %85 = memref.load %arg2[%c15] : memref<99xf32, #tpu.memory_space<smem>>
    %86 = vector.extract_strided_slice %5 {offsets = [1, 0], sizes = [8, 4], strides = [1, 1]} : vector<14x10xf32> to vector<8x4xf32>
    %87 = vector.broadcast %85 : f32 to vector<8x4xf32>
    %88 = arith.mulf %87, %86 : vector<8x4xf32>
    %89 = arith.addf %84, %88 : vector<8x4xf32>
    %c16 = arith.constant 16 : index
    %90 = memref.load %arg2[%c16] : memref<99xf32, #tpu.memory_space<smem>>
    %91 = vector.extract_strided_slice %2 {offsets = [1, 1], sizes = [8, 4], strides = [1, 1]} : vector<14x10xf32> to vector<8x4xf32>
    %92 = vector.broadcast %90 : f32 to vector<8x4xf32>
    %93 = arith.mulf %92, %91 : vector<8x4xf32>
    %94 = arith.addf %89, %93 : vector<8x4xf32>
    %c17 = arith.constant 17 : index
    %95 = memref.load %arg2[%c17] : memref<99xf32, #tpu.memory_space<smem>>
    %96 = vector.extract_strided_slice %5 {offsets = [1, 1], sizes = [8, 4], strides = [1, 1]} : vector<14x10xf32> to vector<8x4xf32>
    %97 = vector.broadcast %95 : f32 to vector<8x4xf32>
    %98 = arith.mulf %97, %96 : vector<8x4xf32>
    %99 = arith.addf %94, %98 : vector<8x4xf32>
    %c18 = arith.constant 18 : index
    %100 = memref.load %arg2[%c18] : memref<99xf32, #tpu.memory_space<smem>>
    %101 = vector.extract_strided_slice %2 {offsets = [1, 2], sizes = [8, 4], strides = [1, 1]} : vector<14x10xf32> to vector<8x4xf32>
    %102 = vector.broadcast %100 : f32 to vector<8x4xf32>
    %103 = arith.mulf %102, %101 : vector<8x4xf32>
    %104 = arith.addf %99, %103 : vector<8x4xf32>
    %c19 = arith.constant 19 : index
    %105 = memref.load %arg2[%c19] : memref<99xf32, #tpu.memory_space<smem>>
    %106 = vector.extract_strided_slice %5 {offsets = [1, 2], sizes = [8, 4], strides = [1, 1]} : vector<14x10xf32> to vector<8x4xf32>
    %107 = vector.broadcast %105 : f32 to vector<8x4xf32>
    %108 = arith.mulf %107, %106 : vector<8x4xf32>
    %109 = arith.addf %104, %108 : vector<8x4xf32>
    %c20 = arith.constant 20 : index
    %110 = memref.load %arg2[%c20] : memref<99xf32, #tpu.memory_space<smem>>
    %111 = vector.extract_strided_slice %2 {offsets = [1, 3], sizes = [8, 4], strides = [1, 1]} : vector<14x10xf32> to vector<8x4xf32>
    %112 = vector.broadcast %110 : f32 to vector<8x4xf32>
    %113 = arith.mulf %112, %111 : vector<8x4xf32>
    %114 = arith.addf %109, %113 : vector<8x4xf32>
    %c21 = arith.constant 21 : index
    %115 = memref.load %arg2[%c21] : memref<99xf32, #tpu.memory_space<smem>>
    %116 = vector.extract_strided_slice %5 {offsets = [1, 3], sizes = [8, 4], strides = [1, 1]} : vector<14x10xf32> to vector<8x4xf32>
    %117 = vector.broadcast %115 : f32 to vector<8x4xf32>
    %118 = arith.mulf %117, %116 : vector<8x4xf32>
    %119 = arith.addf %114, %118 : vector<8x4xf32>
    %c22 = arith.constant 22 : index
    %120 = memref.load %arg2[%c22] : memref<99xf32, #tpu.memory_space<smem>>
    %121 = vector.extract_strided_slice %2 {offsets = [1, 4], sizes = [8, 4], strides = [1, 1]} : vector<14x10xf32> to vector<8x4xf32>
    %122 = vector.broadcast %120 : f32 to vector<8x4xf32>
    %123 = arith.mulf %122, %121 : vector<8x4xf32>
    %124 = arith.addf %119, %123 : vector<8x4xf32>
    %c23 = arith.constant 23 : index
    %125 = memref.load %arg2[%c23] : memref<99xf32, #tpu.memory_space<smem>>
    %126 = vector.extract_strided_slice %5 {offsets = [1, 4], sizes = [8, 4], strides = [1, 1]} : vector<14x10xf32> to vector<8x4xf32>
    %127 = vector.broadcast %125 : f32 to vector<8x4xf32>
    %128 = arith.mulf %127, %126 : vector<8x4xf32>
    %129 = arith.addf %124, %128 : vector<8x4xf32>
    %c24 = arith.constant 24 : index
    %130 = memref.load %arg2[%c24] : memref<99xf32, #tpu.memory_space<smem>>
    %131 = vector.extract_strided_slice %2 {offsets = [1, 5], sizes = [8, 4], strides = [1, 1]} : vector<14x10xf32> to vector<8x4xf32>
    %132 = vector.broadcast %130 : f32 to vector<8x4xf32>
    %133 = arith.mulf %132, %131 : vector<8x4xf32>
    %134 = arith.addf %129, %133 : vector<8x4xf32>
    %c25 = arith.constant 25 : index
    %135 = memref.load %arg2[%c25] : memref<99xf32, #tpu.memory_space<smem>>
    %136 = vector.extract_strided_slice %5 {offsets = [1, 5], sizes = [8, 4], strides = [1, 1]} : vector<14x10xf32> to vector<8x4xf32>
    %137 = vector.broadcast %135 : f32 to vector<8x4xf32>
    %138 = arith.mulf %137, %136 : vector<8x4xf32>
    %139 = arith.addf %134, %138 : vector<8x4xf32>
    %c26 = arith.constant 26 : index
    %140 = memref.load %arg2[%c26] : memref<99xf32, #tpu.memory_space<smem>>
    %141 = vector.extract_strided_slice %2 {offsets = [1, 6], sizes = [8, 4], strides = [1, 1]} : vector<14x10xf32> to vector<8x4xf32>
    %142 = vector.broadcast %140 : f32 to vector<8x4xf32>
    %143 = arith.mulf %142, %141 : vector<8x4xf32>
    %144 = arith.addf %139, %143 : vector<8x4xf32>
    %c27 = arith.constant 27 : index
    %145 = memref.load %arg2[%c27] : memref<99xf32, #tpu.memory_space<smem>>
    %146 = vector.extract_strided_slice %5 {offsets = [1, 6], sizes = [8, 4], strides = [1, 1]} : vector<14x10xf32> to vector<8x4xf32>
    %147 = vector.broadcast %145 : f32 to vector<8x4xf32>
    %148 = arith.mulf %147, %146 : vector<8x4xf32>
    %149 = arith.addf %144, %148 : vector<8x4xf32>
    %c28 = arith.constant 28 : index
    %150 = memref.load %arg2[%c28] : memref<99xf32, #tpu.memory_space<smem>>
    %151 = vector.extract_strided_slice %2 {offsets = [2, 0], sizes = [8, 4], strides = [1, 1]} : vector<14x10xf32> to vector<8x4xf32>
    %152 = vector.broadcast %150 : f32 to vector<8x4xf32>
    %153 = arith.mulf %152, %151 : vector<8x4xf32>
    %154 = arith.addf %149, %153 : vector<8x4xf32>
    %c29 = arith.constant 29 : index
    %155 = memref.load %arg2[%c29] : memref<99xf32, #tpu.memory_space<smem>>
    %156 = vector.extract_strided_slice %5 {offsets = [2, 0], sizes = [8, 4], strides = [1, 1]} : vector<14x10xf32> to vector<8x4xf32>
    %157 = vector.broadcast %155 : f32 to vector<8x4xf32>
    %158 = arith.mulf %157, %156 : vector<8x4xf32>
    %159 = arith.addf %154, %158 : vector<8x4xf32>
    %c30 = arith.constant 30 : index
    %160 = memref.load %arg2[%c30] : memref<99xf32, #tpu.memory_space<smem>>
    %161 = vector.extract_strided_slice %2 {offsets = [2, 1], sizes = [8, 4], strides = [1, 1]} : vector<14x10xf32> to vector<8x4xf32>
    %162 = vector.broadcast %160 : f32 to vector<8x4xf32>
    %163 = arith.mulf %162, %161 : vector<8x4xf32>
    %164 = arith.addf %159, %163 : vector<8x4xf32>
    %c31 = arith.constant 31 : index
    %165 = memref.load %arg2[%c31] : memref<99xf32, #tpu.memory_space<smem>>
    %166 = vector.extract_strided_slice %5 {offsets = [2, 1], sizes = [8, 4], strides = [1, 1]} : vector<14x10xf32> to vector<8x4xf32>
    %167 = vector.broadcast %165 : f32 to vector<8x4xf32>
    %168 = arith.mulf %167, %166 : vector<8x4xf32>
    %169 = arith.addf %164, %168 : vector<8x4xf32>
    %c32 = arith.constant 32 : index
    %170 = memref.load %arg2[%c32] : memref<99xf32, #tpu.memory_space<smem>>
    %171 = vector.extract_strided_slice %2 {offsets = [2, 2], sizes = [8, 4], strides = [1, 1]} : vector<14x10xf32> to vector<8x4xf32>
    %172 = vector.broadcast %170 : f32 to vector<8x4xf32>
    %173 = arith.mulf %172, %171 : vector<8x4xf32>
    %174 = arith.addf %169, %173 : vector<8x4xf32>
    %c33 = arith.constant 33 : index
    %175 = memref.load %arg2[%c33] : memref<99xf32, #tpu.memory_space<smem>>
    %176 = vector.extract_strided_slice %5 {offsets = [2, 2], sizes = [8, 4], strides = [1, 1]} : vector<14x10xf32> to vector<8x4xf32>
    %177 = vector.broadcast %175 : f32 to vector<8x4xf32>
    %178 = arith.mulf %177, %176 : vector<8x4xf32>
    %179 = arith.addf %174, %178 : vector<8x4xf32>
    %c34 = arith.constant 34 : index
    %180 = memref.load %arg2[%c34] : memref<99xf32, #tpu.memory_space<smem>>
    %181 = vector.extract_strided_slice %2 {offsets = [2, 3], sizes = [8, 4], strides = [1, 1]} : vector<14x10xf32> to vector<8x4xf32>
    %182 = vector.broadcast %180 : f32 to vector<8x4xf32>
    %183 = arith.mulf %182, %181 : vector<8x4xf32>
    %184 = arith.addf %179, %183 : vector<8x4xf32>
    %c35 = arith.constant 35 : index
    %185 = memref.load %arg2[%c35] : memref<99xf32, #tpu.memory_space<smem>>
    %186 = vector.extract_strided_slice %5 {offsets = [2, 3], sizes = [8, 4], strides = [1, 1]} : vector<14x10xf32> to vector<8x4xf32>
    %187 = vector.broadcast %185 : f32 to vector<8x4xf32>
    %188 = arith.mulf %187, %186 : vector<8x4xf32>
    %189 = arith.addf %184, %188 : vector<8x4xf32>
    %c36 = arith.constant 36 : index
    %190 = memref.load %arg2[%c36] : memref<99xf32, #tpu.memory_space<smem>>
    %191 = vector.extract_strided_slice %2 {offsets = [2, 4], sizes = [8, 4], strides = [1, 1]} : vector<14x10xf32> to vector<8x4xf32>
    %192 = vector.broadcast %190 : f32 to vector<8x4xf32>
    %193 = arith.mulf %192, %191 : vector<8x4xf32>
    %194 = arith.addf %189, %193 : vector<8x4xf32>
    %c37 = arith.constant 37 : index
    %195 = memref.load %arg2[%c37] : memref<99xf32, #tpu.memory_space<smem>>
    %196 = vector.extract_strided_slice %5 {offsets = [2, 4], sizes = [8, 4], strides = [1, 1]} : vector<14x10xf32> to vector<8x4xf32>
    %197 = vector.broadcast %195 : f32 to vector<8x4xf32>
    %198 = arith.mulf %197, %196 : vector<8x4xf32>
    %199 = arith.addf %194, %198 : vector<8x4xf32>
    %c38 = arith.constant 38 : index
    %200 = memref.load %arg2[%c38] : memref<99xf32, #tpu.memory_space<smem>>
    %201 = vector.extract_strided_slice %2 {offsets = [2, 5], sizes = [8, 4], strides = [1, 1]} : vector<14x10xf32> to vector<8x4xf32>
    %202 = vector.broadcast %200 : f32 to vector<8x4xf32>
    %203 = arith.mulf %202, %201 : vector<8x4xf32>
    %204 = arith.addf %199, %203 : vector<8x4xf32>
    %c39 = arith.constant 39 : index
    %205 = memref.load %arg2[%c39] : memref<99xf32, #tpu.memory_space<smem>>
    %206 = vector.extract_strided_slice %5 {offsets = [2, 5], sizes = [8, 4], strides = [1, 1]} : vector<14x10xf32> to vector<8x4xf32>
    %207 = vector.broadcast %205 : f32 to vector<8x4xf32>
    %208 = arith.mulf %207, %206 : vector<8x4xf32>
    %209 = arith.addf %204, %208 : vector<8x4xf32>
    %c40 = arith.constant 40 : index
    %210 = memref.load %arg2[%c40] : memref<99xf32, #tpu.memory_space<smem>>
    %211 = vector.extract_strided_slice %2 {offsets = [2, 6], sizes = [8, 4], strides = [1, 1]} : vector<14x10xf32> to vector<8x4xf32>
    %212 = vector.broadcast %210 : f32 to vector<8x4xf32>
    %213 = arith.mulf %212, %211 : vector<8x4xf32>
    %214 = arith.addf %209, %213 : vector<8x4xf32>
    %c41 = arith.constant 41 : index
    %215 = memref.load %arg2[%c41] : memref<99xf32, #tpu.memory_space<smem>>
    %216 = vector.extract_strided_slice %5 {offsets = [2, 6], sizes = [8, 4], strides = [1, 1]} : vector<14x10xf32> to vector<8x4xf32>
    %217 = vector.broadcast %215 : f32 to vector<8x4xf32>
    %218 = arith.mulf %217, %216 : vector<8x4xf32>
    %219 = arith.addf %214, %218 : vector<8x4xf32>
    %c42 = arith.constant 42 : index
    %220 = memref.load %arg2[%c42] : memref<99xf32, #tpu.memory_space<smem>>
    %221 = vector.extract_strided_slice %2 {offsets = [3, 0], sizes = [8, 4], strides = [1, 1]} : vector<14x10xf32> to vector<8x4xf32>
    %222 = vector.broadcast %220 : f32 to vector<8x4xf32>
    %223 = arith.mulf %222, %221 : vector<8x4xf32>
    %224 = arith.addf %219, %223 : vector<8x4xf32>
    %c43 = arith.constant 43 : index
    %225 = memref.load %arg2[%c43] : memref<99xf32, #tpu.memory_space<smem>>
    %226 = vector.extract_strided_slice %5 {offsets = [3, 0], sizes = [8, 4], strides = [1, 1]} : vector<14x10xf32> to vector<8x4xf32>
    %227 = vector.broadcast %225 : f32 to vector<8x4xf32>
    %228 = arith.mulf %227, %226 : vector<8x4xf32>
    %229 = arith.addf %224, %228 : vector<8x4xf32>
    %c44 = arith.constant 44 : index
    %230 = memref.load %arg2[%c44] : memref<99xf32, #tpu.memory_space<smem>>
    %231 = vector.extract_strided_slice %2 {offsets = [3, 1], sizes = [8, 4], strides = [1, 1]} : vector<14x10xf32> to vector<8x4xf32>
    %232 = vector.broadcast %230 : f32 to vector<8x4xf32>
    %233 = arith.mulf %232, %231 : vector<8x4xf32>
    %234 = arith.addf %229, %233 : vector<8x4xf32>
    %c45 = arith.constant 45 : index
    %235 = memref.load %arg2[%c45] : memref<99xf32, #tpu.memory_space<smem>>
    %236 = vector.extract_strided_slice %5 {offsets = [3, 1], sizes = [8, 4], strides = [1, 1]} : vector<14x10xf32> to vector<8x4xf32>
    %237 = vector.broadcast %235 : f32 to vector<8x4xf32>
    %238 = arith.mulf %237, %236 : vector<8x4xf32>
    %239 = arith.addf %234, %238 : vector<8x4xf32>
    %c46 = arith.constant 46 : index
    %240 = memref.load %arg2[%c46] : memref<99xf32, #tpu.memory_space<smem>>
    %241 = vector.extract_strided_slice %2 {offsets = [3, 2], sizes = [8, 4], strides = [1, 1]} : vector<14x10xf32> to vector<8x4xf32>
    %242 = vector.broadcast %240 : f32 to vector<8x4xf32>
    %243 = arith.mulf %242, %241 : vector<8x4xf32>
    %244 = arith.addf %239, %243 : vector<8x4xf32>
    %c47 = arith.constant 47 : index
    %245 = memref.load %arg2[%c47] : memref<99xf32, #tpu.memory_space<smem>>
    %246 = vector.extract_strided_slice %5 {offsets = [3, 2], sizes = [8, 4], strides = [1, 1]} : vector<14x10xf32> to vector<8x4xf32>
    %247 = vector.broadcast %245 : f32 to vector<8x4xf32>
    %248 = arith.mulf %247, %246 : vector<8x4xf32>
    %249 = arith.addf %244, %248 : vector<8x4xf32>
    %c48 = arith.constant 48 : index
    %250 = memref.load %arg2[%c48] : memref<99xf32, #tpu.memory_space<smem>>
    %251 = vector.extract_strided_slice %2 {offsets = [3, 3], sizes = [8, 4], strides = [1, 1]} : vector<14x10xf32> to vector<8x4xf32>
    %252 = vector.broadcast %250 : f32 to vector<8x4xf32>
    %253 = arith.mulf %252, %251 : vector<8x4xf32>
    %254 = arith.addf %249, %253 : vector<8x4xf32>
    %c49 = arith.constant 49 : index
    %255 = memref.load %arg2[%c49] : memref<99xf32, #tpu.memory_space<smem>>
    %256 = vector.extract_strided_slice %5 {offsets = [3, 3], sizes = [8, 4], strides = [1, 1]} : vector<14x10xf32> to vector<8x4xf32>
    %257 = vector.broadcast %255 : f32 to vector<8x4xf32>
    %258 = arith.mulf %257, %256 : vector<8x4xf32>
    %259 = arith.addf %254, %258 : vector<8x4xf32>
    %c50 = arith.constant 50 : index
    %260 = memref.load %arg2[%c50] : memref<99xf32, #tpu.memory_space<smem>>
    %261 = vector.extract_strided_slice %2 {offsets = [3, 4], sizes = [8, 4], strides = [1, 1]} : vector<14x10xf32> to vector<8x4xf32>
    %262 = vector.broadcast %260 : f32 to vector<8x4xf32>
    %263 = arith.mulf %262, %261 : vector<8x4xf32>
    %264 = arith.addf %259, %263 : vector<8x4xf32>
    %c51 = arith.constant 51 : index
    %265 = memref.load %arg2[%c51] : memref<99xf32, #tpu.memory_space<smem>>
    %266 = vector.extract_strided_slice %5 {offsets = [3, 4], sizes = [8, 4], strides = [1, 1]} : vector<14x10xf32> to vector<8x4xf32>
    %267 = vector.broadcast %265 : f32 to vector<8x4xf32>
    %268 = arith.mulf %267, %266 : vector<8x4xf32>
    %269 = arith.addf %264, %268 : vector<8x4xf32>
    %c52 = arith.constant 52 : index
    %270 = memref.load %arg2[%c52] : memref<99xf32, #tpu.memory_space<smem>>
    %271 = vector.extract_strided_slice %2 {offsets = [3, 5], sizes = [8, 4], strides = [1, 1]} : vector<14x10xf32> to vector<8x4xf32>
    %272 = vector.broadcast %270 : f32 to vector<8x4xf32>
    %273 = arith.mulf %272, %271 : vector<8x4xf32>
    %274 = arith.addf %269, %273 : vector<8x4xf32>
    %c53 = arith.constant 53 : index
    %275 = memref.load %arg2[%c53] : memref<99xf32, #tpu.memory_space<smem>>
    %276 = vector.extract_strided_slice %5 {offsets = [3, 5], sizes = [8, 4], strides = [1, 1]} : vector<14x10xf32> to vector<8x4xf32>
    %277 = vector.broadcast %275 : f32 to vector<8x4xf32>
    %278 = arith.mulf %277, %276 : vector<8x4xf32>
    %279 = arith.addf %274, %278 : vector<8x4xf32>
    %c54 = arith.constant 54 : index
    %280 = memref.load %arg2[%c54] : memref<99xf32, #tpu.memory_space<smem>>
    %281 = vector.extract_strided_slice %2 {offsets = [3, 6], sizes = [8, 4], strides = [1, 1]} : vector<14x10xf32> to vector<8x4xf32>
    %282 = vector.broadcast %280 : f32 to vector<8x4xf32>
    %283 = arith.mulf %282, %281 : vector<8x4xf32>
    %284 = arith.addf %279, %283 : vector<8x4xf32>
    %c55 = arith.constant 55 : index
    %285 = memref.load %arg2[%c55] : memref<99xf32, #tpu.memory_space<smem>>
    %286 = vector.extract_strided_slice %5 {offsets = [3, 6], sizes = [8, 4], strides = [1, 1]} : vector<14x10xf32> to vector<8x4xf32>
    %287 = vector.broadcast %285 : f32 to vector<8x4xf32>
    %288 = arith.mulf %287, %286 : vector<8x4xf32>
    %289 = arith.addf %284, %288 : vector<8x4xf32>
    %c56 = arith.constant 56 : index
    %290 = memref.load %arg2[%c56] : memref<99xf32, #tpu.memory_space<smem>>
    %291 = vector.extract_strided_slice %2 {offsets = [4, 0], sizes = [8, 4], strides = [1, 1]} : vector<14x10xf32> to vector<8x4xf32>
    %292 = vector.broadcast %290 : f32 to vector<8x4xf32>
    %293 = arith.mulf %292, %291 : vector<8x4xf32>
    %294 = arith.addf %289, %293 : vector<8x4xf32>
    %c57 = arith.constant 57 : index
    %295 = memref.load %arg2[%c57] : memref<99xf32, #tpu.memory_space<smem>>
    %296 = vector.extract_strided_slice %5 {offsets = [4, 0], sizes = [8, 4], strides = [1, 1]} : vector<14x10xf32> to vector<8x4xf32>
    %297 = vector.broadcast %295 : f32 to vector<8x4xf32>
    %298 = arith.mulf %297, %296 : vector<8x4xf32>
    %299 = arith.addf %294, %298 : vector<8x4xf32>
    %c58 = arith.constant 58 : index
    %300 = memref.load %arg2[%c58] : memref<99xf32, #tpu.memory_space<smem>>
    %301 = vector.extract_strided_slice %2 {offsets = [4, 1], sizes = [8, 4], strides = [1, 1]} : vector<14x10xf32> to vector<8x4xf32>
    %302 = vector.broadcast %300 : f32 to vector<8x4xf32>
    %303 = arith.mulf %302, %301 : vector<8x4xf32>
    %304 = arith.addf %299, %303 : vector<8x4xf32>
    %c59 = arith.constant 59 : index
    %305 = memref.load %arg2[%c59] : memref<99xf32, #tpu.memory_space<smem>>
    %306 = vector.extract_strided_slice %5 {offsets = [4, 1], sizes = [8, 4], strides = [1, 1]} : vector<14x10xf32> to vector<8x4xf32>
    %307 = vector.broadcast %305 : f32 to vector<8x4xf32>
    %308 = arith.mulf %307, %306 : vector<8x4xf32>
    %309 = arith.addf %304, %308 : vector<8x4xf32>
    %c60 = arith.constant 60 : index
    %310 = memref.load %arg2[%c60] : memref<99xf32, #tpu.memory_space<smem>>
    %311 = vector.extract_strided_slice %2 {offsets = [4, 2], sizes = [8, 4], strides = [1, 1]} : vector<14x10xf32> to vector<8x4xf32>
    %312 = vector.broadcast %310 : f32 to vector<8x4xf32>
    %313 = arith.mulf %312, %311 : vector<8x4xf32>
    %314 = arith.addf %309, %313 : vector<8x4xf32>
    %c61 = arith.constant 61 : index
    %315 = memref.load %arg2[%c61] : memref<99xf32, #tpu.memory_space<smem>>
    %316 = vector.extract_strided_slice %5 {offsets = [4, 2], sizes = [8, 4], strides = [1, 1]} : vector<14x10xf32> to vector<8x4xf32>
    %317 = vector.broadcast %315 : f32 to vector<8x4xf32>
    %318 = arith.mulf %317, %316 : vector<8x4xf32>
    %319 = arith.addf %314, %318 : vector<8x4xf32>
    %c62 = arith.constant 62 : index
    %320 = memref.load %arg2[%c62] : memref<99xf32, #tpu.memory_space<smem>>
    %321 = vector.extract_strided_slice %2 {offsets = [4, 3], sizes = [8, 4], strides = [1, 1]} : vector<14x10xf32> to vector<8x4xf32>
    %322 = vector.broadcast %320 : f32 to vector<8x4xf32>
    %323 = arith.mulf %322, %321 : vector<8x4xf32>
    %324 = arith.addf %319, %323 : vector<8x4xf32>
    %c63 = arith.constant 63 : index
    %325 = memref.load %arg2[%c63] : memref<99xf32, #tpu.memory_space<smem>>
    %326 = vector.extract_strided_slice %5 {offsets = [4, 3], sizes = [8, 4], strides = [1, 1]} : vector<14x10xf32> to vector<8x4xf32>
    %327 = vector.broadcast %325 : f32 to vector<8x4xf32>
    %328 = arith.mulf %327, %326 : vector<8x4xf32>
    %329 = arith.addf %324, %328 : vector<8x4xf32>
    %c64 = arith.constant 64 : index
    %330 = memref.load %arg2[%c64] : memref<99xf32, #tpu.memory_space<smem>>
    %331 = vector.extract_strided_slice %2 {offsets = [4, 4], sizes = [8, 4], strides = [1, 1]} : vector<14x10xf32> to vector<8x4xf32>
    %332 = vector.broadcast %330 : f32 to vector<8x4xf32>
    %333 = arith.mulf %332, %331 : vector<8x4xf32>
    %334 = arith.addf %329, %333 : vector<8x4xf32>
    %c65 = arith.constant 65 : index
    %335 = memref.load %arg2[%c65] : memref<99xf32, #tpu.memory_space<smem>>
    %336 = vector.extract_strided_slice %5 {offsets = [4, 4], sizes = [8, 4], strides = [1, 1]} : vector<14x10xf32> to vector<8x4xf32>
    %337 = vector.broadcast %335 : f32 to vector<8x4xf32>
    %338 = arith.mulf %337, %336 : vector<8x4xf32>
    %339 = arith.addf %334, %338 : vector<8x4xf32>
    %c66 = arith.constant 66 : index
    %340 = memref.load %arg2[%c66] : memref<99xf32, #tpu.memory_space<smem>>
    %341 = vector.extract_strided_slice %2 {offsets = [4, 5], sizes = [8, 4], strides = [1, 1]} : vector<14x10xf32> to vector<8x4xf32>
    %342 = vector.broadcast %340 : f32 to vector<8x4xf32>
    %343 = arith.mulf %342, %341 : vector<8x4xf32>
    %344 = arith.addf %339, %343 : vector<8x4xf32>
    %c67 = arith.constant 67 : index
    %345 = memref.load %arg2[%c67] : memref<99xf32, #tpu.memory_space<smem>>
    %346 = vector.extract_strided_slice %5 {offsets = [4, 5], sizes = [8, 4], strides = [1, 1]} : vector<14x10xf32> to vector<8x4xf32>
    %347 = vector.broadcast %345 : f32 to vector<8x4xf32>
    %348 = arith.mulf %347, %346 : vector<8x4xf32>
    %349 = arith.addf %344, %348 : vector<8x4xf32>
    %c68 = arith.constant 68 : index
    %350 = memref.load %arg2[%c68] : memref<99xf32, #tpu.memory_space<smem>>
    %351 = vector.extract_strided_slice %2 {offsets = [4, 6], sizes = [8, 4], strides = [1, 1]} : vector<14x10xf32> to vector<8x4xf32>
    %352 = vector.broadcast %350 : f32 to vector<8x4xf32>
    %353 = arith.mulf %352, %351 : vector<8x4xf32>
    %354 = arith.addf %349, %353 : vector<8x4xf32>
    %c69 = arith.constant 69 : index
    %355 = memref.load %arg2[%c69] : memref<99xf32, #tpu.memory_space<smem>>
    %356 = vector.extract_strided_slice %5 {offsets = [4, 6], sizes = [8, 4], strides = [1, 1]} : vector<14x10xf32> to vector<8x4xf32>
    %357 = vector.broadcast %355 : f32 to vector<8x4xf32>
    %358 = arith.mulf %357, %356 : vector<8x4xf32>
    %359 = arith.addf %354, %358 : vector<8x4xf32>
    %c70 = arith.constant 70 : index
    %360 = memref.load %arg2[%c70] : memref<99xf32, #tpu.memory_space<smem>>
    %361 = vector.extract_strided_slice %2 {offsets = [5, 0], sizes = [8, 4], strides = [1, 1]} : vector<14x10xf32> to vector<8x4xf32>
    %362 = vector.broadcast %360 : f32 to vector<8x4xf32>
    %363 = arith.mulf %362, %361 : vector<8x4xf32>
    %364 = arith.addf %359, %363 : vector<8x4xf32>
    %c71 = arith.constant 71 : index
    %365 = memref.load %arg2[%c71] : memref<99xf32, #tpu.memory_space<smem>>
    %366 = vector.extract_strided_slice %5 {offsets = [5, 0], sizes = [8, 4], strides = [1, 1]} : vector<14x10xf32> to vector<8x4xf32>
    %367 = vector.broadcast %365 : f32 to vector<8x4xf32>
    %368 = arith.mulf %367, %366 : vector<8x4xf32>
    %369 = arith.addf %364, %368 : vector<8x4xf32>
    %c72 = arith.constant 72 : index
    %370 = memref.load %arg2[%c72] : memref<99xf32, #tpu.memory_space<smem>>
    %371 = vector.extract_strided_slice %2 {offsets = [5, 1], sizes = [8, 4], strides = [1, 1]} : vector<14x10xf32> to vector<8x4xf32>
    %372 = vector.broadcast %370 : f32 to vector<8x4xf32>
    %373 = arith.mulf %372, %371 : vector<8x4xf32>
    %374 = arith.addf %369, %373 : vector<8x4xf32>
    %c73 = arith.constant 73 : index
    %375 = memref.load %arg2[%c73] : memref<99xf32, #tpu.memory_space<smem>>
    %376 = vector.extract_strided_slice %5 {offsets = [5, 1], sizes = [8, 4], strides = [1, 1]} : vector<14x10xf32> to vector<8x4xf32>
    %377 = vector.broadcast %375 : f32 to vector<8x4xf32>
    %378 = arith.mulf %377, %376 : vector<8x4xf32>
    %379 = arith.addf %374, %378 : vector<8x4xf32>
    %c74 = arith.constant 74 : index
    %380 = memref.load %arg2[%c74] : memref<99xf32, #tpu.memory_space<smem>>
    %381 = vector.extract_strided_slice %2 {offsets = [5, 2], sizes = [8, 4], strides = [1, 1]} : vector<14x10xf32> to vector<8x4xf32>
    %382 = vector.broadcast %380 : f32 to vector<8x4xf32>
    %383 = arith.mulf %382, %381 : vector<8x4xf32>
    %384 = arith.addf %379, %383 : vector<8x4xf32>
    %c75 = arith.constant 75 : index
    %385 = memref.load %arg2[%c75] : memref<99xf32, #tpu.memory_space<smem>>
    %386 = vector.extract_strided_slice %5 {offsets = [5, 2], sizes = [8, 4], strides = [1, 1]} : vector<14x10xf32> to vector<8x4xf32>
    %387 = vector.broadcast %385 : f32 to vector<8x4xf32>
    %388 = arith.mulf %387, %386 : vector<8x4xf32>
    %389 = arith.addf %384, %388 : vector<8x4xf32>
    %c76 = arith.constant 76 : index
    %390 = memref.load %arg2[%c76] : memref<99xf32, #tpu.memory_space<smem>>
    %391 = vector.extract_strided_slice %2 {offsets = [5, 3], sizes = [8, 4], strides = [1, 1]} : vector<14x10xf32> to vector<8x4xf32>
    %392 = vector.broadcast %390 : f32 to vector<8x4xf32>
    %393 = arith.mulf %392, %391 : vector<8x4xf32>
    %394 = arith.addf %389, %393 : vector<8x4xf32>
    %c77 = arith.constant 77 : index
    %395 = memref.load %arg2[%c77] : memref<99xf32, #tpu.memory_space<smem>>
    %396 = vector.extract_strided_slice %5 {offsets = [5, 3], sizes = [8, 4], strides = [1, 1]} : vector<14x10xf32> to vector<8x4xf32>
    %397 = vector.broadcast %395 : f32 to vector<8x4xf32>
    %398 = arith.mulf %397, %396 : vector<8x4xf32>
    %399 = arith.addf %394, %398 : vector<8x4xf32>
    %c78 = arith.constant 78 : index
    %400 = memref.load %arg2[%c78] : memref<99xf32, #tpu.memory_space<smem>>
    %401 = vector.extract_strided_slice %2 {offsets = [5, 4], sizes = [8, 4], strides = [1, 1]} : vector<14x10xf32> to vector<8x4xf32>
    %402 = vector.broadcast %400 : f32 to vector<8x4xf32>
    %403 = arith.mulf %402, %401 : vector<8x4xf32>
    %404 = arith.addf %399, %403 : vector<8x4xf32>
    %c79 = arith.constant 79 : index
    %405 = memref.load %arg2[%c79] : memref<99xf32, #tpu.memory_space<smem>>
    %406 = vector.extract_strided_slice %5 {offsets = [5, 4], sizes = [8, 4], strides = [1, 1]} : vector<14x10xf32> to vector<8x4xf32>
    %407 = vector.broadcast %405 : f32 to vector<8x4xf32>
    %408 = arith.mulf %407, %406 : vector<8x4xf32>
    %409 = arith.addf %404, %408 : vector<8x4xf32>
    %c80 = arith.constant 80 : index
    %410 = memref.load %arg2[%c80] : memref<99xf32, #tpu.memory_space<smem>>
    %411 = vector.extract_strided_slice %2 {offsets = [5, 5], sizes = [8, 4], strides = [1, 1]} : vector<14x10xf32> to vector<8x4xf32>
    %412 = vector.broadcast %410 : f32 to vector<8x4xf32>
    %413 = arith.mulf %412, %411 : vector<8x4xf32>
    %414 = arith.addf %409, %413 : vector<8x4xf32>
    %c81 = arith.constant 81 : index
    %415 = memref.load %arg2[%c81] : memref<99xf32, #tpu.memory_space<smem>>
    %416 = vector.extract_strided_slice %5 {offsets = [5, 5], sizes = [8, 4], strides = [1, 1]} : vector<14x10xf32> to vector<8x4xf32>
    %417 = vector.broadcast %415 : f32 to vector<8x4xf32>
    %418 = arith.mulf %417, %416 : vector<8x4xf32>
    %419 = arith.addf %414, %418 : vector<8x4xf32>
    %c82 = arith.constant 82 : index
    %420 = memref.load %arg2[%c82] : memref<99xf32, #tpu.memory_space<smem>>
    %421 = vector.extract_strided_slice %2 {offsets = [5, 6], sizes = [8, 4], strides = [1, 1]} : vector<14x10xf32> to vector<8x4xf32>
    %422 = vector.broadcast %420 : f32 to vector<8x4xf32>
    %423 = arith.mulf %422, %421 : vector<8x4xf32>
    %424 = arith.addf %419, %423 : vector<8x4xf32>
    %c83 = arith.constant 83 : index
    %425 = memref.load %arg2[%c83] : memref<99xf32, #tpu.memory_space<smem>>
    %426 = vector.extract_strided_slice %5 {offsets = [5, 6], sizes = [8, 4], strides = [1, 1]} : vector<14x10xf32> to vector<8x4xf32>
    %427 = vector.broadcast %425 : f32 to vector<8x4xf32>
    %428 = arith.mulf %427, %426 : vector<8x4xf32>
    %429 = arith.addf %424, %428 : vector<8x4xf32>
    %c84 = arith.constant 84 : index
    %430 = memref.load %arg2[%c84] : memref<99xf32, #tpu.memory_space<smem>>
    %431 = vector.extract_strided_slice %2 {offsets = [6, 0], sizes = [8, 4], strides = [1, 1]} : vector<14x10xf32> to vector<8x4xf32>
    %432 = vector.broadcast %430 : f32 to vector<8x4xf32>
    %433 = arith.mulf %432, %431 : vector<8x4xf32>
    %434 = arith.addf %429, %433 : vector<8x4xf32>
    %c85 = arith.constant 85 : index
    %435 = memref.load %arg2[%c85] : memref<99xf32, #tpu.memory_space<smem>>
    %436 = vector.extract_strided_slice %5 {offsets = [6, 0], sizes = [8, 4], strides = [1, 1]} : vector<14x10xf32> to vector<8x4xf32>
    %437 = vector.broadcast %435 : f32 to vector<8x4xf32>
    %438 = arith.mulf %437, %436 : vector<8x4xf32>
    %439 = arith.addf %434, %438 : vector<8x4xf32>
    %c86 = arith.constant 86 : index
    %440 = memref.load %arg2[%c86] : memref<99xf32, #tpu.memory_space<smem>>
    %441 = vector.extract_strided_slice %2 {offsets = [6, 1], sizes = [8, 4], strides = [1, 1]} : vector<14x10xf32> to vector<8x4xf32>
    %442 = vector.broadcast %440 : f32 to vector<8x4xf32>
    %443 = arith.mulf %442, %441 : vector<8x4xf32>
    %444 = arith.addf %439, %443 : vector<8x4xf32>
    %c87 = arith.constant 87 : index
    %445 = memref.load %arg2[%c87] : memref<99xf32, #tpu.memory_space<smem>>
    %446 = vector.extract_strided_slice %5 {offsets = [6, 1], sizes = [8, 4], strides = [1, 1]} : vector<14x10xf32> to vector<8x4xf32>
    %447 = vector.broadcast %445 : f32 to vector<8x4xf32>
    %448 = arith.mulf %447, %446 : vector<8x4xf32>
    %449 = arith.addf %444, %448 : vector<8x4xf32>
    %c88 = arith.constant 88 : index
    %450 = memref.load %arg2[%c88] : memref<99xf32, #tpu.memory_space<smem>>
    %451 = vector.extract_strided_slice %2 {offsets = [6, 2], sizes = [8, 4], strides = [1, 1]} : vector<14x10xf32> to vector<8x4xf32>
    %452 = vector.broadcast %450 : f32 to vector<8x4xf32>
    %453 = arith.mulf %452, %451 : vector<8x4xf32>
    %454 = arith.addf %449, %453 : vector<8x4xf32>
    %c89 = arith.constant 89 : index
    %455 = memref.load %arg2[%c89] : memref<99xf32, #tpu.memory_space<smem>>
    %456 = vector.extract_strided_slice %5 {offsets = [6, 2], sizes = [8, 4], strides = [1, 1]} : vector<14x10xf32> to vector<8x4xf32>
    %457 = vector.broadcast %455 : f32 to vector<8x4xf32>
    %458 = arith.mulf %457, %456 : vector<8x4xf32>
    %459 = arith.addf %454, %458 : vector<8x4xf32>
    %c90 = arith.constant 90 : index
    %460 = memref.load %arg2[%c90] : memref<99xf32, #tpu.memory_space<smem>>
    %461 = vector.extract_strided_slice %2 {offsets = [6, 3], sizes = [8, 4], strides = [1, 1]} : vector<14x10xf32> to vector<8x4xf32>
    %462 = vector.broadcast %460 : f32 to vector<8x4xf32>
    %463 = arith.mulf %462, %461 : vector<8x4xf32>
    %464 = arith.addf %459, %463 : vector<8x4xf32>
    %c91 = arith.constant 91 : index
    %465 = memref.load %arg2[%c91] : memref<99xf32, #tpu.memory_space<smem>>
    %466 = vector.extract_strided_slice %5 {offsets = [6, 3], sizes = [8, 4], strides = [1, 1]} : vector<14x10xf32> to vector<8x4xf32>
    %467 = vector.broadcast %465 : f32 to vector<8x4xf32>
    %468 = arith.mulf %467, %466 : vector<8x4xf32>
    %469 = arith.addf %464, %468 : vector<8x4xf32>
    %c92 = arith.constant 92 : index
    %470 = memref.load %arg2[%c92] : memref<99xf32, #tpu.memory_space<smem>>
    %471 = vector.extract_strided_slice %2 {offsets = [6, 4], sizes = [8, 4], strides = [1, 1]} : vector<14x10xf32> to vector<8x4xf32>
    %472 = vector.broadcast %470 : f32 to vector<8x4xf32>
    %473 = arith.mulf %472, %471 : vector<8x4xf32>
    %474 = arith.addf %469, %473 : vector<8x4xf32>
    %c93 = arith.constant 93 : index
    %475 = memref.load %arg2[%c93] : memref<99xf32, #tpu.memory_space<smem>>
    %476 = vector.extract_strided_slice %5 {offsets = [6, 4], sizes = [8, 4], strides = [1, 1]} : vector<14x10xf32> to vector<8x4xf32>
    %477 = vector.broadcast %475 : f32 to vector<8x4xf32>
    %478 = arith.mulf %477, %476 : vector<8x4xf32>
    %479 = arith.addf %474, %478 : vector<8x4xf32>
    %c94 = arith.constant 94 : index
    %480 = memref.load %arg2[%c94] : memref<99xf32, #tpu.memory_space<smem>>
    %481 = vector.extract_strided_slice %2 {offsets = [6, 5], sizes = [8, 4], strides = [1, 1]} : vector<14x10xf32> to vector<8x4xf32>
    %482 = vector.broadcast %480 : f32 to vector<8x4xf32>
    %483 = arith.mulf %482, %481 : vector<8x4xf32>
    %484 = arith.addf %479, %483 : vector<8x4xf32>
    %c95 = arith.constant 95 : index
    %485 = memref.load %arg2[%c95] : memref<99xf32, #tpu.memory_space<smem>>
    %486 = vector.extract_strided_slice %5 {offsets = [6, 5], sizes = [8, 4], strides = [1, 1]} : vector<14x10xf32> to vector<8x4xf32>
    %487 = vector.broadcast %485 : f32 to vector<8x4xf32>
    %488 = arith.mulf %487, %486 : vector<8x4xf32>
    %489 = arith.addf %484, %488 : vector<8x4xf32>
    %c96 = arith.constant 96 : index
    %490 = memref.load %arg2[%c96] : memref<99xf32, #tpu.memory_space<smem>>
    %491 = vector.extract_strided_slice %2 {offsets = [6, 6], sizes = [8, 4], strides = [1, 1]} : vector<14x10xf32> to vector<8x4xf32>
    %492 = vector.broadcast %490 : f32 to vector<8x4xf32>
    %493 = arith.mulf %492, %491 : vector<8x4xf32>
    %494 = arith.addf %489, %493 : vector<8x4xf32>
    %c97 = arith.constant 97 : index
    %495 = memref.load %arg2[%c97] : memref<99xf32, #tpu.memory_space<smem>>
    %496 = vector.extract_strided_slice %5 {offsets = [6, 6], sizes = [8, 4], strides = [1, 1]} : vector<14x10xf32> to vector<8x4xf32>
    %497 = vector.broadcast %495 : f32 to vector<8x4xf32>
    %498 = arith.mulf %497, %496 : vector<8x4xf32>
    %499 = arith.addf %494, %498 : vector<8x4xf32>
    %500 = arith.negf %499 : vector<8x4xf32>
    %501 = math.exp %500 : vector<8x4xf32>
    %cst_7 = arith.constant 1.000000e+00 : f32
    %502 = vector.broadcast %cst_7 : f32 to vector<8x4xf32>
    %503 = arith.addf %502, %501 : vector<8x4xf32>
    %504 = arith.divf %502, %503 : vector<8x4xf32>
    %505 = vector.extract_strided_slice %1 {offsets = [0, 3, 3], sizes = [4, 8, 4], strides = [1, 1, 1]} : vector<4x14x10xf32> to vector<4x8x4xf32>
    %506 = vector.shape_cast %504 : vector<8x4xf32> to vector<1x8x4xf32>
    %507 = vector.broadcast %506 : vector<1x8x4xf32> to vector<4x8x4xf32>
    %508 = arith.mulf %505, %507 : vector<4x8x4xf32>
    %509 = vector.shape_cast %508 : vector<4x8x4xf32> to vector<1x4x8x4xf32>
    %c0_8 = arith.constant 0 : index
    %c0_9 = arith.constant 0 : index
    %c0_10 = arith.constant 0 : index
    %c0_11 = arith.constant 0 : index
    %510 = vector.load %arg3[%c0_8, %c0_9, %c0_10, %c0_11] : memref<1x4x8x4xf32, #tpu.memory_space<vmem>>, vector<1x4x8x4xf32>
    tpu.vector_store %arg3[%c0_8, %c0_9, %c0_10, %c0_11], %509 {strides = array<i32>} : memref<1x4x8x4xf32, #tpu.memory_space<vmem>>, vector<1x4x8x4xf32>,
    return
  }
  func.func @transform_0(%arg0: i32) -> (i32, i32, i32, i32) {
    %c0_i32 = arith.constant 0 : i32
    %c0_i32_0 = arith.constant 0 : i32
    %c0_i32_1 = arith.constant 0 : i32
    %c0_i32_2 = arith.constant 0 : i32
    return %arg0, %c0_i32, %c0_i32_0, %c0_i32_1 : i32, i32, i32, i32
  }
  func.func @transform_1(%arg0: i32) -> i32 {
    %c0_i32 = arith.constant 0 : i32
    %c0_i32_0 = arith.constant 0 : i32
    return %c0_i32 : i32
  }
  func.func @transform_2(%arg0: i32) -> (i32, i32, i32, i32) {
    %c0_i32 = arith.constant 0 : i32
    %c0_i32_0 = arith.constant 0 : i32
    %c0_i32_1 = arith.constant 0 : i32
    %c0_i32_2 = arith.constant 0 : i32
    return %arg0, %c0_i32, %c0_i32_0, %c0_i32_1 : i32, i32, i32, i32
  }
}

module attributes {stable_mosaic.version = 11 : i64} {
  func.func @_head_kernel(%arg0: i32, %arg1: memref<1x16x8xf32, #tpu.memory_space<vmem>>, %arg2: memref<8x16xf32, #tpu.memory_space<vmem>>, %arg3: memref<16x5xf32, #tpu.memory_space<vmem>>, %arg4: memref<1x5xf32, #tpu.memory_space<vmem>>, %arg5: memref<1x1x5xf32, #tpu.memory_space<vmem>>) attributes {dimension_semantics = [#tpu.dimension_semantics<parallel>], iteration_bounds = array<i64: 2>, scalar_prefetch = 0 : i64, scratch_operands = 0 : i64, tpu.core_type = #tpu.core_type<tc>, window_params = [{transform_indices = @transform_0, window_bounds = array<i64: 1, 16, 8>}, {pipeline_mode = #tpu.pipeline_mode<synchronous>, transform_indices = @transform_1, window_bounds = array<i64: 8, 16>}, {pipeline_mode = #tpu.pipeline_mode<synchronous>, transform_indices = @transform_2, window_bounds = array<i64: 16, 5>}, {pipeline_mode = #tpu.pipeline_mode<synchronous>, transform_indices = @transform_3, window_bounds = array<i64: 1, 5>}, {transform_indices = @transform_4, window_bounds = array<i64: 1, 1, 5>}]} {
    %c0 = arith.constant 0 : index
    %c0_0 = arith.constant 0 : index
    %c0_1 = arith.constant 0 : index
    %0 = vector.load %arg1[%c0, %c0_0, %c0_1] : memref<1x16x8xf32, #tpu.memory_space<vmem>>, vector<1x16x8xf32>
    %1 = vector.shape_cast %0 : vector<1x16x8xf32> to vector<16x8xf32>
    %2 = arith.truncf %1 : vector<16x8xf32> to vector<16x8xbf16>
    %c0_2 = arith.constant 0 : index
    %c0_3 = arith.constant 0 : index
    %3 = vector.load %arg2[%c0_2, %c0_3] : memref<8x16xf32, #tpu.memory_space<vmem>>, vector<8x16xf32>
    %4 = arith.truncf %3 : vector<8x16xf32> to vector<8x16xbf16>
    %cst = arith.constant dense<0.000000e+00> : vector<16x16xf32>
    %5 = tpu.matmul %2, %4, %cst {dimension_numbers = #tpu.dot_dimension_numbers<[1], [0], [0], [1], [0, 0, 1, 1], [], []>} : vector<16x8xbf16>, vector<8x16xbf16>, vector<16x16xf32> -> vector<16x16xf32>
    %cst_4 = arith.constant 0.000000e+00 : f32
    %6 = vector.broadcast %cst_4 : f32 to vector<16x16xf32>
    %7 = arith.maximumf %5, %6 : vector<16x16xf32>
    %c0_5 = arith.constant 0 : index
    %c0_6 = arith.constant 0 : index
    %8 = vector.load %arg3[%c0_5, %c0_6] : memref<16x5xf32, #tpu.memory_space<vmem>>, vector<16x5xf32>
    %cst_7 = arith.constant dense<0.000000e+00> : vector<16x5xf32>
    %9 = tpu.matmul %7, %8, %cst_7 {dimension_numbers = #tpu.dot_dimension_numbers<[1], [0], [0], [1], [0, 0, 1, 1], [], []>} : vector<16x16xf32>, vector<16x5xf32>, vector<16x5xf32> -> vector<16x5xf32>
    %cst_8 = arith.constant dense<0.000000e+00> : vector<5xf32>
    %10 = vector.multi_reduction <add>, %9, %cst_8 [0] : vector<16x5xf32> to vector<5xf32>
    %11 = vector.shape_cast %10 : vector<5xf32> to vector<1x5xf32>
    %cst_9 = arith.constant 1.600000e+01 : f32
    %12 = vector.broadcast %cst_9 : f32 to vector<1x5xf32>
    %13 = arith.divf %11, %12 : vector<1x5xf32>
    %c0_10 = arith.constant 0 : index
    %c0_11 = arith.constant 0 : index
    %14 = vector.load %arg4[%c0_10, %c0_11] : memref<1x5xf32, #tpu.memory_space<vmem>>, vector<1x5xf32>
    %15 = arith.addf %13, %14 : vector<1x5xf32>
    %16 = vector.shape_cast %15 : vector<1x5xf32> to vector<1x1x5xf32>
    %c0_12 = arith.constant 0 : index
    %c0_13 = arith.constant 0 : index
    %c0_14 = arith.constant 0 : index
    %17 = vector.load %arg5[%c0_12, %c0_13, %c0_14] : memref<1x1x5xf32, #tpu.memory_space<vmem>>, vector<1x1x5xf32>
    tpu.vector_store %arg5[%c0_12, %c0_13, %c0_14], %16 {strides = array<i32>} : memref<1x1x5xf32, #tpu.memory_space<vmem>>, vector<1x1x5xf32>,
    return
  }
  func.func @transform_0(%arg0: i32) -> (i32, i32, i32) {
    %c0_i32 = arith.constant 0 : i32
    %c0_i32_0 = arith.constant 0 : i32
    %c0_i32_1 = arith.constant 0 : i32
    return %arg0, %c0_i32, %c0_i32_0 : i32, i32, i32
  }
  func.func @transform_1(%arg0: i32) -> (i32, i32) {
    %c0_i32 = arith.constant 0 : i32
    %c0_i32_0 = arith.constant 0 : i32
    %c0_i32_1 = arith.constant 0 : i32
    return %c0_i32, %c0_i32_0 : i32, i32
  }
  func.func @transform_2(%arg0: i32) -> (i32, i32) {
    %c0_i32 = arith.constant 0 : i32
    %c0_i32_0 = arith.constant 0 : i32
    %c0_i32_1 = arith.constant 0 : i32
    return %c0_i32, %c0_i32_0 : i32, i32
  }
  func.func @transform_3(%arg0: i32) -> (i32, i32) {
    %c0_i32 = arith.constant 0 : i32
    %c0_i32_0 = arith.constant 0 : i32
    %c0_i32_1 = arith.constant 0 : i32
    return %c0_i32, %c0_i32_0 : i32, i32
  }
  func.func @transform_4(%arg0: i32) -> (i32, i32, i32) {
    %c0_i32 = arith.constant 0 : i32
    %c0_i32_0 = arith.constant 0 : i32
    %c0_i32_1 = arith.constant 0 : i32
    return %arg0, %c0_i32, %c0_i32_0 : i32, i32, i32
  }
}

</mosaic_0001>

<llo_original>
// kernel: simclr_stage2_forward.7
$region0: #{simclr_stage2_forward.7}
  #allocation0 [shape = 'u32[]', space=smem, size = 0x4, offset = 0x4, fixed_abs, tag = 'smem constant byte address 0x4 - core index']
  #allocation1 [shape = 'u32[144,128]{1,0:T(1,128)}', space=vmem, size = 0x12000, scoped, tag = 'internal scratch']
  %s0 = inlined_call_operand.vmem [shape: bf16[128,128], index: 0, kind: input, shape index: {}]
  %s1 = inlined_call_operand.vmem [shape: bf16[128,128], index: 1, kind: input, shape index: {}]
  %s2 = inlined_call_operand.vmem [shape: f32[128,128], index: 2, kind: output, shape index: {}]
  %s3 = sld [smem:[#allocation0]]
  $region18: #{simclr_stage2_forward.7} parent=0
    _
  %s5 = ssub.s32 1, %s3
  %s6 = scalar_select 0, %s5, %s3
  // Predicated region
  $region2: #{simclr_stage2_forward.7} parent=0 // pred_check
    _
  $region3: #{simclr_stage2_forward.7} parent=0 // pred_check_branch
    %8 = sbr.rel (0) target = $region5
  $region4: #{simclr_stage2_forward.7} parent=0 // pred_region
    _
  $region5: #{simclr_stage2_forward.7} parent=0 // pred_fallthru
    _
  // Predicated region
  $region6: #{simclr_stage2_forward.7} parent=0 // pred_check
    _
  $region7: #{simclr_stage2_forward.7} parent=0 // pred_check_branch
    %10 = sbr.rel (0) target = $region9
  $region8: #{simclr_stage2_forward.7} parent=0 // pred_region
    _
  $region9: #{simclr_stage2_forward.7} parent=0 // pred_fallthru
    _
  %v12 = vld [vmem:[%s0] sm:$0xf]
  %v13 = vld [vmem:[%s0 + $0x4] sm:$0xf]
  %v14 = vld [vmem:[%s0 + $0x8] sm:$0xf]
  %v15 = vld [vmem:[%s0 + $0xc] sm:$0xf]
  %v16 = vld [vmem:[%s0 + $0x10] sm:$0xf]
  %v17 = vld [vmem:[%s0 + $0x14] sm:$0xf]
  %v18 = vld [vmem:[%s0 + $0x18] sm:$0xf]
  %v19 = vld [vmem:[%s0 + $0x1c] sm:$0xf]
  %v20 = vld [vmem:[%s0 + $0x20] sm:$0xf]
  %v21 = vld [vmem:[%s0 + $0x24] sm:$0xf]
  %v22 = vld [vmem:[%s0 + $0x28] sm:$0xf]
  %v23 = vld [vmem:[%s0 + $0x2c] sm:$0xf]
  %v24 = vld [vmem:[%s0 + $0x30] sm:$0xf]
  %v25 = vld [vmem:[%s0 + $0x34] sm:$0xf]
  %v26 = vld [vmem:[%s0 + $0x38] sm:$0xf]
  %v27 = vld [vmem:[%s0 + $0x3c] sm:$0xf]
  %v28 = vld [vmem:[%s1] sm:$0xf]
  %v29 = vld [vmem:[%s1 + $0x4] sm:$0xf]
  %v30 = vld [vmem:[%s1 + $0x8] sm:$0xf]
  %v31 = vld [vmem:[%s1 + $0xc] sm:$0xf]
  %v32 = vld [vmem:[%s1 + $0x10] sm:$0xf]
  %v33 = vld [vmem:[%s1 + $0x14] sm:$0xf]
  %v34 = vld [vmem:[%s1 + $0x18] sm:$0xf]
  %v35 = vld [vmem:[%s1 + $0x1c] sm:$0xf]
  %v36 = vld [vmem:[%s1 + $0x20] sm:$0xf]
  %v37 = vld [vmem:[%s1 + $0x24] sm:$0xf]
  %v38 = vld [vmem:[%s1 + $0x28] sm:$0xf]
  %v39 = vld [vmem:[%s1 + $0x2c] sm:$0xf]
  %v40 = vld [vmem:[%s1 + $0x30] sm:$0xf]
  %v41 = vld [vmem:[%s1 + $0x34] sm:$0xf]
  %v42 = vld [vmem:[%s1 + $0x38] sm:$0xf]
  %v43 = vld [vmem:[%s1 + $0x3c] sm:$0xf]
  %v60 = vunpack.c.l.b16 %v12
  %v61 = vunpack.c.l.b16 %v13
  %v62 = vunpack.c.l.b16 %v14
  %v63 = vunpack.c.l.b16 %v15
  %v64 = vunpack.c.l.b16 %v16
  %v65 = vunpack.c.l.b16 %v17
  %v66 = vunpack.c.l.b16 %v18
  %v67 = vunpack.c.l.b16 %v19
  %v68 = vunpack.c.l.b16 %v20
  %v69 = vunpack.c.l.b16 %v21
  %v70 = vunpack.c.l.b16 %v22
  %v71 = vunpack.c.l.b16 %v23
  %v72 = vunpack.c.l.b16 %v24
  %v73 = vunpack.c.l.b16 %v25
  %v74 = vunpack.c.l.b16 %v26
  %v75 = vunpack.c.l.b16 %v27
  %v76 = vpack.c.b16 %v61, %v60
  %v77 = vpack.c.b16 %v63, %v62
  %v78 = vpack.c.b16 %v65, %v64
  %v79 = vpack.c.b16 %v67, %v66
  %v80 = vpack.c.b16 %v69, %v68
  %v81 = vpack.c.b16 %v71, %v70
  %v82 = vpack.c.b16 %v73, %v72
  %v83 = vpack.c.b16 %v75, %v74
  %v108 = vunpack.c.l.b16 %v28
  %v109 = vunpack.c.l.b16 %v29
  %v110 = vunpack.c.l.b16 %v30
  %v111 = vunpack.c.l.b16 %v31
  %v112 = vunpack.c.l.b16 %v32
  %v113 = vunpack.c.l.b16 %v33
  %v114 = vunpack.c.l.b16 %v34
  %v115 = vunpack.c.l.b16 %v35
  %v116 = vunpack.c.l.b16 %v36
  %v117 = vunpack.c.l.b16 %v37
  %v118 = vunpack.c.l.b16 %v38
  %v119 = vunpack.c.l.b16 %v39
  %v120 = vunpack.c.l.b16 %v40
  %v121 = vunpack.c.l.b16 %v41
  %v122 = vunpack.c.l.b16 %v42
  %v123 = vunpack.c.l.b16 %v43
  %v124 = vpack.c.b16 %v109, %v108
  %v125 = vpack.c.b16 %v111, %v110
  %v126 = vpack.c.b16 %v113, %v112
  %v127 = vpack.c.b16 %v115, %v114
  %v128 = vpack.c.b16 %v117, %v116
  %v129 = vpack.c.b16 %v119, %v118
  %v130 = vpack.c.b16 %v121, %v120
  %v131 = vpack.c.b16 %v123, %v122
  %140 = vmatprep.subr.bf16.mxu0 0
  %141 = vmatpush1.bf16.msra.mxu0 %v131
  %142 = vmatprep.subr.bf16.mxu0 0
  %143 = vmatpush1.bf16.msra.mxu0 %v130
  %144 = vmatprep.subr.bf16.mxu0 0
  %145 = vmatpush1.bf16.msra.mxu0 %v129
  %146 = vmatprep.subr.bf16.mxu0 0
  %147 = vmatpush1.bf16.msra.mxu0 %v128
  %148 = vmatprep.subr.bf16.mxu0 0
  %149 = vmatpush1.bf16.msra.mxu0 %v127
  %150 = vmatprep.subr.bf16.mxu0 0
  %151 = vmatpush1.bf16.msra.mxu0 %v126
  %152 = vmatprep.subr.bf16.mxu0 0
  %153 = vmatpush1.bf16.msra.mxu0 %v125
  %154 = vmatprep.subr.bf16.mxu0 0
  %155 = vmatpush1.bf16.msra.mxu0 %v124
  %156 = vmatprep.subr.bf16.mxu0 0
  %157 = vmatpush2.bf16.msra.mxu0 0
  %158 = vmatprep.subr.bf16.mxu0 0
  %159 = vmatpush2.bf16.msra.mxu0 0
  %160 = vmatprep.subr.bf16.mxu0 0
  %161 = vmatpush2.bf16.msra.mxu0 0
  %162 = vmatprep.subr.bf16.mxu0 0
  %163 = vmatpush2.bf16.msra.mxu0 0
  %164 = vmatprep.subr.bf16.mxu0 0
  %165 = vmatpush2.bf16.msra.mxu0 0
  %166 = vmatprep.subr.bf16.mxu0 0
  %167 = vmatpush2.bf16.msra.mxu0 0
  %168 = vmatprep.subr.bf16.mxu0 0
  %169 = vmatpush2.bf16.msra.mxu0 0
  %170 = vmatprep.subr.bf16.mxu0 0
  %171 = vmatpush2.bf16.msra.mxu0 0
  %172 = vmatprep.mubr.bf16.mxu0 0
  %173 = vmatmul.mubr.bf16.gmra.mxu0 %v76
  %v174 = vpop.f32.mrf.mxu0
  %v175 = vadd.f32 0.0, %v174
  %v176 = vpop.f32.mrf.mxu0
  %v177 = vpop.f32.mrf.mxu0
  %v178 = vadd.f32 0.0, %v177
  %v179 = vpop.f32.mrf.mxu0
  %180 = vmatprep.mubr.bf16.mxu0 0
  %181 = vmatmul.mubr.bf16.gmra.mxu0 %v77
  %v182 = vpop.f32.mrf.mxu0
  %v183 = vadd.f32 0.0, %v182
  %v184 = vpop.f32.mrf.mxu0
  %v185 = vpop.f32.mrf.mxu0
  %v186 = vadd.f32 0.0, %v185
  %v187 = vpop.f32.mrf.mxu0
  %188 = vmatprep.mubr.bf16.mxu0 0
  %189 = vmatmul.mubr.bf16.gmra.mxu0 %v78
  %v190 = vpop.f32.mrf.mxu0
  %v191 = vadd.f32 0.0, %v190
  %v192 = vpop.f32.mrf.mxu0
  %v193 = vpop.f32.mrf.mxu0
  %v194 = vadd.f32 0.0, %v193
  %v195 = vpop.f32.mrf.mxu0
  %196 = vmatprep.mubr.bf16.mxu0 0
  %197 = vmatmul.mubr.bf16.gmra.mxu0 %v79
  %v198 = vpop.f32.mrf.mxu0
  %v199 = vadd.f32 0.0, %v198
  %v200 = vpop.f32.mrf.mxu0
  %v201 = vpop.f32.mrf.mxu0
  %v202 = vadd.f32 0.0, %v201
  %v203 = vpop.f32.mrf.mxu0
  %204 = vmatprep.mubr.bf16.mxu0 0
  %205 = vmatmul.mubr.bf16.gmra.mxu0 %v80
  %v206 = vpop.f32.mrf.mxu0
  %v207 = vadd.f32 0.0, %v206
  %v208 = vpop.f32.mrf.mxu0
  %v209 = vpop.f32.mrf.mxu0
  %v210 = vadd.f32 0.0, %v209
  %v211 = vpop.f32.mrf.mxu0
  %212 = vmatprep.mubr.bf16.mxu0 0
  %213 = vmatmul.mubr.bf16.gmra.mxu0 %v81
  %v214 = vpop.f32.mrf.mxu0
  %v215 = vadd.f32 0.0, %v214
  %v216 = vpop.f32.mrf.mxu0
  %v217 = vpop.f32.mrf.mxu0
  %v218 = vadd.f32 0.0, %v217
  %v219 = vpop.f32.mrf.mxu0
  %220 = vmatprep.mubr.bf16.mxu0 0
  %221 = vmatmul.mubr.bf16.gmra.mxu0 %v82
  %v222 = vpop.f32.mrf.mxu0
  %v223 = vadd.f32 0.0, %v222
  %v224 = vpop.f32.mrf.mxu0
  %v225 = vpop.f32.mrf.mxu0
  %v226 = vadd.f32 0.0, %v225
  %v227 = vpop.f32.mrf.mxu0
  %228 = vmatprep.mubr.bf16.mxu0 0
  %229 = vmatmul.mubr.bf16.gmra.mxu0 %v83
  %v230 = vpop.f32.mrf.mxu0
  %v231 = vadd.f32 0.0, %v230
  %v232 = vpop.f32.mrf.mxu0
  %v233 = vpop.f32.mrf.mxu0
  %v234 = vadd.f32 0.0, %v233
  %v235 = vpop.f32.mrf.mxu0
  %236 = vdwg.mxu0
  %v237 = vmax.f32 %v175, 0.0
  %v238 = vmax.f32 %v178, 0.0
  %v239 = vmax.f32 %v183, 0.0
  %v240 = vmax.f32 %v186, 0.0
  %v241 = vmax.f32 %v191, 0.0
  %v242 = vmax.f32 %v194, 0.0
  %v243 = vmax.f32 %v199, 0.0
  %v244 = vmax.f32 %v202, 0.0
  %v245 = vmax.f32 %v207, 0.0
  %v246 = vmax.f32 %v210, 0.0
  %v247 = vmax.f32 %v215, 0.0
  %v248 = vmax.f32 %v218, 0.0
  %v249 = vmax.f32 %v223, 0.0
  %v250 = vmax.f32 %v226, 0.0
  %v251 = vmax.f32 %v231, 0.0
  %v252 = vmax.f32 %v234, 0.0
  %253 = vst [vmem:[%s2] sm:$0xff] %v237
  %254 = vst [vmem:[%s2 + $0x8] sm:$0xff] %v238
  %255 = vst [vmem:[%s2 + $0x10] sm:$0xff] %v239
  %256 = vst [vmem:[%s2 + $0x18] sm:$0xff] %v240
  %257 = vst [vmem:[%s2 + $0x20] sm:$0xff] %v241
  %258 = vst [vmem:[%s2 + $0x28] sm:$0xff] %v242
  %259 = vst [vmem:[%s2 + $0x30] sm:$0xff] %v243
  %260 = vst [vmem:[%s2 + $0x38] sm:$0xff] %v244
  %261 = vst [vmem:[%s2 + $0x40] sm:$0xff] %v245
  %262 = vst [vmem:[%s2 + $0x48] sm:$0xff] %v246
  %263 = vst [vmem:[%s2 + $0x50] sm:$0xff] %v247
  %264 = vst [vmem:[%s2 + $0x58] sm:$0xff] %v248
  %265 = vst [vmem:[%s2 + $0x60] sm:$0xff] %v249
  %266 = vst [vmem:[%s2 + $0x68] sm:$0xff] %v250
  %267 = vst [vmem:[%s2 + $0x70] sm:$0xff] %v251
  %268 = vst [vmem:[%s2 + $0x78] sm:$0xff] %v252
  // Predicated region
  $region10: #{simclr_stage2_forward.7} parent=0 // pred_check
    _
  $region11: #{simclr_stage2_forward.7} parent=0 // pred_check_branch
    %270 = sbr.rel (0) target = $region13
  $region12: #{simclr_stage2_forward.7} parent=0 // pred_region
    _
  $region13: #{simclr_stage2_forward.7} parent=0 // pred_fallthru
    _
  // Predicated region
  $region14: #{simclr_stage2_forward.7} parent=0 // pred_check
    _
  $region15: #{simclr_stage2_forward.7} parent=0 // pred_check_branch
    %272 = sbr.rel (0) target = $region17
  $region16: #{simclr_stage2_forward.7} parent=0 // pred_region
    _
  $region17: #{simclr_stage2_forward.7} parent=0 // pred_fallthru
    _

// kernel: simclr_stage2_forward.8
$region0: #{simclr_stage2_forward.8}
  #allocation0 [shape = 'u32[]', space=smem, size = 0x4, offset = 0x4, fixed_abs, tag = 'smem constant byte address 0x4 - core index']
  #allocation1 [shape = 'u32[144,128]{1,0:T(1,128)}', space=vmem, size = 0x12000, scoped, tag = 'internal scratch']
  %s0 = inlined_call_operand.vmem [shape: bf16[32,128], index: 0, kind: input, shape index: {}]
  %s1 = inlined_call_operand.vmem [shape: bf16[128,128], index: 1, kind: input, shape index: {}]
  %s2 = inlined_call_operand.vmem [shape: f32[32,128], index: 2, kind: output, shape index: {}]
  %s3 = sld [smem:[#allocation0]]
  $region18: #{simclr_stage2_forward.8} parent=0
    _
  %s5 = ssub.s32 1, %s3
  %s6 = scalar_select 0, %s5, %s3
  // Predicated region
  $region2: #{simclr_stage2_forward.8} parent=0 // pred_check
    _
  $region3: #{simclr_stage2_forward.8} parent=0 // pred_check_branch
    %8 = sbr.rel (0) target = $region5
  $region4: #{simclr_stage2_forward.8} parent=0 // pred_region
    _
  $region5: #{simclr_stage2_forward.8} parent=0 // pred_fallthru
    _
  // Predicated region
  $region6: #{simclr_stage2_forward.8} parent=0 // pred_check
    _
  $region7: #{simclr_stage2_forward.8} parent=0 // pred_check_branch
    %10 = sbr.rel (0) target = $region9
  $region8: #{simclr_stage2_forward.8} parent=0 // pred_region
    _
  $region9: #{simclr_stage2_forward.8} parent=0 // pred_fallthru
    _
  %v12 = vld [vmem:[%s0] sm:$0xf]
  %v13 = vld [vmem:[%s0 + $0x4] sm:$0xf]
  %v14 = vld [vmem:[%s0 + $0x8] sm:$0xf]
  %v15 = vld [vmem:[%s0 + $0xc] sm:$0xf]
  %v16 = vld [vmem:[%s1] sm:$0xf]
  %v17 = vld [vmem:[%s1 + $0x4] sm:$0xf]
  %v18 = vld [vmem:[%s1 + $0x8] sm:$0xf]
  %v19 = vld [vmem:[%s1 + $0xc] sm:$0xf]
  %v20 = vld [vmem:[%s1 + $0x10] sm:$0xf]
  %v21 = vld [vmem:[%s1 + $0x14] sm:$0xf]
  %v22 = vld [vmem:[%s1 + $0x18] sm:$0xf]
  %v23 = vld [vmem:[%s1 + $0x1c] sm:$0xf]
  %v24 = vld [vmem:[%s1 + $0x20] sm:$0xf]
  %v25 = vld [vmem:[%s1 + $0x24] sm:$0xf]
  %v26 = vld [vmem:[%s1 + $0x28] sm:$0xf]
  %v27 = vld [vmem:[%s1 + $0x2c] sm:$0xf]
  %v28 = vld [vmem:[%s1 + $0x30] sm:$0xf]
  %v29 = vld [vmem:[%s1 + $0x34] sm:$0xf]
  %v30 = vld [vmem:[%s1 + $0x38] sm:$0xf]
  %v31 = vld [vmem:[%s1 + $0x3c] sm:$0xf]
  %v36 = vunpack.c.l.b16 %v12
  %v37 = vunpack.c.l.b16 %v13
  %v38 = vunpack.c.l.b16 %v14
  %v39 = vunpack.c.l.b16 %v15
  %v40 = vpack.c.b16 %v37, %v36
  %v41 = vpack.c.b16 %v39, %v38
  %v60 = vunpack.c.l.b16 %v16
  %v61 = vunpack.c.l.b16 %v17
  %v62 = vunpack.c.l.b16 %v18
  %v63 = vunpack.c.l.b16 %v19
  %v64 = vunpack.c.l.b16 %v20
  %v65 = vunpack.c.l.b16 %v21
  %v66 = vunpack.c.l.b16 %v22
  %v67 = vunpack.c.l.b16 %v23
  %v68 = vunpack.c.l.b16 %v24
  %v69 = vunpack.c.l.b16 %v25
  %v70 = vunpack.c.l.b16 %v26
  %v71 = vunpack.c.l.b16 %v27
  %v72 = vunpack.c.l.b16 %v28
  %v73 = vunpack.c.l.b16 %v29
  %v74 = vunpack.c.l.b16 %v30
  %v75 = vunpack.c.l.b16 %v31
  %v76 = vpack.c.b16 %v61, %v60
  %v77 = vpack.c.b16 %v63, %v62
  %v78 = vpack.c.b16 %v65, %v64
  %v79 = vpack.c.b16 %v67, %v66
  %v80 = vpack.c.b16 %v69, %v68
  %v81 = vpack.c.b16 %v71, %v70
  %v82 = vpack.c.b16 %v73, %v72
  %v83 = vpack.c.b16 %v75, %v74
  %92 = vmatprep.subr.bf16.mxu0 0
  %93 = vmatpush1.bf16.msra.mxu0 %v83
  %94 = vmatprep.subr.bf16.mxu0 0
  %95 = vmatpush1.bf16.msra.mxu0 %v82
  %96 = vmatprep.subr.bf16.mxu0 0
  %97 = vmatpush1.bf16.msra.mxu0 %v81
  %98 = vmatprep.subr.bf16.mxu0 0
  %99 = vmatpush1.bf16.msra.mxu0 %v80
  %100 = vmatprep.subr.bf16.mxu0 0
  %101 = vmatpush1.bf16.msra.mxu0 %v79
  %102 = vmatprep.subr.bf16.mxu0 0
  %103 = vmatpush1.bf16.msra.mxu0 %v78
  %104 = vmatprep.subr.bf16.mxu0 0
  %105 = vmatpush1.bf16.msra.mxu0 %v77
  %106 = vmatprep.subr.bf16.mxu0 0
  %107 = vmatpush1.bf16.msra.mxu0 %v76
  %108 = vmatprep.subr.bf16.mxu0 0
  %109 = vmatpush2.bf16.msra.mxu0 0
  %110 = vmatprep.subr.bf16.mxu0 0
  %111 = vmatpush2.bf16.msra.mxu0 0
  %112 = vmatprep.subr.bf16.mxu0 0
  %113 = vmatpush2.bf16.msra.mxu0 0
  %114 = vmatprep.subr.bf16.mxu0 0
  %115 = vmatpush2.bf16.msra.mxu0 0
  %116 = vmatprep.subr.bf16.mxu0 0
  %117 = vmatpush2.bf16.msra.mxu0 0
  %118 = vmatprep.subr.bf16.mxu0 0
  %119 = vmatpush2.bf16.msra.mxu0 0
  %120 = vmatprep.subr.bf16.mxu0 0
  %121 = vmatpush2.bf16.msra.mxu0 0
  %122 = vmatprep.subr.bf16.mxu0 0
  %123 = vmatpush2.bf16.msra.mxu0 0
  %124 = vmatprep.mubr.bf16.mxu0 0
  %125 = vmatmul.mubr.bf16.gmra.mxu0 %v40
  %v126 = vpop.f32.mrf.mxu0
  %v127 = vadd.f32 0.0, %v126
  %v128 = vpop.f32.mrf.mxu0
  %v129 = vpop.f32.mrf.mxu0
  %v130 = vadd.f32 0.0, %v129
  %v131 = vpop.f32.mrf.mxu0
  %132 = vmatprep.mubr.bf16.mxu0 0
  %133 = vmatmul.mubr.bf16.gmra.mxu0 %v41
  %v134 = vpop.f32.mrf.mxu0
  %v135 = vadd.f32 0.0, %v134
  %v136 = vpop.f32.mrf.mxu0
  %v137 = vpop.f32.mrf.mxu0
  %v138 = vadd.f32 0.0, %v137
  %v139 = vpop.f32.mrf.mxu0
  %140 = vdwg.mxu0
  %v141 = vmax.f32 %v127, 0.0
  %v142 = vmax.f32 %v130, 0.0
  %v143 = vmax.f32 %v135, 0.0
  %v144 = vmax.f32 %v138, 0.0
  %145 = vst [vmem:[%s2] sm:$0xff] %v141
  %146 = vst [vmem:[%s2 + $0x8] sm:$0xff] %v142
  %147 = vst [vmem:[%s2 + $0x10] sm:$0xff] %v143
  %148 = vst [vmem:[%s2 + $0x18] sm:$0xff] %v144
  // Predicated region
  $region10: #{simclr_stage2_forward.8} parent=0 // pred_check
    _
  $region11: #{simclr_stage2_forward.8} parent=0 // pred_check_branch
    %150 = sbr.rel (0) target = $region13
  $region12: #{simclr_stage2_forward.8} parent=0 // pred_region
    _
  $region13: #{simclr_stage2_forward.8} parent=0 // pred_fallthru
    _
  // Predicated region
  $region14: #{simclr_stage2_forward.8} parent=0 // pred_check
    _
  $region15: #{simclr_stage2_forward.8} parent=0 // pred_check_branch
    %152 = sbr.rel (0) target = $region17
  $region16: #{simclr_stage2_forward.8} parent=0 // pred_region
    _
  $region17: #{simclr_stage2_forward.8} parent=0 // pred_fallthru
    _

// kernel: simclr_stage2_forward.9
$region0: #{simclr_stage2_forward.9}
  #allocation0 [shape = 'u32[]', space=smem, size = 0x4, offset = 0x4, fixed_abs, tag = 'smem constant byte address 0x4 - core index']
  #allocation1 [shape = 'u32[144,128]{1,0:T(1,128)}', space=vmem, size = 0x12000, scoped, tag = 'internal scratch']
  %s0 = inlined_call_operand.vmem [shape: f32[2,3,18,18], index: 0, kind: input, shape index: {}]
  %s1 = inlined_call_operand.vmem [shape: f32[2,16,16], index: 1, kind: output, shape index: {}]
  %s2 = sld [smem:[#allocation0]]
  $region37: #{simclr_stage2_forward.9} parent=0
    _
  %s4 = ssub.s32 1, %s2
  %s5 = scalar_select 0, %s4, %s2
  loop: start=0, step=1, limit=4
  $region2: #{simclr_stage2_forward.9} parent=0 // loop_pre_header
    _
  $region3: #{simclr_stage2_forward.9} parent=0 // loop_header
    %s7 = sphi 0, %s11
    %p8 = scmp.ge.s32.totalorder %s7, 4
    %s17 = sphi 0, %s19
    %s20 = sphi 0, %s17
    %s21 = sphi 0, %s20
    %s37 = sphi 0, %s21
    %s43 = sphi 0, %s45
    %s46 = sphi 0, %s43
    %s47 = sphi 0, %s46
    %s63 = sphi 0, %s47
  $region4: #{simclr_stage2_forward.9} parent=0 // loop_header_branch
    %10 = sbr.rel (%p8) target = $region8
  $region5: #{simclr_stage2_forward.9} parent=0 // loop_body
    %s12 = ssub.s32 %s7, 1
    %s13 = ssub.s32 %s7, 2
    %s14 = sadd.s32 %s7, 1
    %s15 = ssub.s32 %s7, %s14
    %p16 = scmp.eq.s32.totalorder %s15, 0
    %s18 = sadd.s32 %s17, 1
    %s19 = scalar_select %p16, %s17, %s18
    %p22 = pneg %p16
    %p23 = scmp.eq.s32.totalorder %s7, 1
    %p24 = por %p22, %p23
    %p25 = scmp.ne.s32.totalorder %s17, %s20
    %p26 = scmp.eq.s32.totalorder %s7, 0
    %p27 = por %p25, %p26
    %p28 = scmp.ne.s32.totalorder %s17, %s20
    %p29 = scmp.eq.s32.totalorder %s12, 1
    %p30 = por %p28, %p29
    %p31 = scmp.ne.s32.totalorder %s20, %s21
    %p32 = scmp.eq.s32.totalorder %s12, 0
    %p33 = por %p31, %p32
    %p34 = scmp.ne.s32.totalorder %s20, %s21
    %p35 = scmp.eq.s32.totalorder %s13, 1
    %p36 = por %p34, %p35
    %p38 = scmp.ne.s32.totalorder %s21, %s37
    %p39 = scmp.eq.s32.totalorder %s13, 0
    %p40 = por %p38, %p39
    %s41 = ssub.s32 %s7, %s14
    %p42 = scmp.eq.s32.totalorder %s41, 0
    %s44 = sadd.s32 %s43, 1
    %s45 = scalar_select %p42, %s43, %s44
    %p48 = pneg %p42
    %p49 = scmp.eq.s32.totalorder %s7, 1
    %p50 = por %p48, %p49
    %p51 = scmp.ne.s32.totalorder %s43, %s46
    %p52 = scmp.eq.s32.totalorder %s7, 0
    %p53 = por %p51, %p52
    %p54 = scmp.ne.s32.totalorder %s43, %s46
    %p55 = scmp.eq.s32.totalorder %s12, 1
    %p56 = por %p54, %p55
    %p57 = scmp.ne.s32.totalorder %s46, %s47
    %p58 = scmp.eq.s32.totalorder %s12, 0
    %p59 = por %p57, %p58
    %p60 = scmp.ne.s32.totalorder %s46, %s47
    %p61 = scmp.eq.s32.totalorder %s13, 1
    %p62 = por %p60, %p61
    %p64 = scmp.ne.s32.totalorder %s47, %s63
    %p65 = scmp.eq.s32.totalorder %s13, 0
    %p66 = por %p64, %p65
    %p67 = scmp.le.s32.totalorder 1, %s7
    %p68 = scmp.lt.s32.totalorder %s7, 3
    %p69 = pnand %p67, %p68
    %p70 = pneg %p69
    // Predicated region
    $region9: #{simclr_stage2_forward.9} parent=5 // pred_check
      _
    $region10: #{simclr_stage2_forward.9} parent=5 // pred_check_branch
      %72 = sbr.rel (%p69) target = $region12
    $region11: #{simclr_stage2_forward.9} parent=5 // pred_region
      %s73 = ssub.s32 %s7, 1
    $region12: #{simclr_stage2_forward.9} parent=5 // pred_fallthru
      _
    %p74 = scmp.lt.s32.totalorder %s7, 2
    // Predicated region
    $region13: #{simclr_stage2_forward.9} parent=5 // pred_check
      %p75 = pneg %p74
    $region14: #{simclr_stage2_forward.9} parent=5 // pred_check_branch
      %77 = sbr.rel (%p75) target = $region16
    $region15: #{simclr_stage2_forward.9} parent=5 // pred_region
      // Predicated region
      $region17: #{simclr_stage2_forward.9} parent=15 // pred_check
        %p78 = pneg %p27
      $region18: #{simclr_stage2_forward.9} parent=15 // pred_check_branch
        %80 = sbr.rel (%p78) target = $region20
      $region19: #{simclr_stage2_forward.9} parent=15 // pred_region
        %p81 = scmp.lt.s32.totalorder %s7, 1
        %s82 = scalar_select %p81, %s7, 1
        %s83 = smul.addr %s82, 9
        %s84 = smul.addr %s83, 8
        %s85 = scalar_lea.vmem %s0, %s84
      $region20: #{simclr_stage2_forward.9} parent=15 // pred_fallthru
        _
    $region16: #{simclr_stage2_forward.9} parent=5 // pred_fallthru
      _
    %p86 = scmp.le.s32.totalorder 1, %s7
    %p87 = scmp.lt.s32.totalorder %s7, 3
    %p88 = pnand %p86, %p87
    %p89 = pneg %p88
    // Predicated region
    $region21: #{simclr_stage2_forward.9} parent=5 // pred_check
      _
    $region22: #{simclr_stage2_forward.9} parent=5 // pred_check_branch
      %91 = sbr.rel (%p88) target = $region24
    $region23: #{simclr_stage2_forward.9} parent=5 // pred_region
      %s92 = ssub.s32 %s7, 1
      %p93 = scmp.lt.s32.totalorder %s12, 1
      %s94 = scalar_select %p93, %s12, 1
      %s95 = smul.addr %s94, 9
      %s96 = smul.addr %s95, 8
      %s97 = scalar_lea.vmem %s0, %s96
      %p98 = pneg %p33
      %p99 = pneg %p30
      %p100 = pneg %p59
      %p101 = pneg %p56
      %p102 = scmp.lt.s32.totalorder %s12, 1
      %s103 = scalar_select %p102, %s12, 1
      %s104 = smul.addr %s103, 2
      %s105 = smul.addr %s104, 8
      %s106 = scalar_lea.vmem %s1, %s105
      %p107 = scmp.lt.s32.totalorder %s12, 1
      %s108 = scalar_select %p107, %s12, 1
      %s109 = smul.addr %s108, 9
      %s110 = smul.addr %s109, 8
      %s111 = scalar_lea.vmem %s0, %s110
      %p112 = scmp.lt.s32.totalorder %s12, 1
      %s113 = scalar_select %p112, %s12, 1
      %s114 = smul.addr %s113, 2
      %s115 = smul.addr %s114, 8
      %s116 = scalar_lea.vmem %s1, %s115
      %v117 = vld [vmem:[%s111] sm:$0xff]
      %v118 = vld [vmem:[%s111 + $0x8] sm:$0xff]
      %v119 = vld [vmem:[%s111 + $0x10] sm:$0x3]
      %v120 = vld [vmem:[%s111 + $0x18] sm:$0xff]
      %v121 = vld [vmem:[%s111 + $0x20] sm:$0xff]
      %v122 = vld [vmem:[%s111 + $0x28] sm:$0x3]
      %v123 = vld [vmem:[%s111 + $0x30] sm:$0xff]
      %v124 = vld [vmem:[%s111 + $0x38] sm:$0xff]
      %v125 = vld [vmem:[%s111 + $0x40] sm:$0x3]
      %v126 = vmul.f32 %v117, 0.114
      %v127 = vmul.f32 %v118, 0.114
      %v128 = vmul.f32 %v119, 0.114
      %v129 = vmul.f32 %v120, 0.587
      %v130 = vmul.f32 %v121, 0.587
      %v131 = vmul.f32 %v122, 0.587
      %v132 = vadd.f32 %v126, %v129
      %v133 = vadd.f32 %v127, %v130
      %v134 = vadd.f32 %v128, %v131
      %v135 = vmul.f32 %v123, 0.299
      %v136 = vmul.f32 %v124, 0.299
      %v137 = vmul.f32 %v125, 0.299
      %v138 = vadd.f32 %v132, %v135
      %v139 = vadd.f32 %v133, %v136
      %v140 = vadd.f32 %v134, %v137
      %144 = vrot.lane.b32.xlu0 %v138, 1
      %v145 = vpop.permute.xlu0 %144
      %146 = vrot.lane.b32.xlu0 %v139, 1
      %v147 = vpop.permute.xlu0 %146
      %148 = vrot.lane.b32.xlu0 %v140, 1
      %v149 = vpop.permute.xlu0 %148
      %vm153 = vcmp.ge.f32.partialorder %v138, %v145
      %vm154 = vcmp.ge.f32.partialorder %v139, %v147
      %vm155 = vcmp.ge.f32.partialorder %v140, %v149
      %v156 = vsel %vm153, 1, 0
      %v157 = vsel %vm154, 1, 0
      %v158 = vsel %vm155, 1, 0
      %vm159 = vcmask 1040384
      %v160 = vrot.slane %v138, 7
      %v161 = vrot.slane %v139, 7
      %v162 = vsel %vm159, %v160, %v161
      %v163 = vrot.slane %v140, 7
      %v164 = vsel %vm159, %v161, %v163
      %165 = vrot.lane.b32.xlu0 %v160, 1
      %v166 = vpop.permute.xlu0 %165
      %167 = vrot.lane.b32.xlu0 %v162, 1
      %v168 = vpop.permute.xlu0 %167
      %169 = vrot.lane.b32.xlu0 %v164, 1
      %v170 = vpop.permute.xlu0 %169
      %vm174 = vcmp.ge.f32.partialorder %v138, %v166
      %vm175 = vcmp.ge.f32.partialorder %v139, %v168
      %vm176 = vcmp.ge.f32.partialorder %v140, %v170
      %v177 = vsel %vm174, 1, 0
      %v178 = vsel %vm175, 1, 0
      %v179 = vsel %vm176, 1, 0
      %v180 = vshll.u32 %v177, 1
      %v181 = vshll.u32 %v178, 1
      %v182 = vshll.u32 %v179, 1
      %vm183 = vcmask 1046528
      %v184 = vrot.slane %v180, 1
      %v185 = vrot.slane %v181, 1
      %v186 = vsel %vm183, %v184, %v185
      %v187 = vrot.slane %v182, 1
      %v188 = vsel %vm183, %v185, %v187
      %v189 = vor.u32 %v156, %v186
      %v190 = vor.u32 %v157, %v188
      %v191 = vor.u32 %v158, %v187
      %vm195 = vcmp.ge.f32.partialorder %v138, %v160
      %vm196 = vcmp.ge.f32.partialorder %v139, %v162
      %vm197 = vcmp.ge.f32.partialorder %v140, %v164
      %v198 = vsel %vm195, 1, 0
      %v199 = vsel %vm196, 1, 0
      %v200 = vsel %vm197, 1, 0
      %v201 = vshll.u32 %v198, 2
      %v202 = vshll.u32 %v199, 2
      %v203 = vshll.u32 %v200, 2
      %v204 = vrot.slane %v201, 1
      %v205 = vrot.slane %v202, 1
      %v206 = vsel %vm183, %v204, %v205
      %v207 = vrot.slane %v203, 1
      %v208 = vsel %vm183, %v205, %v207
      %209 = vrot.lane.b32.xlu0 %v206, 1
      %v210 = vpop.permute.xlu0 %209
      %211 = vrot.lane.b32.xlu0 %v208, 1
      %v212 = vpop.permute.xlu0 %211
      %213 = vrot.lane.b32.xlu0 %v207, 1
      %v214 = vpop.permute.xlu0 %213
      %v215 = vor.u32 %v189, %v210
      %v216 = vor.u32 %v190, %v212
      %v217 = vor.u32 %v191, %v214
      %218 = vrot.lane.b32.xlu0 %v160, 127
      %v219 = vpop.permute.xlu0 %218
      %220 = vrot.lane.b32.xlu0 %v162, 127
      %v221 = vpop.permute.xlu0 %220
      %222 = vrot.lane.b32.xlu0 %v164, 127
      %v223 = vpop.permute.xlu0 %222
      %vm227 = vcmp.ge.f32.partialorder %v138, %v219
      %vm228 = vcmp.ge.f32.partialorder %v139, %v221
      %vm229 = vcmp.ge.f32.partialorder %v140, %v223
      %v230 = vsel %vm227, 1, 0
      %v231 = vsel %vm228, 1, 0
      %v232 = vsel %vm229, 1, 0
      %v233 = vshll.u32 %v230, 3
      %v234 = vshll.u32 %v231, 3
      %v235 = vshll.u32 %v232, 3
      %v236 = vrot.slane %v233, 1
      %v237 = vrot.slane %v234, 1
      %v238 = vsel %vm183, %v236, %v237
      %v239 = vrot.slane %v235, 1
      %v240 = vsel %vm183, %v237, %v239
      %241 = vrot.lane.b32.xlu0 %v238, 2
      %v242 = vpop.permute.xlu0 %241
      %243 = vrot.lane.b32.xlu0 %v240, 2
      %v244 = vpop.permute.xlu0 %243
      %245 = vrot.lane.b32.xlu0 %v239, 2
      %v246 = vpop.permute.xlu0 %245
      %v247 = vor.u32 %v215, %v242
      %v248 = vor.u32 %v216, %v244
      %v249 = vor.u32 %v217, %v246
      %250 = vrot.lane.b32.xlu0 %v138, 127
      %v251 = vpop.permute.xlu0 %250
      %252 = vrot.lane.b32.xlu0 %v139, 127
      %v253 = vpop.permute.xlu0 %252
      %254 = vrot.lane.b32.xlu0 %v140, 127
      %v255 = vpop.permute.xlu0 %254
      %vm259 = vcmp.ge.f32.partialorder %v138, %v251
      %vm260 = vcmp.ge.f32.partialorder %v139, %v253
      %vm261 = vcmp.ge.f32.partialorder %v140, %v255
      %v262 = vsel %vm259, 1, 0
      %v263 = vsel %vm260, 1, 0
      %v264 = vsel %vm261, 1, 0
      %v265 = vshll.u32 %v262, 4
      %v266 = vshll.u32 %v263, 4
      %v267 = vshll.u32 %v264, 4
      %268 = vrot.lane.b32.xlu0 %v265, 2
      %v269 = vpop.permute.xlu0 %268
      %270 = vrot.lane.b32.xlu0 %v266, 2
      %v271 = vpop.permute.xlu0 %270
      %272 = vrot.lane.b32.xlu0 %v267, 2
      %v273 = vpop.permute.xlu0 %272
      %v274 = vor.u32 %v247, %v269
      %v275 = vor.u32 %v248, %v271
      %v276 = vor.u32 %v249, %v273
      %v277 = vrot.slane %v138, 1
      %v278 = vrot.slane %v139, 1
      %v279 = vsel %vm183, %v277, %v278
      %v280 = vrot.slane %v140, 1
      %v281 = vsel %vm183, %v278, %v280
      %282 = vrot.lane.b32.xlu0 %v279, 127
      %v283 = vpop.permute.xlu0 %282
      %284 = vrot.lane.b32.xlu0 %v281, 127
      %v285 = vpop.permute.xlu0 %284
      %vm288 = vcmp.ge.f32.partialorder %v138, %v283
      %vm289 = vcmp.ge.f32.partialorder %v139, %v285
      %v290 = vsel %vm288, 1, 0
      %v291 = vsel %vm289, 1, 0
      %v292 = vshll.u32 %v290, 5
      %v293 = vshll.u32 %v291, 5
      %v294 = vrot.slane %v292, 7
      %v295 = vrot.slane %v293, 7
      %v296 = vsel %vm159, %v294, %v295
      %297 = vrot.lane.b32.xlu0 %v294, 2
      %v298 = vpop.permute.xlu0 %297
      %299 = vrot.lane.b32.xlu0 %v296, 2
      %v300 = vpop.permute.xlu0 %299
      %301 = vrot.lane.b32.xlu0 %v295, 2
      %v302 = vpop.permute.xlu0 %301
      %v303 = vor.u32 %v274, %v298
      %v304 = vor.u32 %v275, %v300
      %v305 = vor.u32 %v276, %v302
      %vm308 = vcmp.ge.f32.partialorder %v138, %v279
      %vm309 = vcmp.ge.f32.partialorder %v139, %v281
      %v310 = vsel %vm308, 1, 0
      %v311 = vsel %vm309, 1, 0
      %v312 = vshll.u32 %v310, 6
      %v313 = vshll.u32 %v311, 6
      %v314 = vrot.slane %v312, 7
      %v315 = vrot.slane %v313, 7
      %v316 = vsel %vm159, %v314, %v315
      %317 = vrot.lane.b32.xlu0 %v314, 1
      %v318 = vpop.permute.xlu0 %317
      %319 = vrot.lane.b32.xlu0 %v316, 1
      %v320 = vpop.permute.xlu0 %319
      %321 = vrot.lane.b32.xlu0 %v315, 1
      %v322 = vpop.permute.xlu0 %321
      %v323 = vor.u32 %v303, %v318
      %v324 = vor.u32 %v304, %v320
      %v325 = vor.u32 %v305, %v322
      %326 = vrot.lane.b32.xlu0 %v279, 1
      %v327 = vpop.permute.xlu0 %326
      %328 = vrot.lane.b32.xlu0 %v281, 1
      %v329 = vpop.permute.xlu0 %328
      %vm332 = vcmp.ge.f32.partialorder %v138, %v327
      %vm333 = vcmp.ge.f32.partialorder %v139, %v329
      %v334 = vsel %vm332, 1, 0
      %v335 = vsel %vm333, 1, 0
      %v336 = vshll.u32 %v334, 7
      %v337 = vshll.u32 %v335, 7
      %v338 = vrot.slane %v336, 7
      %v339 = vrot.slane %v337, 7
      %v340 = vsel %vm159, %v338, %v339
      %v341 = vor.u32 %v323, %v338
      %v342 = vor.u32 %v324, %v340
      %v343 = vor.u32 %v325, %v339
      %v344 = vcvt.s32.f32 %v341
      %v345 = vcvt.s32.f32 %v342
      %v346 = vcvt.s32.f32 %v343
      %350 = vrot.lane.b32.xlu0 %v344, 126
      %v351 = vpop.permute.xlu0 %350
      %352 = vrot.lane.b32.xlu0 %v345, 126
      %v353 = vpop.permute.xlu0 %352
      %354 = vrot.lane.b32.xlu0 %v346, 126
      %v355 = vpop.permute.xlu0 %354
      %vm359 = vcmask 130049
      %360 = vst.msk [vmem:[%s116 - $0x1] sm:$0xfe] %vm359, %v351
      %vm361 = vcmask 130048
      %362 = vst.msk [vmem:[%s116 + $0x7] sm:$0xff] %vm361, %v353
      %vm363 = vcmask 122880
      %364 = vst.msk [vmem:[%s116 + $0xf] sm:$0x1] %vm363, %v355
      %p365 = scmp.lt.s32.totalorder %s12, 1
      %s366 = scalar_select %p365, %s12, 1
      %s367 = smul.addr %s366, 2
      %s368 = smul.addr %s367, 8
      %s369 = scalar_lea.vmem %s1, %s368
      // Predicated region
      $region25: #{simclr_stage2_forward.9} parent=23 // pred_check
        %p370 = pneg %p56
      $region26: #{simclr_stage2_forward.9} parent=23 // pred_check_branch
        %372 = sbr.rel (%p370) target = $region28
      $region27: #{simclr_stage2_forward.9} parent=23 // pred_region
        _
      $region28: #{simclr_stage2_forward.9} parent=23 // pred_fallthru
        _
    $region24: #{simclr_stage2_forward.9} parent=5 // pred_fallthru
      _
    %p373 = scmp.le.s32.totalorder 2, %s7
    // Predicated region
    $region29: #{simclr_stage2_forward.9} parent=5 // pred_check
      %p374 = pneg %p373
    $region30: #{simclr_stage2_forward.9} parent=5 // pred_check_branch
      %376 = sbr.rel (%p374) target = $region32
    $region31: #{simclr_stage2_forward.9} parent=5 // pred_region
      %s377 = ssub.s32 %s7, 2
      // Predicated region
      $region33: #{simclr_stage2_forward.9} parent=31 // pred_check
        %p378 = pneg %p62
      $region34: #{simclr_stage2_forward.9} parent=31 // pred_check_branch
        %380 = sbr.rel (%p378) target = $region36
      $region35: #{simclr_stage2_forward.9} parent=31 // pred_region
        %p381 = scmp.lt.s32.totalorder %s13, 1
        %s382 = scalar_select %p381, %s13, 1
        %s383 = smul.addr %s382, 2
        %s384 = smul.addr %s383, 8
        %s385 = scalar_lea.vmem %s1, %s384
      $region36: #{simclr_stage2_forward.9} parent=31 // pred_fallthru
        _
    $region32: #{simclr_stage2_forward.9} parent=5 // pred_fallthru
      _
  $region6: #{simclr_stage2_forward.9} parent=0 // loop_footer
    %s11 = sadd.s32 1, %s7
  $region7: #{simclr_stage2_forward.9} parent=0 // loop_footer_branch
    %6 = sbr.rel target = $region3
  $region8: #{simclr_stage2_forward.9} parent=0 // loop_exit
    _

// kernel: simclr_stage2_forward.10
$region0: #{simclr_stage2_forward.10}
  #allocation0 [shape = 'u32[]', space=smem, size = 0x4, offset = 0x4, fixed_abs, tag = 'smem constant byte address 0x4 - core index']
  #allocation1 [shape = 'u32[144,128]{1,0:T(1,128)}', space=vmem, size = 0x12000, scoped, tag = 'internal scratch']
  %s0 = inlined_call_operand.vmem [shape: f32[2,8,10,10], index: 0, kind: input, shape index: {}]
  %s1 = inlined_call_operand.vmem [shape: f32[99], index: 1, kind: input, shape index: {}]
  %s2 = inlined_call_operand.vmem [shape: f32[2,8,4,4], index: 2, kind: output, shape index: {}]
  %s3 = sld [smem:[#allocation0]]
  $region45: #{simclr_stage2_forward.10} parent=0
    _
  %s5 = ssub.s32 1, %s3
  %s6 = scalar_select 0, %s5, %s3
  $region1: #{simclr_stage2_forward.10} parent=0
    #allocation2 [shape = 'u8[512]{0}', space=smem, size = 0x200, scoped, tag = 'input window, operand 1, single buffered']
    #allocation3 [shape = 's32[2]{0}', space=sflag, size = 0x8, scoped, tag = 'scoped memory for simclr_stage2_forward.10']
    %7 = vsyncpa [#allocation3], 0
    loop: start=0, step=1, limit=4
    $region2: #{simclr_stage2_forward.10} parent=1 // loop_pre_header
      _
    $region3: #{simclr_stage2_forward.10} parent=1 // loop_header
      %s9 = sphi 0, %s13
      %p10 = scmp.ge.s32.totalorder %s9, 4
      %s19 = sphi 0, %s21
      %s22 = sphi 0, %s19
      %s23 = sphi 0, %s22
      %s39 = sphi 0, %s23
      %s43 = sphi 0, %s43
      %s45 = sphi 0, %s43
      %s46 = sphi 0, %s45
      %s60 = sphi 0, %s46
      %s66 = sphi 0, %s68
      %s69 = sphi 0, %s66
      %s70 = sphi 0, %s69
      %s86 = sphi 0, %s70
    $region4: #{simclr_stage2_forward.10} parent=1 // loop_header_branch
      %12 = sbr.rel (%p10) target = $region8
    $region5: #{simclr_stage2_forward.10} parent=1 // loop_body
      %s14 = ssub.s32 %s9, 1
      %s15 = ssub.s32 %s9, 2
      %s16 = sadd.s32 %s9, 1
      %s17 = ssub.s32 %s9, %s16
      %p18 = scmp.eq.s32.totalorder %s17, 0
      %s20 = sadd.s32 %s19, 1
      %s21 = scalar_select %p18, %s19, %s20
      %p24 = pneg %p18
      %p25 = scmp.eq.s32.totalorder %s9, 1
      %p26 = por %p24, %p25
      %p27 = scmp.ne.s32.totalorder %s19, %s22
      %p28 = scmp.eq.s32.totalorder %s9, 0
      %p29 = por %p27, %p28
      %p30 = scmp.ne.s32.totalorder %s19, %s22
      %p31 = scmp.eq.s32.totalorder %s14, 1
      %p32 = por %p30, %p31
      %p33 = scmp.ne.s32.totalorder %s22, %s23
      %p34 = scmp.eq.s32.totalorder %s14, 0
      %p35 = por %p33, %p34
      %p36 = scmp.ne.s32.totalorder %s22, %s23
      %p37 = scmp.eq.s32.totalorder %s15, 1
      %p38 = por %p36, %p37
      %p40 = scmp.ne.s32.totalorder %s23, %s39
      %p41 = scmp.eq.s32.totalorder %s15, 0
      %p42 = por %p40, %p41
      %s44 = sadd.s32 %s43, 1
      %p47 = scmp.eq.s32.totalorder %s9, 1
      %p48 = scmp.ne.s32.totalorder %s43, %s45
      %p49 = scmp.eq.s32.totalorder %s9, 0
      %p50 = por %p48, %p49
      %p51 = scmp.ne.s32.totalorder %s43, %s45
      %p52 = scmp.eq.s32.totalorder %s14, 1
      %p53 = por %p51, %p52
      %p54 = scmp.ne.s32.totalorder %s45, %s46
      %p55 = scmp.eq.s32.totalorder %s14, 0
      %p56 = por %p54, %p55
      %p57 = scmp.ne.s32.totalorder %s45, %s46
      %p58 = scmp.eq.s32.totalorder %s15, 1
      %p59 = por %p57, %p58
      %p61 = scmp.ne.s32.totalorder %s46, %s60
      %p62 = scmp.eq.s32.totalorder %s15, 0
      %p63 = por %p61, %p62
      %s64 = ssub.s32 %s9, %s16
      %p65 = scmp.eq.s32.totalorder %s64, 0
      %s67 = sadd.s32 %s66, 1
      %s68 = scalar_select %p65, %s66, %s67
      %p71 = pneg %p65
      %p72 = scmp.eq.s32.totalorder %s9, 1
      %p73 = por %p71, %p72
      %p74 = scmp.ne.s32.totalorder %s66, %s69
      %p75 = scmp.eq.s32.totalorder %s9, 0
      %p76 = por %p74, %p75
      %p77 = scmp.ne.s32.totalorder %s66, %s69
      %p78 = scmp.eq.s32.totalorder %s14, 1
      %p79 = por %p77, %p78
      %p80 = scmp.ne.s32.totalorder %s69, %s70
      %p81 = scmp.eq.s32.totalorder %s14, 0
      %p82 = por %p80, %p81
      %p83 = scmp.ne.s32.totalorder %s69, %s70
      %p84 = scmp.eq.s32.totalorder %s15, 1
      %p85 = por %p83, %p84
      %p87 = scmp.ne.s32.totalorder %s70, %s86
      %p88 = scmp.eq.s32.totalorder %s15, 0
      %p89 = por %p87, %p88
      %p90 = scmp.le.s32.totalorder 1, %s9
      %p91 = scmp.lt.s32.totalorder %s9, 3
      %p92 = pnand %p90, %p91
      %p93 = pneg %p92
      // Predicated region
      $region9: #{simclr_stage2_forward.10} parent=5 // pred_check
        _
      $region10: #{simclr_stage2_forward.10} parent=5 // pred_check_branch
        %95 = sbr.rel (%p92) target = $region12
      $region11: #{simclr_stage2_forward.10} parent=5 // pred_region
        %s96 = ssub.s32 %s9, 1
        // Predicated region
        $region13: #{simclr_stage2_forward.10} parent=11 // pred_check
          %p97 = pneg %p56
        $region14: #{simclr_stage2_forward.10} parent=11 // pred_check_branch
          %99 = sbr.rel (%p97) target = $region16
        $region15: #{simclr_stage2_forward.10} parent=11 // pred_region
          %s101 = ssub.s32 16, 16
          %102 = vsyncadd [#allocation3], %s101
          %s104 = sshll.u32 %s1, 4
          %s105 = int_to_ptr.vmem [resolvable:$true] %s104
          %107 = dma.vmem_to_smem %s105, 16, [#allocation2], [#allocation3]
        $region16: #{simclr_stage2_forward.10} parent=11 // pred_fallthru
          _
      $region12: #{simclr_stage2_forward.10} parent=5 // pred_fallthru
        _
      %p108 = scmp.lt.s32.totalorder %s9, 2
      // Predicated region
      $region17: #{simclr_stage2_forward.10} parent=5 // pred_check
        %p109 = pneg %p108
      $region18: #{simclr_stage2_forward.10} parent=5 // pred_check_branch
        %111 = sbr.rel (%p109) target = $region20
      $region19: #{simclr_stage2_forward.10} parent=5 // pred_region
        // Predicated region
        $region21: #{simclr_stage2_forward.10} parent=19 // pred_check
          %p112 = pneg %p29
        $region22: #{simclr_stage2_forward.10} parent=19 // pred_check_branch
          %114 = sbr.rel (%p112) target = $region24
        $region23: #{simclr_stage2_forward.10} parent=19 // pred_region
          %p115 = scmp.lt.s32.totalorder %s9, 1
          %s116 = scalar_select %p115, %s9, 1
          %s117 = smul.addr %s116, 16
          %s118 = smul.addr %s117, 8
          %s119 = scalar_lea.vmem %s0, %s118
        $region24: #{simclr_stage2_forward.10} parent=19 // pred_fallthru
          _
      $region20: #{simclr_stage2_forward.10} parent=5 // pred_fallthru
        _
      %p120 = scmp.le.s32.totalorder 1, %s9
      %p121 = scmp.lt.s32.totalorder %s9, 3
      %p122 = pnand %p120, %p121
      %p123 = pneg %p122
      // Predicated region
      $region25: #{simclr_stage2_forward.10} parent=5 // pred_check
        _
      $region26: #{simclr_stage2_forward.10} parent=5 // pred_check_branch
        %125 = sbr.rel (%p122) target = $region28
      $region27: #{simclr_stage2_forward.10} parent=5 // pred_region
        %s126 = ssub.s32 %s9, 1
        // Predicated region
        $region29: #{simclr_stage2_forward.10} parent=27 // pred_check
          %p127 = pneg %p56
        $region30: #{simclr_stage2_forward.10} parent=27 // pred_check_branch
          %129 = sbr.rel (%p127) target = $region32
        $region31: #{simclr_stage2_forward.10} parent=27 // pred_region
          %130 = dma.done [#allocation3], 16
        $region32: #{simclr_stage2_forward.10} parent=27 // pred_fallthru
          _
        %131 = sfence
        %p132 = scmp.lt.s32.totalorder %s14, 1
        %s133 = scalar_select %p132, %s14, 1
        %s134 = smul.addr %s133, 16
        %s135 = smul.addr %s134, 8
        %s136 = scalar_lea.vmem %s0, %s135
        %p137 = pneg %p35
        %p138 = pneg %p32
        %p139 = pneg %p56
        %p140 = pneg %p53
        %p141 = pneg %p82
        %p142 = pneg %p79
        %p143 = scmp.lt.s32.totalorder %s14, 1
        %s144 = scalar_select %p143, %s14, 1
        %s145 = smul.addr %s144, 8
        %s146 = smul.addr %s145, 4
        %s147 = scalar_lea.vmem %s2, %s146
        %p148 = scmp.lt.s32.totalorder %s14, 1
        %s149 = scalar_select %p148, %s14, 1
        %s150 = smul.addr %s149, 16
        %s151 = smul.addr %s150, 8
        %s152 = scalar_lea.vmem %s0, %s151
        %p153 = scmp.lt.s32.totalorder %s14, 1
        %s154 = scalar_select %p153, %s14, 1
        %s155 = smul.addr %s154, 8
        %s156 = smul.addr %s155, 4
        %s157 = scalar_lea.vmem %s2, %s156
        %v158 = vld [vmem:[%s152] sm:$0xff]
        %v159 = vld [vmem:[%s152 + $0x8] sm:$0x3]
        %v160 = vld [vmem:[%s152 + $0x10] sm:$0xff]
        %v161 = vld [vmem:[%s152 + $0x18] sm:$0x3]
        %v162 = vld [vmem:[%s152 + $0x20] sm:$0xff]
        %v163 = vld [vmem:[%s152 + $0x28] sm:$0x3]
        %v164 = vld [vmem:[%s152 + $0x30] sm:$0xff]
        %v165 = vld [vmem:[%s152 + $0x38] sm:$0x3]
        %v166 = vld [vmem:[%s152 + $0x40] sm:$0xff]
        %v167 = vld [vmem:[%s152 + $0x48] sm:$0x3]
        %v168 = vld [vmem:[%s152 + $0x50] sm:$0xff]
        %v169 = vld [vmem:[%s152 + $0x58] sm:$0x3]
        %v170 = vld [vmem:[%s152 + $0x60] sm:$0xff]
        %v171 = vld [vmem:[%s152 + $0x68] sm:$0x3]
        %v172 = vld [vmem:[%s152 + $0x70] sm:$0xff]
        %v173 = vld [vmem:[%s152 + $0x78] sm:$0x3]
        %vm174 = vcmask 80896
        %v175 = vsel %vm174, %v158, -inf
        %v176 = vsel %vm174, %v160, -inf
        %v177 = vsel %vm174, %v162, -inf
        %v178 = vmax.f32 %v175, %v177
        %v179 = vsel %vm174, %v164, -inf
        %v180 = vmax.f32 %v176, %v179
        %v181 = vsel %vm174, %v166, -inf
        %v182 = vmax.f32 %v178, %v181
        %v183 = vsel %vm174, %v168, -inf
        %v184 = vmax.f32 %v180, %v183
        %v185 = vsel %vm174, %v170, -inf
        %v186 = vmax.f32 %v182, %v185
        %v187 = vsel %vm174, %v172, -inf
        %v188 = vmax.f32 %v184, %v187
        %v189 = vmax.f32 %v186, %v188
        %vm190 = vcmask 74752
        %v191 = vsel %vm190, %v159, -inf
        %v192 = vsel %vm190, %v161, -inf
        %v193 = vsel %vm190, %v163, -inf
        %v194 = vmax.f32 %v191, %v193
        %v195 = vsel %vm190, %v165, -inf
        %v196 = vmax.f32 %v192, %v195
        %v197 = vsel %vm190, %v167, -inf
        %v198 = vmax.f32 %v194, %v197
        %v199 = vsel %vm190, %v169, -inf
        %v200 = vmax.f32 %v196, %v199
        %v201 = vsel %vm190, %v171, -inf
        %v202 = vmax.f32 %v198, %v201
        %v203 = vsel %vm190, %v173, -inf
        %v204 = vmax.f32 %v200, %v203
        %v205 = vmax.f32 %v202, %v204
        %v206 = vsel %vm174, %v158, 0.0
        %v207 = vsel %vm174, %v160, 0.0
        %v208 = vadd.f32 %v206, %v207
        %v209 = vsel %vm174, %v162, 0.0
        %v210 = vadd.f32 %v208, %v209
        %v211 = vsel %vm174, %v164, 0.0
        %v212 = vadd.f32 %v210, %v211
        %v213 = vsel %vm174, %v166, 0.0
        %v214 = vadd.f32 %v212, %v213
        %v215 = vsel %vm174, %v168, 0.0
        %v216 = vadd.f32 %v214, %v215
        %v217 = vsel %vm174, %v170, 0.0
        %v218 = vadd.f32 %v216, %v217
        %v219 = vsel %vm174, %v172, 0.0
        %v220 = vadd.f32 %v218, %v219
        %v221 = vsel %vm190, %v159, 0.0
        %v222 = vsel %vm190, %v161, 0.0
        %v223 = vadd.f32 %v221, %v222
        %v224 = vsel %vm190, %v163, 0.0
        %v225 = vadd.f32 %v223, %v224
        %v226 = vsel %vm190, %v165, 0.0
        %v227 = vadd.f32 %v225, %v226
        %v228 = vsel %vm190, %v167, 0.0
        %v229 = vadd.f32 %v227, %v228
        %v230 = vsel %vm190, %v169, 0.0
        %v231 = vadd.f32 %v229, %v230
        %v232 = vsel %vm190, %v171, 0.0
        %v233 = vadd.f32 %v231, %v232
        %v234 = vsel %vm190, %v173, 0.0
        %v235 = vadd.f32 %v233, %v234
        %v236 = vrcp.pop 8.0
        %v237 = vmul.f32 %v220, %v236
        %v238 = vmul.f32 %v235, %v236
        %s239 = sld [smem:[#allocation2 + $0x62]]
        %v240 = vstv %s239
        %v241 = vadd.f32 %v240, 0.0
        %s242 = sld [smem:[#allocation2]]
        %v243 = vstv %s242
        %v244 = vmul.f32 %v243, %v189
        %v245 = vadd.f32 %v241, %v244
        %s246 = sld [smem:[#allocation2 + $0x1]]
        %v247 = vstv %s246
        %v248 = vmul.f32 %v247, %v237
        %v249 = vadd.f32 %v245, %v248
        %s250 = sld [smem:[#allocation2 + $0x2]]
        %v251 = vstv %s250
        %v252 = vmul.f32 %v251, %v189
        %254 = vrot.lane.b32.xlu0 %v252, 127
        %v255 = vpop.permute.xlu0 %254
        %v257 = vadd.f32 %v249, %v255
        %s258 = sld [smem:[#allocation2 + $0x3]]
        %v259 = vstv %s258
        %v260 = vmul.f32 %v259, %v237
        %262 = vrot.lane.b32.xlu0 %v260, 127
        %v263 = vpop.permute.xlu0 %262
        %v265 = vadd.f32 %v257, %v263
        %s266 = sld [smem:[#allocation2 + $0x4]]
        %v267 = vstv %s266
        %v268 = vmul.f32 %v267, %v189
        %270 = vrot.lane.b32.xlu0 %v268, 126
        %v271 = vpop.permute.xlu0 %270
        %v273 = vadd.f32 %v265, %v271
        %s274 = sld [smem:[#allocation2 + $0x5]]
        %v275 = vstv %s274
        %v276 = vmul.f32 %v275, %v237
        %278 = vrot.lane.b32.xlu0 %v276, 126
        %v279 = vpop.permute.xlu0 %278
        %v281 = vadd.f32 %v273, %v279
        %s282 = sld [smem:[#allocation2 + $0x6]]
        %v283 = vstv %s282
        %v284 = vmul.f32 %v283, %v189
        %286 = vrot.lane.b32.xlu0 %v284, 125
        %v287 = vpop.permute.xlu0 %286
        %v289 = vadd.f32 %v281, %v287
        %s290 = sld [smem:[#allocation2 + $0x7]]
        %v291 = vstv %s290
        %v292 = vmul.f32 %v291, %v237
        %294 = vrot.lane.b32.xlu0 %v292, 125
        %v295 = vpop.permute.xlu0 %294
        %v297 = vadd.f32 %v289, %v295
        %s298 = sld [smem:[#allocation2 + $0x8]]
        %v299 = vstv %s298
        %v300 = vmul.f32 %v299, %v189
        %302 = vrot.lane.b32.xlu0 %v300, 124
        %v303 = vpop.permute.xlu0 %302
        %v305 = vadd.f32 %v297, %v303
        %s306 = sld [smem:[#allocation2 + $0x9]]
        %v307 = vstv %s306
        %v308 = vmul.f32 %v307, %v237
        %310 = vrot.lane.b32.xlu0 %v308, 124
        %v311 = vpop.permute.xlu0 %310
        %v313 = vadd.f32 %v305, %v311
        %s314 = sld [smem:[#allocation2 + $0xa]]
        %v315 = vstv %s314
        %v316 = vmul.f32 %v315, %v189
        %318 = vrot.lane.b32.xlu0 %v316, 123
        %v319 = vpop.permute.xlu0 %318
        %v321 = vadd.f32 %v313, %v319
        %s322 = sld [smem:[#allocation2 + $0xb]]
        %v323 = vstv %s322
        %v324 = vmul.f32 %v323, %v237
        %326 = vrot.lane.b32.xlu0 %v324, 123
        %v327 = vpop.permute.xlu0 %326
        %v329 = vadd.f32 %v321, %v327
        %s330 = sld [smem:[#allocation2 + $0xc]]
        %v331 = vstv %s330
        %v332 = vmul.f32 %v331, %v189
        %334 = vrot.lane.b32.xlu0 %v332, 122
        %v335 = vpop.permute.xlu0 %334
        %v337 = vadd.f32 %v329, %v335
        %s338 = sld [smem:[#allocation2 + $0xd]]
        %v339 = vstv %s338
        %v340 = vmul.f32 %v339, %v237
        %342 = vrot.lane.b32.xlu0 %v340, 122
        %v343 = vpop.permute.xlu0 %342
        %v345 = vadd.f32 %v337, %v343
        %s346 = sld [smem:[#allocation2 + $0xe]]
        %v347 = vstv %s346
        %v348 = vmul.f32 %v347, %v189
        %v350 = vrot.slane %v348, 1
        %v352 = vadd.f32 %v345, %v350
        %s353 = sld [smem:[#allocation2 + $0xf]]
        %v354 = vstv %s353
        %v355 = vmul.f32 %v354, %v237
        %v357 = vrot.slane %v355, 1
        %v359 = vadd.f32 %v352, %v357
        %s360 = sld [smem:[#allocation2 + $0x10]]
        %v361 = vstv %s360
        %v362 = vmul.f32 %v361, %v189
        %v364 = vrot.slane %v362, 1
        %365 = vrot.lane.b32.xlu0 %v364, 127
        %v366 = vpop.permute.xlu0 %365
        %v368 = vadd.f32 %v359, %v366
        %s369 = sld [smem:[#allocation2 + $0x11]]
        %v370 = vstv %s369
        %v371 = vmul.f32 %v370, %v237
        %v373 = vrot.slane %v371, 1
        %374 = vrot.lane.b32.xlu0 %v373, 127
        %v375 = vpop.permute.xlu0 %374
        %v377 = vadd.f32 %v368, %v375
        %s378 = sld [smem:[#allocation2 + $0x12]]
        %v379 = vstv %s378
        %v380 = vmul.f32 %v379, %v189
        %v382 = vrot.slane %v380, 1
        %383 = vrot.lane.b32.xlu0 %v382, 126
        %v384 = vpop.permute.xlu0 %383
        %v386 = vadd.f32 %v377, %v384
        %s387 = sld [smem:[#allocation2 + $0x13]]
        %v388 = vstv %s387
        %v389 = vmul.f32 %v388, %v237
        %v391 = vrot.slane %v389, 1
        %392 = vrot.lane.b32.xlu0 %v391, 126
        %v393 = vpop.permute.xlu0 %392
        %v395 = vadd.f32 %v386, %v393
        %s396 = sld [smem:[#allocation2 + $0x14]]
        %v397 = vstv %s396
        %v398 = vmul.f32 %v397, %v189
        %v400 = vrot.slane %v398, 1
        %401 = vrot.lane.b32.xlu0 %v400, 125
        %v402 = vpop.permute.xlu0 %401
        %v404 = vadd.f32 %v395, %v402
        %s405 = sld [smem:[#allocation2 + $0x15]]
        %v406 = vstv %s405
        %v407 = vmul.f32 %v406, %v237
        %v409 = vrot.slane %v407, 1
        %410 = vrot.lane.b32.xlu0 %v409, 125
        %v411 = vpop.permute.xlu0 %410
        %v413 = vadd.f32 %v404, %v411
        %s414 = sld [smem:[#allocation2 + $0x16]]
        %v415 = vstv %s414
        %v416 = vmul.f32 %v415, %v189
        %v418 = vrot.slane %v416, 1
        %419 = vrot.lane.b32.xlu0 %v418, 124
        %v420 = vpop.permute.xlu0 %419
        %v422 = vadd.f32 %v413, %v420
        %s423 = sld [smem:[#allocation2 + $0x17]]
        %v424 = vstv %s423
        %v425 = vmul.f32 %v424, %v237
        %v427 = vrot.slane %v425, 1
        %428 = vrot.lane.b32.xlu0 %v427, 124
        %v429 = vpop.permute.xlu0 %428
        %v431 = vadd.f32 %v422, %v429
        %s432 = sld [smem:[#allocation2 + $0x18]]
        %v433 = vstv %s432
        %v434 = vmul.f32 %v433, %v189
        %v436 = vrot.slane %v434, 1
        %437 = vrot.lane.b32.xlu0 %v436, 123
        %v438 = vpop.permute.xlu0 %437
        %v440 = vadd.f32 %v431, %v438
        %s441 = sld [smem:[#allocation2 + $0x19]]
        %v442 = vstv %s441
        %v443 = vmul.f32 %v442, %v237
        %v445 = vrot.slane %v443, 1
        %446 = vrot.lane.b32.xlu0 %v445, 123
        %v447 = vpop.permute.xlu0 %446
        %v449 = vadd.f32 %v440, %v447
        %s450 = sld [smem:[#allocation2 + $0x1a]]
        %v451 = vstv %s450
        %v452 = vmul.f32 %v451, %v189
        %v454 = vrot.slane %v452, 1
        %455 = vrot.lane.b32.xlu0 %v454, 122
        %v456 = vpop.permute.xlu0 %455
        %v458 = vadd.f32 %v449, %v456
        %s459 = sld [smem:[#allocation2 + $0x1b]]
        %v460 = vstv %s459
        %v461 = vmul.f32 %v460, %v237
        %v463 = vrot.slane %v461, 1
        %464 = vrot.lane.b32.xlu0 %v463, 122
        %v465 = vpop.permute.xlu0 %464
        %v467 = vadd.f32 %v458, %v465
        %s468 = sld [smem:[#allocation2 + $0x1c]]
        %v469 = vstv %s468
        %v470 = vmul.f32 %v469, %v189
        %v472 = vrot.slane %v470, 2
        %v474 = vadd.f32 %v467, %v472
        %s475 = sld [smem:[#allocation2 + $0x1d]]
        %v476 = vstv %s475
        %v477 = vmul.f32 %v476, %v237
        %v479 = vrot.slane %v477, 2
        %v481 = vadd.f32 %v474, %v479
        %s482 = sld [smem:[#allocation2 + $0x1e]]
        %v483 = vstv %s482
        %v484 = vmul.f32 %v483, %v189
        %v486 = vrot.slane %v484, 2
        %487 = vrot.lane.b32.xlu0 %v486, 127
        %v488 = vpop.permute.xlu0 %487
        %v490 = vadd.f32 %v481, %v488
        %s491 = sld [smem:[#allocation2 + $0x1f]]
        %v492 = vstv %s491
        %v493 = vmul.f32 %v492, %v237
        %v495 = vrot.slane %v493, 2
        %496 = vrot.lane.b32.xlu0 %v495, 127
        %v497 = vpop.permute.xlu0 %496
        %v499 = vadd.f32 %v490, %v497
        %s500 = sld [smem:[#allocation2 + $0x20]]
        %v501 = vstv %s500
        %v502 = vmul.f32 %v501, %v189
        %v504 = vrot.slane %v502, 2
        %505 = vrot.lane.b32.xlu0 %v504, 126
        %v506 = vpop.permute.xlu0 %505
        %v508 = vadd.f32 %v499, %v506
        %s509 = sld [smem:[#allocation2 + $0x21]]
        %v510 = vstv %s509
        %v511 = vmul.f32 %v510, %v237
        %v513 = vrot.slane %v511, 2
        %514 = vrot.lane.b32.xlu0 %v513, 126
        %v515 = vpop.permute.xlu0 %514
        %v517 = vadd.f32 %v508, %v515
        %s518 = sld [smem:[#allocation2 + $0x22]]
        %v519 = vstv %s518
        %v520 = vmul.f32 %v519, %v189
        %v522 = vrot.slane %v520, 2
        %523 = vrot.lane.b32.xlu0 %v522, 125
        %v524 = vpop.permute.xlu0 %523
        %v526 = vadd.f32 %v517, %v524
        %s527 = sld [smem:[#allocation2 + $0x23]]
        %v528 = vstv %s527
        %v529 = vmul.f32 %v528, %v237
        %v531 = vrot.slane %v529, 2
        %532 = vrot.lane.b32.xlu0 %v531, 125
        %v533 = vpop.permute.xlu0 %532
        %v535 = vadd.f32 %v526, %v533
        %s536 = sld [smem:[#allocation2 + $0x24]]
        %v537 = vstv %s536
        %v538 = vmul.f32 %v537, %v189
        %v540 = vrot.slane %v538, 2
        %541 = vrot.lane.b32.xlu0 %v540, 124
        %v542 = vpop.permute.xlu0 %541
        %v544 = vadd.f32 %v535, %v542
        %s545 = sld [smem:[#allocation2 + $0x25]]
        %v546 = vstv %s545
        %v547 = vmul.f32 %v546, %v237
        %v549 = vrot.slane %v547, 2
        %550 = vrot.lane.b32.xlu0 %v549, 124
        %v551 = vpop.permute.xlu0 %550
        %v553 = vadd.f32 %v544, %v551
        %s554 = sld [smem:[#allocation2 + $0x26]]
        %v555 = vstv %s554
        %v556 = vmul.f32 %v555, %v189
        %v558 = vrot.slane %v556, 2
        %559 = vrot.lane.b32.xlu0 %v558, 123
        %v560 = vpop.permute.xlu0 %559
        %v562 = vadd.f32 %v553, %v560
        %s563 = sld [smem:[#allocation2 + $0x27]]
        %v564 = vstv %s563
        %v565 = vmul.f32 %v564, %v237
        %v567 = vrot.slane %v565, 2
        %568 = vrot.lane.b32.xlu0 %v567, 123
        %v569 = vpop.permute.xlu0 %568
        %v571 = vadd.f32 %v562, %v569
        %s572 = sld [smem:[#allocation2 + $0x28]]
        %v573 = vstv %s572
        %v574 = vmul.f32 %v573, %v189
        %v576 = vrot.slane %v574, 2
        %577 = vrot.lane.b32.xlu0 %v576, 122
        %v578 = vpop.permute.xlu0 %577
        %v580 = vadd.f32 %v571, %v578
        %s581 = sld [smem:[#allocation2 + $0x29]]
        %v582 = vstv %s581
        %v583 = vmul.f32 %v582, %v237
        %v585 = vrot.slane %v583, 2
        %586 = vrot.lane.b32.xlu0 %v585, 122
        %v587 = vpop.permute.xlu0 %586
        %v589 = vadd.f32 %v580, %v587
        %s590 = sld [smem:[#allocation2 + $0x2a]]
        %v591 = vstv %s590
        %v592 = vmul.f32 %v591, %v189
        %v594 = vrot.slane %v592, 3
        %v596 = vadd.f32 %v589, %v594
        %s597 = sld [smem:[#allocation2 + $0x2b]]
        %v598 = vstv %s597
        %v599 = vmul.f32 %v598, %v237
        %v601 = vrot.slane %v599, 3
        %v603 = vadd.f32 %v596, %v601
        %s604 = sld [smem:[#allocation2 + $0x2c]]
        %v605 = vstv %s604
        %v606 = vmul.f32 %v605, %v189
        %v608 = vrot.slane %v606, 3
        %609 = vrot.lane.b32.xlu0 %v608, 127
        %v610 = vpop.permute.xlu0 %609
        %v612 = vadd.f32 %v603, %v610
        %s613 = sld [smem:[#allocation2 + $0x2d]]
        %v614 = vstv %s613
        %v615 = vmul.f32 %v614, %v237
        %v617 = vrot.slane %v615, 3
        %618 = vrot.lane.b32.xlu0 %v617, 127
        %v619 = vpop.permute.xlu0 %618
        %v621 = vadd.f32 %v612, %v619
        %s622 = sld [smem:[#allocation2 + $0x2e]]
        %v623 = vstv %s622
        %v624 = vmul.f32 %v623, %v189
        %v626 = vrot.slane %v624, 3
        %627 = vrot.lane.b32.xlu0 %v626, 126
        %v628 = vpop.permute.xlu0 %627
        %v630 = vadd.f32 %v621, %v628
        %s631 = sld [smem:[#allocation2 + $0x2f]]
        %v632 = vstv %s631
        %v633 = vmul.f32 %v632, %v237
        %v635 = vrot.slane %v633, 3
        %636 = vrot.lane.b32.xlu0 %v635, 126
        %v637 = vpop.permute.xlu0 %636
        %v639 = vadd.f32 %v630, %v637
        %s640 = sld [smem:[#allocation2 + $0x30]]
        %v641 = vstv %s640
        %v642 = vmul.f32 %v641, %v189
        %v644 = vrot.slane %v642, 3
        %645 = vrot.lane.b32.xlu0 %v644, 125
        %v646 = vpop.permute.xlu0 %645
        %v648 = vadd.f32 %v639, %v646
        %s649 = sld [smem:[#allocation2 + $0x31]]
        %v650 = vstv %s649
        %v651 = vmul.f32 %v650, %v237
        %v653 = vrot.slane %v651, 3
        %654 = vrot.lane.b32.xlu0 %v653, 125
        %v655 = vpop.permute.xlu0 %654
        %v657 = vadd.f32 %v648, %v655
        %s658 = sld [smem:[#allocation2 + $0x32]]
        %v659 = vstv %s658
        %v660 = vmul.f32 %v659, %v189
        %v662 = vrot.slane %v660, 3
        %663 = vrot.lane.b32.xlu0 %v662, 124
        %v664 = vpop.permute.xlu0 %663
        %v666 = vadd.f32 %v657, %v664
        %s667 = sld [smem:[#allocation2 + $0x33]]
        %v668 = vstv %s667
        %v669 = vmul.f32 %v668, %v237
        %v671 = vrot.slane %v669, 3
        %672 = vrot.lane.b32.xlu0 %v671, 124
        %v673 = vpop.permute.xlu0 %672
        %v675 = vadd.f32 %v666, %v673
        %s676 = sld [smem:[#allocation2 + $0x34]]
        %v677 = vstv %s676
        %v678 = vmul.f32 %v677, %v189
        %v680 = vrot.slane %v678, 3
        %681 = vrot.lane.b32.xlu0 %v680, 123
        %v682 = vpop.permute.xlu0 %681
        %v684 = vadd.f32 %v675, %v682
        %s685 = sld [smem:[#allocation2 + $0x35]]
        %v686 = vstv %s685
        %v687 = vmul.f32 %v686, %v237
        %v689 = vrot.slane %v687, 3
        %690 = vrot.lane.b32.xlu0 %v689, 123
        %v691 = vpop.permute.xlu0 %690
        %v693 = vadd.f32 %v684, %v691
        %s694 = sld [smem:[#allocation2 + $0x36]]
        %v695 = vstv %s694
        %v696 = vmul.f32 %v695, %v189
        %v698 = vrot.slane %v696, 3
        %699 = vrot.lane.b32.xlu0 %v698, 122
        %v700 = vpop.permute.xlu0 %699
        %v702 = vadd.f32 %v693, %v700
        %s703 = sld [smem:[#allocation2 + $0x37]]
        %v704 = vstv %s703
        %v705 = vmul.f32 %v704, %v237
        %v707 = vrot.slane %v705, 3
        %708 = vrot.lane.b32.xlu0 %v707, 122
        %v709 = vpop.permute.xlu0 %708
        %v711 = vadd.f32 %v702, %v709
        %s712 = sld [smem:[#allocation2 + $0x38]]
        %v713 = vstv %s712
        %v714 = vmul.f32 %v713, %v189
        %v716 = vrot.slane %v714, 4
        %v718 = vadd.f32 %v711, %v716
        %s719 = sld [smem:[#allocation2 + $0x39]]
        %v720 = vstv %s719
        %v721 = vmul.f32 %v720, %v237
        %v723 = vrot.slane %v721, 4
        %v725 = vadd.f32 %v718, %v723
        %s726 = sld [smem:[#allocation2 + $0x3a]]
        %v727 = vstv %s726
        %v728 = vmul.f32 %v727, %v189
        %v730 = vrot.slane %v728, 4
        %731 = vrot.lane.b32.xlu0 %v730, 127
        %v732 = vpop.permute.xlu0 %731
        %v734 = vadd.f32 %v725, %v732
        %s735 = sld [smem:[#allocation2 + $0x3b]]
        %v736 = vstv %s735
        %v737 = vmul.f32 %v736, %v237
        %v739 = vrot.slane %v737, 4
        %740 = vrot.lane.b32.xlu0 %v739, 127
        %v741 = vpop.permute.xlu0 %740
        %v743 = vadd.f32 %v734, %v741
        %s744 = sld [smem:[#allocation2 + $0x3c]]
        %v745 = vstv %s744
        %v746 = vmul.f32 %v745, %v189
        %v748 = vrot.slane %v746, 4
        %749 = vrot.lane.b32.xlu0 %v748, 126
        %v750 = vpop.permute.xlu0 %749
        %v752 = vadd.f32 %v743, %v750
        %s753 = sld [smem:[#allocation2 + $0x3d]]
        %v754 = vstv %s753
        %v755 = vmul.f32 %v754, %v237
        %v757 = vrot.slane %v755, 4
        %758 = vrot.lane.b32.xlu0 %v757, 126
        %v759 = vpop.permute.xlu0 %758
        %v761 = vadd.f32 %v752, %v759
        %s762 = sld [smem:[#allocation2 + $0x3e]]
        %v763 = vstv %s762
        %v764 = vmul.f32 %v763, %v189
        %v766 = vrot.slane %v764, 4
        %767 = vrot.lane.b32.xlu0 %v766, 125
        %v768 = vpop.permute.xlu0 %767
        %v770 = vadd.f32 %v761, %v768
        %s771 = sld [smem:[#allocation2 + $0x3f]]
        %v772 = vstv %s771
        %v773 = vmul.f32 %v772, %v237
        %v775 = vrot.slane %v773, 4
        %776 = vrot.lane.b32.xlu0 %v775, 125
        %v777 = vpop.permute.xlu0 %776
        %v779 = vadd.f32 %v770, %v777
        %s780 = sld [smem:[#allocation2 + $0x40]]
        %v781 = vstv %s780
        %v782 = vmul.f32 %v781, %v189
        %v784 = vrot.slane %v782, 4
        %785 = vrot.lane.b32.xlu0 %v784, 124
        %v786 = vpop.permute.xlu0 %785
        %v788 = vadd.f32 %v779, %v786
        %s789 = sld [smem:[#allocation2 + $0x41]]
        %v790 = vstv %s789
        %v791 = vmul.f32 %v790, %v237
        %v793 = vrot.slane %v791, 4
        %794 = vrot.lane.b32.xlu0 %v793, 124
        %v795 = vpop.permute.xlu0 %794
        %v797 = vadd.f32 %v788, %v795
        %s798 = sld [smem:[#allocation2 + $0x42]]
        %v799 = vstv %s798
        %v800 = vmul.f32 %v799, %v189
        %v802 = vrot.slane %v800, 4
        %803 = vrot.lane.b32.xlu0 %v802, 123
        %v804 = vpop.permute.xlu0 %803
        %v806 = vadd.f32 %v797, %v804
        %s807 = sld [smem:[#allocation2 + $0x43]]
        %v808 = vstv %s807
        %v809 = vmul.f32 %v808, %v237
        %v811 = vrot.slane %v809, 4
        %812 = vrot.lane.b32.xlu0 %v811, 123
        %v813 = vpop.permute.xlu0 %812
        %v815 = vadd.f32 %v806, %v813
        %s816 = sld [smem:[#allocation2 + $0x44]]
        %v817 = vstv %s816
        %v818 = vmul.f32 %v817, %v189
        %v820 = vrot.slane %v818, 4
        %821 = vrot.lane.b32.xlu0 %v820, 122
        %v822 = vpop.permute.xlu0 %821
        %v824 = vadd.f32 %v815, %v822
        %s825 = sld [smem:[#allocation2 + $0x45]]
        %v826 = vstv %s825
        %v827 = vmul.f32 %v826, %v237
        %v829 = vrot.slane %v827, 4
        %830 = vrot.lane.b32.xlu0 %v829, 122
        %v831 = vpop.permute.xlu0 %830
        %v833 = vadd.f32 %v824, %v831
        %s834 = sld [smem:[#allocation2 + $0x46]]
        %v835 = vstv %s834
        %v836 = vmul.f32 %v835, %v189
        %v837 = vmul.f32 %v835, %v205
        %vm840 = vcmask 1042432
        %v841 = vrot.slane %v836, 5
        %v842 = vrot.slane %v837, 5
        %v843 = vsel %vm840, %v841, %v842
        %v845 = vadd.f32 %v833, %v843
        %s846 = sld [smem:[#allocation2 + $0x47]]
        %v847 = vstv %s846
        %v848 = vmul.f32 %v847, %v237
        %v849 = vmul.f32 %v847, %v238
        %v852 = vrot.slane %v848, 5
        %v853 = vrot.slane %v849, 5
        %v854 = vsel %vm840, %v852, %v853
        %v856 = vadd.f32 %v845, %v854
        %s857 = sld [smem:[#allocation2 + $0x48]]
        %v858 = vstv %s857
        %v859 = vmul.f32 %v858, %v189
        %v860 = vmul.f32 %v858, %v205
        %v863 = vrot.slane %v859, 5
        %v864 = vrot.slane %v860, 5
        %v865 = vsel %vm840, %v863, %v864
        %866 = vrot.lane.b32.xlu0 %v865, 127
        %v867 = vpop.permute.xlu0 %866
        %v869 = vadd.f32 %v856, %v867
        %s870 = sld [smem:[#allocation2 + $0x49]]
        %v871 = vstv %s870
        %v872 = vmul.f32 %v871, %v237
        %v873 = vmul.f32 %v871, %v238
        %v876 = vrot.slane %v872, 5
        %v877 = vrot.slane %v873, 5
        %v878 = vsel %vm840, %v876, %v877
        %879 = vrot.lane.b32.xlu0 %v878, 127
        %v880 = vpop.permute.xlu0 %879
        %v882 = vadd.f32 %v869, %v880
        %s883 = sld [smem:[#allocation2 + $0x4a]]
        %v884 = vstv %s883
        %v885 = vmul.f32 %v884, %v189
        %v886 = vmul.f32 %v884, %v205
        %v889 = vrot.slane %v885, 5
        %v890 = vrot.slane %v886, 5
        %v891 = vsel %vm840, %v889, %v890
        %892 = vrot.lane.b32.xlu0 %v891, 126
        %v893 = vpop.permute.xlu0 %892
        %v895 = vadd.f32 %v882, %v893
        %s896 = sld [smem:[#allocation2 + $0x4b]]
        %v897 = vstv %s896
        %v898 = vmul.f32 %v897, %v237
        %v899 = vmul.f32 %v897, %v238
        %v902 = vrot.slane %v898, 5
        %v903 = vrot.slane %v899, 5
        %v904 = vsel %vm840, %v902, %v903
        %905 = vrot.lane.b32.xlu0 %v904, 126
        %v906 = vpop.permute.xlu0 %905
        %v908 = vadd.f32 %v895, %v906
        %s909 = sld [smem:[#allocation2 + $0x4c]]
        %v910 = vstv %s909
        %v911 = vmul.f32 %v910, %v189
        %v912 = vmul.f32 %v910, %v205
        %v915 = vrot.slane %v911, 5
        %v916 = vrot.slane %v912, 5
        %v917 = vsel %vm840, %v915, %v916
        %918 = vrot.lane.b32.xlu0 %v917, 125
        %v919 = vpop.permute.xlu0 %918
        %v921 = vadd.f32 %v908, %v919
        %s922 = sld [smem:[#allocation2 + $0x4d]]
        %v923 = vstv %s922
        %v924 = vmul.f32 %v923, %v237
        %v925 = vmul.f32 %v923, %v238
        %v928 = vrot.slane %v924, 5
        %v929 = vrot.slane %v925, 5
        %v930 = vsel %vm840, %v928, %v929
        %931 = vrot.lane.b32.xlu0 %v930, 125
        %v932 = vpop.permute.xlu0 %931
        %v934 = vadd.f32 %v921, %v932
        %s935 = sld [smem:[#allocation2 + $0x4e]]
        %v936 = vstv %s935
        %v937 = vmul.f32 %v936, %v189
        %v938 = vmul.f32 %v936, %v205
        %v941 = vrot.slane %v937, 5
        %v942 = vrot.slane %v938, 5
        %v943 = vsel %vm840, %v941, %v942
        %944 = vrot.lane.b32.xlu0 %v943, 124
        %v945 = vpop.permute.xlu0 %944
        %v947 = vadd.f32 %v934, %v945
        %s948 = sld [smem:[#allocation2 + $0x4f]]
        %v949 = vstv %s948
        %v950 = vmul.f32 %v949, %v237
        %v951 = vmul.f32 %v949, %v238
        %v954 = vrot.slane %v950, 5
        %v955 = vrot.slane %v951, 5
        %v956 = vsel %vm840, %v954, %v955
        %957 = vrot.lane.b32.xlu0 %v956, 124
        %v958 = vpop.permute.xlu0 %957
        %v960 = vadd.f32 %v947, %v958
        %s961 = sld [smem:[#allocation2 + $0x50]]
        %v962 = vstv %s961
        %v963 = vmul.f32 %v962, %v189
        %v964 = vmul.f32 %v962, %v205
        %v967 = vrot.slane %v963, 5
        %v968 = vrot.slane %v964, 5
        %v969 = vsel %vm840, %v967, %v968
        %970 = vrot.lane.b32.xlu0 %v969, 123
        %v971 = vpop.permute.xlu0 %970
        %v973 = vadd.f32 %v960, %v971
        %s974 = sld [smem:[#allocation2 + $0x51]]
        %v975 = vstv %s974
        %v976 = vmul.f32 %v975, %v237
        %v977 = vmul.f32 %v975, %v238
        %v980 = vrot.slane %v976, 5
        %v981 = vrot.slane %v977, 5
        %v982 = vsel %vm840, %v980, %v981
        %983 = vrot.lane.b32.xlu0 %v982, 123
        %v984 = vpop.permute.xlu0 %983
        %v986 = vadd.f32 %v973, %v984
        %s987 = sld [smem:[#allocation2 + $0x52]]
        %v988 = vstv %s987
        %v989 = vmul.f32 %v988, %v189
        %v990 = vmul.f32 %v988, %v205
        %v993 = vrot.slane %v989, 5
        %v994 = vrot.slane %v990, 5
        %v995 = vsel %vm840, %v993, %v994
        %996 = vrot.lane.b32.xlu0 %v995, 122
        %v997 = vpop.permute.xlu0 %996
        %v999 = vadd.f32 %v986, %v997
        %s1000 = sld [smem:[#allocation2 + $0x53]]
        %v1001 = vstv %s1000
        %v1002 = vmul.f32 %v1001, %v237
        %v1003 = vmul.f32 %v1001, %v238
        %v1006 = vrot.slane %v1002, 5
        %v1007 = vrot.slane %v1003, 5
        %v1008 = vsel %vm840, %v1006, %v1007
        %1009 = vrot.lane.b32.xlu0 %v1008, 122
        %v1010 = vpop.permute.xlu0 %1009
        %v1012 = vadd.f32 %v999, %v1010
        %s1013 = sld [smem:[#allocation2 + $0x54]]
        %v1014 = vstv %s1013
        %v1015 = vmul.f32 %v1014, %v189
        %v1016 = vmul.f32 %v1014, %v205
        %vm1019 = vcmask 1041408
        %v1020 = vrot.slane %v1015, 6
        %v1021 = vrot.slane %v1016, 6
        %v1022 = vsel %vm1019, %v1020, %v1021
        %v1024 = vadd.f32 %v1012, %v1022
        %s1025 = sld [smem:[#allocation2 + $0x55]]
        %v1026 = vstv %s1025
        %v1027 = vmul.f32 %v1026, %v237
        %v1028 = vmul.f32 %v1026, %v238
        %v1031 = vrot.slane %v1027, 6
        %v1032 = vrot.slane %v1028, 6
        %v1033 = vsel %vm1019, %v1031, %v1032
        %v1035 = vadd.f32 %v1024, %v1033
        %s1036 = sld [smem:[#allocation2 + $0x56]]
        %v1037 = vstv %s1036
        %v1038 = vmul.f32 %v1037, %v189
        %v1039 = vmul.f32 %v1037, %v205
        %v1042 = vrot.slane %v1038, 6
        %v1043 = vrot.slane %v1039, 6
        %v1044 = vsel %vm1019, %v1042, %v1043
        %1045 = vrot.lane.b32.xlu0 %v1044, 127
        %v1046 = vpop.permute.xlu0 %1045
        %v1048 = vadd.f32 %v1035, %v1046
        %s1049 = sld [smem:[#allocation2 + $0x57]]
        %v1050 = vstv %s1049
        %v1051 = vmul.f32 %v1050, %v237
        %v1052 = vmul.f32 %v1050, %v238
        %v1055 = vrot.slane %v1051, 6
        %v1056 = vrot.slane %v1052, 6
        %v1057 = vsel %vm1019, %v1055, %v1056
        %1058 = vrot.lane.b32.xlu0 %v1057, 127
        %v1059 = vpop.permute.xlu0 %1058
        %v1061 = vadd.f32 %v1048, %v1059
        %s1062 = sld [smem:[#allocation2 + $0x58]]
        %v1063 = vstv %s1062
        %v1064 = vmul.f32 %v1063, %v189
        %v1065 = vmul.f32 %v1063, %v205
        %v1068 = vrot.slane %v1064, 6
        %v1069 = vrot.slane %v1065, 6
        %v1070 = vsel %vm1019, %v1068, %v1069
        %1071 = vrot.lane.b32.xlu0 %v1070, 126
        %v1072 = vpop.permute.xlu0 %1071
        %v1074 = vadd.f32 %v1061, %v1072
        %s1075 = sld [smem:[#allocation2 + $0x59]]
        %v1076 = vstv %s1075
        %v1077 = vmul.f32 %v1076, %v237
        %v1078 = vmul.f32 %v1076, %v238
        %v1081 = vrot.slane %v1077, 6
        %v1082 = vrot.slane %v1078, 6
        %v1083 = vsel %vm1019, %v1081, %v1082
        %1084 = vrot.lane.b32.xlu0 %v1083, 126
        %v1085 = vpop.permute.xlu0 %1084
        %v1087 = vadd.f32 %v1074, %v1085
        %s1088 = sld [smem:[#allocation2 + $0x5a]]
        %v1089 = vstv %s1088
        %v1090 = vmul.f32 %v1089, %v189
        %v1091 = vmul.f32 %v1089, %v205
        %v1094 = vrot.slane %v1090, 6
        %v1095 = vrot.slane %v1091, 6
        %v1096 = vsel %vm1019, %v1094, %v1095
        %1097 = vrot.lane.b32.xlu0 %v1096, 125
        %v1098 = vpop.permute.xlu0 %1097
        %v1100 = vadd.f32 %v1087, %v1098
        %s1101 = sld [smem:[#allocation2 + $0x5b]]
        %v1102 = vstv %s1101
        %v1103 = vmul.f32 %v1102, %v237
        %v1104 = vmul.f32 %v1102, %v238
        %v1107 = vrot.slane %v1103, 6
        %v1108 = vrot.slane %v1104, 6
        %v1109 = vsel %vm1019, %v1107, %v1108
        %1110 = vrot.lane.b32.xlu0 %v1109, 125
        %v1111 = vpop.permute.xlu0 %1110
        %v1113 = vadd.f32 %v1100, %v1111
        %s1114 = sld [smem:[#allocation2 + $0x5c]]
        %v1115 = vstv %s1114
        %v1116 = vmul.f32 %v1115, %v189
        %v1117 = vmul.f32 %v1115, %v205
        %v1120 = vrot.slane %v1116, 6
        %v1121 = vrot.slane %v1117, 6
        %v1122 = vsel %vm1019, %v1120, %v1121
        %1123 = vrot.lane.b32.xlu0 %v1122, 124
        %v1124 = vpop.permute.xlu0 %1123
        %v1126 = vadd.f32 %v1113, %v1124
        %s1127 = sld [smem:[#allocation2 + $0x5d]]
        %v1128 = vstv %s1127
        %v1129 = vmul.f32 %v1128, %v237
        %v1130 = vmul.f32 %v1128, %v238
        %v1133 = vrot.slane %v1129, 6
        %v1134 = vrot.slane %v1130, 6
        %v1135 = vsel %vm1019, %v1133, %v1134
        %1136 = vrot.lane.b32.xlu0 %v1135, 124
        %v1137 = vpop.permute.xlu0 %1136
        %v1139 = vadd.f32 %v1126, %v1137
        %s1140 = sld [smem:[#allocation2 + $0x5e]]
        %v1141 = vstv %s1140
        %v1142 = vmul.f32 %v1141, %v189
        %v1143 = vmul.f32 %v1141, %v205
        %v1146 = vrot.slane %v1142, 6
        %v1147 = vrot.slane %v1143, 6
        %v1148 = vsel %vm1019, %v1146, %v1147
        %1149 = vrot.lane.b32.xlu0 %v1148, 123
        %v1150 = vpop.permute.xlu0 %1149
        %v1152 = vadd.f32 %v1139, %v1150
        %s1153 = sld [smem:[#allocation2 + $0x5f]]
        %v1154 = vstv %s1153
        %v1155 = vmul.f32 %v1154, %v237
        %v1156 = vmul.f32 %v1154, %v238
        %v1159 = vrot.slane %v1155, 6
        %v1160 = vrot.slane %v1156, 6
        %v1161 = vsel %vm1019, %v1159, %v1160
        %1162 = vrot.lane.b32.xlu0 %v1161, 123
        %v1163 = vpop.permute.xlu0 %1162
        %v1165 = vadd.f32 %v1152, %v1163
        %s1166 = sld [smem:[#allocation2 + $0x60]]
        %v1167 = vstv %s1166
        %v1168 = vmul.f32 %v1167, %v189
        %v1169 = vmul.f32 %v1167, %v205
        %v1172 = vrot.slane %v1168, 6
        %v1173 = vrot.slane %v1169, 6
        %v1174 = vsel %vm1019, %v1172, %v1173
        %1175 = vrot.lane.b32.xlu0 %v1174, 122
        %v1176 = vpop.permute.xlu0 %1175
        %v1178 = vadd.f32 %v1165, %v1176
        %s1179 = sld [smem:[#allocation2 + $0x61]]
        %v1180 = vstv %s1179
        %v1181 = vmul.f32 %v1180, %v237
        %v1182 = vmul.f32 %v1180, %v238
        %v1185 = vrot.slane %v1181, 6
        %v1186 = vrot.slane %v1182, 6
        %v1187 = vsel %vm1019, %v1185, %v1186
        %1188 = vrot.lane.b32.xlu0 %v1187, 122
        %v1189 = vpop.permute.xlu0 %1188
        %v1191 = vadd.f32 %v1178, %v1189
        %v1192 = vxor.u32 %v1191, 2147483648
        %v1193 = vmul.f32 %v1192, 1.442695
        %v1194 = vpow.pop %v1193
        %v1195 = vadd.f32 %v1194, 1.0
        %v1196 = vrcp.pop %v1195
        %v1197 = vmul.f32 1.0, %v1196
        %v1199 = vrot.slane %v1197, 5
        %1200 = vrot.lane.b32.xlu0 %v1199, 3
        %v1201 = vpop.permute.xlu0 %1200
        %v1203 = vmul.f32 %v158, %v1201
        %v1204 = vmul.f32 %v160, %v1201
        %v1205 = vmul.f32 %v162, %v1201
        %v1206 = vmul.f32 %v164, %v1201
        %v1207 = vmul.f32 %v166, %v1201
        %v1208 = vmul.f32 %v168, %v1201
        %v1209 = vmul.f32 %v170, %v1201
        %v1210 = vmul.f32 %v172, %v1201
        %1219 = vrot.lane.b32.xlu0 %v1203, 125
        %v1220 = vpop.permute.xlu0 %1219
        %1221 = vrot.lane.b32.xlu0 %v1204, 125
        %v1222 = vpop.permute.xlu0 %1221
        %1223 = vrot.lane.b32.xlu0 %v1205, 125
        %v1224 = vpop.permute.xlu0 %1223
        %1225 = vrot.lane.b32.xlu0 %v1206, 125
        %v1226 = vpop.permute.xlu0 %1225
        %1227 = vrot.lane.b32.xlu0 %v1207, 125
        %v1228 = vpop.permute.xlu0 %1227
        %1229 = vrot.lane.b32.xlu0 %v1208, 125
        %v1230 = vpop.permute.xlu0 %1229
        %1231 = vrot.lane.b32.xlu0 %v1209, 125
        %v1232 = vpop.permute.xlu0 %1231
        %1233 = vrot.lane.b32.xlu0 %v1210, 125
        %v1234 = vpop.permute.xlu0 %1233
        %vm1243 = vcmask 30723
        %1244 = vst.msk [vmem:[%s157 - $0x3] sm:$0x78] %vm1243, %v1220
        %1245 = vst.msk [vmem:[%s157 + $0x1] sm:$0x78] %vm1243, %v1222
        %1246 = vst.msk [vmem:[%s157 + $0x5] sm:$0x78] %vm1243, %v1224
        %1247 = vst.msk [vmem:[%s157 + $0x9] sm:$0x78] %vm1243, %v1226
        %1248 = vst.msk [vmem:[%s157 + $0xd] sm:$0x78] %vm1243, %v1228
        %1249 = vst.msk [vmem:[%s157 + $0x11] sm:$0x78] %vm1243, %v1230
        %1250 = vst.msk [vmem:[%s157 + $0x15] sm:$0x78] %vm1243, %v1232
        %1251 = vst.msk [vmem:[%s157 + $0x19] sm:$0x78] %vm1243, %v1234
        %p1252 = scmp.lt.s32.totalorder %s14, 1
        %s1253 = scalar_select %p1252, %s14, 1
        %s1254 = smul.addr %s1253, 8
        %s1255 = smul.addr %s1254, 4
        %s1256 = scalar_lea.vmem %s2, %s1255
        // Predicated region
        $region33: #{simclr_stage2_forward.10} parent=27 // pred_check
          %p1257 = pneg %p79
        $region34: #{simclr_stage2_forward.10} parent=27 // pred_check_branch
          %1259 = sbr.rel (%p1257) target = $region36
        $region35: #{simclr_stage2_forward.10} parent=27 // pred_region
          _
        $region36: #{simclr_stage2_forward.10} parent=27 // pred_fallthru
          _
      $region28: #{simclr_stage2_forward.10} parent=5 // pred_fallthru
        _
      %p1260 = scmp.le.s32.totalorder 2, %s9
      // Predicated region
      $region37: #{simclr_stage2_forward.10} parent=5 // pred_check
        %p1261 = pneg %p1260
      $region38: #{simclr_stage2_forward.10} parent=5 // pred_check_branch
        %1263 = sbr.rel (%p1261) target = $region40
      $region39: #{simclr_stage2_forward.10} parent=5 // pred_region
        %s1264 = ssub.s32 %s9, 2
        // Predicated region
        $region41: #{simclr_stage2_forward.10} parent=39 // pred_check
          %p1265 = pneg %p85
        $region42: #{simclr_stage2_forward.10} parent=39 // pred_check_branch
          %1267 = sbr.rel (%p1265) target = $region44
        $region43: #{simclr_stage2_forward.10} parent=39 // pred_region
          %p1268 = scmp.lt.s32.totalorder %s15, 1
          %s1269 = scalar_select %p1268, %s15, 1
          %s1270 = smul.addr %s1269, 8
          %s1271 = smul.addr %s1270, 4
          %s1272 = scalar_lea.vmem %s2, %s1271
        $region44: #{simclr_stage2_forward.10} parent=39 // pred_fallthru
          _
      $region40: #{simclr_stage2_forward.10} parent=5 // pred_fallthru
        _
    $region6: #{simclr_stage2_forward.10} parent=1 // loop_footer
      %s13 = sadd.s32 1, %s9
    $region7: #{simclr_stage2_forward.10} parent=1 // loop_footer_branch
      %8 = sbr.rel target = $region3
    $region8: #{simclr_stage2_forward.10} parent=1 // loop_exit
      _
    %1273 = vsyncpa [#allocation3], 1
    %s1274 = scalar_lea.sflag [#allocation3], 1
    %1275 = vsyncpa %s1274, 1

// kernel: simclr_stage2_forward.13
$region0: #{simclr_stage2_forward.13}
  #allocation0 [shape = 'u32[]', space=smem, size = 0x4, offset = 0x4, fixed_abs, tag = 'smem constant byte address 0x4 - core index']
  #allocation1 [shape = 'u32[144,128]{1,0:T(1,128)}', space=vmem, size = 0x12000, scoped, tag = 'internal scratch']
  %s0 = inlined_call_operand.vmem [shape: f32[2,16,8], index: 0, kind: input, shape index: {}]
  %s1 = inlined_call_operand.vmem [shape: f32[8,16], index: 1, kind: input, shape index: {}]
  %s2 = inlined_call_operand.vmem [shape: f32[16,5], index: 2, kind: input, shape index: {}]
  %s3 = inlined_call_operand.vmem [shape: f32[1,5], index: 3, kind: input, shape index: {}]
  %s4 = inlined_call_operand.hbm [shape: f32[2,1,5], index: 4, kind: output, shape index: {}]
  %s5 = sld [smem:[#allocation0]]
  $region49: #{simclr_stage2_forward.13} parent=0
    _
  %s7 = ssub.s32 1, %s5
  %s8 = scalar_select 0, %s7, %s5
  $region1: #{simclr_stage2_forward.13} parent=0
    #allocation2 [shape = 'u8[1024]{0}', space=vmem, size = 0x400, scoped, tag = 'output window, operand 0']
    #allocation3 [shape = 's32[2]{0}', space=sflag, size = 0x8, scoped, tag = 'scoped memory for simclr_stage2_forward.13']
    %9 = vsyncpa [#allocation3], 0
    %s10 = scalar_lea.sflag [#allocation3], 1
    %11 = vsyncpa %s10, 0
    loop: start=0, step=1, limit=4
    $region2: #{simclr_stage2_forward.13} parent=1 // loop_pre_header
      _
    $region3: #{simclr_stage2_forward.13} parent=1 // loop_header
      %s13 = sphi 0, %s17
      %p14 = scmp.ge.s32.totalorder %s13, 4
      %s23 = sphi 0, %s25
      %s26 = sphi 0, %s23
      %s27 = sphi 0, %s26
      %s43 = sphi 0, %s27
      %s47 = sphi 0, %s47
      %s49 = sphi 0, %s47
      %s50 = sphi 0, %s49
      %s64 = sphi 0, %s50
      %s68 = sphi 0, %s68
      %s70 = sphi 0, %s68
      %s71 = sphi 0, %s70
      %s85 = sphi 0, %s71
      %s89 = sphi 0, %s89
      %s91 = sphi 0, %s89
      %s92 = sphi 0, %s91
      %s106 = sphi 0, %s92
      %s112 = sphi 0, %s114
      %s115 = sphi 0, %s112
      %s116 = sphi 0, %s115
      %s132 = sphi 0, %s116
    $region4: #{simclr_stage2_forward.13} parent=1 // loop_header_branch
      %16 = sbr.rel (%p14) target = $region8
    $region5: #{simclr_stage2_forward.13} parent=1 // loop_body
      %s18 = ssub.s32 %s13, 1
      %s19 = ssub.s32 %s13, 2
      %s20 = sadd.s32 %s13, 1
      %s21 = ssub.s32 %s13, %s20
      %p22 = scmp.eq.s32.totalorder %s21, 0
      %s24 = sadd.s32 %s23, 1
      %s25 = scalar_select %p22, %s23, %s24
      %p28 = pneg %p22
      %p29 = scmp.eq.s32.totalorder %s13, 1
      %p30 = por %p28, %p29
      %p31 = scmp.ne.s32.totalorder %s23, %s26
      %p32 = scmp.eq.s32.totalorder %s13, 0
      %p33 = por %p31, %p32
      %p34 = scmp.ne.s32.totalorder %s23, %s26
      %p35 = scmp.eq.s32.totalorder %s18, 1
      %p36 = por %p34, %p35
      %p37 = scmp.ne.s32.totalorder %s26, %s27
      %p38 = scmp.eq.s32.totalorder %s18, 0
      %p39 = por %p37, %p38
      %p40 = scmp.ne.s32.totalorder %s26, %s27
      %p41 = scmp.eq.s32.totalorder %s19, 1
      %p42 = por %p40, %p41
      %p44 = scmp.ne.s32.totalorder %s27, %s43
      %p45 = scmp.eq.s32.totalorder %s19, 0
      %p46 = por %p44, %p45
      %s48 = sadd.s32 %s47, 1
      %p51 = scmp.eq.s32.totalorder %s13, 1
      %p52 = scmp.ne.s32.totalorder %s47, %s49
      %p53 = scmp.eq.s32.totalorder %s13, 0
      %p54 = por %p52, %p53
      %p55 = scmp.ne.s32.totalorder %s47, %s49
      %p56 = scmp.eq.s32.totalorder %s18, 1
      %p57 = por %p55, %p56
      %p58 = scmp.ne.s32.totalorder %s49, %s50
      %p59 = scmp.eq.s32.totalorder %s18, 0
      %p60 = por %p58, %p59
      %p61 = scmp.ne.s32.totalorder %s49, %s50
      %p62 = scmp.eq.s32.totalorder %s19, 1
      %p63 = por %p61, %p62
      %p65 = scmp.ne.s32.totalorder %s50, %s64
      %p66 = scmp.eq.s32.totalorder %s19, 0
      %p67 = por %p65, %p66
      %s69 = sadd.s32 %s68, 1
      %p72 = scmp.eq.s32.totalorder %s13, 1
      %p73 = scmp.ne.s32.totalorder %s68, %s70
      %p74 = scmp.eq.s32.totalorder %s13, 0
      %p75 = por %p73, %p74
      %p76 = scmp.ne.s32.totalorder %s68, %s70
      %p77 = scmp.eq.s32.totalorder %s18, 1
      %p78 = por %p76, %p77
      %p79 = scmp.ne.s32.totalorder %s70, %s71
      %p80 = scmp.eq.s32.totalorder %s18, 0
      %p81 = por %p79, %p80
      %p82 = scmp.ne.s32.totalorder %s70, %s71
      %p83 = scmp.eq.s32.totalorder %s19, 1
      %p84 = por %p82, %p83
      %p86 = scmp.ne.s32.totalorder %s71, %s85
      %p87 = scmp.eq.s32.totalorder %s19, 0
      %p88 = por %p86, %p87
      %s90 = sadd.s32 %s89, 1
      %p93 = scmp.eq.s32.totalorder %s13, 1
      %p94 = scmp.ne.s32.totalorder %s89, %s91
      %p95 = scmp.eq.s32.totalorder %s13, 0
      %p96 = por %p94, %p95
      %p97 = scmp.ne.s32.totalorder %s89, %s91
      %p98 = scmp.eq.s32.totalorder %s18, 1
      %p99 = por %p97, %p98
      %p100 = scmp.ne.s32.totalorder %s91, %s92
      %p101 = scmp.eq.s32.totalorder %s18, 0
      %p102 = por %p100, %p101
      %p103 = scmp.ne.s32.totalorder %s91, %s92
      %p104 = scmp.eq.s32.totalorder %s19, 1
      %p105 = por %p103, %p104
      %p107 = scmp.ne.s32.totalorder %s92, %s106
      %p108 = scmp.eq.s32.totalorder %s19, 0
      %p109 = por %p107, %p108
      %s110 = ssub.s32 %s13, %s20
      %p111 = scmp.eq.s32.totalorder %s110, 0
      %s113 = sadd.s32 %s112, 1
      %s114 = scalar_select %p111, %s112, %s113
      %p117 = pneg %p111
      %p118 = scmp.eq.s32.totalorder %s13, 1
      %p119 = por %p117, %p118
      %p120 = scmp.ne.s32.totalorder %s112, %s115
      %p121 = scmp.eq.s32.totalorder %s13, 0
      %p122 = por %p120, %p121
      %p123 = scmp.ne.s32.totalorder %s112, %s115
      %p124 = scmp.eq.s32.totalorder %s18, 1
      %p125 = por %p123, %p124
      %p126 = scmp.ne.s32.totalorder %s115, %s116
      %p127 = scmp.eq.s32.totalorder %s18, 0
      %p128 = por %p126, %p127
      %p129 = scmp.ne.s32.totalorder %s115, %s116
      %p130 = scmp.eq.s32.totalorder %s19, 1
      %p131 = por %p129, %p130
      %p133 = scmp.ne.s32.totalorder %s116, %s132
      %p134 = scmp.eq.s32.totalorder %s19, 0
      %p135 = por %p133, %p134
      %p136 = scmp.le.s32.totalorder 1, %s13
      %p137 = scmp.lt.s32.totalorder %s13, 3
      %p138 = pnand %p136, %p137
      %p139 = pneg %p138
      // Predicated region
      $region9: #{simclr_stage2_forward.13} parent=5 // pred_check
        _
      $region10: #{simclr_stage2_forward.13} parent=5 // pred_check_branch
        %141 = sbr.rel (%p138) target = $region12
      $region11: #{simclr_stage2_forward.13} parent=5 // pred_region
        %s142 = ssub.s32 %s13, 1
        // Predicated region
        $region13: #{simclr_stage2_forward.13} parent=11 // pred_check
          %p143 = pneg %p60
        $region14: #{simclr_stage2_forward.13} parent=11 // pred_check_branch
          %145 = sbr.rel (%p143) target = $region16
        $region15: #{simclr_stage2_forward.13} parent=11 // pred_region
          _
        $region16: #{simclr_stage2_forward.13} parent=11 // pred_fallthru
          _
        // Predicated region
        $region17: #{simclr_stage2_forward.13} parent=11 // pred_check
          %p146 = pneg %p81
        $region18: #{simclr_stage2_forward.13} parent=11 // pred_check_branch
          %148 = sbr.rel (%p146) target = $region20
        $region19: #{simclr_stage2_forward.13} parent=11 // pred_region
          _
        $region20: #{simclr_stage2_forward.13} parent=11 // pred_fallthru
          _
        // Predicated region
        $region21: #{simclr_stage2_forward.13} parent=11 // pred_check
          %p149 = pneg %p102
        $region22: #{simclr_stage2_forward.13} parent=11 // pred_check_branch
          %151 = sbr.rel (%p149) target = $region24
        $region23: #{simclr_stage2_forward.13} parent=11 // pred_region
          _
        $region24: #{simclr_stage2_forward.13} parent=11 // pred_fallthru
          _
      $region12: #{simclr_stage2_forward.13} parent=5 // pred_fallthru
        _
      %p152 = scmp.lt.s32.totalorder %s13, 2
      // Predicated region
      $region25: #{simclr_stage2_forward.13} parent=5 // pred_check
        %p153 = pneg %p152
      $region26: #{simclr_stage2_forward.13} parent=5 // pred_check_branch
        %155 = sbr.rel (%p153) target = $region28
      $region27: #{simclr_stage2_forward.13} parent=5 // pred_region
        // Predicated region
        $region29: #{simclr_stage2_forward.13} parent=27 // pred_check
          %p156 = pneg %p33
        $region30: #{simclr_stage2_forward.13} parent=27 // pred_check_branch
          %158 = sbr.rel (%p156) target = $region32
        $region31: #{simclr_stage2_forward.13} parent=27 // pred_region
          %p159 = scmp.lt.s32.totalorder %s13, 1
          %s160 = scalar_select %p159, %s13, 1
          %s161 = smul.addr %s160, 2
          %s162 = smul.addr %s161, 8
          %s163 = scalar_lea.vmem %s0, %s162
        $region32: #{simclr_stage2_forward.13} parent=27 // pred_fallthru
          _
      $region28: #{simclr_stage2_forward.13} parent=5 // pred_fallthru
        _
      %p164 = scmp.le.s32.totalorder 1, %s13
      %p165 = scmp.lt.s32.totalorder %s13, 3
      %p166 = pnand %p164, %p165
      %p167 = pneg %p166
      // Predicated region
      $region33: #{simclr_stage2_forward.13} parent=5 // pred_check
        _
      $region34: #{simclr_stage2_forward.13} parent=5 // pred_check_branch
        %169 = sbr.rel (%p166) target = $region36
      $region35: #{simclr_stage2_forward.13} parent=5 // pred_region
        %s170 = ssub.s32 %s13, 1
        %p171 = scmp.lt.s32.totalorder %s18, 1
        %s172 = scalar_select %p171, %s18, 1
        %s173 = smul.addr %s172, 2
        %s174 = smul.addr %s173, 8
        %s175 = scalar_lea.vmem %s0, %s174
        %p176 = pneg %p39
        %p177 = pneg %p36
        %p178 = pneg %p60
        %p179 = pneg %p57
        %p180 = pneg %p81
        %p181 = pneg %p78
        %p182 = pneg %p102
        %p183 = pneg %p99
        %p184 = pneg %p128
        %p185 = pneg %p125
        %s186 = sand.u32 %s115, 1
        %s187 = scalar_lea.sflag [#allocation3], %s186
        %s188 = sand.u32 %s115, 1
        %s189 = scalar_lea.vmem [#allocation2], %s188
        %p190 = scmp.lt.s32.totalorder %s18, 1
        %s191 = scalar_select %p190, %s18, 1
        %s192 = smul.addr %s191, 2
        %s193 = smul.addr %s192, 8
        %s194 = scalar_lea.vmem %s0, %s193
        %v196 = vld [vmem:[%s194] sm:$0xff]
        %v197 = vld [vmem:[%s194 + $0x8] sm:$0xff]
        %v198 = vpack.c.bf16 %v197, %v196
        %v199 = vld [vmem:[%s1] sm:$0xff]
        %v200 = vpack.c.bf16 %v199, %v199
        %vm201 = vcmask 64512
        %v203 = vsel %vm201, %v198, 0
        %vm205 = vcmask 1043456
        %v207 = vsel %vm205, %v200, 0
        %209 = vmatprep.subr.bf16.mxu0 0
        %210 = vmatpush1.bf16.msra.mxu0 0
        %211 = vmatprep.subr.bf16.mxu0 0
        %212 = vmatpush1.bf16.msra.mxu0 0
        %213 = vmatprep.subr.bf16.mxu0 0
        %214 = vmatpush1.bf16.msra.mxu0 0
        %215 = vmatprep.subr.bf16.mxu0 0
        %216 = vmatpush1.bf16.msra.mxu0 0
        %217 = vmatprep.subr.bf16.mxu0 0
        %218 = vmatpush1.bf16.msra.mxu0 0
        %219 = vmatprep.subr.bf16.mxu0 0
        %220 = vmatpush1.bf16.msra.mxu0 0
        %221 = vmatprep.subr.bf16.mxu0 0
        %222 = vmatpush1.bf16.msra.mxu0 0
        %223 = vmatprep.subr.bf16.mxu0 0
        %224 = vmatpush1.bf16.msra.mxu0 %v207
        %225 = vmatprep.subr.bf16.mxu0 0
        %226 = vmatpush2.bf16.msra.mxu0 0
        %227 = vmatprep.subr.bf16.mxu0 0
        %228 = vmatpush2.bf16.msra.mxu0 0
        %229 = vmatprep.subr.bf16.mxu0 0
        %230 = vmatpush2.bf16.msra.mxu0 0
        %231 = vmatprep.subr.bf16.mxu0 0
        %232 = vmatpush2.bf16.msra.mxu0 0
        %233 = vmatprep.subr.bf16.mxu0 0
        %234 = vmatpush2.bf16.msra.mxu0 0
        %235 = vmatprep.subr.bf16.mxu0 0
        %236 = vmatpush2.bf16.msra.mxu0 0
        %237 = vmatprep.subr.bf16.mxu0 0
        %238 = vmatpush2.bf16.msra.mxu0 0
        %239 = vmatprep.subr.bf16.mxu0 0
        %240 = vmatpush2.bf16.msra.mxu0 0
        %241 = vmatprep.mubr.bf16.mxu0 0
        %242 = vmatmul.mubr.bf16.gmra.mxu0 %v203
        %v243 = vpop.f32.mrf.mxu0
        %v244 = vadd.f32 0.0, %v243
        %v245 = vpop.f32.mrf.mxu0
        %v246 = vpop.f32.mrf.mxu0
        %v247 = vadd.f32 0.0, %v246
        %v248 = vpop.f32.mrf.mxu0
        %249 = vdwg.mxu0
        %v250 = vmax.f32 %v244, 0.0
        %v251 = vmax.f32 %v247, 0.0
        %v252 = vld [vmem:[%s2] sm:$0xff]
        %v253 = vld [vmem:[%s2 + $0x8] sm:$0xff]
        %vm254 = vcmask 130048
        %v256 = vsel %vm254, %v250, 0
        %v259 = vsel %vm254, %v251, 0
        %261 = vmatprep.subr.mxu0 0.0
        %262 = vmatpush1.msra.mxu0 0.0
        %263 = vmatprep.subr.mxu0 0.0
        %264 = vmatpush1.msra.mxu0 0.0
        %265 = vmatprep.subr.mxu0 0.0
        %266 = vmatpush1.msra.mxu0 0.0
        %267 = vmatprep.subr.mxu0 0.0
        %268 = vmatpush1.msra.mxu0 0.0
        %269 = vmatprep.subr.mxu0 0.0
        %270 = vmatpush1.msra.mxu0 0.0
        %271 = vmatprep.subr.mxu0 0.0
        %272 = vmatpush1.msra.mxu0 0.0
        %273 = vmatprep.subr.mxu0 0.0
        %274 = vmatpush1.msra.mxu0 0.0
        %275 = vmatprep.subr.mxu0 0.0
        %276 = vmatpush1.msra.mxu0 0.0
        %277 = vmatprep.subr.mxu0 0.0
        %278 = vmatpush1.msra.mxu0 0.0
        %279 = vmatprep.subr.mxu0 0.0
        %280 = vmatpush1.msra.mxu0 0.0
        %281 = vmatprep.subr.mxu0 0.0
        %282 = vmatpush1.msra.mxu0 0.0
        %283 = vmatprep.subr.mxu0 0.0
        %284 = vmatpush1.msra.mxu0 0.0
        %285 = vmatprep.subr.mxu0 0.0
        %286 = vmatpush1.msra.mxu0 0.0
        %287 = vmatprep.subr.mxu0 0.0
        %288 = vmatpush1.msra.mxu0 0.0
        %289 = vmatprep.subr.mxu0 0.0
        %290 = vmatpush1.msra.mxu0 %v253
        %291 = vmatprep.subr.mxu0 0.0
        %292 = vmatpush1.msra.mxu0 %v252
        %293 = vmatprep.subr.mxu0 0.0
        %294 = vmatpush2.msra.mxu0 0.0
        %295 = vmatprep.subr.mxu0 0.0
        %296 = vmatpush2.msra.mxu0 0.0
        %297 = vmatprep.subr.mxu0 0.0
        %298 = vmatpush2.msra.mxu0 0.0
        %299 = vmatprep.subr.mxu0 0.0
        %300 = vmatpush2.msra.mxu0 0.0
        %301 = vmatprep.subr.mxu0 0.0
        %302 = vmatpush2.msra.mxu0 0.0
        %303 = vmatprep.subr.mxu0 0.0
        %304 = vmatpush2.msra.mxu0 0.0
        %305 = vmatprep.subr.mxu0 0.0
        %306 = vmatpush2.msra.mxu0 0.0
        %307 = vmatprep.subr.mxu0 0.0
        %308 = vmatpush2.msra.mxu0 0.0
        %309 = vmatprep.subr.mxu0 0.0
        %310 = vmatpush2.msra.mxu0 0.0
        %311 = vmatprep.subr.mxu0 0.0
        %312 = vmatpush2.msra.mxu0 0.0
        %313 = vmatprep.subr.mxu0 0.0
        %314 = vmatpush2.msra.mxu0 0.0
        %315 = vmatprep.subr.mxu0 0.0
        %316 = vmatpush2.msra.mxu0 0.0
        %317 = vmatprep.subr.mxu0 0.0
        %318 = vmatpush2.msra.mxu0 0.0
        %319 = vmatprep.subr.mxu0 0.0
        %320 = vmatpush2.msra.mxu0 0.0
        %321 = vmatprep.subr.mxu0 0.0
        %322 = vmatpush2.msra.mxu0 0.0
        %323 = vmatprep.subr.mxu0 0.0
        %324 = vmatpush2.msra.mxu0 0.0
        %325 = vmatprep.mubr.f32.mxu0 0.0
        %326 = vmatmul.mubr.f32.gmra.mxu0 %v256
        %v327 = vpop.f32.mrf.mxu0
        %v328 = vadd.f32 0.0, %v327
        %v329 = vpop.f32.mrf.mxu0
        %330 = vmatprep.mubr.f32.mxu0 0.0
        %331 = vmatmul.mubr.f32.gmra.mxu0 %v259
        %v332 = vpop.f32.mrf.mxu0
        %v333 = vadd.f32 0.0, %v332
        %v334 = vpop.f32.mrf.mxu0
        %335 = vdwg.mxu0
        %vm336 = vcmask 39936
        %v337 = vsel %vm336, %v328, 0.0
        %v338 = vsel %vm336, %v333, 0.0
        %v339 = vadd.f32 %v337, %v338
        %v340 = vrot.slane %v339, 4
        %v341 = vadd.f32 %v339, %v340
        %v342 = vrot.slane %v341, 2
        %v343 = vadd.f32 %v341, %v342
        %v344 = vrot.slane %v343, 1
        %v345 = vadd.f32 %v343, %v344
        %v346 = vrcp.pop 16.0
        %v347 = vmul.f32 %v345, %v346
        %v348 = vld [vmem:[%s3] sm:$0x1]
        %v349 = vadd.f32 %v347, %v348
        %vm350 = vcmask 32768
        %351 = vst.msk [vmem:[%s189] sm:$0x1] %vm350, %v349
        %s352 = sand.u32 %s115, 1
        %s353 = scalar_lea.sflag [#allocation3], %s352
        %s354 = sand.u32 %s115, 1
        %s355 = scalar_lea.vmem [#allocation2], %s354
        // Predicated region
        $region37: #{simclr_stage2_forward.13} parent=35 // pred_check
          %p356 = pneg %p125
        $region38: #{simclr_stage2_forward.13} parent=35 // pred_check_branch
          %358 = sbr.rel (%p356) target = $region40
        $region39: #{simclr_stage2_forward.13} parent=35 // pred_region
          %s360 = ssub.s32 16, 16
          %361 = vsyncadd %s353, %s360
          %s362 = smul.addr %s18, 16
          %s363 = scalar_lea.hbm %s4, %s362
          %s365 = sshll.u32 %s355, 4
          %s366 = int_to_ptr.vmem [resolvable:$true] %s365
          %368 = dma.vmem_to_hbm [thread:$0]  %s366, 16, %s363, %s353
        $region40: #{simclr_stage2_forward.13} parent=35 // pred_fallthru
          _
      $region36: #{simclr_stage2_forward.13} parent=5 // pred_fallthru
        _
      %p369 = scmp.le.s32.totalorder 2, %s13
      // Predicated region
      $region41: #{simclr_stage2_forward.13} parent=5 // pred_check
        %p370 = pneg %p369
      $region42: #{simclr_stage2_forward.13} parent=5 // pred_check_branch
        %372 = sbr.rel (%p370) target = $region44
      $region43: #{simclr_stage2_forward.13} parent=5 // pred_region
        %s373 = ssub.s32 %s13, 2
        // Predicated region
        $region45: #{simclr_stage2_forward.13} parent=43 // pred_check
          %p374 = pneg %p131
        $region46: #{simclr_stage2_forward.13} parent=43 // pred_check_branch
          %376 = sbr.rel (%p374) target = $region48
        $region47: #{simclr_stage2_forward.13} parent=43 // pred_region
          %s377 = sand.u32 %s116, 1
          %s378 = scalar_lea.sflag [#allocation3], %s377
          %s379 = sand.u32 %s116, 1
          %s380 = scalar_lea.vmem [#allocation2], %s379
          %381 = dma.done %s378, 16
        $region48: #{simclr_stage2_forward.13} parent=43 // pred_fallthru
          _
      $region44: #{simclr_stage2_forward.13} parent=5 // pred_fallthru
        _
    $region6: #{simclr_stage2_forward.13} parent=1 // loop_footer
      %s17 = sadd.s32 1, %s13
    $region7: #{simclr_stage2_forward.13} parent=1 // loop_footer_branch
      %12 = sbr.rel target = $region3
    $region8: #{simclr_stage2_forward.13} parent=1 // loop_exit
      _
    %382 = vsyncpa [#allocation3], 1
    %s383 = scalar_lea.sflag [#allocation3], 1
    %384 = vsyncpa %s383, 1

// kernel: simclr_stage2_forward.12
$region0: #{simclr_stage2_forward.12}
  #allocation0 [shape = 'u32[]', space=smem, size = 0x4, offset = 0x4, fixed_abs, tag = 'smem constant byte address 0x4 - core index']
  #allocation1 [shape = 'u32[144,128]{1,0:T(1,128)}', space=vmem, size = 0x12000, scoped, tag = 'internal scratch']
  %s0 = inlined_call_operand.vmem [shape: f32[2,4,10,14], index: 0, kind: input, shape index: {}]
  %s1 = inlined_call_operand.vmem [shape: f32[99], index: 1, kind: input, shape index: {}]
  %s2 = inlined_call_operand.vmem [shape: f32[2,4,4,8], index: 2, kind: output, shape index: {}]
  %s3 = sld [smem:[#allocation0]]
  $region45: #{simclr_stage2_forward.12} parent=0
    _
  %s5 = ssub.s32 1, %s3
  %s6 = scalar_select 0, %s5, %s3
  $region1: #{simclr_stage2_forward.12} parent=0
    #allocation2 [shape = 'u8[512]{0}', space=smem, size = 0x200, scoped, tag = 'input window, operand 1, single buffered']
    #allocation3 [shape = 's32[2]{0}', space=sflag, size = 0x8, scoped, tag = 'scoped memory for simclr_stage2_forward.12']
    %7 = vsyncpa [#allocation3], 0
    loop: start=0, step=1, limit=4
    $region2: #{simclr_stage2_forward.12} parent=1 // loop_pre_header
      _
    $region3: #{simclr_stage2_forward.12} parent=1 // loop_header
      %s9 = sphi 0, %s13
      %p10 = scmp.ge.s32.totalorder %s9, 4
      %s19 = sphi 0, %s21
      %s22 = sphi 0, %s19
      %s23 = sphi 0, %s22
      %s39 = sphi 0, %s23
      %s43 = sphi 0, %s43
      %s45 = sphi 0, %s43
      %s46 = sphi 0, %s45
      %s60 = sphi 0, %s46
      %s66 = sphi 0, %s68
      %s69 = sphi 0, %s66
      %s70 = sphi 0, %s69
      %s86 = sphi 0, %s70
    $region4: #{simclr_stage2_forward.12} parent=1 // loop_header_branch
      %12 = sbr.rel (%p10) target = $region8
    $region5: #{simclr_stage2_forward.12} parent=1 // loop_body
      %s14 = ssub.s32 %s9, 1
      %s15 = ssub.s32 %s9, 2
      %s16 = sadd.s32 %s9, 1
      %s17 = ssub.s32 %s9, %s16
      %p18 = scmp.eq.s32.totalorder %s17, 0
      %s20 = sadd.s32 %s19, 1
      %s21 = scalar_select %p18, %s19, %s20
      %p24 = pneg %p18
      %p25 = scmp.eq.s32.totalorder %s9, 1
      %p26 = por %p24, %p25
      %p27 = scmp.ne.s32.totalorder %s19, %s22
      %p28 = scmp.eq.s32.totalorder %s9, 0
      %p29 = por %p27, %p28
      %p30 = scmp.ne.s32.totalorder %s19, %s22
      %p31 = scmp.eq.s32.totalorder %s14, 1
      %p32 = por %p30, %p31
      %p33 = scmp.ne.s32.totalorder %s22, %s23
      %p34 = scmp.eq.s32.totalorder %s14, 0
      %p35 = por %p33, %p34
      %p36 = scmp.ne.s32.totalorder %s22, %s23
      %p37 = scmp.eq.s32.totalorder %s15, 1
      %p38 = por %p36, %p37
      %p40 = scmp.ne.s32.totalorder %s23, %s39
      %p41 = scmp.eq.s32.totalorder %s15, 0
      %p42 = por %p40, %p41
      %s44 = sadd.s32 %s43, 1
      %p47 = scmp.eq.s32.totalorder %s9, 1
      %p48 = scmp.ne.s32.totalorder %s43, %s45
      %p49 = scmp.eq.s32.totalorder %s9, 0
      %p50 = por %p48, %p49
      %p51 = scmp.ne.s32.totalorder %s43, %s45
      %p52 = scmp.eq.s32.totalorder %s14, 1
      %p53 = por %p51, %p52
      %p54 = scmp.ne.s32.totalorder %s45, %s46
      %p55 = scmp.eq.s32.totalorder %s14, 0
      %p56 = por %p54, %p55
      %p57 = scmp.ne.s32.totalorder %s45, %s46
      %p58 = scmp.eq.s32.totalorder %s15, 1
      %p59 = por %p57, %p58
      %p61 = scmp.ne.s32.totalorder %s46, %s60
      %p62 = scmp.eq.s32.totalorder %s15, 0
      %p63 = por %p61, %p62
      %s64 = ssub.s32 %s9, %s16
      %p65 = scmp.eq.s32.totalorder %s64, 0
      %s67 = sadd.s32 %s66, 1
      %s68 = scalar_select %p65, %s66, %s67
      %p71 = pneg %p65
      %p72 = scmp.eq.s32.totalorder %s9, 1
      %p73 = por %p71, %p72
      %p74 = scmp.ne.s32.totalorder %s66, %s69
      %p75 = scmp.eq.s32.totalorder %s9, 0
      %p76 = por %p74, %p75
      %p77 = scmp.ne.s32.totalorder %s66, %s69
      %p78 = scmp.eq.s32.totalorder %s14, 1
      %p79 = por %p77, %p78
      %p80 = scmp.ne.s32.totalorder %s69, %s70
      %p81 = scmp.eq.s32.totalorder %s14, 0
      %p82 = por %p80, %p81
      %p83 = scmp.ne.s32.totalorder %s69, %s70
      %p84 = scmp.eq.s32.totalorder %s15, 1
      %p85 = por %p83, %p84
      %p87 = scmp.ne.s32.totalorder %s70, %s86
      %p88 = scmp.eq.s32.totalorder %s15, 0
      %p89 = por %p87, %p88
      %p90 = scmp.le.s32.totalorder 1, %s9
      %p91 = scmp.lt.s32.totalorder %s9, 3
      %p92 = pnand %p90, %p91
      %p93 = pneg %p92
      // Predicated region
      $region9: #{simclr_stage2_forward.12} parent=5 // pred_check
        _
      $region10: #{simclr_stage2_forward.12} parent=5 // pred_check_branch
        %95 = sbr.rel (%p92) target = $region12
      $region11: #{simclr_stage2_forward.12} parent=5 // pred_region
        %s96 = ssub.s32 %s9, 1
        // Predicated region
        $region13: #{simclr_stage2_forward.12} parent=11 // pred_check
          %p97 = pneg %p56
        $region14: #{simclr_stage2_forward.12} parent=11 // pred_check_branch
          %99 = sbr.rel (%p97) target = $region16
        $region15: #{simclr_stage2_forward.12} parent=11 // pred_region
          %s101 = ssub.s32 16, 16
          %102 = vsyncadd [#allocation3], %s101
          %s104 = sshll.u32 %s1, 4
          %s105 = int_to_ptr.vmem [resolvable:$true] %s104
          %107 = dma.vmem_to_smem %s105, 16, [#allocation2], [#allocation3]
        $region16: #{simclr_stage2_forward.12} parent=11 // pred_fallthru
          _
      $region12: #{simclr_stage2_forward.12} parent=5 // pred_fallthru
        _
      %p108 = scmp.lt.s32.totalorder %s9, 2
      // Predicated region
      $region17: #{simclr_stage2_forward.12} parent=5 // pred_check
        %p109 = pneg %p108
      $region18: #{simclr_stage2_forward.12} parent=5 // pred_check_branch
        %111 = sbr.rel (%p109) target = $region20
      $region19: #{simclr_stage2_forward.12} parent=5 // pred_region
        // Predicated region
        $region21: #{simclr_stage2_forward.12} parent=19 // pred_check
          %p112 = pneg %p29
        $region22: #{simclr_stage2_forward.12} parent=19 // pred_check_branch
          %114 = sbr.rel (%p112) target = $region24
        $region23: #{simclr_stage2_forward.12} parent=19 // pred_region
          %p115 = scmp.lt.s32.totalorder %s9, 1
          %s116 = scalar_select %p115, %s9, 1
          %s117 = smul.addr %s116, 8
          %s118 = smul.addr %s117, 8
          %s119 = scalar_lea.vmem %s0, %s118
        $region24: #{simclr_stage2_forward.12} parent=19 // pred_fallthru
          _
      $region20: #{simclr_stage2_forward.12} parent=5 // pred_fallthru
        _
      %p120 = scmp.le.s32.totalorder 1, %s9
      %p121 = scmp.lt.s32.totalorder %s9, 3
      %p122 = pnand %p120, %p121
      %p123 = pneg %p122
      // Predicated region
      $region25: #{simclr_stage2_forward.12} parent=5 // pred_check
        _
      $region26: #{simclr_stage2_forward.12} parent=5 // pred_check_branch
        %125 = sbr.rel (%p122) target = $region28
      $region27: #{simclr_stage2_forward.12} parent=5 // pred_region
        %s126 = ssub.s32 %s9, 1
        // Predicated region
        $region29: #{simclr_stage2_forward.12} parent=27 // pred_check
          %p127 = pneg %p56
        $region30: #{simclr_stage2_forward.12} parent=27 // pred_check_branch
          %129 = sbr.rel (%p127) target = $region32
        $region31: #{simclr_stage2_forward.12} parent=27 // pred_region
          %130 = dma.done [#allocation3], 16
        $region32: #{simclr_stage2_forward.12} parent=27 // pred_fallthru
          _
        %131 = sfence
        %p132 = scmp.lt.s32.totalorder %s14, 1
        %s133 = scalar_select %p132, %s14, 1
        %s134 = smul.addr %s133, 8
        %s135 = smul.addr %s134, 8
        %s136 = scalar_lea.vmem %s0, %s135
        %p137 = pneg %p35
        %p138 = pneg %p32
        %p139 = pneg %p56
        %p140 = pneg %p53
        %p141 = pneg %p82
        %p142 = pneg %p79
        %p143 = scmp.lt.s32.totalorder %s14, 1
        %s144 = scalar_select %p143, %s14, 1
        %s145 = smul.addr %s144, 4
        %s146 = smul.addr %s145, 4
        %s147 = scalar_lea.vmem %s2, %s146
        %p148 = scmp.lt.s32.totalorder %s14, 1
        %s149 = scalar_select %p148, %s14, 1
        %s150 = smul.addr %s149, 8
        %s151 = smul.addr %s150, 8
        %s152 = scalar_lea.vmem %s0, %s151
        %p153 = scmp.lt.s32.totalorder %s14, 1
        %s154 = scalar_select %p153, %s14, 1
        %s155 = smul.addr %s154, 4
        %s156 = smul.addr %s155, 4
        %s157 = scalar_lea.vmem %s2, %s156
        %v158 = vld [vmem:[%s152] sm:$0xff]
        %v159 = vld [vmem:[%s152 + $0x8] sm:$0x3]
        %v160 = vld [vmem:[%s152 + $0x10] sm:$0xff]
        %v161 = vld [vmem:[%s152 + $0x18] sm:$0x3]
        %v162 = vld [vmem:[%s152 + $0x20] sm:$0xff]
        %v163 = vld [vmem:[%s152 + $0x28] sm:$0x3]
        %v164 = vld [vmem:[%s152 + $0x30] sm:$0xff]
        %v165 = vld [vmem:[%s152 + $0x38] sm:$0x3]
        %vm166 = vcmask 113664
        %v167 = vsel %vm166, %v158, -inf
        %v168 = vsel %vm166, %v160, -inf
        %v169 = vsel %vm166, %v162, -inf
        %v170 = vmax.f32 %v167, %v169
        %v171 = vsel %vm166, %v164, -inf
        %v172 = vmax.f32 %v168, %v171
        %v173 = vmax.f32 %v170, %v172
        %vm174 = vcmask 107520
        %v175 = vsel %vm174, %v159, -inf
        %v176 = vsel %vm174, %v161, -inf
        %v177 = vsel %vm174, %v163, -inf
        %v178 = vmax.f32 %v175, %v177
        %v179 = vsel %vm174, %v165, -inf
        %v180 = vmax.f32 %v176, %v179
        %v181 = vmax.f32 %v178, %v180
        %v182 = vsel %vm166, %v158, 0.0
        %v183 = vsel %vm166, %v160, 0.0
        %v184 = vadd.f32 %v182, %v183
        %v185 = vsel %vm166, %v162, 0.0
        %v186 = vadd.f32 %v184, %v185
        %v187 = vsel %vm166, %v164, 0.0
        %v188 = vadd.f32 %v186, %v187
        %v189 = vsel %vm174, %v159, 0.0
        %v190 = vsel %vm174, %v161, 0.0
        %v191 = vadd.f32 %v189, %v190
        %v192 = vsel %vm174, %v163, 0.0
        %v193 = vadd.f32 %v191, %v192
        %v194 = vsel %vm174, %v165, 0.0
        %v195 = vadd.f32 %v193, %v194
        %v196 = vrcp.pop 4.0
        %v197 = vmul.f32 %v188, %v196
        %v198 = vmul.f32 %v195, %v196
        %s199 = sld [smem:[#allocation2 + $0x62]]
        %v200 = vstv %s199
        %v201 = vadd.f32 %v200, 0.0
        %s202 = sld [smem:[#allocation2]]
        %v203 = vstv %s202
        %v204 = vmul.f32 %v203, %v173
        %v205 = vadd.f32 %v201, %v204
        %s206 = sld [smem:[#allocation2 + $0x1]]
        %v207 = vstv %s206
        %v208 = vmul.f32 %v207, %v197
        %v209 = vadd.f32 %v205, %v208
        %s210 = sld [smem:[#allocation2 + $0x2]]
        %v211 = vstv %s210
        %v212 = vmul.f32 %v211, %v173
        %214 = vrot.lane.b32.xlu0 %v212, 127
        %v215 = vpop.permute.xlu0 %214
        %v217 = vadd.f32 %v209, %v215
        %s218 = sld [smem:[#allocation2 + $0x3]]
        %v219 = vstv %s218
        %v220 = vmul.f32 %v219, %v197
        %222 = vrot.lane.b32.xlu0 %v220, 127
        %v223 = vpop.permute.xlu0 %222
        %v225 = vadd.f32 %v217, %v223
        %s226 = sld [smem:[#allocation2 + $0x4]]
        %v227 = vstv %s226
        %v228 = vmul.f32 %v227, %v173
        %230 = vrot.lane.b32.xlu0 %v228, 126
        %v231 = vpop.permute.xlu0 %230
        %v233 = vadd.f32 %v225, %v231
        %s234 = sld [smem:[#allocation2 + $0x5]]
        %v235 = vstv %s234
        %v236 = vmul.f32 %v235, %v197
        %238 = vrot.lane.b32.xlu0 %v236, 126
        %v239 = vpop.permute.xlu0 %238
        %v241 = vadd.f32 %v233, %v239
        %s242 = sld [smem:[#allocation2 + $0x6]]
        %v243 = vstv %s242
        %v244 = vmul.f32 %v243, %v173
        %246 = vrot.lane.b32.xlu0 %v244, 125
        %v247 = vpop.permute.xlu0 %246
        %v249 = vadd.f32 %v241, %v247
        %s250 = sld [smem:[#allocation2 + $0x7]]
        %v251 = vstv %s250
        %v252 = vmul.f32 %v251, %v197
        %254 = vrot.lane.b32.xlu0 %v252, 125
        %v255 = vpop.permute.xlu0 %254
        %v257 = vadd.f32 %v249, %v255
        %s258 = sld [smem:[#allocation2 + $0x8]]
        %v259 = vstv %s258
        %v260 = vmul.f32 %v259, %v173
        %262 = vrot.lane.b32.xlu0 %v260, 124
        %v263 = vpop.permute.xlu0 %262
        %v265 = vadd.f32 %v257, %v263
        %s266 = sld [smem:[#allocation2 + $0x9]]
        %v267 = vstv %s266
        %v268 = vmul.f32 %v267, %v197
        %270 = vrot.lane.b32.xlu0 %v268, 124
        %v271 = vpop.permute.xlu0 %270
        %v273 = vadd.f32 %v265, %v271
        %s274 = sld [smem:[#allocation2 + $0xa]]
        %v275 = vstv %s274
        %v276 = vmul.f32 %v275, %v173
        %278 = vrot.lane.b32.xlu0 %v276, 123
        %v279 = vpop.permute.xlu0 %278
        %v281 = vadd.f32 %v273, %v279
        %s282 = sld [smem:[#allocation2 + $0xb]]
        %v283 = vstv %s282
        %v284 = vmul.f32 %v283, %v197
        %286 = vrot.lane.b32.xlu0 %v284, 123
        %v287 = vpop.permute.xlu0 %286
        %v289 = vadd.f32 %v281, %v287
        %s290 = sld [smem:[#allocation2 + $0xc]]
        %v291 = vstv %s290
        %v292 = vmul.f32 %v291, %v173
        %294 = vrot.lane.b32.xlu0 %v292, 122
        %v295 = vpop.permute.xlu0 %294
        %v297 = vadd.f32 %v289, %v295
        %s298 = sld [smem:[#allocation2 + $0xd]]
        %v299 = vstv %s298
        %v300 = vmul.f32 %v299, %v197
        %302 = vrot.lane.b32.xlu0 %v300, 122
        %v303 = vpop.permute.xlu0 %302
        %v305 = vadd.f32 %v297, %v303
        %s306 = sld [smem:[#allocation2 + $0xe]]
        %v307 = vstv %s306
        %v308 = vmul.f32 %v307, %v173
        %v310 = vrot.slane %v308, 1
        %v312 = vadd.f32 %v305, %v310
        %s313 = sld [smem:[#allocation2 + $0xf]]
        %v314 = vstv %s313
        %v315 = vmul.f32 %v314, %v197
        %v317 = vrot.slane %v315, 1
        %v319 = vadd.f32 %v312, %v317
        %s320 = sld [smem:[#allocation2 + $0x10]]
        %v321 = vstv %s320
        %v322 = vmul.f32 %v321, %v173
        %v324 = vrot.slane %v322, 1
        %325 = vrot.lane.b32.xlu0 %v324, 127
        %v326 = vpop.permute.xlu0 %325
        %v328 = vadd.f32 %v319, %v326
        %s329 = sld [smem:[#allocation2 + $0x11]]
        %v330 = vstv %s329
        %v331 = vmul.f32 %v330, %v197
        %v333 = vrot.slane %v331, 1
        %334 = vrot.lane.b32.xlu0 %v333, 127
        %v335 = vpop.permute.xlu0 %334
        %v337 = vadd.f32 %v328, %v335
        %s338 = sld [smem:[#allocation2 + $0x12]]
        %v339 = vstv %s338
        %v340 = vmul.f32 %v339, %v173
        %v342 = vrot.slane %v340, 1
        %343 = vrot.lane.b32.xlu0 %v342, 126
        %v344 = vpop.permute.xlu0 %343
        %v346 = vadd.f32 %v337, %v344
        %s347 = sld [smem:[#allocation2 + $0x13]]
        %v348 = vstv %s347
        %v349 = vmul.f32 %v348, %v197
        %v351 = vrot.slane %v349, 1
        %352 = vrot.lane.b32.xlu0 %v351, 126
        %v353 = vpop.permute.xlu0 %352
        %v355 = vadd.f32 %v346, %v353
        %s356 = sld [smem:[#allocation2 + $0x14]]
        %v357 = vstv %s356
        %v358 = vmul.f32 %v357, %v173
        %v360 = vrot.slane %v358, 1
        %361 = vrot.lane.b32.xlu0 %v360, 125
        %v362 = vpop.permute.xlu0 %361
        %v364 = vadd.f32 %v355, %v362
        %s365 = sld [smem:[#allocation2 + $0x15]]
        %v366 = vstv %s365
        %v367 = vmul.f32 %v366, %v197
        %v369 = vrot.slane %v367, 1
        %370 = vrot.lane.b32.xlu0 %v369, 125
        %v371 = vpop.permute.xlu0 %370
        %v373 = vadd.f32 %v364, %v371
        %s374 = sld [smem:[#allocation2 + $0x16]]
        %v375 = vstv %s374
        %v376 = vmul.f32 %v375, %v173
        %v378 = vrot.slane %v376, 1
        %379 = vrot.lane.b32.xlu0 %v378, 124
        %v380 = vpop.permute.xlu0 %379
        %v382 = vadd.f32 %v373, %v380
        %s383 = sld [smem:[#allocation2 + $0x17]]
        %v384 = vstv %s383
        %v385 = vmul.f32 %v384, %v197
        %v387 = vrot.slane %v385, 1
        %388 = vrot.lane.b32.xlu0 %v387, 124
        %v389 = vpop.permute.xlu0 %388
        %v391 = vadd.f32 %v382, %v389
        %s392 = sld [smem:[#allocation2 + $0x18]]
        %v393 = vstv %s392
        %v394 = vmul.f32 %v393, %v173
        %v396 = vrot.slane %v394, 1
        %397 = vrot.lane.b32.xlu0 %v396, 123
        %v398 = vpop.permute.xlu0 %397
        %v400 = vadd.f32 %v391, %v398
        %s401 = sld [smem:[#allocation2 + $0x19]]
        %v402 = vstv %s401
        %v403 = vmul.f32 %v402, %v197
        %v405 = vrot.slane %v403, 1
        %406 = vrot.lane.b32.xlu0 %v405, 123
        %v407 = vpop.permute.xlu0 %406
        %v409 = vadd.f32 %v400, %v407
        %s410 = sld [smem:[#allocation2 + $0x1a]]
        %v411 = vstv %s410
        %v412 = vmul.f32 %v411, %v173
        %v414 = vrot.slane %v412, 1
        %415 = vrot.lane.b32.xlu0 %v414, 122
        %v416 = vpop.permute.xlu0 %415
        %v418 = vadd.f32 %v409, %v416
        %s419 = sld [smem:[#allocation2 + $0x1b]]
        %v420 = vstv %s419
        %v421 = vmul.f32 %v420, %v197
        %v423 = vrot.slane %v421, 1
        %424 = vrot.lane.b32.xlu0 %v423, 122
        %v425 = vpop.permute.xlu0 %424
        %v427 = vadd.f32 %v418, %v425
        %s428 = sld [smem:[#allocation2 + $0x1c]]
        %v429 = vstv %s428
        %v430 = vmul.f32 %v429, %v173
        %v432 = vrot.slane %v430, 2
        %v434 = vadd.f32 %v427, %v432
        %s435 = sld [smem:[#allocation2 + $0x1d]]
        %v436 = vstv %s435
        %v437 = vmul.f32 %v436, %v197
        %v439 = vrot.slane %v437, 2
        %v441 = vadd.f32 %v434, %v439
        %s442 = sld [smem:[#allocation2 + $0x1e]]
        %v443 = vstv %s442
        %v444 = vmul.f32 %v443, %v173
        %v446 = vrot.slane %v444, 2
        %447 = vrot.lane.b32.xlu0 %v446, 127
        %v448 = vpop.permute.xlu0 %447
        %v450 = vadd.f32 %v441, %v448
        %s451 = sld [smem:[#allocation2 + $0x1f]]
        %v452 = vstv %s451
        %v453 = vmul.f32 %v452, %v197
        %v455 = vrot.slane %v453, 2
        %456 = vrot.lane.b32.xlu0 %v455, 127
        %v457 = vpop.permute.xlu0 %456
        %v459 = vadd.f32 %v450, %v457
        %s460 = sld [smem:[#allocation2 + $0x20]]
        %v461 = vstv %s460
        %v462 = vmul.f32 %v461, %v173
        %v464 = vrot.slane %v462, 2
        %465 = vrot.lane.b32.xlu0 %v464, 126
        %v466 = vpop.permute.xlu0 %465
        %v468 = vadd.f32 %v459, %v466
        %s469 = sld [smem:[#allocation2 + $0x21]]
        %v470 = vstv %s469
        %v471 = vmul.f32 %v470, %v197
        %v473 = vrot.slane %v471, 2
        %474 = vrot.lane.b32.xlu0 %v473, 126
        %v475 = vpop.permute.xlu0 %474
        %v477 = vadd.f32 %v468, %v475
        %s478 = sld [smem:[#allocation2 + $0x22]]
        %v479 = vstv %s478
        %v480 = vmul.f32 %v479, %v173
        %v482 = vrot.slane %v480, 2
        %483 = vrot.lane.b32.xlu0 %v482, 125
        %v484 = vpop.permute.xlu0 %483
        %v486 = vadd.f32 %v477, %v484
        %s487 = sld [smem:[#allocation2 + $0x23]]
        %v488 = vstv %s487
        %v489 = vmul.f32 %v488, %v197
        %v491 = vrot.slane %v489, 2
        %492 = vrot.lane.b32.xlu0 %v491, 125
        %v493 = vpop.permute.xlu0 %492
        %v495 = vadd.f32 %v486, %v493
        %s496 = sld [smem:[#allocation2 + $0x24]]
        %v497 = vstv %s496
        %v498 = vmul.f32 %v497, %v173
        %v500 = vrot.slane %v498, 2
        %501 = vrot.lane.b32.xlu0 %v500, 124
        %v502 = vpop.permute.xlu0 %501
        %v504 = vadd.f32 %v495, %v502
        %s505 = sld [smem:[#allocation2 + $0x25]]
        %v506 = vstv %s505
        %v507 = vmul.f32 %v506, %v197
        %v509 = vrot.slane %v507, 2
        %510 = vrot.lane.b32.xlu0 %v509, 124
        %v511 = vpop.permute.xlu0 %510
        %v513 = vadd.f32 %v504, %v511
        %s514 = sld [smem:[#allocation2 + $0x26]]
        %v515 = vstv %s514
        %v516 = vmul.f32 %v515, %v173
        %v518 = vrot.slane %v516, 2
        %519 = vrot.lane.b32.xlu0 %v518, 123
        %v520 = vpop.permute.xlu0 %519
        %v522 = vadd.f32 %v513, %v520
        %s523 = sld [smem:[#allocation2 + $0x27]]
        %v524 = vstv %s523
        %v525 = vmul.f32 %v524, %v197
        %v527 = vrot.slane %v525, 2
        %528 = vrot.lane.b32.xlu0 %v527, 123
        %v529 = vpop.permute.xlu0 %528
        %v531 = vadd.f32 %v522, %v529
        %s532 = sld [smem:[#allocation2 + $0x28]]
        %v533 = vstv %s532
        %v534 = vmul.f32 %v533, %v173
        %v536 = vrot.slane %v534, 2
        %537 = vrot.lane.b32.xlu0 %v536, 122
        %v538 = vpop.permute.xlu0 %537
        %v540 = vadd.f32 %v531, %v538
        %s541 = sld [smem:[#allocation2 + $0x29]]
        %v542 = vstv %s541
        %v543 = vmul.f32 %v542, %v197
        %v545 = vrot.slane %v543, 2
        %546 = vrot.lane.b32.xlu0 %v545, 122
        %v547 = vpop.permute.xlu0 %546
        %v549 = vadd.f32 %v540, %v547
        %s550 = sld [smem:[#allocation2 + $0x2a]]
        %v551 = vstv %s550
        %v552 = vmul.f32 %v551, %v173
        %v554 = vrot.slane %v552, 3
        %v556 = vadd.f32 %v549, %v554
        %s557 = sld [smem:[#allocation2 + $0x2b]]
        %v558 = vstv %s557
        %v559 = vmul.f32 %v558, %v197
        %v561 = vrot.slane %v559, 3
        %v563 = vadd.f32 %v556, %v561
        %s564 = sld [smem:[#allocation2 + $0x2c]]
        %v565 = vstv %s564
        %v566 = vmul.f32 %v565, %v173
        %v568 = vrot.slane %v566, 3
        %569 = vrot.lane.b32.xlu0 %v568, 127
        %v570 = vpop.permute.xlu0 %569
        %v572 = vadd.f32 %v563, %v570
        %s573 = sld [smem:[#allocation2 + $0x2d]]
        %v574 = vstv %s573
        %v575 = vmul.f32 %v574, %v197
        %v577 = vrot.slane %v575, 3
        %578 = vrot.lane.b32.xlu0 %v577, 127
        %v579 = vpop.permute.xlu0 %578
        %v581 = vadd.f32 %v572, %v579
        %s582 = sld [smem:[#allocation2 + $0x2e]]
        %v583 = vstv %s582
        %v584 = vmul.f32 %v583, %v173
        %v586 = vrot.slane %v584, 3
        %587 = vrot.lane.b32.xlu0 %v586, 126
        %v588 = vpop.permute.xlu0 %587
        %v590 = vadd.f32 %v581, %v588
        %s591 = sld [smem:[#allocation2 + $0x2f]]
        %v592 = vstv %s591
        %v593 = vmul.f32 %v592, %v197
        %v595 = vrot.slane %v593, 3
        %596 = vrot.lane.b32.xlu0 %v595, 126
        %v597 = vpop.permute.xlu0 %596
        %v599 = vadd.f32 %v590, %v597
        %s600 = sld [smem:[#allocation2 + $0x30]]
        %v601 = vstv %s600
        %v602 = vmul.f32 %v601, %v173
        %v604 = vrot.slane %v602, 3
        %605 = vrot.lane.b32.xlu0 %v604, 125
        %v606 = vpop.permute.xlu0 %605
        %v608 = vadd.f32 %v599, %v606
        %s609 = sld [smem:[#allocation2 + $0x31]]
        %v610 = vstv %s609
        %v611 = vmul.f32 %v610, %v197
        %v613 = vrot.slane %v611, 3
        %614 = vrot.lane.b32.xlu0 %v613, 125
        %v615 = vpop.permute.xlu0 %614
        %v617 = vadd.f32 %v608, %v615
        %s618 = sld [smem:[#allocation2 + $0x32]]
        %v619 = vstv %s618
        %v620 = vmul.f32 %v619, %v173
        %v622 = vrot.slane %v620, 3
        %623 = vrot.lane.b32.xlu0 %v622, 124
        %v624 = vpop.permute.xlu0 %623
        %v626 = vadd.f32 %v617, %v624
        %s627 = sld [smem:[#allocation2 + $0x33]]
        %v628 = vstv %s627
        %v629 = vmul.f32 %v628, %v197
        %v631 = vrot.slane %v629, 3
        %632 = vrot.lane.b32.xlu0 %v631, 124
        %v633 = vpop.permute.xlu0 %632
        %v635 = vadd.f32 %v626, %v633
        %s636 = sld [smem:[#allocation2 + $0x34]]
        %v637 = vstv %s636
        %v638 = vmul.f32 %v637, %v173
        %v640 = vrot.slane %v638, 3
        %641 = vrot.lane.b32.xlu0 %v640, 123
        %v642 = vpop.permute.xlu0 %641
        %v644 = vadd.f32 %v635, %v642
        %s645 = sld [smem:[#allocation2 + $0x35]]
        %v646 = vstv %s645
        %v647 = vmul.f32 %v646, %v197
        %v649 = vrot.slane %v647, 3
        %650 = vrot.lane.b32.xlu0 %v649, 123
        %v651 = vpop.permute.xlu0 %650
        %v653 = vadd.f32 %v644, %v651
        %s654 = sld [smem:[#allocation2 + $0x36]]
        %v655 = vstv %s654
        %v656 = vmul.f32 %v655, %v173
        %v658 = vrot.slane %v656, 3
        %659 = vrot.lane.b32.xlu0 %v658, 122
        %v660 = vpop.permute.xlu0 %659
        %v662 = vadd.f32 %v653, %v660
        %s663 = sld [smem:[#allocation2 + $0x37]]
        %v664 = vstv %s663
        %v665 = vmul.f32 %v664, %v197
        %v667 = vrot.slane %v665, 3
        %668 = vrot.lane.b32.xlu0 %v667, 122
        %v669 = vpop.permute.xlu0 %668
        %v671 = vadd.f32 %v662, %v669
        %s672 = sld [smem:[#allocation2 + $0x38]]
        %v673 = vstv %s672
        %v674 = vmul.f32 %v673, %v173
        %v676 = vrot.slane %v674, 4
        %v678 = vadd.f32 %v671, %v676
        %s679 = sld [smem:[#allocation2 + $0x39]]
        %v680 = vstv %s679
        %v681 = vmul.f32 %v680, %v197
        %v683 = vrot.slane %v681, 4
        %v685 = vadd.f32 %v678, %v683
        %s686 = sld [smem:[#allocation2 + $0x3a]]
        %v687 = vstv %s686
        %v688 = vmul.f32 %v687, %v173
        %v690 = vrot.slane %v688, 4
        %691 = vrot.lane.b32.xlu0 %v690, 127
        %v692 = vpop.permute.xlu0 %691
        %v694 = vadd.f32 %v685, %v692
        %s695 = sld [smem:[#allocation2 + $0x3b]]
        %v696 = vstv %s695
        %v697 = vmul.f32 %v696, %v197
        %v699 = vrot.slane %v697, 4
        %700 = vrot.lane.b32.xlu0 %v699, 127
        %v701 = vpop.permute.xlu0 %700
        %v703 = vadd.f32 %v694, %v701
        %s704 = sld [smem:[#allocation2 + $0x3c]]
        %v705 = vstv %s704
        %v706 = vmul.f32 %v705, %v173
        %v708 = vrot.slane %v706, 4
        %709 = vrot.lane.b32.xlu0 %v708, 126
        %v710 = vpop.permute.xlu0 %709
        %v712 = vadd.f32 %v703, %v710
        %s713 = sld [smem:[#allocation2 + $0x3d]]
        %v714 = vstv %s713
        %v715 = vmul.f32 %v714, %v197
        %v717 = vrot.slane %v715, 4
        %718 = vrot.lane.b32.xlu0 %v717, 126
        %v719 = vpop.permute.xlu0 %718
        %v721 = vadd.f32 %v712, %v719
        %s722 = sld [smem:[#allocation2 + $0x3e]]
        %v723 = vstv %s722
        %v724 = vmul.f32 %v723, %v173
        %v726 = vrot.slane %v724, 4
        %727 = vrot.lane.b32.xlu0 %v726, 125
        %v728 = vpop.permute.xlu0 %727
        %v730 = vadd.f32 %v721, %v728
        %s731 = sld [smem:[#allocation2 + $0x3f]]
        %v732 = vstv %s731
        %v733 = vmul.f32 %v732, %v197
        %v735 = vrot.slane %v733, 4
        %736 = vrot.lane.b32.xlu0 %v735, 125
        %v737 = vpop.permute.xlu0 %736
        %v739 = vadd.f32 %v730, %v737
        %s740 = sld [smem:[#allocation2 + $0x40]]
        %v741 = vstv %s740
        %v742 = vmul.f32 %v741, %v173
        %v744 = vrot.slane %v742, 4
        %745 = vrot.lane.b32.xlu0 %v744, 124
        %v746 = vpop.permute.xlu0 %745
        %v748 = vadd.f32 %v739, %v746
        %s749 = sld [smem:[#allocation2 + $0x41]]
        %v750 = vstv %s749
        %v751 = vmul.f32 %v750, %v197
        %v753 = vrot.slane %v751, 4
        %754 = vrot.lane.b32.xlu0 %v753, 124
        %v755 = vpop.permute.xlu0 %754
        %v757 = vadd.f32 %v748, %v755
        %s758 = sld [smem:[#allocation2 + $0x42]]
        %v759 = vstv %s758
        %v760 = vmul.f32 %v759, %v173
        %v762 = vrot.slane %v760, 4
        %763 = vrot.lane.b32.xlu0 %v762, 123
        %v764 = vpop.permute.xlu0 %763
        %v766 = vadd.f32 %v757, %v764
        %s767 = sld [smem:[#allocation2 + $0x43]]
        %v768 = vstv %s767
        %v769 = vmul.f32 %v768, %v197
        %v771 = vrot.slane %v769, 4
        %772 = vrot.lane.b32.xlu0 %v771, 123
        %v773 = vpop.permute.xlu0 %772
        %v775 = vadd.f32 %v766, %v773
        %s776 = sld [smem:[#allocation2 + $0x44]]
        %v777 = vstv %s776
        %v778 = vmul.f32 %v777, %v173
        %v780 = vrot.slane %v778, 4
        %781 = vrot.lane.b32.xlu0 %v780, 122
        %v782 = vpop.permute.xlu0 %781
        %v784 = vadd.f32 %v775, %v782
        %s785 = sld [smem:[#allocation2 + $0x45]]
        %v786 = vstv %s785
        %v787 = vmul.f32 %v786, %v197
        %v789 = vrot.slane %v787, 4
        %790 = vrot.lane.b32.xlu0 %v789, 122
        %v791 = vpop.permute.xlu0 %790
        %v793 = vadd.f32 %v784, %v791
        %s794 = sld [smem:[#allocation2 + $0x46]]
        %v795 = vstv %s794
        %v796 = vmul.f32 %v795, %v173
        %v797 = vmul.f32 %v795, %v181
        %vm800 = vcmask 1042432
        %v801 = vrot.slane %v796, 5
        %v802 = vrot.slane %v797, 5
        %v803 = vsel %vm800, %v801, %v802
        %v805 = vadd.f32 %v793, %v803
        %s806 = sld [smem:[#allocation2 + $0x47]]
        %v807 = vstv %s806
        %v808 = vmul.f32 %v807, %v197
        %v809 = vmul.f32 %v807, %v198
        %v812 = vrot.slane %v808, 5
        %v813 = vrot.slane %v809, 5
        %v814 = vsel %vm800, %v812, %v813
        %v816 = vadd.f32 %v805, %v814
        %s817 = sld [smem:[#allocation2 + $0x48]]
        %v818 = vstv %s817
        %v819 = vmul.f32 %v818, %v173
        %v820 = vmul.f32 %v818, %v181
        %v823 = vrot.slane %v819, 5
        %v824 = vrot.slane %v820, 5
        %v825 = vsel %vm800, %v823, %v824
        %826 = vrot.lane.b32.xlu0 %v825, 127
        %v827 = vpop.permute.xlu0 %826
        %v829 = vadd.f32 %v816, %v827
        %s830 = sld [smem:[#allocation2 + $0x49]]
        %v831 = vstv %s830
        %v832 = vmul.f32 %v831, %v197
        %v833 = vmul.f32 %v831, %v198
        %v836 = vrot.slane %v832, 5
        %v837 = vrot.slane %v833, 5
        %v838 = vsel %vm800, %v836, %v837
        %839 = vrot.lane.b32.xlu0 %v838, 127
        %v840 = vpop.permute.xlu0 %839
        %v842 = vadd.f32 %v829, %v840
        %s843 = sld [smem:[#allocation2 + $0x4a]]
        %v844 = vstv %s843
        %v845 = vmul.f32 %v844, %v173
        %v846 = vmul.f32 %v844, %v181
        %v849 = vrot.slane %v845, 5
        %v850 = vrot.slane %v846, 5
        %v851 = vsel %vm800, %v849, %v850
        %852 = vrot.lane.b32.xlu0 %v851, 126
        %v853 = vpop.permute.xlu0 %852
        %v855 = vadd.f32 %v842, %v853
        %s856 = sld [smem:[#allocation2 + $0x4b]]
        %v857 = vstv %s856
        %v858 = vmul.f32 %v857, %v197
        %v859 = vmul.f32 %v857, %v198
        %v862 = vrot.slane %v858, 5
        %v863 = vrot.slane %v859, 5
        %v864 = vsel %vm800, %v862, %v863
        %865 = vrot.lane.b32.xlu0 %v864, 126
        %v866 = vpop.permute.xlu0 %865
        %v868 = vadd.f32 %v855, %v866
        %s869 = sld [smem:[#allocation2 + $0x4c]]
        %v870 = vstv %s869
        %v871 = vmul.f32 %v870, %v173
        %v872 = vmul.f32 %v870, %v181
        %v875 = vrot.slane %v871, 5
        %v876 = vrot.slane %v872, 5
        %v877 = vsel %vm800, %v875, %v876
        %878 = vrot.lane.b32.xlu0 %v877, 125
        %v879 = vpop.permute.xlu0 %878
        %v881 = vadd.f32 %v868, %v879
        %s882 = sld [smem:[#allocation2 + $0x4d]]
        %v883 = vstv %s882
        %v884 = vmul.f32 %v883, %v197
        %v885 = vmul.f32 %v883, %v198
        %v888 = vrot.slane %v884, 5
        %v889 = vrot.slane %v885, 5
        %v890 = vsel %vm800, %v888, %v889
        %891 = vrot.lane.b32.xlu0 %v890, 125
        %v892 = vpop.permute.xlu0 %891
        %v894 = vadd.f32 %v881, %v892
        %s895 = sld [smem:[#allocation2 + $0x4e]]
        %v896 = vstv %s895
        %v897 = vmul.f32 %v896, %v173
        %v898 = vmul.f32 %v896, %v181
        %v901 = vrot.slane %v897, 5
        %v902 = vrot.slane %v898, 5
        %v903 = vsel %vm800, %v901, %v902
        %904 = vrot.lane.b32.xlu0 %v903, 124
        %v905 = vpop.permute.xlu0 %904
        %v907 = vadd.f32 %v894, %v905
        %s908 = sld [smem:[#allocation2 + $0x4f]]
        %v909 = vstv %s908
        %v910 = vmul.f32 %v909, %v197
        %v911 = vmul.f32 %v909, %v198
        %v914 = vrot.slane %v910, 5
        %v915 = vrot.slane %v911, 5
        %v916 = vsel %vm800, %v914, %v915
        %917 = vrot.lane.b32.xlu0 %v916, 124
        %v918 = vpop.permute.xlu0 %917
        %v920 = vadd.f32 %v907, %v918
        %s921 = sld [smem:[#allocation2 + $0x50]]
        %v922 = vstv %s921
        %v923 = vmul.f32 %v922, %v173
        %v924 = vmul.f32 %v922, %v181
        %v927 = vrot.slane %v923, 5
        %v928 = vrot.slane %v924, 5
        %v929 = vsel %vm800, %v927, %v928
        %930 = vrot.lane.b32.xlu0 %v929, 123
        %v931 = vpop.permute.xlu0 %930
        %v933 = vadd.f32 %v920, %v931
        %s934 = sld [smem:[#allocation2 + $0x51]]
        %v935 = vstv %s934
        %v936 = vmul.f32 %v935, %v197
        %v937 = vmul.f32 %v935, %v198
        %v940 = vrot.slane %v936, 5
        %v941 = vrot.slane %v937, 5
        %v942 = vsel %vm800, %v940, %v941
        %943 = vrot.lane.b32.xlu0 %v942, 123
        %v944 = vpop.permute.xlu0 %943
        %v946 = vadd.f32 %v933, %v944
        %s947 = sld [smem:[#allocation2 + $0x52]]
        %v948 = vstv %s947
        %v949 = vmul.f32 %v948, %v173
        %v950 = vmul.f32 %v948, %v181
        %v953 = vrot.slane %v949, 5
        %v954 = vrot.slane %v950, 5
        %v955 = vsel %vm800, %v953, %v954
        %956 = vrot.lane.b32.xlu0 %v955, 122
        %v957 = vpop.permute.xlu0 %956
        %v959 = vadd.f32 %v946, %v957
        %s960 = sld [smem:[#allocation2 + $0x53]]
        %v961 = vstv %s960
        %v962 = vmul.f32 %v961, %v197
        %v963 = vmul.f32 %v961, %v198
        %v966 = vrot.slane %v962, 5
        %v967 = vrot.slane %v963, 5
        %v968 = vsel %vm800, %v966, %v967
        %969 = vrot.lane.b32.xlu0 %v968, 122
        %v970 = vpop.permute.xlu0 %969
        %v972 = vadd.f32 %v959, %v970
        %s973 = sld [smem:[#allocation2 + $0x54]]
        %v974 = vstv %s973
        %v975 = vmul.f32 %v974, %v173
        %v976 = vmul.f32 %v974, %v181
        %vm979 = vcmask 1041408
        %v980 = vrot.slane %v975, 6
        %v981 = vrot.slane %v976, 6
        %v982 = vsel %vm979, %v980, %v981
        %v984 = vadd.f32 %v972, %v982
        %s985 = sld [smem:[#allocation2 + $0x55]]
        %v986 = vstv %s985
        %v987 = vmul.f32 %v986, %v197
        %v988 = vmul.f32 %v986, %v198
        %v991 = vrot.slane %v987, 6
        %v992 = vrot.slane %v988, 6
        %v993 = vsel %vm979, %v991, %v992
        %v995 = vadd.f32 %v984, %v993
        %s996 = sld [smem:[#allocation2 + $0x56]]
        %v997 = vstv %s996
        %v998 = vmul.f32 %v997, %v173
        %v999 = vmul.f32 %v997, %v181
        %v1002 = vrot.slane %v998, 6
        %v1003 = vrot.slane %v999, 6
        %v1004 = vsel %vm979, %v1002, %v1003
        %1005 = vrot.lane.b32.xlu0 %v1004, 127
        %v1006 = vpop.permute.xlu0 %1005
        %v1008 = vadd.f32 %v995, %v1006
        %s1009 = sld [smem:[#allocation2 + $0x57]]
        %v1010 = vstv %s1009
        %v1011 = vmul.f32 %v1010, %v197
        %v1012 = vmul.f32 %v1010, %v198
        %v1015 = vrot.slane %v1011, 6
        %v1016 = vrot.slane %v1012, 6
        %v1017 = vsel %vm979, %v1015, %v1016
        %1018 = vrot.lane.b32.xlu0 %v1017, 127
        %v1019 = vpop.permute.xlu0 %1018
        %v1021 = vadd.f32 %v1008, %v1019
        %s1022 = sld [smem:[#allocation2 + $0x58]]
        %v1023 = vstv %s1022
        %v1024 = vmul.f32 %v1023, %v173
        %v1025 = vmul.f32 %v1023, %v181
        %v1028 = vrot.slane %v1024, 6
        %v1029 = vrot.slane %v1025, 6
        %v1030 = vsel %vm979, %v1028, %v1029
        %1031 = vrot.lane.b32.xlu0 %v1030, 126
        %v1032 = vpop.permute.xlu0 %1031
        %v1034 = vadd.f32 %v1021, %v1032
        %s1035 = sld [smem:[#allocation2 + $0x59]]
        %v1036 = vstv %s1035
        %v1037 = vmul.f32 %v1036, %v197
        %v1038 = vmul.f32 %v1036, %v198
        %v1041 = vrot.slane %v1037, 6
        %v1042 = vrot.slane %v1038, 6
        %v1043 = vsel %vm979, %v1041, %v1042
        %1044 = vrot.lane.b32.xlu0 %v1043, 126
        %v1045 = vpop.permute.xlu0 %1044
        %v1047 = vadd.f32 %v1034, %v1045
        %s1048 = sld [smem:[#allocation2 + $0x5a]]
        %v1049 = vstv %s1048
        %v1050 = vmul.f32 %v1049, %v173
        %v1051 = vmul.f32 %v1049, %v181
        %v1054 = vrot.slane %v1050, 6
        %v1055 = vrot.slane %v1051, 6
        %v1056 = vsel %vm979, %v1054, %v1055
        %1057 = vrot.lane.b32.xlu0 %v1056, 125
        %v1058 = vpop.permute.xlu0 %1057
        %v1060 = vadd.f32 %v1047, %v1058
        %s1061 = sld [smem:[#allocation2 + $0x5b]]
        %v1062 = vstv %s1061
        %v1063 = vmul.f32 %v1062, %v197
        %v1064 = vmul.f32 %v1062, %v198
        %v1067 = vrot.slane %v1063, 6
        %v1068 = vrot.slane %v1064, 6
        %v1069 = vsel %vm979, %v1067, %v1068
        %1070 = vrot.lane.b32.xlu0 %v1069, 125
        %v1071 = vpop.permute.xlu0 %1070
        %v1073 = vadd.f32 %v1060, %v1071
        %s1074 = sld [smem:[#allocation2 + $0x5c]]
        %v1075 = vstv %s1074
        %v1076 = vmul.f32 %v1075, %v173
        %v1077 = vmul.f32 %v1075, %v181
        %v1080 = vrot.slane %v1076, 6
        %v1081 = vrot.slane %v1077, 6
        %v1082 = vsel %vm979, %v1080, %v1081
        %1083 = vrot.lane.b32.xlu0 %v1082, 124
        %v1084 = vpop.permute.xlu0 %1083
        %v1086 = vadd.f32 %v1073, %v1084
        %s1087 = sld [smem:[#allocation2 + $0x5d]]
        %v1088 = vstv %s1087
        %v1089 = vmul.f32 %v1088, %v197
        %v1090 = vmul.f32 %v1088, %v198
        %v1093 = vrot.slane %v1089, 6
        %v1094 = vrot.slane %v1090, 6
        %v1095 = vsel %vm979, %v1093, %v1094
        %1096 = vrot.lane.b32.xlu0 %v1095, 124
        %v1097 = vpop.permute.xlu0 %1096
        %v1099 = vadd.f32 %v1086, %v1097
        %s1100 = sld [smem:[#allocation2 + $0x5e]]
        %v1101 = vstv %s1100
        %v1102 = vmul.f32 %v1101, %v173
        %v1103 = vmul.f32 %v1101, %v181
        %v1106 = vrot.slane %v1102, 6
        %v1107 = vrot.slane %v1103, 6
        %v1108 = vsel %vm979, %v1106, %v1107
        %1109 = vrot.lane.b32.xlu0 %v1108, 123
        %v1110 = vpop.permute.xlu0 %1109
        %v1112 = vadd.f32 %v1099, %v1110
        %s1113 = sld [smem:[#allocation2 + $0x5f]]
        %v1114 = vstv %s1113
        %v1115 = vmul.f32 %v1114, %v197
        %v1116 = vmul.f32 %v1114, %v198
        %v1119 = vrot.slane %v1115, 6
        %v1120 = vrot.slane %v1116, 6
        %v1121 = vsel %vm979, %v1119, %v1120
        %1122 = vrot.lane.b32.xlu0 %v1121, 123
        %v1123 = vpop.permute.xlu0 %1122
        %v1125 = vadd.f32 %v1112, %v1123
        %s1126 = sld [smem:[#allocation2 + $0x60]]
        %v1127 = vstv %s1126
        %v1128 = vmul.f32 %v1127, %v173
        %v1129 = vmul.f32 %v1127, %v181
        %v1132 = vrot.slane %v1128, 6
        %v1133 = vrot.slane %v1129, 6
        %v1134 = vsel %vm979, %v1132, %v1133
        %1135 = vrot.lane.b32.xlu0 %v1134, 122
        %v1136 = vpop.permute.xlu0 %1135
        %v1138 = vadd.f32 %v1125, %v1136
        %s1139 = sld [smem:[#allocation2 + $0x61]]
        %v1140 = vstv %s1139
        %v1141 = vmul.f32 %v1140, %v197
        %v1142 = vmul.f32 %v1140, %v198
        %v1145 = vrot.slane %v1141, 6
        %v1146 = vrot.slane %v1142, 6
        %v1147 = vsel %vm979, %v1145, %v1146
        %1148 = vrot.lane.b32.xlu0 %v1147, 122
        %v1149 = vpop.permute.xlu0 %1148
        %v1151 = vadd.f32 %v1138, %v1149
        %v1152 = vxor.u32 %v1151, 2147483648
        %v1153 = vmul.f32 %v1152, 1.442695
        %v1154 = vpow.pop %v1153
        %v1155 = vadd.f32 %v1154, 1.0
        %v1156 = vrcp.pop %v1155
        %v1157 = vmul.f32 1.0, %v1156
        %v1159 = vrot.slane %v1157, 5
        %1160 = vrot.lane.b32.xlu0 %v1159, 3
        %v1161 = vpop.permute.xlu0 %1160
        %v1163 = vmul.f32 %v158, %v1161
        %v1164 = vmul.f32 %v160, %v1161
        %v1165 = vmul.f32 %v162, %v1161
        %v1166 = vmul.f32 %v164, %v1161
        %1171 = vrot.lane.b32.xlu0 %v1163, 125
        %v1172 = vpop.permute.xlu0 %1171
        %1173 = vrot.lane.b32.xlu0 %v1164, 125
        %v1174 = vpop.permute.xlu0 %1173
        %1175 = vrot.lane.b32.xlu0 %v1165, 125
        %v1176 = vpop.permute.xlu0 %1175
        %1177 = vrot.lane.b32.xlu0 %v1166, 125
        %v1178 = vpop.permute.xlu0 %1177
        %vm1183 = vcmask 63491
        %1184 = vst.msk [vmem:[%s157 - $0x3] sm:$0x78] %vm1183, %v1172
        %1185 = vst.msk [vmem:[%s157 + $0x1] sm:$0x78] %vm1183, %v1174
        %1186 = vst.msk [vmem:[%s157 + $0x5] sm:$0x78] %vm1183, %v1176
        %1187 = vst.msk [vmem:[%s157 + $0x9] sm:$0x78] %vm1183, %v1178
        %p1188 = scmp.lt.s32.totalorder %s14, 1
        %s1189 = scalar_select %p1188, %s14, 1
        %s1190 = smul.addr %s1189, 4
        %s1191 = smul.addr %s1190, 4
        %s1192 = scalar_lea.vmem %s2, %s1191
        // Predicated region
        $region33: #{simclr_stage2_forward.12} parent=27 // pred_check
          %p1193 = pneg %p79
        $region34: #{simclr_stage2_forward.12} parent=27 // pred_check_branch
          %1195 = sbr.rel (%p1193) target = $region36
        $region35: #{simclr_stage2_forward.12} parent=27 // pred_region
          _
        $region36: #{simclr_stage2_forward.12} parent=27 // pred_fallthru
          _
      $region28: #{simclr_stage2_forward.12} parent=5 // pred_fallthru
        _
      %p1196 = scmp.le.s32.totalorder 2, %s9
      // Predicated region
      $region37: #{simclr_stage2_forward.12} parent=5 // pred_check
        %p1197 = pneg %p1196
      $region38: #{simclr_stage2_forward.12} parent=5 // pred_check_branch
        %1199 = sbr.rel (%p1197) target = $region40
      $region39: #{simclr_stage2_forward.12} parent=5 // pred_region
        %s1200 = ssub.s32 %s9, 2
        // Predicated region
        $region41: #{simclr_stage2_forward.12} parent=39 // pred_check
          %p1201 = pneg %p85
        $region42: #{simclr_stage2_forward.12} parent=39 // pred_check_branch
          %1203 = sbr.rel (%p1201) target = $region44
        $region43: #{simclr_stage2_forward.12} parent=39 // pred_region
          %p1204 = scmp.lt.s32.totalorder %s15, 1
          %s1205 = scalar_select %p1204, %s15, 1
          %s1206 = smul.addr %s1205, 4
          %s1207 = smul.addr %s1206, 4
          %s1208 = scalar_lea.vmem %s2, %s1207
        $region44: #{simclr_stage2_forward.12} parent=39 // pred_fallthru
          _
      $region40: #{simclr_stage2_forward.12} parent=5 // pred_fallthru
        _
    $region6: #{simclr_stage2_forward.12} parent=1 // loop_footer
      %s13 = sadd.s32 1, %s9
    $region7: #{simclr_stage2_forward.12} parent=1 // loop_footer_branch
      %8 = sbr.rel target = $region3
    $region8: #{simclr_stage2_forward.12} parent=1 // loop_exit
      _
    %1209 = vsyncpa [#allocation3], 1
    %s1210 = scalar_lea.sflag [#allocation3], 1
    %1211 = vsyncpa %s1210, 1

// kernel: simclr_stage2_forward.11
$region0: #{simclr_stage2_forward.11}
  #allocation0 [shape = 'u32[]', space=smem, size = 0x4, offset = 0x4, fixed_abs, tag = 'smem constant byte address 0x4 - core index']
  #allocation1 [shape = 'u32[144,128]{1,0:T(1,128)}', space=vmem, size = 0x12000, scoped, tag = 'internal scratch']
  %s0 = inlined_call_operand.vmem [shape: f32[2,4,14,10], index: 0, kind: input, shape index: {}]
  %s1 = inlined_call_operand.vmem [shape: f32[99], index: 1, kind: input, shape index: {}]
  %s2 = inlined_call_operand.vmem [shape: f32[2,4,8,4], index: 2, kind: output, shape index: {}]
  %s3 = sld [smem:[#allocation0]]
  $region45: #{simclr_stage2_forward.11} parent=0
    _
  %s5 = ssub.s32 1, %s3
  %s6 = scalar_select 0, %s5, %s3
  $region1: #{simclr_stage2_forward.11} parent=0
    #allocation2 [shape = 'u8[512]{0}', space=smem, size = 0x200, scoped, tag = 'input window, operand 1, single buffered']
    #allocation3 [shape = 's32[2]{0}', space=sflag, size = 0x8, scoped, tag = 'scoped memory for simclr_stage2_forward.11']
    %7 = vsyncpa [#allocation3], 0
    loop: start=0, step=1, limit=4
    $region2: #{simclr_stage2_forward.11} parent=1 // loop_pre_header
      _
    $region3: #{simclr_stage2_forward.11} parent=1 // loop_header
      %s9 = sphi 0, %s13
      %p10 = scmp.ge.s32.totalorder %s9, 4
      %s19 = sphi 0, %s21
      %s22 = sphi 0, %s19
      %s23 = sphi 0, %s22
      %s39 = sphi 0, %s23
      %s43 = sphi 0, %s43
      %s45 = sphi 0, %s43
      %s46 = sphi 0, %s45
      %s60 = sphi 0, %s46
      %s66 = sphi 0, %s68
      %s69 = sphi 0, %s66
      %s70 = sphi 0, %s69
      %s86 = sphi 0, %s70
    $region4: #{simclr_stage2_forward.11} parent=1 // loop_header_branch
      %12 = sbr.rel (%p10) target = $region8
    $region5: #{simclr_stage2_forward.11} parent=1 // loop_body
      %s14 = ssub.s32 %s9, 1
      %s15 = ssub.s32 %s9, 2
      %s16 = sadd.s32 %s9, 1
      %s17 = ssub.s32 %s9, %s16
      %p18 = scmp.eq.s32.totalorder %s17, 0
      %s20 = sadd.s32 %s19, 1
      %s21 = scalar_select %p18, %s19, %s20
      %p24 = pneg %p18
      %p25 = scmp.eq.s32.totalorder %s9, 1
      %p26 = por %p24, %p25
      %p27 = scmp.ne.s32.totalorder %s19, %s22
      %p28 = scmp.eq.s32.totalorder %s9, 0
      %p29 = por %p27, %p28
      %p30 = scmp.ne.s32.totalorder %s19, %s22
      %p31 = scmp.eq.s32.totalorder %s14, 1
      %p32 = por %p30, %p31
      %p33 = scmp.ne.s32.totalorder %s22, %s23
      %p34 = scmp.eq.s32.totalorder %s14, 0
      %p35 = por %p33, %p34
      %p36 = scmp.ne.s32.totalorder %s22, %s23
      %p37 = scmp.eq.s32.totalorder %s15, 1
      %p38 = por %p36, %p37
      %p40 = scmp.ne.s32.totalorder %s23, %s39
      %p41 = scmp.eq.s32.totalorder %s15, 0
      %p42 = por %p40, %p41
      %s44 = sadd.s32 %s43, 1
      %p47 = scmp.eq.s32.totalorder %s9, 1
      %p48 = scmp.ne.s32.totalorder %s43, %s45
      %p49 = scmp.eq.s32.totalorder %s9, 0
      %p50 = por %p48, %p49
      %p51 = scmp.ne.s32.totalorder %s43, %s45
      %p52 = scmp.eq.s32.totalorder %s14, 1
      %p53 = por %p51, %p52
      %p54 = scmp.ne.s32.totalorder %s45, %s46
      %p55 = scmp.eq.s32.totalorder %s14, 0
      %p56 = por %p54, %p55
      %p57 = scmp.ne.s32.totalorder %s45, %s46
      %p58 = scmp.eq.s32.totalorder %s15, 1
      %p59 = por %p57, %p58
      %p61 = scmp.ne.s32.totalorder %s46, %s60
      %p62 = scmp.eq.s32.totalorder %s15, 0
      %p63 = por %p61, %p62
      %s64 = ssub.s32 %s9, %s16
      %p65 = scmp.eq.s32.totalorder %s64, 0
      %s67 = sadd.s32 %s66, 1
      %s68 = scalar_select %p65, %s66, %s67
      %p71 = pneg %p65
      %p72 = scmp.eq.s32.totalorder %s9, 1
      %p73 = por %p71, %p72
      %p74 = scmp.ne.s32.totalorder %s66, %s69
      %p75 = scmp.eq.s32.totalorder %s9, 0
      %p76 = por %p74, %p75
      %p77 = scmp.ne.s32.totalorder %s66, %s69
      %p78 = scmp.eq.s32.totalorder %s14, 1
      %p79 = por %p77, %p78
      %p80 = scmp.ne.s32.totalorder %s69, %s70
      %p81 = scmp.eq.s32.totalorder %s14, 0
      %p82 = por %p80, %p81
      %p83 = scmp.ne.s32.totalorder %s69, %s70
      %p84 = scmp.eq.s32.totalorder %s15, 1
      %p85 = por %p83, %p84
      %p87 = scmp.ne.s32.totalorder %s70, %s86
      %p88 = scmp.eq.s32.totalorder %s15, 0
      %p89 = por %p87, %p88
      %p90 = scmp.le.s32.totalorder 1, %s9
      %p91 = scmp.lt.s32.totalorder %s9, 3
      %p92 = pnand %p90, %p91
      %p93 = pneg %p92
      // Predicated region
      $region9: #{simclr_stage2_forward.11} parent=5 // pred_check
        _
      $region10: #{simclr_stage2_forward.11} parent=5 // pred_check_branch
        %95 = sbr.rel (%p92) target = $region12
      $region11: #{simclr_stage2_forward.11} parent=5 // pred_region
        %s96 = ssub.s32 %s9, 1
        // Predicated region
        $region13: #{simclr_stage2_forward.11} parent=11 // pred_check
          %p97 = pneg %p56
        $region14: #{simclr_stage2_forward.11} parent=11 // pred_check_branch
          %99 = sbr.rel (%p97) target = $region16
        $region15: #{simclr_stage2_forward.11} parent=11 // pred_region
          %s101 = ssub.s32 16, 16
          %102 = vsyncadd [#allocation3], %s101
          %s104 = sshll.u32 %s1, 4
          %s105 = int_to_ptr.vmem [resolvable:$true] %s104
          %107 = dma.vmem_to_smem %s105, 16, [#allocation2], [#allocation3]
        $region16: #{simclr_stage2_forward.11} parent=11 // pred_fallthru
          _
      $region12: #{simclr_stage2_forward.11} parent=5 // pred_fallthru
        _
      %p108 = scmp.lt.s32.totalorder %s9, 2
      // Predicated region
      $region17: #{simclr_stage2_forward.11} parent=5 // pred_check
        %p109 = pneg %p108
      $region18: #{simclr_stage2_forward.11} parent=5 // pred_check_branch
        %111 = sbr.rel (%p109) target = $region20
      $region19: #{simclr_stage2_forward.11} parent=5 // pred_region
        // Predicated region
        $region21: #{simclr_stage2_forward.11} parent=19 // pred_check
          %p112 = pneg %p29
        $region22: #{simclr_stage2_forward.11} parent=19 // pred_check_branch
          %114 = sbr.rel (%p112) target = $region24
        $region23: #{simclr_stage2_forward.11} parent=19 // pred_region
          %p115 = scmp.lt.s32.totalorder %s9, 1
          %s116 = scalar_select %p115, %s9, 1
          %s117 = smul.addr %s116, 8
          %s118 = smul.addr %s117, 8
          %s119 = scalar_lea.vmem %s0, %s118
        $region24: #{simclr_stage2_forward.11} parent=19 // pred_fallthru
          _
      $region20: #{simclr_stage2_forward.11} parent=5 // pred_fallthru
        _
      %p120 = scmp.le.s32.totalorder 1, %s9
      %p121 = scmp.lt.s32.totalorder %s9, 3
      %p122 = pnand %p120, %p121
      %p123 = pneg %p122
      // Predicated region
      $region25: #{simclr_stage2_forward.11} parent=5 // pred_check
        _
      $region26: #{simclr_stage2_forward.11} parent=5 // pred_check_branch
        %125 = sbr.rel (%p122) target = $region28
      $region27: #{simclr_stage2_forward.11} parent=5 // pred_region
        %s126 = ssub.s32 %s9, 1
        // Predicated region
        $region29: #{simclr_stage2_forward.11} parent=27 // pred_check
          %p127 = pneg %p56
        $region30: #{simclr_stage2_forward.11} parent=27 // pred_check_branch
          %129 = sbr.rel (%p127) target = $region32
        $region31: #{simclr_stage2_forward.11} parent=27 // pred_region
          %130 = dma.done [#allocation3], 16
        $region32: #{simclr_stage2_forward.11} parent=27 // pred_fallthru
          _
        %131 = sfence
        %p132 = scmp.lt.s32.totalorder %s14, 1
        %s133 = scalar_select %p132, %s14, 1
        %s134 = smul.addr %s133, 8
        %s135 = smul.addr %s134, 8
        %s136 = scalar_lea.vmem %s0, %s135
        %p137 = pneg %p35
        %p138 = pneg %p32
        %p139 = pneg %p56
        %p140 = pneg %p53
        %p141 = pneg %p82
        %p142 = pneg %p79
        %p143 = scmp.lt.s32.totalorder %s14, 1
        %s144 = scalar_select %p143, %s14, 1
        %s145 = smul.addr %s144, 4
        %s146 = smul.addr %s145, 8
        %s147 = scalar_lea.vmem %s2, %s146
        %p148 = scmp.lt.s32.totalorder %s14, 1
        %s149 = scalar_select %p148, %s14, 1
        %s150 = smul.addr %s149, 8
        %s151 = smul.addr %s150, 8
        %s152 = scalar_lea.vmem %s0, %s151
        %p153 = scmp.lt.s32.totalorder %s14, 1
        %s154 = scalar_select %p153, %s14, 1
        %s155 = smul.addr %s154, 4
        %s156 = smul.addr %s155, 8
        %s157 = scalar_lea.vmem %s2, %s156
        %v158 = vld [vmem:[%s152] sm:$0xff]
        %v159 = vld [vmem:[%s152 + $0x8] sm:$0x3f]
        %v160 = vld [vmem:[%s152 + $0x10] sm:$0xff]
        %v161 = vld [vmem:[%s152 + $0x18] sm:$0x3f]
        %v162 = vld [vmem:[%s152 + $0x20] sm:$0xff]
        %v163 = vld [vmem:[%s152 + $0x28] sm:$0x3f]
        %v164 = vld [vmem:[%s152 + $0x30] sm:$0xff]
        %v165 = vld [vmem:[%s152 + $0x38] sm:$0x3f]
        %vm166 = vcmask 80896
        %v167 = vsel %vm166, %v158, -inf
        %v168 = vsel %vm166, %v160, -inf
        %v169 = vsel %vm166, %v162, -inf
        %v170 = vmax.f32 %v167, %v169
        %v171 = vsel %vm166, %v164, -inf
        %v172 = vmax.f32 %v168, %v171
        %v173 = vmax.f32 %v170, %v172
        %vm174 = vcmask 78848
        %v175 = vsel %vm174, %v159, -inf
        %v176 = vsel %vm174, %v161, -inf
        %v177 = vsel %vm174, %v163, -inf
        %v178 = vmax.f32 %v175, %v177
        %v179 = vsel %vm174, %v165, -inf
        %v180 = vmax.f32 %v176, %v179
        %v181 = vmax.f32 %v178, %v180
        %v182 = vsel %vm166, %v158, 0.0
        %v183 = vsel %vm166, %v160, 0.0
        %v184 = vadd.f32 %v182, %v183
        %v185 = vsel %vm166, %v162, 0.0
        %v186 = vadd.f32 %v184, %v185
        %v187 = vsel %vm166, %v164, 0.0
        %v188 = vadd.f32 %v186, %v187
        %v189 = vsel %vm174, %v159, 0.0
        %v190 = vsel %vm174, %v161, 0.0
        %v191 = vadd.f32 %v189, %v190
        %v192 = vsel %vm174, %v163, 0.0
        %v193 = vadd.f32 %v191, %v192
        %v194 = vsel %vm174, %v165, 0.0
        %v195 = vadd.f32 %v193, %v194
        %v196 = vrcp.pop 4.0
        %v197 = vmul.f32 %v188, %v196
        %v198 = vmul.f32 %v195, %v196
        %s199 = sld [smem:[#allocation2 + $0x62]]
        %v200 = vstv %s199
        %v201 = vadd.f32 %v200, 0.0
        %s202 = sld [smem:[#allocation2]]
        %v203 = vstv %s202
        %v204 = vmul.f32 %v203, %v173
        %v205 = vadd.f32 %v201, %v204
        %s206 = sld [smem:[#allocation2 + $0x1]]
        %v207 = vstv %s206
        %v208 = vmul.f32 %v207, %v197
        %v209 = vadd.f32 %v205, %v208
        %s210 = sld [smem:[#allocation2 + $0x2]]
        %v211 = vstv %s210
        %v212 = vmul.f32 %v211, %v173
        %214 = vrot.lane.b32.xlu0 %v212, 127
        %v215 = vpop.permute.xlu0 %214
        %v217 = vadd.f32 %v209, %v215
        %s218 = sld [smem:[#allocation2 + $0x3]]
        %v219 = vstv %s218
        %v220 = vmul.f32 %v219, %v197
        %222 = vrot.lane.b32.xlu0 %v220, 127
        %v223 = vpop.permute.xlu0 %222
        %v225 = vadd.f32 %v217, %v223
        %s226 = sld [smem:[#allocation2 + $0x4]]
        %v227 = vstv %s226
        %v228 = vmul.f32 %v227, %v173
        %230 = vrot.lane.b32.xlu0 %v228, 126
        %v231 = vpop.permute.xlu0 %230
        %v233 = vadd.f32 %v225, %v231
        %s234 = sld [smem:[#allocation2 + $0x5]]
        %v235 = vstv %s234
        %v236 = vmul.f32 %v235, %v197
        %238 = vrot.lane.b32.xlu0 %v236, 126
        %v239 = vpop.permute.xlu0 %238
        %v241 = vadd.f32 %v233, %v239
        %s242 = sld [smem:[#allocation2 + $0x6]]
        %v243 = vstv %s242
        %v244 = vmul.f32 %v243, %v173
        %246 = vrot.lane.b32.xlu0 %v244, 125
        %v247 = vpop.permute.xlu0 %246
        %v249 = vadd.f32 %v241, %v247
        %s250 = sld [smem:[#allocation2 + $0x7]]
        %v251 = vstv %s250
        %v252 = vmul.f32 %v251, %v197
        %254 = vrot.lane.b32.xlu0 %v252, 125
        %v255 = vpop.permute.xlu0 %254
        %v257 = vadd.f32 %v249, %v255
        %s258 = sld [smem:[#allocation2 + $0x8]]
        %v259 = vstv %s258
        %v260 = vmul.f32 %v259, %v173
        %262 = vrot.lane.b32.xlu0 %v260, 124
        %v263 = vpop.permute.xlu0 %262
        %v265 = vadd.f32 %v257, %v263
        %s266 = sld [smem:[#allocation2 + $0x9]]
        %v267 = vstv %s266
        %v268 = vmul.f32 %v267, %v197
        %270 = vrot.lane.b32.xlu0 %v268, 124
        %v271 = vpop.permute.xlu0 %270
        %v273 = vadd.f32 %v265, %v271
        %s274 = sld [smem:[#allocation2 + $0xa]]
        %v275 = vstv %s274
        %v276 = vmul.f32 %v275, %v173
        %278 = vrot.lane.b32.xlu0 %v276, 123
        %v279 = vpop.permute.xlu0 %278
        %v281 = vadd.f32 %v273, %v279
        %s282 = sld [smem:[#allocation2 + $0xb]]
        %v283 = vstv %s282
        %v284 = vmul.f32 %v283, %v197
        %286 = vrot.lane.b32.xlu0 %v284, 123
        %v287 = vpop.permute.xlu0 %286
        %v289 = vadd.f32 %v281, %v287
        %s290 = sld [smem:[#allocation2 + $0xc]]
        %v291 = vstv %s290
        %v292 = vmul.f32 %v291, %v173
        %294 = vrot.lane.b32.xlu0 %v292, 122
        %v295 = vpop.permute.xlu0 %294
        %v297 = vadd.f32 %v289, %v295
        %s298 = sld [smem:[#allocation2 + $0xd]]
        %v299 = vstv %s298
        %v300 = vmul.f32 %v299, %v197
        %302 = vrot.lane.b32.xlu0 %v300, 122
        %v303 = vpop.permute.xlu0 %302
        %v305 = vadd.f32 %v297, %v303
        %s306 = sld [smem:[#allocation2 + $0xe]]
        %v307 = vstv %s306
        %v308 = vmul.f32 %v307, %v173
        %v309 = vmul.f32 %v307, %v181
        %vm312 = vcmask 1046528
        %v313 = vrot.slane %v308, 1
        %v314 = vrot.slane %v309, 1
        %v315 = vsel %vm312, %v313, %v314
        %v317 = vadd.f32 %v305, %v315
        %s318 = sld [smem:[#allocation2 + $0xf]]
        %v319 = vstv %s318
        %v320 = vmul.f32 %v319, %v197
        %v321 = vmul.f32 %v319, %v198
        %v324 = vrot.slane %v320, 1
        %v325 = vrot.slane %v321, 1
        %v326 = vsel %vm312, %v324, %v325
        %v328 = vadd.f32 %v317, %v326
        %s329 = sld [smem:[#allocation2 + $0x10]]
        %v330 = vstv %s329
        %v331 = vmul.f32 %v330, %v173
        %v332 = vmul.f32 %v330, %v181
        %v335 = vrot.slane %v331, 1
        %v336 = vrot.slane %v332, 1
        %v337 = vsel %vm312, %v335, %v336
        %338 = vrot.lane.b32.xlu0 %v337, 127
        %v339 = vpop.permute.xlu0 %338
        %v341 = vadd.f32 %v328, %v339
        %s342 = sld [smem:[#allocation2 + $0x11]]
        %v343 = vstv %s342
        %v344 = vmul.f32 %v343, %v197
        %v345 = vmul.f32 %v343, %v198
        %v348 = vrot.slane %v344, 1
        %v349 = vrot.slane %v345, 1
        %v350 = vsel %vm312, %v348, %v349
        %351 = vrot.lane.b32.xlu0 %v350, 127
        %v352 = vpop.permute.xlu0 %351
        %v354 = vadd.f32 %v341, %v352
        %s355 = sld [smem:[#allocation2 + $0x12]]
        %v356 = vstv %s355
        %v357 = vmul.f32 %v356, %v173
        %v358 = vmul.f32 %v356, %v181
        %v361 = vrot.slane %v357, 1
        %v362 = vrot.slane %v358, 1
        %v363 = vsel %vm312, %v361, %v362
        %364 = vrot.lane.b32.xlu0 %v363, 126
        %v365 = vpop.permute.xlu0 %364
        %v367 = vadd.f32 %v354, %v365
        %s368 = sld [smem:[#allocation2 + $0x13]]
        %v369 = vstv %s368
        %v370 = vmul.f32 %v369, %v197
        %v371 = vmul.f32 %v369, %v198
        %v374 = vrot.slane %v370, 1
        %v375 = vrot.slane %v371, 1
        %v376 = vsel %vm312, %v374, %v375
        %377 = vrot.lane.b32.xlu0 %v376, 126
        %v378 = vpop.permute.xlu0 %377
        %v380 = vadd.f32 %v367, %v378
        %s381 = sld [smem:[#allocation2 + $0x14]]
        %v382 = vstv %s381
        %v383 = vmul.f32 %v382, %v173
        %v384 = vmul.f32 %v382, %v181
        %v387 = vrot.slane %v383, 1
        %v388 = vrot.slane %v384, 1
        %v389 = vsel %vm312, %v387, %v388
        %390 = vrot.lane.b32.xlu0 %v389, 125
        %v391 = vpop.permute.xlu0 %390
        %v393 = vadd.f32 %v380, %v391
        %s394 = sld [smem:[#allocation2 + $0x15]]
        %v395 = vstv %s394
        %v396 = vmul.f32 %v395, %v197
        %v397 = vmul.f32 %v395, %v198
        %v400 = vrot.slane %v396, 1
        %v401 = vrot.slane %v397, 1
        %v402 = vsel %vm312, %v400, %v401
        %403 = vrot.lane.b32.xlu0 %v402, 125
        %v404 = vpop.permute.xlu0 %403
        %v406 = vadd.f32 %v393, %v404
        %s407 = sld [smem:[#allocation2 + $0x16]]
        %v408 = vstv %s407
        %v409 = vmul.f32 %v408, %v173
        %v410 = vmul.f32 %v408, %v181
        %v413 = vrot.slane %v409, 1
        %v414 = vrot.slane %v410, 1
        %v415 = vsel %vm312, %v413, %v414
        %416 = vrot.lane.b32.xlu0 %v415, 124
        %v417 = vpop.permute.xlu0 %416
        %v419 = vadd.f32 %v406, %v417
        %s420 = sld [smem:[#allocation2 + $0x17]]
        %v421 = vstv %s420
        %v422 = vmul.f32 %v421, %v197
        %v423 = vmul.f32 %v421, %v198
        %v426 = vrot.slane %v422, 1
        %v427 = vrot.slane %v423, 1
        %v428 = vsel %vm312, %v426, %v427
        %429 = vrot.lane.b32.xlu0 %v428, 124
        %v430 = vpop.permute.xlu0 %429
        %v432 = vadd.f32 %v419, %v430
        %s433 = sld [smem:[#allocation2 + $0x18]]
        %v434 = vstv %s433
        %v435 = vmul.f32 %v434, %v173
        %v436 = vmul.f32 %v434, %v181
        %v439 = vrot.slane %v435, 1
        %v440 = vrot.slane %v436, 1
        %v441 = vsel %vm312, %v439, %v440
        %442 = vrot.lane.b32.xlu0 %v441, 123
        %v443 = vpop.permute.xlu0 %442
        %v445 = vadd.f32 %v432, %v443
        %s446 = sld [smem:[#allocation2 + $0x19]]
        %v447 = vstv %s446
        %v448 = vmul.f32 %v447, %v197
        %v449 = vmul.f32 %v447, %v198
        %v452 = vrot.slane %v448, 1
        %v453 = vrot.slane %v449, 1
        %v454 = vsel %vm312, %v452, %v453
        %455 = vrot.lane.b32.xlu0 %v454, 123
        %v456 = vpop.permute.xlu0 %455
        %v458 = vadd.f32 %v445, %v456
        %s459 = sld [smem:[#allocation2 + $0x1a]]
        %v460 = vstv %s459
        %v461 = vmul.f32 %v460, %v173
        %v462 = vmul.f32 %v460, %v181
        %v465 = vrot.slane %v461, 1
        %v466 = vrot.slane %v462, 1
        %v467 = vsel %vm312, %v465, %v466
        %468 = vrot.lane.b32.xlu0 %v467, 122
        %v469 = vpop.permute.xlu0 %468
        %v471 = vadd.f32 %v458, %v469
        %s472 = sld [smem:[#allocation2 + $0x1b]]
        %v473 = vstv %s472
        %v474 = vmul.f32 %v473, %v197
        %v475 = vmul.f32 %v473, %v198
        %v478 = vrot.slane %v474, 1
        %v479 = vrot.slane %v475, 1
        %v480 = vsel %vm312, %v478, %v479
        %481 = vrot.lane.b32.xlu0 %v480, 122
        %v482 = vpop.permute.xlu0 %481
        %v484 = vadd.f32 %v471, %v482
        %s485 = sld [smem:[#allocation2 + $0x1c]]
        %v486 = vstv %s485
        %v487 = vmul.f32 %v486, %v173
        %v488 = vmul.f32 %v486, %v181
        %vm491 = vcmask 1045504
        %v492 = vrot.slane %v487, 2
        %v493 = vrot.slane %v488, 2
        %v494 = vsel %vm491, %v492, %v493
        %v496 = vadd.f32 %v484, %v494
        %s497 = sld [smem:[#allocation2 + $0x1d]]
        %v498 = vstv %s497
        %v499 = vmul.f32 %v498, %v197
        %v500 = vmul.f32 %v498, %v198
        %v503 = vrot.slane %v499, 2
        %v504 = vrot.slane %v500, 2
        %v505 = vsel %vm491, %v503, %v504
        %v507 = vadd.f32 %v496, %v505
        %s508 = sld [smem:[#allocation2 + $0x1e]]
        %v509 = vstv %s508
        %v510 = vmul.f32 %v509, %v173
        %v511 = vmul.f32 %v509, %v181
        %v514 = vrot.slane %v510, 2
        %v515 = vrot.slane %v511, 2
        %v516 = vsel %vm491, %v514, %v515
        %517 = vrot.lane.b32.xlu0 %v516, 127
        %v518 = vpop.permute.xlu0 %517
        %v520 = vadd.f32 %v507, %v518
        %s521 = sld [smem:[#allocation2 + $0x1f]]
        %v522 = vstv %s521
        %v523 = vmul.f32 %v522, %v197
        %v524 = vmul.f32 %v522, %v198
        %v527 = vrot.slane %v523, 2
        %v528 = vrot.slane %v524, 2
        %v529 = vsel %vm491, %v527, %v528
        %530 = vrot.lane.b32.xlu0 %v529, 127
        %v531 = vpop.permute.xlu0 %530
        %v533 = vadd.f32 %v520, %v531
        %s534 = sld [smem:[#allocation2 + $0x20]]
        %v535 = vstv %s534
        %v536 = vmul.f32 %v535, %v173
        %v537 = vmul.f32 %v535, %v181
        %v540 = vrot.slane %v536, 2
        %v541 = vrot.slane %v537, 2
        %v542 = vsel %vm491, %v540, %v541
        %543 = vrot.lane.b32.xlu0 %v542, 126
        %v544 = vpop.permute.xlu0 %543
        %v546 = vadd.f32 %v533, %v544
        %s547 = sld [smem:[#allocation2 + $0x21]]
        %v548 = vstv %s547
        %v549 = vmul.f32 %v548, %v197
        %v550 = vmul.f32 %v548, %v198
        %v553 = vrot.slane %v549, 2
        %v554 = vrot.slane %v550, 2
        %v555 = vsel %vm491, %v553, %v554
        %556 = vrot.lane.b32.xlu0 %v555, 126
        %v557 = vpop.permute.xlu0 %556
        %v559 = vadd.f32 %v546, %v557
        %s560 = sld [smem:[#allocation2 + $0x22]]
        %v561 = vstv %s560
        %v562 = vmul.f32 %v561, %v173
        %v563 = vmul.f32 %v561, %v181
        %v566 = vrot.slane %v562, 2
        %v567 = vrot.slane %v563, 2
        %v568 = vsel %vm491, %v566, %v567
        %569 = vrot.lane.b32.xlu0 %v568, 125
        %v570 = vpop.permute.xlu0 %569
        %v572 = vadd.f32 %v559, %v570
        %s573 = sld [smem:[#allocation2 + $0x23]]
        %v574 = vstv %s573
        %v575 = vmul.f32 %v574, %v197
        %v576 = vmul.f32 %v574, %v198
        %v579 = vrot.slane %v575, 2
        %v580 = vrot.slane %v576, 2
        %v581 = vsel %vm491, %v579, %v580
        %582 = vrot.lane.b32.xlu0 %v581, 125
        %v583 = vpop.permute.xlu0 %582
        %v585 = vadd.f32 %v572, %v583
        %s586 = sld [smem:[#allocation2 + $0x24]]
        %v587 = vstv %s586
        %v588 = vmul.f32 %v587, %v173
        %v589 = vmul.f32 %v587, %v181
        %v592 = vrot.slane %v588, 2
        %v593 = vrot.slane %v589, 2
        %v594 = vsel %vm491, %v592, %v593
        %595 = vrot.lane.b32.xlu0 %v594, 124
        %v596 = vpop.permute.xlu0 %595
        %v598 = vadd.f32 %v585, %v596
        %s599 = sld [smem:[#allocation2 + $0x25]]
        %v600 = vstv %s599
        %v601 = vmul.f32 %v600, %v197
        %v602 = vmul.f32 %v600, %v198
        %v605 = vrot.slane %v601, 2
        %v606 = vrot.slane %v602, 2
        %v607 = vsel %vm491, %v605, %v606
        %608 = vrot.lane.b32.xlu0 %v607, 124
        %v609 = vpop.permute.xlu0 %608
        %v611 = vadd.f32 %v598, %v609
        %s612 = sld [smem:[#allocation2 + $0x26]]
        %v613 = vstv %s612
        %v614 = vmul.f32 %v613, %v173
        %v615 = vmul.f32 %v613, %v181
        %v618 = vrot.slane %v614, 2
        %v619 = vrot.slane %v615, 2
        %v620 = vsel %vm491, %v618, %v619
        %621 = vrot.lane.b32.xlu0 %v620, 123
        %v622 = vpop.permute.xlu0 %621
        %v624 = vadd.f32 %v611, %v622
        %s625 = sld [smem:[#allocation2 + $0x27]]
        %v626 = vstv %s625
        %v627 = vmul.f32 %v626, %v197
        %v628 = vmul.f32 %v626, %v198
        %v631 = vrot.slane %v627, 2
        %v632 = vrot.slane %v628, 2
        %v633 = vsel %vm491, %v631, %v632
        %634 = vrot.lane.b32.xlu0 %v633, 123
        %v635 = vpop.permute.xlu0 %634
        %v637 = vadd.f32 %v624, %v635
        %s638 = sld [smem:[#allocation2 + $0x28]]
        %v639 = vstv %s638
        %v640 = vmul.f32 %v639, %v173
        %v641 = vmul.f32 %v639, %v181
        %v644 = vrot.slane %v640, 2
        %v645 = vrot.slane %v641, 2
        %v646 = vsel %vm491, %v644, %v645
        %647 = vrot.lane.b32.xlu0 %v646, 122
        %v648 = vpop.permute.xlu0 %647
        %v650 = vadd.f32 %v637, %v648
        %s651 = sld [smem:[#allocation2 + $0x29]]
        %v652 = vstv %s651
        %v653 = vmul.f32 %v652, %v197
        %v654 = vmul.f32 %v652, %v198
        %v657 = vrot.slane %v653, 2
        %v658 = vrot.slane %v654, 2
        %v659 = vsel %vm491, %v657, %v658
        %660 = vrot.lane.b32.xlu0 %v659, 122
        %v661 = vpop.permute.xlu0 %660
        %v663 = vadd.f32 %v650, %v661
        %s664 = sld [smem:[#allocation2 + $0x2a]]
        %v665 = vstv %s664
        %v666 = vmul.f32 %v665, %v173
        %v667 = vmul.f32 %v665, %v181
        %vm670 = vcmask 1044480
        %v671 = vrot.slane %v666, 3
        %v672 = vrot.slane %v667, 3
        %v673 = vsel %vm670, %v671, %v672
        %v675 = vadd.f32 %v663, %v673
        %s676 = sld [smem:[#allocation2 + $0x2b]]
        %v677 = vstv %s676
        %v678 = vmul.f32 %v677, %v197
        %v679 = vmul.f32 %v677, %v198
        %v682 = vrot.slane %v678, 3
        %v683 = vrot.slane %v679, 3
        %v684 = vsel %vm670, %v682, %v683
        %v686 = vadd.f32 %v675, %v684
        %s687 = sld [smem:[#allocation2 + $0x2c]]
        %v688 = vstv %s687
        %v689 = vmul.f32 %v688, %v173
        %v690 = vmul.f32 %v688, %v181
        %v693 = vrot.slane %v689, 3
        %v694 = vrot.slane %v690, 3
        %v695 = vsel %vm670, %v693, %v694
        %696 = vrot.lane.b32.xlu0 %v695, 127
        %v697 = vpop.permute.xlu0 %696
        %v699 = vadd.f32 %v686, %v697
        %s700 = sld [smem:[#allocation2 + $0x2d]]
        %v701 = vstv %s700
        %v702 = vmul.f32 %v701, %v197
        %v703 = vmul.f32 %v701, %v198
        %v706 = vrot.slane %v702, 3
        %v707 = vrot.slane %v703, 3
        %v708 = vsel %vm670, %v706, %v707
        %709 = vrot.lane.b32.xlu0 %v708, 127
        %v710 = vpop.permute.xlu0 %709
        %v712 = vadd.f32 %v699, %v710
        %s713 = sld [smem:[#allocation2 + $0x2e]]
        %v714 = vstv %s713
        %v715 = vmul.f32 %v714, %v173
        %v716 = vmul.f32 %v714, %v181
        %v719 = vrot.slane %v715, 3
        %v720 = vrot.slane %v716, 3
        %v721 = vsel %vm670, %v719, %v720
        %722 = vrot.lane.b32.xlu0 %v721, 126
        %v723 = vpop.permute.xlu0 %722
        %v725 = vadd.f32 %v712, %v723
        %s726 = sld [smem:[#allocation2 + $0x2f]]
        %v727 = vstv %s726
        %v728 = vmul.f32 %v727, %v197
        %v729 = vmul.f32 %v727, %v198
        %v732 = vrot.slane %v728, 3
        %v733 = vrot.slane %v729, 3
        %v734 = vsel %vm670, %v732, %v733
        %735 = vrot.lane.b32.xlu0 %v734, 126
        %v736 = vpop.permute.xlu0 %735
        %v738 = vadd.f32 %v725, %v736
        %s739 = sld [smem:[#allocation2 + $0x30]]
        %v740 = vstv %s739
        %v741 = vmul.f32 %v740, %v173
        %v742 = vmul.f32 %v740, %v181
        %v745 = vrot.slane %v741, 3
        %v746 = vrot.slane %v742, 3
        %v747 = vsel %vm670, %v745, %v746
        %748 = vrot.lane.b32.xlu0 %v747, 125
        %v749 = vpop.permute.xlu0 %748
        %v751 = vadd.f32 %v738, %v749
        %s752 = sld [smem:[#allocation2 + $0x31]]
        %v753 = vstv %s752
        %v754 = vmul.f32 %v753, %v197
        %v755 = vmul.f32 %v753, %v198
        %v758 = vrot.slane %v754, 3
        %v759 = vrot.slane %v755, 3
        %v760 = vsel %vm670, %v758, %v759
        %761 = vrot.lane.b32.xlu0 %v760, 125
        %v762 = vpop.permute.xlu0 %761
        %v764 = vadd.f32 %v751, %v762
        %s765 = sld [smem:[#allocation2 + $0x32]]
        %v766 = vstv %s765
        %v767 = vmul.f32 %v766, %v173
        %v768 = vmul.f32 %v766, %v181
        %v771 = vrot.slane %v767, 3
        %v772 = vrot.slane %v768, 3
        %v773 = vsel %vm670, %v771, %v772
        %774 = vrot.lane.b32.xlu0 %v773, 124
        %v775 = vpop.permute.xlu0 %774
        %v777 = vadd.f32 %v764, %v775
        %s778 = sld [smem:[#allocation2 + $0x33]]
        %v779 = vstv %s778
        %v780 = vmul.f32 %v779, %v197
        %v781 = vmul.f32 %v779, %v198
        %v784 = vrot.slane %v780, 3
        %v785 = vrot.slane %v781, 3
        %v786 = vsel %vm670, %v784, %v785
        %787 = vrot.lane.b32.xlu0 %v786, 124
        %v788 = vpop.permute.xlu0 %787
        %v790 = vadd.f32 %v777, %v788
        %s791 = sld [smem:[#allocation2 + $0x34]]
        %v792 = vstv %s791
        %v793 = vmul.f32 %v792, %v173
        %v794 = vmul.f32 %v792, %v181
        %v797 = vrot.slane %v793, 3
        %v798 = vrot.slane %v794, 3
        %v799 = vsel %vm670, %v797, %v798
        %800 = vrot.lane.b32.xlu0 %v799, 123
        %v801 = vpop.permute.xlu0 %800
        %v803 = vadd.f32 %v790, %v801
        %s804 = sld [smem:[#allocation2 + $0x35]]
        %v805 = vstv %s804
        %v806 = vmul.f32 %v805, %v197
        %v807 = vmul.f32 %v805, %v198
        %v810 = vrot.slane %v806, 3
        %v811 = vrot.slane %v807, 3
        %v812 = vsel %vm670, %v810, %v811
        %813 = vrot.lane.b32.xlu0 %v812, 123
        %v814 = vpop.permute.xlu0 %813
        %v816 = vadd.f32 %v803, %v814
        %s817 = sld [smem:[#allocation2 + $0x36]]
        %v818 = vstv %s817
        %v819 = vmul.f32 %v818, %v173
        %v820 = vmul.f32 %v818, %v181
        %v823 = vrot.slane %v819, 3
        %v824 = vrot.slane %v820, 3
        %v825 = vsel %vm670, %v823, %v824
        %826 = vrot.lane.b32.xlu0 %v825, 122
        %v827 = vpop.permute.xlu0 %826
        %v829 = vadd.f32 %v816, %v827
        %s830 = sld [smem:[#allocation2 + $0x37]]
        %v831 = vstv %s830
        %v832 = vmul.f32 %v831, %v197
        %v833 = vmul.f32 %v831, %v198
        %v836 = vrot.slane %v832, 3
        %v837 = vrot.slane %v833, 3
        %v838 = vsel %vm670, %v836, %v837
        %839 = vrot.lane.b32.xlu0 %v838, 122
        %v840 = vpop.permute.xlu0 %839
        %v842 = vadd.f32 %v829, %v840
        %s843 = sld [smem:[#allocation2 + $0x38]]
        %v844 = vstv %s843
        %v845 = vmul.f32 %v844, %v173
        %v846 = vmul.f32 %v844, %v181
        %vm849 = vcmask 1043456
        %v850 = vrot.slane %v845, 4
        %v851 = vrot.slane %v846, 4
        %v852 = vsel %vm849, %v850, %v851
        %v854 = vadd.f32 %v842, %v852
        %s855 = sld [smem:[#allocation2 + $0x39]]
        %v856 = vstv %s855
        %v857 = vmul.f32 %v856, %v197
        %v858 = vmul.f32 %v856, %v198
        %v861 = vrot.slane %v857, 4
        %v862 = vrot.slane %v858, 4
        %v863 = vsel %vm849, %v861, %v862
        %v865 = vadd.f32 %v854, %v863
        %s866 = sld [smem:[#allocation2 + $0x3a]]
        %v867 = vstv %s866
        %v868 = vmul.f32 %v867, %v173
        %v869 = vmul.f32 %v867, %v181
        %v872 = vrot.slane %v868, 4
        %v873 = vrot.slane %v869, 4
        %v874 = vsel %vm849, %v872, %v873
        %875 = vrot.lane.b32.xlu0 %v874, 127
        %v876 = vpop.permute.xlu0 %875
        %v878 = vadd.f32 %v865, %v876
        %s879 = sld [smem:[#allocation2 + $0x3b]]
        %v880 = vstv %s879
        %v881 = vmul.f32 %v880, %v197
        %v882 = vmul.f32 %v880, %v198
        %v885 = vrot.slane %v881, 4
        %v886 = vrot.slane %v882, 4
        %v887 = vsel %vm849, %v885, %v886
        %888 = vrot.lane.b32.xlu0 %v887, 127
        %v889 = vpop.permute.xlu0 %888
        %v891 = vadd.f32 %v878, %v889
        %s892 = sld [smem:[#allocation2 + $0x3c]]
        %v893 = vstv %s892
        %v894 = vmul.f32 %v893, %v173
        %v895 = vmul.f32 %v893, %v181
        %v898 = vrot.slane %v894, 4
        %v899 = vrot.slane %v895, 4
        %v900 = vsel %vm849, %v898, %v899
        %901 = vrot.lane.b32.xlu0 %v900, 126
        %v902 = vpop.permute.xlu0 %901
        %v904 = vadd.f32 %v891, %v902
        %s905 = sld [smem:[#allocation2 + $0x3d]]
        %v906 = vstv %s905
        %v907 = vmul.f32 %v906, %v197
        %v908 = vmul.f32 %v906, %v198
        %v911 = vrot.slane %v907, 4
        %v912 = vrot.slane %v908, 4
        %v913 = vsel %vm849, %v911, %v912
        %914 = vrot.lane.b32.xlu0 %v913, 126
        %v915 = vpop.permute.xlu0 %914
        %v917 = vadd.f32 %v904, %v915
        %s918 = sld [smem:[#allocation2 + $0x3e]]
        %v919 = vstv %s918
        %v920 = vmul.f32 %v919, %v173
        %v921 = vmul.f32 %v919, %v181
        %v924 = vrot.slane %v920, 4
        %v925 = vrot.slane %v921, 4
        %v926 = vsel %vm849, %v924, %v925
        %927 = vrot.lane.b32.xlu0 %v926, 125
        %v928 = vpop.permute.xlu0 %927
        %v930 = vadd.f32 %v917, %v928
        %s931 = sld [smem:[#allocation2 + $0x3f]]
        %v932 = vstv %s931
        %v933 = vmul.f32 %v932, %v197
        %v934 = vmul.f32 %v932, %v198
        %v937 = vrot.slane %v933, 4
        %v938 = vrot.slane %v934, 4
        %v939 = vsel %vm849, %v937, %v938
        %940 = vrot.lane.b32.xlu0 %v939, 125
        %v941 = vpop.permute.xlu0 %940
        %v943 = vadd.f32 %v930, %v941
        %s944 = sld [smem:[#allocation2 + $0x40]]
        %v945 = vstv %s944
        %v946 = vmul.f32 %v945, %v173
        %v947 = vmul.f32 %v945, %v181
        %v950 = vrot.slane %v946, 4
        %v951 = vrot.slane %v947, 4
        %v952 = vsel %vm849, %v950, %v951
        %953 = vrot.lane.b32.xlu0 %v952, 124
        %v954 = vpop.permute.xlu0 %953
        %v956 = vadd.f32 %v943, %v954
        %s957 = sld [smem:[#allocation2 + $0x41]]
        %v958 = vstv %s957
        %v959 = vmul.f32 %v958, %v197
        %v960 = vmul.f32 %v958, %v198
        %v963 = vrot.slane %v959, 4
        %v964 = vrot.slane %v960, 4
        %v965 = vsel %vm849, %v963, %v964
        %966 = vrot.lane.b32.xlu0 %v965, 124
        %v967 = vpop.permute.xlu0 %966
        %v969 = vadd.f32 %v956, %v967
        %s970 = sld [smem:[#allocation2 + $0x42]]
        %v971 = vstv %s970
        %v972 = vmul.f32 %v971, %v173
        %v973 = vmul.f32 %v971, %v181
        %v976 = vrot.slane %v972, 4
        %v977 = vrot.slane %v973, 4
        %v978 = vsel %vm849, %v976, %v977
        %979 = vrot.lane.b32.xlu0 %v978, 123
        %v980 = vpop.permute.xlu0 %979
        %v982 = vadd.f32 %v969, %v980
        %s983 = sld [smem:[#allocation2 + $0x43]]
        %v984 = vstv %s983
        %v985 = vmul.f32 %v984, %v197
        %v986 = vmul.f32 %v984, %v198
        %v989 = vrot.slane %v985, 4
        %v990 = vrot.slane %v986, 4
        %v991 = vsel %vm849, %v989, %v990
        %992 = vrot.lane.b32.xlu0 %v991, 123
        %v993 = vpop.permute.xlu0 %992
        %v995 = vadd.f32 %v982, %v993
        %s996 = sld [smem:[#allocation2 + $0x44]]
        %v997 = vstv %s996
        %v998 = vmul.f32 %v997, %v173
        %v999 = vmul.f32 %v997, %v181
        %v1002 = vrot.slane %v998, 4
        %v1003 = vrot.slane %v999, 4
        %v1004 = vsel %vm849, %v1002, %v1003
        %1005 = vrot.lane.b32.xlu0 %v1004, 122
        %v1006 = vpop.permute.xlu0 %1005
        %v1008 = vadd.f32 %v995, %v1006
        %s1009 = sld [smem:[#allocation2 + $0x45]]
        %v1010 = vstv %s1009
        %v1011 = vmul.f32 %v1010, %v197
        %v1012 = vmul.f32 %v1010, %v198
        %v1015 = vrot.slane %v1011, 4
        %v1016 = vrot.slane %v1012, 4
        %v1017 = vsel %vm849, %v1015, %v1016
        %1018 = vrot.lane.b32.xlu0 %v1017, 122
        %v1019 = vpop.permute.xlu0 %1018
        %v1021 = vadd.f32 %v1008, %v1019
        %s1022 = sld [smem:[#allocation2 + $0x46]]
        %v1023 = vstv %s1022
        %v1024 = vmul.f32 %v1023, %v173
        %v1025 = vmul.f32 %v1023, %v181
        %vm1028 = vcmask 1042432
        %v1029 = vrot.slane %v1024, 5
        %v1030 = vrot.slane %v1025, 5
        %v1031 = vsel %vm1028, %v1029, %v1030
        %v1033 = vadd.f32 %v1021, %v1031
        %s1034 = sld [smem:[#allocation2 + $0x47]]
        %v1035 = vstv %s1034
        %v1036 = vmul.f32 %v1035, %v197
        %v1037 = vmul.f32 %v1035, %v198
        %v1040 = vrot.slane %v1036, 5
        %v1041 = vrot.slane %v1037, 5
        %v1042 = vsel %vm1028, %v1040, %v1041
        %v1044 = vadd.f32 %v1033, %v1042
        %s1045 = sld [smem:[#allocation2 + $0x48]]
        %v1046 = vstv %s1045
        %v1047 = vmul.f32 %v1046, %v173
        %v1048 = vmul.f32 %v1046, %v181
        %v1051 = vrot.slane %v1047, 5
        %v1052 = vrot.slane %v1048, 5
        %v1053 = vsel %vm1028, %v1051, %v1052
        %1054 = vrot.lane.b32.xlu0 %v1053, 127
        %v1055 = vpop.permute.xlu0 %1054
        %v1057 = vadd.f32 %v1044, %v1055
        %s1058 = sld [smem:[#allocation2 + $0x49]]
        %v1059 = vstv %s1058
        %v1060 = vmul.f32 %v1059, %v197
        %v1061 = vmul.f32 %v1059, %v198
        %v1064 = vrot.slane %v1060, 5
        %v1065 = vrot.slane %v1061, 5
        %v1066 = vsel %vm1028, %v1064, %v1065
        %1067 = vrot.lane.b32.xlu0 %v1066, 127
        %v1068 = vpop.permute.xlu0 %1067
        %v1070 = vadd.f32 %v1057, %v1068
        %s1071 = sld [smem:[#allocation2 + $0x4a]]
        %v1072 = vstv %s1071
        %v1073 = vmul.f32 %v1072, %v173
        %v1074 = vmul.f32 %v1072, %v181
        %v1077 = vrot.slane %v1073, 5
        %v1078 = vrot.slane %v1074, 5
        %v1079 = vsel %vm1028, %v1077, %v1078
        %1080 = vrot.lane.b32.xlu0 %v1079, 126
        %v1081 = vpop.permute.xlu0 %1080
        %v1083 = vadd.f32 %v1070, %v1081
        %s1084 = sld [smem:[#allocation2 + $0x4b]]
        %v1085 = vstv %s1084
        %v1086 = vmul.f32 %v1085, %v197
        %v1087 = vmul.f32 %v1085, %v198
        %v1090 = vrot.slane %v1086, 5
        %v1091 = vrot.slane %v1087, 5
        %v1092 = vsel %vm1028, %v1090, %v1091
        %1093 = vrot.lane.b32.xlu0 %v1092, 126
        %v1094 = vpop.permute.xlu0 %1093
        %v1096 = vadd.f32 %v1083, %v1094
        %s1097 = sld [smem:[#allocation2 + $0x4c]]
        %v1098 = vstv %s1097
        %v1099 = vmul.f32 %v1098, %v173
        %v1100 = vmul.f32 %v1098, %v181
        %v1103 = vrot.slane %v1099, 5
        %v1104 = vrot.slane %v1100, 5
        %v1105 = vsel %vm1028, %v1103, %v1104
        %1106 = vrot.lane.b32.xlu0 %v1105, 125
        %v1107 = vpop.permute.xlu0 %1106
        %v1109 = vadd.f32 %v1096, %v1107
        %s1110 = sld [smem:[#allocation2 + $0x4d]]
        %v1111 = vstv %s1110
        %v1112 = vmul.f32 %v1111, %v197
        %v1113 = vmul.f32 %v1111, %v198
        %v1116 = vrot.slane %v1112, 5
        %v1117 = vrot.slane %v1113, 5
        %v1118 = vsel %vm1028, %v1116, %v1117
        %1119 = vrot.lane.b32.xlu0 %v1118, 125
        %v1120 = vpop.permute.xlu0 %1119
        %v1122 = vadd.f32 %v1109, %v1120
        %s1123 = sld [smem:[#allocation2 + $0x4e]]
        %v1124 = vstv %s1123
        %v1125 = vmul.f32 %v1124, %v173
        %v1126 = vmul.f32 %v1124, %v181
        %v1129 = vrot.slane %v1125, 5
        %v1130 = vrot.slane %v1126, 5
        %v1131 = vsel %vm1028, %v1129, %v1130
        %1132 = vrot.lane.b32.xlu0 %v1131, 124
        %v1133 = vpop.permute.xlu0 %1132
        %v1135 = vadd.f32 %v1122, %v1133
        %s1136 = sld [smem:[#allocation2 + $0x4f]]
        %v1137 = vstv %s1136
        %v1138 = vmul.f32 %v1137, %v197
        %v1139 = vmul.f32 %v1137, %v198
        %v1142 = vrot.slane %v1138, 5
        %v1143 = vrot.slane %v1139, 5
        %v1144 = vsel %vm1028, %v1142, %v1143
        %1145 = vrot.lane.b32.xlu0 %v1144, 124
        %v1146 = vpop.permute.xlu0 %1145
        %v1148 = vadd.f32 %v1135, %v1146
        %s1149 = sld [smem:[#allocation2 + $0x50]]
        %v1150 = vstv %s1149
        %v1151 = vmul.f32 %v1150, %v173
        %v1152 = vmul.f32 %v1150, %v181
        %v1155 = vrot.slane %v1151, 5
        %v1156 = vrot.slane %v1152, 5
        %v1157 = vsel %vm1028, %v1155, %v1156
        %1158 = vrot.lane.b32.xlu0 %v1157, 123
        %v1159 = vpop.permute.xlu0 %1158
        %v1161 = vadd.f32 %v1148, %v1159
        %s1162 = sld [smem:[#allocation2 + $0x51]]
        %v1163 = vstv %s1162
        %v1164 = vmul.f32 %v1163, %v197
        %v1165 = vmul.f32 %v1163, %v198
        %v1168 = vrot.slane %v1164, 5
        %v1169 = vrot.slane %v1165, 5
        %v1170 = vsel %vm1028, %v1168, %v1169
        %1171 = vrot.lane.b32.xlu0 %v1170, 123
        %v1172 = vpop.permute.xlu0 %1171
        %v1174 = vadd.f32 %v1161, %v1172
        %s1175 = sld [smem:[#allocation2 + $0x52]]
        %v1176 = vstv %s1175
        %v1177 = vmul.f32 %v1176, %v173
        %v1178 = vmul.f32 %v1176, %v181
        %v1181 = vrot.slane %v1177, 5
        %v1182 = vrot.slane %v1178, 5
        %v1183 = vsel %vm1028, %v1181, %v1182
        %1184 = vrot.lane.b32.xlu0 %v1183, 122
        %v1185 = vpop.permute.xlu0 %1184
        %v1187 = vadd.f32 %v1174, %v1185
        %s1188 = sld [smem:[#allocation2 + $0x53]]
        %v1189 = vstv %s1188
        %v1190 = vmul.f32 %v1189, %v197
        %v1191 = vmul.f32 %v1189, %v198
        %v1194 = vrot.slane %v1190, 5
        %v1195 = vrot.slane %v1191, 5
        %v1196 = vsel %vm1028, %v1194, %v1195
        %1197 = vrot.lane.b32.xlu0 %v1196, 122
        %v1198 = vpop.permute.xlu0 %1197
        %v1200 = vadd.f32 %v1187, %v1198
        %s1201 = sld [smem:[#allocation2 + $0x54]]
        %v1202 = vstv %s1201
        %v1203 = vmul.f32 %v1202, %v173
        %v1204 = vmul.f32 %v1202, %v181
        %vm1207 = vcmask 1041408
        %v1208 = vrot.slane %v1203, 6
        %v1209 = vrot.slane %v1204, 6
        %v1210 = vsel %vm1207, %v1208, %v1209
        %v1212 = vadd.f32 %v1200, %v1210
        %s1213 = sld [smem:[#allocation2 + $0x55]]
        %v1214 = vstv %s1213
        %v1215 = vmul.f32 %v1214, %v197
        %v1216 = vmul.f32 %v1214, %v198
        %v1219 = vrot.slane %v1215, 6
        %v1220 = vrot.slane %v1216, 6
        %v1221 = vsel %vm1207, %v1219, %v1220
        %v1223 = vadd.f32 %v1212, %v1221
        %s1224 = sld [smem:[#allocation2 + $0x56]]
        %v1225 = vstv %s1224
        %v1226 = vmul.f32 %v1225, %v173
        %v1227 = vmul.f32 %v1225, %v181
        %v1230 = vrot.slane %v1226, 6
        %v1231 = vrot.slane %v1227, 6
        %v1232 = vsel %vm1207, %v1230, %v1231
        %1233 = vrot.lane.b32.xlu0 %v1232, 127
        %v1234 = vpop.permute.xlu0 %1233
        %v1236 = vadd.f32 %v1223, %v1234
        %s1237 = sld [smem:[#allocation2 + $0x57]]
        %v1238 = vstv %s1237
        %v1239 = vmul.f32 %v1238, %v197
        %v1240 = vmul.f32 %v1238, %v198
        %v1243 = vrot.slane %v1239, 6
        %v1244 = vrot.slane %v1240, 6
        %v1245 = vsel %vm1207, %v1243, %v1244
        %1246 = vrot.lane.b32.xlu0 %v1245, 127
        %v1247 = vpop.permute.xlu0 %1246
        %v1249 = vadd.f32 %v1236, %v1247
        %s1250 = sld [smem:[#allocation2 + $0x58]]
        %v1251 = vstv %s1250
        %v1252 = vmul.f32 %v1251, %v173
        %v1253 = vmul.f32 %v1251, %v181
        %v1256 = vrot.slane %v1252, 6
        %v1257 = vrot.slane %v1253, 6
        %v1258 = vsel %vm1207, %v1256, %v1257
        %1259 = vrot.lane.b32.xlu0 %v1258, 126
        %v1260 = vpop.permute.xlu0 %1259
        %v1262 = vadd.f32 %v1249, %v1260
        %s1263 = sld [smem:[#allocation2 + $0x59]]
        %v1264 = vstv %s1263
        %v1265 = vmul.f32 %v1264, %v197
        %v1266 = vmul.f32 %v1264, %v198
        %v1269 = vrot.slane %v1265, 6
        %v1270 = vrot.slane %v1266, 6
        %v1271 = vsel %vm1207, %v1269, %v1270
        %1272 = vrot.lane.b32.xlu0 %v1271, 126
        %v1273 = vpop.permute.xlu0 %1272
        %v1275 = vadd.f32 %v1262, %v1273
        %s1276 = sld [smem:[#allocation2 + $0x5a]]
        %v1277 = vstv %s1276
        %v1278 = vmul.f32 %v1277, %v173
        %v1279 = vmul.f32 %v1277, %v181
        %v1282 = vrot.slane %v1278, 6
        %v1283 = vrot.slane %v1279, 6
        %v1284 = vsel %vm1207, %v1282, %v1283
        %1285 = vrot.lane.b32.xlu0 %v1284, 125
        %v1286 = vpop.permute.xlu0 %1285
        %v1288 = vadd.f32 %v1275, %v1286
        %s1289 = sld [smem:[#allocation2 + $0x5b]]
        %v1290 = vstv %s1289
        %v1291 = vmul.f32 %v1290, %v197
        %v1292 = vmul.f32 %v1290, %v198
        %v1295 = vrot.slane %v1291, 6
        %v1296 = vrot.slane %v1292, 6
        %v1297 = vsel %vm1207, %v1295, %v1296
        %1298 = vrot.lane.b32.xlu0 %v1297, 125
        %v1299 = vpop.permute.xlu0 %1298
        %v1301 = vadd.f32 %v1288, %v1299
        %s1302 = sld [smem:[#allocation2 + $0x5c]]
        %v1303 = vstv %s1302
        %v1304 = vmul.f32 %v1303, %v173
        %v1305 = vmul.f32 %v1303, %v181
        %v1308 = vrot.slane %v1304, 6
        %v1309 = vrot.slane %v1305, 6
        %v1310 = vsel %vm1207, %v1308, %v1309
        %1311 = vrot.lane.b32.xlu0 %v1310, 124
        %v1312 = vpop.permute.xlu0 %1311
        %v1314 = vadd.f32 %v1301, %v1312
        %s1315 = sld [smem:[#allocation2 + $0x5d]]
        %v1316 = vstv %s1315
        %v1317 = vmul.f32 %v1316, %v197
        %v1318 = vmul.f32 %v1316, %v198
        %v1321 = vrot.slane %v1317, 6
        %v1322 = vrot.slane %v1318, 6
        %v1323 = vsel %vm1207, %v1321, %v1322
        %1324 = vrot.lane.b32.xlu0 %v1323, 124
        %v1325 = vpop.permute.xlu0 %1324
        %v1327 = vadd.f32 %v1314, %v1325
        %s1328 = sld [smem:[#allocation2 + $0x5e]]
        %v1329 = vstv %s1328
        %v1330 = vmul.f32 %v1329, %v173
        %v1331 = vmul.f32 %v1329, %v181
        %v1334 = vrot.slane %v1330, 6
        %v1335 = vrot.slane %v1331, 6
        %v1336 = vsel %vm1207, %v1334, %v1335
        %1337 = vrot.lane.b32.xlu0 %v1336, 123
        %v1338 = vpop.permute.xlu0 %1337
        %v1340 = vadd.f32 %v1327, %v1338
        %s1341 = sld [smem:[#allocation2 + $0x5f]]
        %v1342 = vstv %s1341
        %v1343 = vmul.f32 %v1342, %v197
        %v1344 = vmul.f32 %v1342, %v198
        %v1347 = vrot.slane %v1343, 6
        %v1348 = vrot.slane %v1344, 6
        %v1349 = vsel %vm1207, %v1347, %v1348
        %1350 = vrot.lane.b32.xlu0 %v1349, 123
        %v1351 = vpop.permute.xlu0 %1350
        %v1353 = vadd.f32 %v1340, %v1351
        %s1354 = sld [smem:[#allocation2 + $0x60]]
        %v1355 = vstv %s1354
        %v1356 = vmul.f32 %v1355, %v173
        %v1357 = vmul.f32 %v1355, %v181
        %v1360 = vrot.slane %v1356, 6
        %v1361 = vrot.slane %v1357, 6
        %v1362 = vsel %vm1207, %v1360, %v1361
        %1363 = vrot.lane.b32.xlu0 %v1362, 122
        %v1364 = vpop.permute.xlu0 %1363
        %v1366 = vadd.f32 %v1353, %v1364
        %s1367 = sld [smem:[#allocation2 + $0x61]]
        %v1368 = vstv %s1367
        %v1369 = vmul.f32 %v1368, %v197
        %v1370 = vmul.f32 %v1368, %v198
        %v1373 = vrot.slane %v1369, 6
        %v1374 = vrot.slane %v1370, 6
        %v1375 = vsel %vm1207, %v1373, %v1374
        %1376 = vrot.lane.b32.xlu0 %v1375, 122
        %v1377 = vpop.permute.xlu0 %1376
        %v1379 = vadd.f32 %v1366, %v1377
        %v1380 = vxor.u32 %v1379, 2147483648
        %v1381 = vmul.f32 %v1380, 1.442695
        %v1382 = vpow.pop %v1381
        %v1383 = vadd.f32 %v1382, 1.0
        %v1384 = vrcp.pop %v1383
        %v1385 = vmul.f32 1.0, %v1384
        %v1387 = vrot.slane %v1385, 5
        %1388 = vrot.lane.b32.xlu0 %v1387, 3
        %v1389 = vpop.permute.xlu0 %1388
        %v1391 = vmul.f32 %v158, %v1389
        %v1392 = vmul.f32 %v159, %v1389
        %v1393 = vmul.f32 %v160, %v1389
        %v1394 = vmul.f32 %v161, %v1389
        %v1395 = vmul.f32 %v162, %v1389
        %v1396 = vmul.f32 %v163, %v1389
        %v1397 = vmul.f32 %v164, %v1389
        %v1398 = vmul.f32 %v165, %v1389
        %1407 = vrot.lane.b32.xlu0 %v1391, 125
        %v1408 = vpop.permute.xlu0 %1407
        %1409 = vrot.lane.b32.xlu0 %v1392, 125
        %v1410 = vpop.permute.xlu0 %1409
        %1411 = vrot.lane.b32.xlu0 %v1393, 125
        %v1412 = vpop.permute.xlu0 %1411
        %1413 = vrot.lane.b32.xlu0 %v1394, 125
        %v1414 = vpop.permute.xlu0 %1413
        %1415 = vrot.lane.b32.xlu0 %v1395, 125
        %v1416 = vpop.permute.xlu0 %1415
        %1417 = vrot.lane.b32.xlu0 %v1396, 125
        %v1418 = vpop.permute.xlu0 %1417
        %1419 = vrot.lane.b32.xlu0 %v1397, 125
        %v1420 = vpop.permute.xlu0 %1419
        %1421 = vrot.lane.b32.xlu0 %v1398, 125
        %v1422 = vpop.permute.xlu0 %1421
        %vm1431 = vcmask 31747
        %1432 = vst.msk [vmem:[%s157 - $0x3] sm:$0xf8] %vm1431, %v1408
        %vm1433 = vcmask 26624
        %1434 = vst.msk [vmem:[%s157 + $0x5] sm:$0x7] %vm1433, %v1410
        %1435 = vst.msk [vmem:[%s157 + $0x5] sm:$0xf8] %vm1431, %v1412
        %1436 = vst.msk [vmem:[%s157 + $0xd] sm:$0x7] %vm1433, %v1414
        %1437 = vst.msk [vmem:[%s157 + $0xd] sm:$0xf8] %vm1431, %v1416
        %1438 = vst.msk [vmem:[%s157 + $0x15] sm:$0x7] %vm1433, %v1418
        %1439 = vst.msk [vmem:[%s157 + $0x15] sm:$0xf8] %vm1431, %v1420
        %1440 = vst.msk [vmem:[%s157 + $0x1d] sm:$0x7] %vm1433, %v1422
        %p1441 = scmp.lt.s32.totalorder %s14, 1
        %s1442 = scalar_select %p1441, %s14, 1
        %s1443 = smul.addr %s1442, 4
        %s1444 = smul.addr %s1443, 8
        %s1445 = scalar_lea.vmem %s2, %s1444
        // Predicated region
        $region33: #{simclr_stage2_forward.11} parent=27 // pred_check
          %p1446 = pneg %p79
        $region34: #{simclr_stage2_forward.11} parent=27 // pred_check_branch
          %1448 = sbr.rel (%p1446) target = $region36
        $region35: #{simclr_stage2_forward.11} parent=27 // pred_region
          _
        $region36: #{simclr_stage2_forward.11} parent=27 // pred_fallthru
          _
      $region28: #{simclr_stage2_forward.11} parent=5 // pred_fallthru
        _
      %p1449 = scmp.le.s32.totalorder 2, %s9
      // Predicated region
      $region37: #{simclr_stage2_forward.11} parent=5 // pred_check
        %p1450 = pneg %p1449
      $region38: #{simclr_stage2_forward.11} parent=5 // pred_check_branch
        %1452 = sbr.rel (%p1450) target = $region40
      $region39: #{simclr_stage2_forward.11} parent=5 // pred_region
        %s1453 = ssub.s32 %s9, 2
        // Predicated region
        $region41: #{simclr_stage2_forward.11} parent=39 // pred_check
          %p1454 = pneg %p85
        $region42: #{simclr_stage2_forward.11} parent=39 // pred_check_branch
          %1456 = sbr.rel (%p1454) target = $region44
        $region43: #{simclr_stage2_forward.11} parent=39 // pred_region
          %p1457 = scmp.lt.s32.totalorder %s15, 1
          %s1458 = scalar_select %p1457, %s15, 1
          %s1459 = smul.addr %s1458, 4
          %s1460 = smul.addr %s1459, 8
          %s1461 = scalar_lea.vmem %s2, %s1460
        $region44: #{simclr_stage2_forward.11} parent=39 // pred_fallthru
          _
      $region40: #{simclr_stage2_forward.11} parent=5 // pred_fallthru
        _
    $region6: #{simclr_stage2_forward.11} parent=1 // loop_footer
      %s13 = sadd.s32 1, %s9
    $region7: #{simclr_stage2_forward.11} parent=1 // loop_footer_branch
      %8 = sbr.rel target = $region3
    $region8: #{simclr_stage2_forward.11} parent=1 // loop_exit
      _
    %1462 = vsyncpa [#allocation3], 1
    %s1463 = scalar_lea.sflag [#allocation3], 1
    %1464 = vsyncpa %s1463, 1

</llo_original>
